<compile_context>
chip_gen: v6e
topology: v6e:2x2x1
jax: 0.10.0
libtpu: 0.0.40
codegen_flags: <defaults>
</compile_context>

<pallas_src>
import jax
import jax.numpy as jnp
from jax.experimental import pallas as pl
from jax.experimental.pallas import tpu as pltpu


# ---------------- fused Pallas kernel ----------------

def _cnn_fused_kernel(x_ref, m1_ref, s1_ref, b1_ref, m2_ref, s2_ref, b2_ref,
                      fc_ref, bfc_ref, o_ref, pad2_ref):
    """16 images per grid step.

    x_ref   : (3, 32, B, 96) bf16  per-dy H-shifted input rows, lanes = ci*32+w
    m1_ref  : (3, 96, 512)   bf16  banded conv1 matrices (parity-split cols)
    s1/b1   : (1, 512)       f32   folded BN1 scale / bias (conv bias included)
    m2_ref  : (3, 256, 512)  bf16  banded conv2 matrices
    s2/b2   : (1, 512)       f32   folded BN2 scale / bias
    fc_ref  : (8, 256, 128)  bf16  fc weight (flatten perm folded, padded)
    bfc_ref : (1, 128)       f32   fc bias (padded)
    o_ref   : (B, 128)       f32   logits (cols 0..9 valid)
    pad2_ref: (18, B, 256)   bf16  H-padded conv2 input (scratch)
    """
    f32 = jnp.float32
    bf16 = jnp.bfloat16
    B = x_ref.shape[2]                                   # images per block (16)

    # ---- conv1 (3x3, pad 1): 3 banded matmuls, M = 32*B, + folded BN + ReLU
    acc1 = jnp.dot(x_ref[0].reshape(32 * B, 96), m1_ref[0],
                   preferred_element_type=f32)
    for dy in (1, 2):
        acc1 = acc1 + jnp.dot(x_ref[dy].reshape(32 * B, 96), m1_ref[dy],
                              preferred_element_type=f32)
    y1 = jnp.maximum(acc1 * s1_ref[...] + b1_ref[...], 0.0)          # (32B, 512)

    # ---- maxpool 2x2 #1: W pairs = 256-lane halves, H pairs = adjacent h-slabs
    y1w = jnp.maximum(y1[:, 0:256], y1[:, 256:512]).reshape(16, 2, B, 256)
    pooled1 = jnp.maximum(y1w[:, 0], y1w[:, 1])                      # (16, B, 256)

    # ---- conv2 input: H zero padding lives in the outer dim of the scratch
    zero_slab = jnp.zeros((B, 256), bf16)
    pad2_ref[0] = zero_slab
    pad2_ref[17] = zero_slab
    pad2_ref[pl.ds(1, 16), :, :] = pooled1.astype(bf16)

    # ---- conv2 + BN + ReLU (M = 16*B)
    acc2 = jnp.dot(pad2_ref[pl.ds(0, 16), :, :].reshape(16 * B, 256), m2_ref[0],
                   preferred_element_type=f32)
    for dy in (1, 2):
        lhs = pad2_ref[pl.ds(dy, 16), :, :].reshape(16 * B, 256)
        acc2 = acc2 + jnp.dot(lhs, m2_ref[dy], preferred_element_type=f32)
    y2 = jnp.maximum(acc2 * s2_ref[...] + b2_ref[...], 0.0)          # (16B, 512)

    # ---- maxpool 2x2 #2
    y2w = jnp.maximum(y2[:, 0:256], y2[:, 256:512]).reshape(8, 2, B, 256)
    pooled2 = jnp.maximum(y2w[:, 0], y2w[:, 1]).astype(bf16)         # (8, B, 256)

    # ---- fc (torch.flatten permutation folded into fc_ref), M = B per dot
    acc = jnp.dot(pooled2[0], fc_ref[0], preferred_element_type=f32)  # (B, 128)
    for h2 in range(1, 8):
        acc = acc + jnp.dot(pooled2[h2], fc_ref[h2], preferred_element_type=f32)
    o_ref[...] = acc + bfc_ref[...]


# ---------------- host-side one-time parameter prep ----------------

def _fold_bn(conv_bias, gamma, beta, mean, var, eps=1e-5):
    # TODO(synk): training-mode BatchNorm (batch statistics) not implemented;
    # eval-mode running-stats BN is folded into a per-channel scale/bias.
    s = gamma / jnp.sqrt(var + eps)
    b = (conv_bias - mean) * s + beta
    return s, b


def _banded_conv_matrix(w, width):
    """w: (Cout, Cin, 3, 3) torch-layout conv weight -> (3, Cin*width, Cout*width).

    M[dy][ci*width + w', co*width + wo] = w[co, ci, dy, dx] with w' = wo + dx - 1;
    out-of-range taps (W-direction zero padding) are simply absent (zero rows).
    """
    mats = []
    for dy in range(3):
        m = jnp.zeros((w.shape[1] * width, w.shape[0] * width), jnp.float32)
        for dx in range(3):
            shift = jnp.eye(width, k=1 - dx, dtype=jnp.float32)
            m = m + jnp.kron(jnp.transpose(w[:, :, dy, dx]), shift)
        mats.append(m)
    return jnp.stack(mats)


def _split_perm(C, Wd):
    """Column perm: new p*(C*Wd//2) + c*(Wd//2) + wo <- old c*Wd + 2*wo + p."""
    wo = Wd // 2
    p = jnp.arange(2)[:, None, None]
    c = jnp.arange(C)[None, :, None]
    woi = jnp.arange(wo)[None, None, :]
    return (c * Wd + 2 * woi + p).reshape(-1)


def prepare_params(p, eps=1e-5):
    perm1 = _split_perm(16, 32)   # conv1 output: 16 channels x 32 wide
    perm2 = _split_perm(32, 16)   # conv2 output: 32 channels x 16 wide

    cm1 = _banded_conv_matrix(p["w1"], 32)[:, :, perm1].astype(jnp.bfloat16)   # (3,96,512)
    s1, b1 = _fold_bn(p["b1"], p["g1"], p["beta1"], p["m1"], p["v1"], eps)
    s1r = jnp.repeat(s1, 32)[perm1][None, :].astype(jnp.float32)
    b1r = jnp.repeat(b1, 32)[perm1][None, :].astype(jnp.float32)

    cm2 = _banded_conv_matrix(p["w2"], 16)[:, :, perm2].astype(jnp.bfloat16)   # (3,256,512)
    s2, b2 = _fold_bn(p["b2"], p["g2"], p["beta2"], p["m2"], p["v2"], eps)
    s2r = jnp.repeat(s2, 16)[perm2][None, :].astype(jnp.float32)
    b2r = jnp.repeat(b2, 16)[perm2][None, :].astype(jnp.float32)

    # fc: feature index in torch.flatten order is c2*64 + h2*8 + w2 -> fold into weight.
    wfc = p["wfc"].reshape(10, 32, 8, 8)                        # (k, c2, h2, w2)
    fcm = jnp.transpose(wfc, (2, 1, 3, 0)).reshape(8, 256, 10)  # (h2, c2*8+w2, k)
    fcm = jnp.pad(fcm, ((0, 0), (0, 0), (0, 118))).astype(jnp.bfloat16)  # (8,256,128)
    bfc = jnp.pad(p["bfc"], (0, 118))[None, :].astype(jnp.float32)       # (1,128)

    return dict(conv1=cm1, scale1=s1r, bias1=b1r,
                conv2=cm2, scale2=s2r, bias2=b2r, fc=fcm, fc_bias=bfc)


# ---------------- forward ----------------

def cnn_forward(x_nchw, prep, block_n=16):
    N = x_nchw.shape[0]
    nb = (N + block_n - 1) // block_n
    Np = nb * block_n

    # NCHW -> rows (n, h, ci*32 + w); pad H by 1 and N up to a block multiple.
    xr = jnp.transpose(x_nchw, (0, 2, 1, 3)).reshape(N, 32, 96)
    xr = jnp.pad(xr, ((0, Np - N), (1, 1), (0, 0)))                  # (Np, 34, 96)
    # Per-dy H-shifted copies, h-major with batch innermost: (3, 32, Np, 96).
    x_dy = jnp.stack([xr[:, dy:dy + 32, :] for dy in range(3)], axis=0)
    x_dy = jnp.transpose(x_dy, (0, 2, 1, 3)).astype(jnp.bfloat16)

    out = pl.pallas_call(
        _cnn_fused_kernel,
        out_shape=jax.ShapeDtypeStruct((Np, 128), jnp.float32),
        grid=(nb,),
        in_specs=[
            pl.BlockSpec((3, 32, block_n, 96), lambda i: (0, 0, i, 0)),
            pl.BlockSpec((3, 96, 512), lambda i: (0, 0, 0)),
            pl.BlockSpec((1, 512), lambda i: (0, 0)),
            pl.BlockSpec((1, 512), lambda i: (0, 0)),
            pl.BlockSpec((3, 256, 512), lambda i: (0, 0, 0)),
            pl.BlockSpec((1, 512), lambda i: (0, 0)),
            pl.BlockSpec((1, 512), lambda i: (0, 0)),
            pl.BlockSpec((8, 256, 128), lambda i: (0, 0, 0)),
            pl.BlockSpec((1, 128), lambda i: (0, 0)),
        ],
        out_specs=pl.BlockSpec((block_n, 128), lambda i: (i, 0)),
        scratch_shapes=[
            pltpu.VMEM((18, block_n, 256), jnp.bfloat16),   # H-padded conv2 input
        ],
        compiler_params=pltpu.CompilerParams(
            dimension_semantics=("parallel",),
            vmem_limit_bytes=32 * 1024 * 1024),
    )(x_dy, prep["conv1"], prep["scale1"], prep["bias1"],
      prep["conv2"], prep["scale2"], prep["bias2"], prep["fc"], prep["fc_bias"])

    return out[:N, :10]


# ---------------- pure-JAX reference (PyTorch semantics) ----------------

def cnn_reference(x_nchw, p, eps=1e-5):
    def conv(x, w, b):
        y = jax.lax.conv_general_dilated(
            x, w, window_strides=(1, 1), padding=((1, 1), (1, 1)),
            dimension_numbers=("NCHW", "OIHW", "NCHW"),
            precision=jax.lax.Precision.HIGHEST)
        return y + b[None, :, None, None]

    def bn(x, g, be, m, v):
        return ((x - m[None, :, None, None])
                / jnp.sqrt(v[None, :, None, None] + eps)
                * g[None, :, None, None] + be[None, :, None, None])

    def pool(x):
        n, c, h, w = x.shape
        return x.reshape(n, c, h // 2, 2, w // 2, 2).max(axis=(3, 5))

    y = pool(jnp.maximum(bn(conv(x_nchw, p["w1"], p["b1"]),
                            p["g1"], p["beta1"], p["m1"], p["v1"]), 0.0))
    y = pool(jnp.maximum(bn(conv(y, p["w2"], p["b2"]),
                            p["g2"], p["beta2"], p["m2"], p["v2"]), 0.0))
    y = y.reshape(y.shape[0], -1)
    return y @ p["wfc"].T + p["bfc"][None, :]


if __name__ == "__main__":
    key = jax.random.PRNGKey(0)
    keys = jax.random.split(key, 16)
    p = {
        "w1": 0.1 * jax.random.normal(keys[0], (16, 3, 3, 3), jnp.float32),
        "b1": 0.1 * jax.random.normal(keys[1], (16,), jnp.float32),
        "g1": 1.0 + 0.1 * jax.random.normal(keys[2], (16,), jnp.float32),
        "beta1": 0.1 * jax.random.normal(keys[3], (16,), jnp.float32),
        "m1": 0.1 * jax.random.normal(keys[4], (16,), jnp.float32),
        "v1": 0.5 + jax.random.uniform(keys[5], (16,), jnp.float32),
        "w2": 0.05 * jax.random.normal(keys[6], (32, 16, 3, 3), jnp.float32),
        "b2": 0.1 * jax.random.normal(keys[7], (32,), jnp.float32),
        "g2": 1.0 + 0.1 * jax.random.normal(keys[8], (32,), jnp.float32),
        "beta2": 0.1 * jax.random.normal(keys[9], (32,), jnp.float32),
        "m2": 0.1 * jax.random.normal(keys[10], (32,), jnp.float32),
        "v2": 0.5 + jax.random.uniform(keys[11], (32,), jnp.float32),
        "wfc": 0.02 * jax.random.normal(keys[12], (10, 32 * 8 * 8), jnp.float32),
        "bfc": 0.02 * jax.random.normal(keys[13], (10,), jnp.float32),
    }
    # fc expects 32*8*8 features after two 2x2 pools -> input spatial must be 32x32.
    # N=24 exercises both the batched grid (2 steps of 16) and the N-padding path.
    x = jax.random.normal(keys[14], (24, 3, 32, 32), jnp.float32)

    prep = prepare_params(p)
    out = jax.block_until_ready(cnn_forward(x, prep))
    ref = jax.block_until_ready(cnn_reference(x, p))

    assert out.shape == (24, 10) and out.dtype == jnp.float32
    # bf16 conv/fc matrices and bf16 LHS (f32 accumulation) -> a few 1e-3 of
    # absolute drift vs the f32 HIGHEST-precision reference is expected.
    max_err = float(jnp.max(jnp.abs(out - ref)))
    assert max_err < 2e-2, f"mismatch vs reference: {max_err}"
    print("KERNEL_OK")
</pallas_src>

<mosaic_0001>
module attributes {stable_mosaic.version = 11 : i64} {
  func.func @_cnn_fused_kernel(%arg0: i32, %arg1: memref<3x32x16x96xbf16, #tpu.memory_space<vmem>>, %arg2: memref<3x96x512xbf16, #tpu.memory_space<vmem>>, %arg3: memref<1x512xf32, #tpu.memory_space<vmem>>, %arg4: memref<1x512xf32, #tpu.memory_space<vmem>>, %arg5: memref<3x256x512xbf16, #tpu.memory_space<vmem>>, %arg6: memref<1x512xf32, #tpu.memory_space<vmem>>, %arg7: memref<1x512xf32, #tpu.memory_space<vmem>>, %arg8: memref<8x256x128xbf16, #tpu.memory_space<vmem>>, %arg9: memref<1x128xf32, #tpu.memory_space<vmem>>, %arg10: memref<16x128xf32, #tpu.memory_space<vmem>>, %arg11: memref<18x16x256xbf16, #tpu.memory_space<vmem>>) attributes {dimension_semantics = [#tpu.dimension_semantics<parallel>], iteration_bounds = array<i64: 2>, scalar_prefetch = 0 : i64, scratch_operands = 1 : i64, tpu.core_type = #tpu.core_type<tc>, window_params = [{transform_indices = @transform_0, window_bounds = array<i64: 3, 32, 16, 96>}, {pipeline_mode = #tpu.pipeline_mode<synchronous>, transform_indices = @transform_1, window_bounds = array<i64: 3, 96, 512>}, {pipeline_mode = #tpu.pipeline_mode<synchronous>, transform_indices = @transform_2, window_bounds = array<i64: 1, 512>}, {pipeline_mode = #tpu.pipeline_mode<synchronous>, transform_indices = @transform_3, window_bounds = array<i64: 1, 512>}, {pipeline_mode = #tpu.pipeline_mode<synchronous>, transform_indices = @transform_4, window_bounds = array<i64: 3, 256, 512>}, {pipeline_mode = #tpu.pipeline_mode<synchronous>, transform_indices = @transform_5, window_bounds = array<i64: 1, 512>}, {pipeline_mode = #tpu.pipeline_mode<synchronous>, transform_indices = @transform_6, window_bounds = array<i64: 1, 512>}, {pipeline_mode = #tpu.pipeline_mode<synchronous>, transform_indices = @transform_7, window_bounds = array<i64: 8, 256, 128>}, {pipeline_mode = #tpu.pipeline_mode<synchronous>, transform_indices = @transform_8, window_bounds = array<i64: 1, 128>}, {transform_indices = @transform_9, window_bounds = array<i64: 16, 128>}]} {
    %c0 = arith.constant 0 : index
    %c0_0 = arith.constant 0 : index
    %c0_1 = arith.constant 0 : index
    %c0_2 = arith.constant 0 : index
    %0 = vector.load %arg1[%c0, %c0_0, %c0_1, %c0_2] : memref<3x32x16x96xbf16, #tpu.memory_space<vmem>>, vector<1x32x16x96xbf16>
    %1 = vector.shape_cast %0 : vector<1x32x16x96xbf16> to vector<32x16x96xbf16>
    %2 = vector.shape_cast %1 : vector<32x16x96xbf16> to vector<512x96xbf16>
    %c0_3 = arith.constant 0 : index
    %c0_4 = arith.constant 0 : index
    %c0_5 = arith.constant 0 : index
    %3 = vector.load %arg2[%c0_3, %c0_4, %c0_5] : memref<3x96x512xbf16, #tpu.memory_space<vmem>>, vector<1x96x512xbf16>
    %4 = vector.shape_cast %3 : vector<1x96x512xbf16> to vector<96x512xbf16>
    %cst = arith.constant dense<0.000000e+00> : vector<512x512xf32>
    %5 = tpu.matmul %2, %4, %cst {dimension_numbers = #tpu.dot_dimension_numbers<[1], [0], [0], [1], [0, 0, 1, 1], [], []>} : vector<512x96xbf16>, vector<96x512xbf16>, vector<512x512xf32> -> vector<512x512xf32>
    %c1 = arith.constant 1 : index
    %c0_6 = arith.constant 0 : index
    %c0_7 = arith.constant 0 : index
    %c0_8 = arith.constant 0 : index
    %6 = vector.load %arg1[%c1, %c0_6, %c0_7, %c0_8] : memref<3x32x16x96xbf16, #tpu.memory_space<vmem>>, vector<1x32x16x96xbf16>
    %7 = vector.shape_cast %6 : vector<1x32x16x96xbf16> to vector<32x16x96xbf16>
    %8 = vector.shape_cast %7 : vector<32x16x96xbf16> to vector<512x96xbf16>
    %c1_9 = arith.constant 1 : index
    %c0_10 = arith.constant 0 : index
    %c0_11 = arith.constant 0 : index
    %9 = vector.load %arg2[%c1_9, %c0_10, %c0_11] : memref<3x96x512xbf16, #tpu.memory_space<vmem>>, vector<1x96x512xbf16>
    %10 = vector.shape_cast %9 : vector<1x96x512xbf16> to vector<96x512xbf16>
    %cst_12 = arith.constant dense<0.000000e+00> : vector<512x512xf32>
    %11 = tpu.matmul %8, %10, %cst_12 {dimension_numbers = #tpu.dot_dimension_numbers<[1], [0], [0], [1], [0, 0, 1, 1], [], []>} : vector<512x96xbf16>, vector<96x512xbf16>, vector<512x512xf32> -> vector<512x512xf32>
    %12 = arith.addf %5, %11 : vector<512x512xf32>
    %c2 = arith.constant 2 : index
    %c0_13 = arith.constant 0 : index
    %c0_14 = arith.constant 0 : index
    %c0_15 = arith.constant 0 : index
    %13 = vector.load %arg1[%c2, %c0_13, %c0_14, %c0_15] : memref<3x32x16x96xbf16, #tpu.memory_space<vmem>>, vector<1x32x16x96xbf16>
    %14 = vector.shape_cast %13 : vector<1x32x16x96xbf16> to vector<32x16x96xbf16>
    %15 = vector.shape_cast %14 : vector<32x16x96xbf16> to vector<512x96xbf16>
    %c2_16 = arith.constant 2 : index
    %c0_17 = arith.constant 0 : index
    %c0_18 = arith.constant 0 : index
    %16 = vector.load %arg2[%c2_16, %c0_17, %c0_18] : memref<3x96x512xbf16, #tpu.memory_space<vmem>>, vector<1x96x512xbf16>
    %17 = vector.shape_cast %16 : vector<1x96x512xbf16> to vector<96x512xbf16>
    %cst_19 = arith.constant dense<0.000000e+00> : vector<512x512xf32>
    %18 = tpu.matmul %15, %17, %cst_19 {dimension_numbers = #tpu.dot_dimension_numbers<[1], [0], [0], [1], [0, 0, 1, 1], [], []>} : vector<512x96xbf16>, vector<96x512xbf16>, vector<512x512xf32> -> vector<512x512xf32>
    %19 = arith.addf %12, %18 : vector<512x512xf32>
    %c0_20 = arith.constant 0 : index
    %c0_21 = arith.constant 0 : index
    %20 = vector.load %arg3[%c0_20, %c0_21] : memref<1x512xf32, #tpu.memory_space<vmem>>, vector<1x512xf32>
    %21 = vector.broadcast %20 : vector<1x512xf32> to vector<512x512xf32>
    %22 = arith.mulf %19, %21 : vector<512x512xf32>
    %c0_22 = arith.constant 0 : index
    %c0_23 = arith.constant 0 : index
    %23 = vector.load %arg4[%c0_22, %c0_23] : memref<1x512xf32, #tpu.memory_space<vmem>>, vector<1x512xf32>
    %24 = vector.broadcast %23 : vector<1x512xf32> to vector<512x512xf32>
    %25 = arith.addf %22, %24 : vector<512x512xf32>
    %cst_24 = arith.constant 0.000000e+00 : f32
    %26 = vector.broadcast %cst_24 : f32 to vector<512x512xf32>
    %27 = arith.maximumf %25, %26 : vector<512x512xf32>
    %28 = vector.extract_strided_slice %27 {offsets = [0, 0], sizes = [512, 256], strides = [1, 1]} : vector<512x512xf32> to vector<512x256xf32>
    %29 = vector.extract_strided_slice %27 {offsets = [0, 256], sizes = [512, 256], strides = [1, 1]} : vector<512x512xf32> to vector<512x256xf32>
    %30 = arith.maximumf %28, %29 : vector<512x256xf32>
    %31 = vector.shape_cast %30 : vector<512x256xf32> to vector<16x2x16x256xf32>
    %32 = vector.extract_strided_slice %31 {offsets = [0, 0, 0, 0], sizes = [16, 1, 16, 256], strides = [1, 1, 1, 1]} : vector<16x2x16x256xf32> to vector<16x1x16x256xf32>
    %33 = vector.shape_cast %32 : vector<16x1x16x256xf32> to vector<16x16x256xf32>
    %34 = vector.extract_strided_slice %31 {offsets = [0, 1, 0, 0], sizes = [16, 1, 16, 256], strides = [1, 1, 1, 1]} : vector<16x2x16x256xf32> to vector<16x1x16x256xf32>
    %35 = vector.shape_cast %34 : vector<16x1x16x256xf32> to vector<16x16x256xf32>
    %36 = arith.maximumf %33, %35 : vector<16x16x256xf32>
    %cst_25 = arith.constant 0.000000e+00 : bf16
    %37 = vector.broadcast %cst_25 : bf16 to vector<16x256xbf16>
    %c0_26 = arith.constant 0 : index
    %c0_27 = arith.constant 0 : index
    %c0_28 = arith.constant 0 : index
    %38 = vector.load %arg11[%c0_26, %c0_27, %c0_28] : memref<18x16x256xbf16, #tpu.memory_space<vmem>>, vector<1x16x256xbf16>
    %39 = vector.shape_cast %38 : vector<1x16x256xbf16> to vector<16x256xbf16>
    %40 = vector.shape_cast %37 : vector<16x256xbf16> to vector<1x16x256xbf16>
    tpu.vector_store %arg11[%c0_26, %c0_27, %c0_28], %40 {strides = array<i32>} : memref<18x16x256xbf16, #tpu.memory_space<vmem>>, vector<1x16x256xbf16>,
    %c17 = arith.constant 17 : index
    %c0_29 = arith.constant 0 : index
    %c0_30 = arith.constant 0 : index
    %41 = vector.load %arg11[%c17, %c0_29, %c0_30] : memref<18x16x256xbf16, #tpu.memory_space<vmem>>, vector<1x16x256xbf16>
    %42 = vector.shape_cast %41 : vector<1x16x256xbf16> to vector<16x256xbf16>
    %43 = vector.shape_cast %37 : vector<16x256xbf16> to vector<1x16x256xbf16>
    tpu.vector_store %arg11[%c17, %c0_29, %c0_30], %43 {strides = array<i32>} : memref<18x16x256xbf16, #tpu.memory_space<vmem>>, vector<1x16x256xbf16>,
    %44 = arith.truncf %36 : vector<16x16x256xf32> to vector<16x16x256xbf16>
    %c1_31 = arith.constant 1 : index
    %c0_32 = arith.constant 0 : index
    %c0_33 = arith.constant 0 : index
    %45 = vector.load %arg11[%c1_31, %c0_32, %c0_33] : memref<18x16x256xbf16, #tpu.memory_space<vmem>>, vector<16x16x256xbf16>
    tpu.vector_store %arg11[%c1_31, %c0_32, %c0_33], %44 {strides = array<i32>} : memref<18x16x256xbf16, #tpu.memory_space<vmem>>, vector<16x16x256xbf16>,
    %c0_34 = arith.constant 0 : index
    %c0_35 = arith.constant 0 : index
    %c0_36 = arith.constant 0 : index
    %46 = vector.load %arg11[%c0_34, %c0_35, %c0_36] : memref<18x16x256xbf16, #tpu.memory_space<vmem>>, vector<16x16x256xbf16>
    %47 = vector.shape_cast %46 : vector<16x16x256xbf16> to vector<256x256xbf16>
    %c0_37 = arith.constant 0 : index
    %c0_38 = arith.constant 0 : index
    %c0_39 = arith.constant 0 : index
    %48 = vector.load %arg5[%c0_37, %c0_38, %c0_39] : memref<3x256x512xbf16, #tpu.memory_space<vmem>>, vector<1x256x512xbf16>
    %49 = vector.shape_cast %48 : vector<1x256x512xbf16> to vector<256x512xbf16>
    %cst_40 = arith.constant dense<0.000000e+00> : vector<256x512xf32>
    %50 = tpu.matmul %47, %49, %cst_40 {dimension_numbers = #tpu.dot_dimension_numbers<[1], [0], [0], [1], [0, 0, 1, 1], [], []>} : vector<256x256xbf16>, vector<256x512xbf16>, vector<256x512xf32> -> vector<256x512xf32>
    %c1_41 = arith.constant 1 : index
    %c0_42 = arith.constant 0 : index
    %c0_43 = arith.constant 0 : index
    %51 = vector.load %arg11[%c1_41, %c0_42, %c0_43] : memref<18x16x256xbf16, #tpu.memory_space<vmem>>, vector<16x16x256xbf16>
    %52 = vector.shape_cast %51 : vector<16x16x256xbf16> to vector<256x256xbf16>
    %c1_44 = arith.constant 1 : index
    %c0_45 = arith.constant 0 : index
    %c0_46 = arith.constant 0 : index
    %53 = vector.load %arg5[%c1_44, %c0_45, %c0_46] : memref<3x256x512xbf16, #tpu.memory_space<vmem>>, vector<1x256x512xbf16>
    %54 = vector.shape_cast %53 : vector<1x256x512xbf16> to vector<256x512xbf16>
    %cst_47 = arith.constant dense<0.000000e+00> : vector<256x512xf32>
    %55 = tpu.matmul %52, %54, %cst_47 {dimension_numbers = #tpu.dot_dimension_numbers<[1], [0], [0], [1], [0, 0, 1, 1], [], []>} : vector<256x256xbf16>, vector<256x512xbf16>, vector<256x512xf32> -> vector<256x512xf32>
    %56 = arith.addf %50, %55 : vector<256x512xf32>
    %c2_48 = arith.constant 2 : index
    %c0_49 = arith.constant 0 : index
    %c0_50 = arith.constant 0 : index
    %57 = vector.load %arg11[%c2_48, %c0_49, %c0_50] : memref<18x16x256xbf16, #tpu.memory_space<vmem>>, vector<16x16x256xbf16>
    %58 = vector.shape_cast %57 : vector<16x16x256xbf16> to vector<256x256xbf16>
    %c2_51 = arith.constant 2 : index
    %c0_52 = arith.constant 0 : index
    %c0_53 = arith.constant 0 : index
    %59 = vector.load %arg5[%c2_51, %c0_52, %c0_53] : memref<3x256x512xbf16, #tpu.memory_space<vmem>>, vector<1x256x512xbf16>
    %60 = vector.shape_cast %59 : vector<1x256x512xbf16> to vector<256x512xbf16>
    %cst_54 = arith.constant dense<0.000000e+00> : vector<256x512xf32>
    %61 = tpu.matmul %58, %60, %cst_54 {dimension_numbers = #tpu.dot_dimension_numbers<[1], [0], [0], [1], [0, 0, 1, 1], [], []>} : vector<256x256xbf16>, vector<256x512xbf16>, vector<256x512xf32> -> vector<256x512xf32>
    %62 = arith.addf %56, %61 : vector<256x512xf32>
    %c0_55 = arith.constant 0 : index
    %c0_56 = arith.constant 0 : index
    %63 = vector.load %arg6[%c0_55, %c0_56] : memref<1x512xf32, #tpu.memory_space<vmem>>, vector<1x512xf32>
    %64 = vector.broadcast %63 : vector<1x512xf32> to vector<256x512xf32>
    %65 = arith.mulf %62, %64 : vector<256x512xf32>
    %c0_57 = arith.constant 0 : index
    %c0_58 = arith.constant 0 : index
    %66 = vector.load %arg7[%c0_57, %c0_58] : memref<1x512xf32, #tpu.memory_space<vmem>>, vector<1x512xf32>
    %67 = vector.broadcast %66 : vector<1x512xf32> to vector<256x512xf32>
    %68 = arith.addf %65, %67 : vector<256x512xf32>
    %cst_59 = arith.constant 0.000000e+00 : f32
    %69 = vector.broadcast %cst_59 : f32 to vector<256x512xf32>
    %70 = arith.maximumf %68, %69 : vector<256x512xf32>
    %71 = vector.extract_strided_slice %70 {offsets = [0, 0], sizes = [256, 256], strides = [1, 1]} : vector<256x512xf32> to vector<256x256xf32>
    %72 = vector.extract_strided_slice %70 {offsets = [0, 256], sizes = [256, 256], strides = [1, 1]} : vector<256x512xf32> to vector<256x256xf32>
    %73 = arith.maximumf %71, %72 : vector<256x256xf32>
    %74 = vector.shape_cast %73 : vector<256x256xf32> to vector<8x2x16x256xf32>
    %75 = vector.extract_strided_slice %74 {offsets = [0, 0, 0, 0], sizes = [8, 1, 16, 256], strides = [1, 1, 1, 1]} : vector<8x2x16x256xf32> to vector<8x1x16x256xf32>
    %76 = vector.shape_cast %75 : vector<8x1x16x256xf32> to vector<8x16x256xf32>
    %77 = vector.extract_strided_slice %74 {offsets = [0, 1, 0, 0], sizes = [8, 1, 16, 256], strides = [1, 1, 1, 1]} : vector<8x2x16x256xf32> to vector<8x1x16x256xf32>
    %78 = vector.shape_cast %77 : vector<8x1x16x256xf32> to vector<8x16x256xf32>
    %79 = arith.maximumf %76, %78 : vector<8x16x256xf32>
    %80 = arith.truncf %79 : vector<8x16x256xf32> to vector<8x16x256xbf16>
    %81 = vector.extract_strided_slice %80 {offsets = [0, 0, 0], sizes = [1, 16, 256], strides = [1, 1, 1]} : vector<8x16x256xbf16> to vector<1x16x256xbf16>
    %82 = vector.shape_cast %81 : vector<1x16x256xbf16> to vector<16x256xbf16>
    %c0_60 = arith.constant 0 : index
    %c0_61 = arith.constant 0 : index
    %c0_62 = arith.constant 0 : index
    %83 = vector.load %arg8[%c0_60, %c0_61, %c0_62] : memref<8x256x128xbf16, #tpu.memory_space<vmem>>, vector<1x256x128xbf16>
    %84 = vector.shape_cast %83 : vector<1x256x128xbf16> to vector<256x128xbf16>
    %cst_63 = arith.constant dense<0.000000e+00> : vector<16x128xf32>
    %85 = tpu.matmul %82, %84, %cst_63 {dimension_numbers = #tpu.dot_dimension_numbers<[1], [0], [0], [1], [0, 0, 1, 1], [], []>} : vector<16x256xbf16>, vector<256x128xbf16>, vector<16x128xf32> -> vector<16x128xf32>
    %86 = vector.extract_strided_slice %80 {offsets = [1, 0, 0], sizes = [1, 16, 256], strides = [1, 1, 1]} : vector<8x16x256xbf16> to vector<1x16x256xbf16>
    %87 = vector.shape_cast %86 : vector<1x16x256xbf16> to vector<16x256xbf16>
    %c1_64 = arith.constant 1 : index
    %c0_65 = arith.constant 0 : index
    %c0_66 = arith.constant 0 : index
    %88 = vector.load %arg8[%c1_64, %c0_65, %c0_66] : memref<8x256x128xbf16, #tpu.memory_space<vmem>>, vector<1x256x128xbf16>
    %89 = vector.shape_cast %88 : vector<1x256x128xbf16> to vector<256x128xbf16>
    %cst_67 = arith.constant dense<0.000000e+00> : vector<16x128xf32>
    %90 = tpu.matmul %87, %89, %cst_67 {dimension_numbers = #tpu.dot_dimension_numbers<[1], [0], [0], [1], [0, 0, 1, 1], [], []>} : vector<16x256xbf16>, vector<256x128xbf16>, vector<16x128xf32> -> vector<16x128xf32>
    %91 = arith.addf %85, %90 : vector<16x128xf32>
    %92 = vector.extract_strided_slice %80 {offsets = [2, 0, 0], sizes = [1, 16, 256], strides = [1, 1, 1]} : vector<8x16x256xbf16> to vector<1x16x256xbf16>
    %93 = vector.shape_cast %92 : vector<1x16x256xbf16> to vector<16x256xbf16>
    %c2_68 = arith.constant 2 : index
    %c0_69 = arith.constant 0 : index
    %c0_70 = arith.constant 0 : index
    %94 = vector.load %arg8[%c2_68, %c0_69, %c0_70] : memref<8x256x128xbf16, #tpu.memory_space<vmem>>, vector<1x256x128xbf16>
    %95 = vector.shape_cast %94 : vector<1x256x128xbf16> to vector<256x128xbf16>
    %cst_71 = arith.constant dense<0.000000e+00> : vector<16x128xf32>
    %96 = tpu.matmul %93, %95, %cst_71 {dimension_numbers = #tpu.dot_dimension_numbers<[1], [0], [0], [1], [0, 0, 1, 1], [], []>} : vector<16x256xbf16>, vector<256x128xbf16>, vector<16x128xf32> -> vector<16x128xf32>
    %97 = arith.addf %91, %96 : vector<16x128xf32>
    %98 = vector.extract_strided_slice %80 {offsets = [3, 0, 0], sizes = [1, 16, 256], strides = [1, 1, 1]} : vector<8x16x256xbf16> to vector<1x16x256xbf16>
    %99 = vector.shape_cast %98 : vector<1x16x256xbf16> to vector<16x256xbf16>
    %c3 = arith.constant 3 : index
    %c0_72 = arith.constant 0 : index
    %c0_73 = arith.constant 0 : index
    %100 = vector.load %arg8[%c3, %c0_72, %c0_73] : memref<8x256x128xbf16, #tpu.memory_space<vmem>>, vector<1x256x128xbf16>
    %101 = vector.shape_cast %100 : vector<1x256x128xbf16> to vector<256x128xbf16>
    %cst_74 = arith.constant dense<0.000000e+00> : vector<16x128xf32>
    %102 = tpu.matmul %99, %101, %cst_74 {dimension_numbers = #tpu.dot_dimension_numbers<[1], [0], [0], [1], [0, 0, 1, 1], [], []>} : vector<16x256xbf16>, vector<256x128xbf16>, vector<16x128xf32> -> vector<16x128xf32>
    %103 = arith.addf %97, %102 : vector<16x128xf32>
    %104 = vector.extract_strided_slice %80 {offsets = [4, 0, 0], sizes = [1, 16, 256], strides = [1, 1, 1]} : vector<8x16x256xbf16> to vector<1x16x256xbf16>
    %105 = vector.shape_cast %104 : vector<1x16x256xbf16> to vector<16x256xbf16>
    %c4 = arith.constant 4 : index
    %c0_75 = arith.constant 0 : index
    %c0_76 = arith.constant 0 : index
    %106 = vector.load %arg8[%c4, %c0_75, %c0_76] : memref<8x256x128xbf16, #tpu.memory_space<vmem>>, vector<1x256x128xbf16>
    %107 = vector.shape_cast %106 : vector<1x256x128xbf16> to vector<256x128xbf16>
    %cst_77 = arith.constant dense<0.000000e+00> : vector<16x128xf32>
    %108 = tpu.matmul %105, %107, %cst_77 {dimension_numbers = #tpu.dot_dimension_numbers<[1], [0], [0], [1], [0, 0, 1, 1], [], []>} : vector<16x256xbf16>, vector<256x128xbf16>, vector<16x128xf32> -> vector<16x128xf32>
    %109 = arith.addf %103, %108 : vector<16x128xf32>
    %110 = vector.extract_strided_slice %80 {offsets = [5, 0, 0], sizes = [1, 16, 256], strides = [1, 1, 1]} : vector<8x16x256xbf16> to vector<1x16x256xbf16>
    %111 = vector.shape_cast %110 : vector<1x16x256xbf16> to vector<16x256xbf16>
    %c5 = arith.constant 5 : index
    %c0_78 = arith.constant 0 : index
    %c0_79 = arith.constant 0 : index
    %112 = vector.load %arg8[%c5, %c0_78, %c0_79] : memref<8x256x128xbf16, #tpu.memory_space<vmem>>, vector<1x256x128xbf16>
    %113 = vector.shape_cast %112 : vector<1x256x128xbf16> to vector<256x128xbf16>
    %cst_80 = arith.constant dense<0.000000e+00> : vector<16x128xf32>
    %114 = tpu.matmul %111, %113, %cst_80 {dimension_numbers = #tpu.dot_dimension_numbers<[1], [0], [0], [1], [0, 0, 1, 1], [], []>} : vector<16x256xbf16>, vector<256x128xbf16>, vector<16x128xf32> -> vector<16x128xf32>
    %115 = arith.addf %109, %114 : vector<16x128xf32>
    %116 = vector.extract_strided_slice %80 {offsets = [6, 0, 0], sizes = [1, 16, 256], strides = [1, 1, 1]} : vector<8x16x256xbf16> to vector<1x16x256xbf16>
    %117 = vector.shape_cast %116 : vector<1x16x256xbf16> to vector<16x256xbf16>
    %c6 = arith.constant 6 : index
    %c0_81 = arith.constant 0 : index
    %c0_82 = arith.constant 0 : index
    %118 = vector.load %arg8[%c6, %c0_81, %c0_82] : memref<8x256x128xbf16, #tpu.memory_space<vmem>>, vector<1x256x128xbf16>
    %119 = vector.shape_cast %118 : vector<1x256x128xbf16> to vector<256x128xbf16>
    %cst_83 = arith.constant dense<0.000000e+00> : vector<16x128xf32>
    %120 = tpu.matmul %117, %119, %cst_83 {dimension_numbers = #tpu.dot_dimension_numbers<[1], [0], [0], [1], [0, 0, 1, 1], [], []>} : vector<16x256xbf16>, vector<256x128xbf16>, vector<16x128xf32> -> vector<16x128xf32>
    %121 = arith.addf %115, %120 : vector<16x128xf32>
    %122 = vector.extract_strided_slice %80 {offsets = [7, 0, 0], sizes = [1, 16, 256], strides = [1, 1, 1]} : vector<8x16x256xbf16> to vector<1x16x256xbf16>
    %123 = vector.shape_cast %122 : vector<1x16x256xbf16> to vector<16x256xbf16>
    %c7 = arith.constant 7 : index
    %c0_84 = arith.constant 0 : index
    %c0_85 = arith.constant 0 : index
    %124 = vector.load %arg8[%c7, %c0_84, %c0_85] : memref<8x256x128xbf16, #tpu.memory_space<vmem>>, vector<1x256x128xbf16>
    %125 = vector.shape_cast %124 : vector<1x256x128xbf16> to vector<256x128xbf16>
    %cst_86 = arith.constant dense<0.000000e+00> : vector<16x128xf32>
    %126 = tpu.matmul %123, %125, %cst_86 {dimension_numbers = #tpu.dot_dimension_numbers<[1], [0], [0], [1], [0, 0, 1, 1], [], []>} : vector<16x256xbf16>, vector<256x128xbf16>, vector<16x128xf32> -> vector<16x128xf32>
    %127 = arith.addf %121, %126 : vector<16x128xf32>
    %c0_87 = arith.constant 0 : index
    %c0_88 = arith.constant 0 : index
    %128 = vector.load %arg9[%c0_87, %c0_88] : memref<1x128xf32, #tpu.memory_space<vmem>>, vector<1x128xf32>
    %129 = vector.broadcast %128 : vector<1x128xf32> to vector<16x128xf32>
    %130 = arith.addf %127, %129 : vector<16x128xf32>
    %c0_89 = arith.constant 0 : index
    %c0_90 = arith.constant 0 : index
    %131 = vector.load %arg10[%c0_89, %c0_90] : memref<16x128xf32, #tpu.memory_space<vmem>>, vector<16x128xf32>
    tpu.vector_store %arg10[%c0_89, %c0_90], %130 {strides = array<i32>} : memref<16x128xf32, #tpu.memory_space<vmem>>, vector<16x128xf32>,
    return
  }
  func.func @transform_0(%arg0: i32) -> (i32, i32, i32, i32) {
    %c0_i32 = arith.constant 0 : i32
    %c0_i32_0 = arith.constant 0 : i32
    %c0_i32_1 = arith.constant 0 : i32
    %c0_i32_2 = arith.constant 0 : i32
    return %c0_i32, %c0_i32_0, %arg0, %c0_i32_1 : i32, i32, i32, i32
  }
  func.func @transform_1(%arg0: i32) -> (i32, i32, i32) {
    %c0_i32 = arith.constant 0 : i32
    %c0_i32_0 = arith.constant 0 : i32
    %c0_i32_1 = arith.constant 0 : i32
    %c0_i32_2 = arith.constant 0 : i32
    return %c0_i32, %c0_i32_0, %c0_i32_1 : i32, i32, i32
  }
  func.func @transform_2(%arg0: i32) -> (i32, i32) {
    %c0_i32 = arith.constant 0 : i32
    %c0_i32_0 = arith.constant 0 : i32
    %c0_i32_1 = arith.constant 0 : i32
    return %c0_i32, %c0_i32_0 : i32, i32
  }
  func.func @transform_3(%arg0: i32) -> (i32, i32) {
    %c0_i32 = arith.constant 0 : i32
    %c0_i32_0 = arith.constant 0 : i32
    %c0_i32_1 = arith.constant 0 : i32
    return %c0_i32, %c0_i32_0 : i32, i32
  }
  func.func @transform_4(%arg0: i32) -> (i32, i32, i32) {
    %c0_i32 = arith.constant 0 : i32
    %c0_i32_0 = arith.constant 0 : i32
    %c0_i32_1 = arith.constant 0 : i32
    %c0_i32_2 = arith.constant 0 : i32
    return %c0_i32, %c0_i32_0, %c0_i32_1 : i32, i32, i32
  }
  func.func @transform_5(%arg0: i32) -> (i32, i32) {
    %c0_i32 = arith.constant 0 : i32
    %c0_i32_0 = arith.constant 0 : i32
    %c0_i32_1 = arith.constant 0 : i32
    return %c0_i32, %c0_i32_0 : i32, i32
  }
  func.func @transform_6(%arg0: i32) -> (i32, i32) {
    %c0_i32 = arith.constant 0 : i32
    %c0_i32_0 = arith.constant 0 : i32
    %c0_i32_1 = arith.constant 0 : i32
    return %c0_i32, %c0_i32_0 : i32, i32
  }
  func.func @transform_7(%arg0: i32) -> (i32, i32, i32) {
    %c0_i32 = arith.constant 0 : i32
    %c0_i32_0 = arith.constant 0 : i32
    %c0_i32_1 = arith.constant 0 : i32
    %c0_i32_2 = arith.constant 0 : i32
    return %c0_i32, %c0_i32_0, %c0_i32_1 : i32, i32, i32
  }
  func.func @transform_8(%arg0: i32) -> (i32, i32) {
    %c0_i32 = arith.constant 0 : i32
    %c0_i32_0 = arith.constant 0 : i32
    %c0_i32_1 = arith.constant 0 : i32
    return %c0_i32, %c0_i32_0 : i32, i32
  }
  func.func @transform_9(%arg0: i32) -> (i32, i32) {
    %c0_i32 = arith.constant 0 : i32
    %c0_i32_0 = arith.constant 0 : i32
    return %arg0, %c0_i32 : i32, i32
  }
}

</mosaic_0001>

<llo_original>
// kernel: tpu_custom_call.1
$region0: #{tpu_custom_call.1}
  #allocation0 [shape = 'u32[]', space=smem, size = 0x4, offset = 0x4, fixed_abs, tag = 'smem constant byte address 0x4 - core index']
  #allocation1 [shape = 'u32[144,128]{1,0:T(1,128)}', space=vmem, size = 0x12000, scoped, tag = 'internal scratch']
  #allocation2 [shape = 'bf16[18,16,256]{2,1,0:T(8,128)(2,1)}', space=vmem, size = 0x24000, scoped, tag = 'scratch operand']
  #allocation15 [shape = 's32[]', space=sflag, size = 0x4, offset = 0, fixed_abs, tag = 'sflag constant byte address 0x0 - dummy sync flag']
  %s0 = inlined_call_operand.hbm [shape: bf16[3,32,32,96], index: 0, kind: input, shape index: {}]
  %s1 = inlined_call_operand.hbm [shape: bf16[3,96,512], index: 1, kind: input, shape index: {}]
  %s2 = inlined_call_operand.hbm [shape: f32[1,512], index: 2, kind: input, shape index: {}]
  %s3 = inlined_call_operand.vmem [shape: f32[1,512], index: 3, kind: input, shape index: {}]
  %s4 = inlined_call_operand.hbm [shape: bf16[3,256,512], index: 4, kind: input, shape index: {}]
  %s5 = inlined_call_operand.vmem [shape: f32[1,512], index: 5, kind: input, shape index: {}]
  %s6 = inlined_call_operand.hbm [shape: f32[1,512], index: 6, kind: input, shape index: {}]
  %s7 = inlined_call_operand.hbm [shape: bf16[8,256,128], index: 7, kind: input, shape index: {}]
  %s8 = inlined_call_operand.vmem [shape: f32[1,128], index: 8, kind: input, shape index: {}]
  %s9 = inlined_call_operand.hbm [shape: f32[32,128], index: 9, kind: output, shape index: {}]
  %s10 = sld [smem:[#allocation0]]
  $region93: #{tpu_custom_call.1} parent=0
    _
  %s12 = ssub.s32 1, %s10
  %s13 = scalar_select 0, %s12, %s10
  $region1: #{tpu_custom_call.1} parent=0
    #allocation3 [shape = 'u8[786432]{0}', space=vmem, size = 0xc0000, scoped, tag = 'input window, operand 0']
    #allocation4 [shape = 's32[2]{0}', space=sflag, size = 0x8, scoped, tag = 'scoped memory for tpu_custom_call.1']
    #allocation5 [shape = 's32[2]{0}', space=sflag, size = 0x8, scoped, tag = 'scoped memory for tpu_custom_call.1']
    #allocation6 [shape = 'u8[294912]{0}', space=vmem, size = 0x48000, scoped, tag = 'input window, operand 1, single buffered']
    #allocation7 [shape = 's32[1]{0}', space=sflag, size = 0x4, scoped, tag = 'scoped memory for tpu_custom_call.1']
    #allocation8 [shape = 'u8[2048]{0}', space=vmem, size = 0x800, scoped, tag = 'input window, operand 2, single buffered']
    #allocation9 [shape = 'u8[786432]{0}', space=vmem, size = 0xc0000, scoped, tag = 'input window, operand 4, single buffered']
    #allocation10 [shape = 's32[1]{0}', space=sflag, size = 0x4, scoped, tag = 'scoped memory for tpu_custom_call.1']
    #allocation11 [shape = 'u8[2048]{0}', space=vmem, size = 0x800, scoped, tag = 'input window, operand 6, single buffered']
    #allocation12 [shape = 'u8[524288]{0}', space=vmem, size = 0x80000, scoped, tag = 'input window, operand 7, single buffered']
    #allocation13 [shape = 's32[1]{0}', space=sflag, size = 0x4, scoped, tag = 'scoped memory for tpu_custom_call.1']
    #allocation14 [shape = 'u8[16384]{0}', space=vmem, size = 0x4000, scoped, tag = 'output window, operand 0']
    %14 = vsyncpa [#allocation4], 0
    %s15 = scalar_lea.sflag [#allocation4], 1
    %16 = vsyncpa %s15, 0
    %17 = vsyncpa [#allocation7], 0
    %18 = vsyncpa [#allocation10], 0
    %19 = vsyncpa [#allocation13], 0
    %20 = vsyncpa [#allocation5], 0
    %s21 = scalar_lea.sflag [#allocation5], 1
    %22 = vsyncpa %s21, 0
    loop: start=0, step=1, limit=4
    $region2: #{tpu_custom_call.1} parent=1 // loop_pre_header
      _
    $region3: #{tpu_custom_call.1} parent=1 // loop_header
      %s24 = sphi 0, %s28
      %p25 = scmp.ge.s32.totalorder %s24, 4
      %s34 = sphi 0, %s36
      %s37 = sphi 0, %s34
      %s38 = sphi 0, %s37
      %s54 = sphi 0, %s38
      %s58 = sphi 0, %s58
      %s60 = sphi 0, %s58
      %s61 = sphi 0, %s60
      %s75 = sphi 0, %s61
      %s79 = sphi 0, %s79
      %s81 = sphi 0, %s79
      %s82 = sphi 0, %s81
      %s96 = sphi 0, %s82
      %s100 = sphi 0, %s100
      %s102 = sphi 0, %s100
      %s103 = sphi 0, %s102
      %s117 = sphi 0, %s103
      %s121 = sphi 0, %s121
      %s123 = sphi 0, %s121
      %s124 = sphi 0, %s123
      %s138 = sphi 0, %s124
      %s142 = sphi 0, %s142
      %s144 = sphi 0, %s142
      %s145 = sphi 0, %s144
      %s159 = sphi 0, %s145
      %s163 = sphi 0, %s163
      %s165 = sphi 0, %s163
      %s166 = sphi 0, %s165
      %s180 = sphi 0, %s166
      %s184 = sphi 0, %s184
      %s186 = sphi 0, %s184
      %s187 = sphi 0, %s186
      %s201 = sphi 0, %s187
      %s205 = sphi 0, %s205
      %s207 = sphi 0, %s205
      %s208 = sphi 0, %s207
      %s222 = sphi 0, %s208
      %s228 = sphi 0, %s230
      %s231 = sphi 0, %s228
      %s232 = sphi 0, %s231
      %s248 = sphi 0, %s232
    $region4: #{tpu_custom_call.1} parent=1 // loop_header_branch
      %27 = sbr.rel (%p25) target = $region8
    $region5: #{tpu_custom_call.1} parent=1 // loop_body
      %s29 = ssub.s32 %s24, 1
      %s30 = ssub.s32 %s24, 2
      %s31 = sadd.s32 %s24, 1
      %s32 = ssub.s32 %s24, %s31
      %p33 = scmp.eq.s32.totalorder %s32, 0
      %s35 = sadd.s32 %s34, 1
      %s36 = scalar_select %p33, %s34, %s35
      %p39 = pneg %p33
      %p40 = scmp.eq.s32.totalorder %s24, 1
      %p41 = por %p39, %p40
      %p42 = scmp.ne.s32.totalorder %s34, %s37
      %p43 = scmp.eq.s32.totalorder %s24, 0
      %p44 = por %p42, %p43
      %p45 = scmp.ne.s32.totalorder %s34, %s37
      %p46 = scmp.eq.s32.totalorder %s29, 1
      %p47 = por %p45, %p46
      %p48 = scmp.ne.s32.totalorder %s37, %s38
      %p49 = scmp.eq.s32.totalorder %s29, 0
      %p50 = por %p48, %p49
      %p51 = scmp.ne.s32.totalorder %s37, %s38
      %p52 = scmp.eq.s32.totalorder %s30, 1
      %p53 = por %p51, %p52
      %p55 = scmp.ne.s32.totalorder %s38, %s54
      %p56 = scmp.eq.s32.totalorder %s30, 0
      %p57 = por %p55, %p56
      %s59 = sadd.s32 %s58, 1
      %p62 = scmp.eq.s32.totalorder %s24, 1
      %p63 = scmp.ne.s32.totalorder %s58, %s60
      %p64 = scmp.eq.s32.totalorder %s24, 0
      %p65 = por %p63, %p64
      %p66 = scmp.ne.s32.totalorder %s58, %s60
      %p67 = scmp.eq.s32.totalorder %s29, 1
      %p68 = por %p66, %p67
      %p69 = scmp.ne.s32.totalorder %s60, %s61
      %p70 = scmp.eq.s32.totalorder %s29, 0
      %p71 = por %p69, %p70
      %p72 = scmp.ne.s32.totalorder %s60, %s61
      %p73 = scmp.eq.s32.totalorder %s30, 1
      %p74 = por %p72, %p73
      %p76 = scmp.ne.s32.totalorder %s61, %s75
      %p77 = scmp.eq.s32.totalorder %s30, 0
      %p78 = por %p76, %p77
      %s80 = sadd.s32 %s79, 1
      %p83 = scmp.eq.s32.totalorder %s24, 1
      %p84 = scmp.ne.s32.totalorder %s79, %s81
      %p85 = scmp.eq.s32.totalorder %s24, 0
      %p86 = por %p84, %p85
      %p87 = scmp.ne.s32.totalorder %s79, %s81
      %p88 = scmp.eq.s32.totalorder %s29, 1
      %p89 = por %p87, %p88
      %p90 = scmp.ne.s32.totalorder %s81, %s82
      %p91 = scmp.eq.s32.totalorder %s29, 0
      %p92 = por %p90, %p91
      %p93 = scmp.ne.s32.totalorder %s81, %s82
      %p94 = scmp.eq.s32.totalorder %s30, 1
      %p95 = por %p93, %p94
      %p97 = scmp.ne.s32.totalorder %s82, %s96
      %p98 = scmp.eq.s32.totalorder %s30, 0
      %p99 = por %p97, %p98
      %s101 = sadd.s32 %s100, 1
      %p104 = scmp.eq.s32.totalorder %s24, 1
      %p105 = scmp.ne.s32.totalorder %s100, %s102
      %p106 = scmp.eq.s32.totalorder %s24, 0
      %p107 = por %p105, %p106
      %p108 = scmp.ne.s32.totalorder %s100, %s102
      %p109 = scmp.eq.s32.totalorder %s29, 1
      %p110 = por %p108, %p109
      %p111 = scmp.ne.s32.totalorder %s102, %s103
      %p112 = scmp.eq.s32.totalorder %s29, 0
      %p113 = por %p111, %p112
      %p114 = scmp.ne.s32.totalorder %s102, %s103
      %p115 = scmp.eq.s32.totalorder %s30, 1
      %p116 = por %p114, %p115
      %p118 = scmp.ne.s32.totalorder %s103, %s117
      %p119 = scmp.eq.s32.totalorder %s30, 0
      %p120 = por %p118, %p119
      %s122 = sadd.s32 %s121, 1
      %p125 = scmp.eq.s32.totalorder %s24, 1
      %p126 = scmp.ne.s32.totalorder %s121, %s123
      %p127 = scmp.eq.s32.totalorder %s24, 0
      %p128 = por %p126, %p127
      %p129 = scmp.ne.s32.totalorder %s121, %s123
      %p130 = scmp.eq.s32.totalorder %s29, 1
      %p131 = por %p129, %p130
      %p132 = scmp.ne.s32.totalorder %s123, %s124
      %p133 = scmp.eq.s32.totalorder %s29, 0
      %p134 = por %p132, %p133
      %p135 = scmp.ne.s32.totalorder %s123, %s124
      %p136 = scmp.eq.s32.totalorder %s30, 1
      %p137 = por %p135, %p136
      %p139 = scmp.ne.s32.totalorder %s124, %s138
      %p140 = scmp.eq.s32.totalorder %s30, 0
      %p141 = por %p139, %p140
      %s143 = sadd.s32 %s142, 1
      %p146 = scmp.eq.s32.totalorder %s24, 1
      %p147 = scmp.ne.s32.totalorder %s142, %s144
      %p148 = scmp.eq.s32.totalorder %s24, 0
      %p149 = por %p147, %p148
      %p150 = scmp.ne.s32.totalorder %s142, %s144
      %p151 = scmp.eq.s32.totalorder %s29, 1
      %p152 = por %p150, %p151
      %p153 = scmp.ne.s32.totalorder %s144, %s145
      %p154 = scmp.eq.s32.totalorder %s29, 0
      %p155 = por %p153, %p154
      %p156 = scmp.ne.s32.totalorder %s144, %s145
      %p157 = scmp.eq.s32.totalorder %s30, 1
      %p158 = por %p156, %p157
      %p160 = scmp.ne.s32.totalorder %s145, %s159
      %p161 = scmp.eq.s32.totalorder %s30, 0
      %p162 = por %p160, %p161
      %s164 = sadd.s32 %s163, 1
      %p167 = scmp.eq.s32.totalorder %s24, 1
      %p168 = scmp.ne.s32.totalorder %s163, %s165
      %p169 = scmp.eq.s32.totalorder %s24, 0
      %p170 = por %p168, %p169
      %p171 = scmp.ne.s32.totalorder %s163, %s165
      %p172 = scmp.eq.s32.totalorder %s29, 1
      %p173 = por %p171, %p172
      %p174 = scmp.ne.s32.totalorder %s165, %s166
      %p175 = scmp.eq.s32.totalorder %s29, 0
      %p176 = por %p174, %p175
      %p177 = scmp.ne.s32.totalorder %s165, %s166
      %p178 = scmp.eq.s32.totalorder %s30, 1
      %p179 = por %p177, %p178
      %p181 = scmp.ne.s32.totalorder %s166, %s180
      %p182 = scmp.eq.s32.totalorder %s30, 0
      %p183 = por %p181, %p182
      %s185 = sadd.s32 %s184, 1
      %p188 = scmp.eq.s32.totalorder %s24, 1
      %p189 = scmp.ne.s32.totalorder %s184, %s186
      %p190 = scmp.eq.s32.totalorder %s24, 0
      %p191 = por %p189, %p190
      %p192 = scmp.ne.s32.totalorder %s184, %s186
      %p193 = scmp.eq.s32.totalorder %s29, 1
      %p194 = por %p192, %p193
      %p195 = scmp.ne.s32.totalorder %s186, %s187
      %p196 = scmp.eq.s32.totalorder %s29, 0
      %p197 = por %p195, %p196
      %p198 = scmp.ne.s32.totalorder %s186, %s187
      %p199 = scmp.eq.s32.totalorder %s30, 1
      %p200 = por %p198, %p199
      %p202 = scmp.ne.s32.totalorder %s187, %s201
      %p203 = scmp.eq.s32.totalorder %s30, 0
      %p204 = por %p202, %p203
      %s206 = sadd.s32 %s205, 1
      %p209 = scmp.eq.s32.totalorder %s24, 1
      %p210 = scmp.ne.s32.totalorder %s205, %s207
      %p211 = scmp.eq.s32.totalorder %s24, 0
      %p212 = por %p210, %p211
      %p213 = scmp.ne.s32.totalorder %s205, %s207
      %p214 = scmp.eq.s32.totalorder %s29, 1
      %p215 = por %p213, %p214
      %p216 = scmp.ne.s32.totalorder %s207, %s208
      %p217 = scmp.eq.s32.totalorder %s29, 0
      %p218 = por %p216, %p217
      %p219 = scmp.ne.s32.totalorder %s207, %s208
      %p220 = scmp.eq.s32.totalorder %s30, 1
      %p221 = por %p219, %p220
      %p223 = scmp.ne.s32.totalorder %s208, %s222
      %p224 = scmp.eq.s32.totalorder %s30, 0
      %p225 = por %p223, %p224
      %s226 = ssub.s32 %s24, %s31
      %p227 = scmp.eq.s32.totalorder %s226, 0
      %s229 = sadd.s32 %s228, 1
      %s230 = scalar_select %p227, %s228, %s229
      %p233 = pneg %p227
      %p234 = scmp.eq.s32.totalorder %s24, 1
      %p235 = por %p233, %p234
      %p236 = scmp.ne.s32.totalorder %s228, %s231
      %p237 = scmp.eq.s32.totalorder %s24, 0
      %p238 = por %p236, %p237
      %p239 = scmp.ne.s32.totalorder %s228, %s231
      %p240 = scmp.eq.s32.totalorder %s29, 1
      %p241 = por %p239, %p240
      %p242 = scmp.ne.s32.totalorder %s231, %s232
      %p243 = scmp.eq.s32.totalorder %s29, 0
      %p244 = por %p242, %p243
      %p245 = scmp.ne.s32.totalorder %s231, %s232
      %p246 = scmp.eq.s32.totalorder %s30, 1
      %p247 = por %p245, %p246
      %p249 = scmp.ne.s32.totalorder %s232, %s248
      %p250 = scmp.eq.s32.totalorder %s30, 0
      %p251 = por %p249, %p250
      %p252 = scmp.le.s32.totalorder 1, %s24
      %p253 = scmp.lt.s32.totalorder %s24, 3
      %p254 = pnand %p252, %p253
      %p255 = pneg %p254
      // Predicated region
      $region9: #{tpu_custom_call.1} parent=5 // pred_check
        _
      $region10: #{tpu_custom_call.1} parent=5 // pred_check_branch
        %257 = sbr.rel (%p254) target = $region12
      $region11: #{tpu_custom_call.1} parent=5 // pred_region
        %s258 = ssub.s32 %s24, 1
        // Predicated region
        $region13: #{tpu_custom_call.1} parent=11 // pred_check
          %p259 = pneg %p71
        $region14: #{tpu_custom_call.1} parent=11 // pred_check_branch
          %261 = sbr.rel (%p259) target = $region16
        $region15: #{tpu_custom_call.1} parent=11 // pred_region
          %s263 = ssub.s32 9216, 9216
          %264 = vsyncadd [#allocation7], %s263
          %s265 = sshll.u32 [#allocation6], 4
          %s266 = int_to_ptr.vmem [resolvable:$true] %s265
          %271 = dma.hbm_to_vmem [thread:$0]  %s1, 9216, %s266, [#allocation7], 256, 256, 16
        $region16: #{tpu_custom_call.1} parent=11 // pred_fallthru
          _
        // Predicated region
        $region17: #{tpu_custom_call.1} parent=11 // pred_check
          %p272 = pneg %p92
        $region18: #{tpu_custom_call.1} parent=11 // pred_check_branch
          %274 = sbr.rel (%p272) target = $region20
        $region19: #{tpu_custom_call.1} parent=11 // pred_region
          %s276 = ssub.s32 64, 64
          %277 = vsyncadd [#allocation7], %s276
          %s279 = sshll.u32 [#allocation8], 4
          %s280 = int_to_ptr.vmem [resolvable:$true] %s279
          %282 = dma.hbm_to_vmem [thread:$0]  %s2, 64, %s280, [#allocation7]
        $region20: #{tpu_custom_call.1} parent=11 // pred_fallthru
          _
        // Predicated region
        $region21: #{tpu_custom_call.1} parent=11 // pred_check
          %p283 = pneg %p113
        $region22: #{tpu_custom_call.1} parent=11 // pred_check_branch
          %285 = sbr.rel (%p283) target = $region24
        $region23: #{tpu_custom_call.1} parent=11 // pred_region
          _
        $region24: #{tpu_custom_call.1} parent=11 // pred_fallthru
          _
        // Predicated region
        $region25: #{tpu_custom_call.1} parent=11 // pred_check
          %p286 = pneg %p134
        $region26: #{tpu_custom_call.1} parent=11 // pred_check_branch
          %288 = sbr.rel (%p286) target = $region28
        $region27: #{tpu_custom_call.1} parent=11 // pred_region
          %s290 = ssub.s32 24576, 24576
          %291 = vsyncadd [#allocation10], %s290
          %s292 = sshll.u32 [#allocation9], 4
          %s293 = int_to_ptr.vmem [resolvable:$true] %s292
          %298 = dma.hbm_to_vmem [thread:$0]  %s4, 24576, %s293, [#allocation10], 256, 256, 16
        $region28: #{tpu_custom_call.1} parent=11 // pred_fallthru
          _
        // Predicated region
        $region29: #{tpu_custom_call.1} parent=11 // pred_check
          %p299 = pneg %p155
        $region30: #{tpu_custom_call.1} parent=11 // pred_check_branch
          %301 = sbr.rel (%p299) target = $region32
        $region31: #{tpu_custom_call.1} parent=11 // pred_region
          _
        $region32: #{tpu_custom_call.1} parent=11 // pred_fallthru
          _
        // Predicated region
        $region33: #{tpu_custom_call.1} parent=11 // pred_check
          %p302 = pneg %p176
        $region34: #{tpu_custom_call.1} parent=11 // pred_check_branch
          %304 = sbr.rel (%p302) target = $region36
        $region35: #{tpu_custom_call.1} parent=11 // pred_region
          %s306 = ssub.s32 64, 64
          %307 = vsyncadd [#allocation10], %s306
          %s309 = sshll.u32 [#allocation11], 4
          %s310 = int_to_ptr.vmem [resolvable:$true] %s309
          %312 = dma.hbm_to_vmem [thread:$0]  %s6, 64, %s310, [#allocation10]
        $region36: #{tpu_custom_call.1} parent=11 // pred_fallthru
          _
        // Predicated region
        $region37: #{tpu_custom_call.1} parent=11 // pred_check
          %p313 = pneg %p197
        $region38: #{tpu_custom_call.1} parent=11 // pred_check_branch
          %315 = sbr.rel (%p313) target = $region40
        $region39: #{tpu_custom_call.1} parent=11 // pred_region
          %s317 = ssub.s32 16384, 16384
          %318 = vsyncadd [#allocation13], %s317
          %s319 = sshll.u32 [#allocation12], 4
          %s320 = int_to_ptr.vmem [resolvable:$true] %s319
          %325 = dma.hbm_to_vmem [thread:$0]  %s7, 16384, %s320, [#allocation13], 64, 64, 4
        $region40: #{tpu_custom_call.1} parent=11 // pred_fallthru
          _
        // Predicated region
        $region41: #{tpu_custom_call.1} parent=11 // pred_check
          %p326 = pneg %p218
        $region42: #{tpu_custom_call.1} parent=11 // pred_check_branch
          %328 = sbr.rel (%p326) target = $region44
        $region43: #{tpu_custom_call.1} parent=11 // pred_region
          _
        $region44: #{tpu_custom_call.1} parent=11 // pred_fallthru
          _
      $region12: #{tpu_custom_call.1} parent=5 // pred_fallthru
        _
      %p329 = scmp.lt.s32.totalorder %s24, 2
      // Predicated region
      $region45: #{tpu_custom_call.1} parent=5 // pred_check
        %p330 = pneg %p329
      $region46: #{tpu_custom_call.1} parent=5 // pred_check_branch
        %332 = sbr.rel (%p330) target = $region48
      $region47: #{tpu_custom_call.1} parent=5 // pred_region
        // Predicated region
        $region49: #{tpu_custom_call.1} parent=47 // pred_check
          %p333 = pneg %p44
        $region50: #{tpu_custom_call.1} parent=47 // pred_check_branch
          %335 = sbr.rel (%p333) target = $region52
        $region51: #{tpu_custom_call.1} parent=47 // pred_region
          #allocation16 [shape = 'u32[6]{0}', space=smem, size = 0x18, scoped, tag = 'DMA stride descriptor']
          %s336 = sand.u32 %s34, 1
          %s337 = scalar_lea.sflag [#allocation4], %s336
          %s338 = sand.u32 %s34, 1
          %s339 = smul.addr %s338, 768
          %s340 = scalar_lea.vmem [#allocation3], %s339
          %s341 = smul.u32 2, %s24
          %s343 = ssub.s32 12288, 12288
          %344 = vsyncadd %s337, %s343
          %s345 = smul.addr %s341, 64
          %s346 = scalar_lea.hbm %s0, %s345
          %s348 = sshll.u32 1, 14
          %s349 = sxor.u32 4294967295, %s348
          %s351 = sld [smem:[#allocation0]]
          %s352 = sadd.s32 2, %s351
          %s354 = sshll.u32 7, 26
          %s355 = sxor.u32 4294967295, %s354
          %s356 = sand.u32 0, %s355
          %s357 = sshll.u32 %s352, 26
          %s358 = sor.u32 %s356, %s357
          %s359 = sshll.u32 %s340, 4
          %s360 = int_to_ptr.vmem [resolvable:$true] %s359
          %366 = sst [smem:[#allocation16]] 256
          %s367 = scalar_lea.smem [#allocation16], 1
          %368 = sst [smem:[%s367]] 128
          %s369 = scalar_lea.smem [#allocation16], 2
          %370 = sst [smem:[%s369]] 2
          %s371 = scalar_lea.smem [#allocation16], 3
          %372 = sst [smem:[%s371]] 64
          %s373 = scalar_lea.smem [#allocation16], 4
          %374 = sst [smem:[%s373]] 64
          %s375 = scalar_lea.smem [#allocation16], 5
          %376 = sst [smem:[%s375]] 4
          %378 = dma.general %s346, 12288, %s360, %s337, 131072, [#allocation16], %s358, 0
        $region52: #{tpu_custom_call.1} parent=47 // pred_fallthru
          _
      $region48: #{tpu_custom_call.1} parent=5 // pred_fallthru
        _
      %p379 = scmp.le.s32.totalorder 1, %s24
      %p380 = scmp.lt.s32.totalorder %s24, 3
      %p381 = pnand %p379, %p380
      %p382 = pneg %p381
      // Predicated region
      $region53: #{tpu_custom_call.1} parent=5 // pred_check
        _
      $region54: #{tpu_custom_call.1} parent=5 // pred_check_branch
        %384 = sbr.rel (%p381) target = $region56
      $region55: #{tpu_custom_call.1} parent=5 // pred_region
        %s385 = ssub.s32 %s24, 1
        %s386 = sand.u32 %s37, 1
        %s387 = scalar_lea.sflag [#allocation4], %s386
        %s388 = sand.u32 %s37, 1
        %s389 = smul.addr %s388, 768
        %s390 = scalar_lea.vmem [#allocation3], %s389
        // Predicated region
        $region57: #{tpu_custom_call.1} parent=55 // pred_check
          %p391 = pneg %p50
        $region58: #{tpu_custom_call.1} parent=55 // pred_check_branch
          %393 = sbr.rel (%p391) target = $region60
        $region59: #{tpu_custom_call.1} parent=55 // pred_region
          %394 = dma.done %s387, 12288
        $region60: #{tpu_custom_call.1} parent=55 // pred_fallthru
          _
        // Predicated region
        $region61: #{tpu_custom_call.1} parent=55 // pred_check
          %p395 = pneg %p71
        $region62: #{tpu_custom_call.1} parent=55 // pred_check_branch
          %397 = sbr.rel (%p395) target = $region64
        $region63: #{tpu_custom_call.1} parent=55 // pred_region
          %398 = dma.done [#allocation7], 9216
        $region64: #{tpu_custom_call.1} parent=55 // pred_fallthru
          _
        // Predicated region
        $region65: #{tpu_custom_call.1} parent=55 // pred_check
          %p399 = pneg %p92
        $region66: #{tpu_custom_call.1} parent=55 // pred_check_branch
          %401 = sbr.rel (%p399) target = $region68
        $region67: #{tpu_custom_call.1} parent=55 // pred_region
          %402 = dma.done [#allocation7], 64
        $region68: #{tpu_custom_call.1} parent=55 // pred_fallthru
          _
        // Predicated region
        $region69: #{tpu_custom_call.1} parent=55 // pred_check
          %p403 = pneg %p134
        $region70: #{tpu_custom_call.1} parent=55 // pred_check_branch
          %405 = sbr.rel (%p403) target = $region72
        $region71: #{tpu_custom_call.1} parent=55 // pred_region
          %406 = dma.done [#allocation10], 24576
        $region72: #{tpu_custom_call.1} parent=55 // pred_fallthru
          _
        // Predicated region
        $region73: #{tpu_custom_call.1} parent=55 // pred_check
          %p407 = pneg %p176
        $region74: #{tpu_custom_call.1} parent=55 // pred_check_branch
          %409 = sbr.rel (%p407) target = $region76
        $region75: #{tpu_custom_call.1} parent=55 // pred_region
          %410 = dma.done [#allocation10], 64
        $region76: #{tpu_custom_call.1} parent=55 // pred_fallthru
          _
        // Predicated region
        $region77: #{tpu_custom_call.1} parent=55 // pred_check
          %p411 = pneg %p197
        $region78: #{tpu_custom_call.1} parent=55 // pred_check_branch
          %413 = sbr.rel (%p411) target = $region80
        $region79: #{tpu_custom_call.1} parent=55 // pred_region
          %414 = dma.done [#allocation13], 16384
        $region80: #{tpu_custom_call.1} parent=55 // pred_fallthru
          _
        %s415 = sand.u32 %s37, 1
        %s416 = scalar_lea.sflag [#allocation4], %s415
        %s417 = sand.u32 %s37, 1
        %s418 = smul.addr %s417, 768
        %s419 = scalar_lea.vmem [#allocation3], %s418
        %p420 = pneg %p50
        %p421 = pneg %p47
        %p422 = pneg %p71
        %p423 = pneg %p68
        %p424 = pneg %p92
        %p425 = pneg %p89
        %p426 = pneg %p113
        %p427 = pneg %p110
        %p428 = pneg %p134
        %p429 = pneg %p131
        %p430 = pneg %p155
        %p431 = pneg %p152
        %p432 = pneg %p176
        %p433 = pneg %p173
        %p434 = pneg %p197
        %p435 = pneg %p194
        %p436 = pneg %p218
        %p437 = pneg %p215
        %p438 = pneg %p244
        %p439 = pneg %p241
        %s440 = sand.u32 %s231, 1
        %s441 = scalar_lea.sflag [#allocation5], %s440
        %s442 = sand.u32 %s231, 1
        %s443 = smul.addr %s442, 16
        %s444 = scalar_lea.vmem [#allocation14], %s443
        %s445 = smul.u32 2, %s29
        %s446 = smul.u32 2, %s29
        %v448 = vld [vmem:[%s390] sm:$0xf]
        %v449 = vld [vmem:[%s390 + $0x4] sm:$0xf]
        %v450 = vld [vmem:[%s390 + $0x8] sm:$0xf]
        %v451 = vld [vmem:[%s390 + $0xc] sm:$0xf]
        %v452 = vld [vmem:[%s390 + $0x10] sm:$0xf]
        %v453 = vld [vmem:[%s390 + $0x14] sm:$0xf]
        %v454 = vld [vmem:[%s390 + $0x18] sm:$0xf]
        %v455 = vld [vmem:[%s390 + $0x1c] sm:$0xf]
        %v456 = vld [vmem:[%s390 + $0x20] sm:$0xf]
        %v457 = vld [vmem:[%s390 + $0x24] sm:$0xf]
        %v458 = vld [vmem:[%s390 + $0x28] sm:$0xf]
        %v459 = vld [vmem:[%s390 + $0x2c] sm:$0xf]
        %v460 = vld [vmem:[%s390 + $0x30] sm:$0xf]
        %v461 = vld [vmem:[%s390 + $0x34] sm:$0xf]
        %v462 = vld [vmem:[%s390 + $0x38] sm:$0xf]
        %v463 = vld [vmem:[%s390 + $0x3c] sm:$0xf]
        %v464 = vld [vmem:[%s390 + $0x40] sm:$0xf]
        %v465 = vld [vmem:[%s390 + $0x44] sm:$0xf]
        %v466 = vld [vmem:[%s390 + $0x48] sm:$0xf]
        %v467 = vld [vmem:[%s390 + $0x4c] sm:$0xf]
        %v468 = vld [vmem:[%s390 + $0x50] sm:$0xf]
        %v469 = vld [vmem:[%s390 + $0x54] sm:$0xf]
        %v470 = vld [vmem:[%s390 + $0x58] sm:$0xf]
        %v471 = vld [vmem:[%s390 + $0x5c] sm:$0xf]
        %v472 = vld [vmem:[%s390 + $0x60] sm:$0xf]
        %v473 = vld [vmem:[%s390 + $0x64] sm:$0xf]
        %v474 = vld [vmem:[%s390 + $0x68] sm:$0xf]
        %v475 = vld [vmem:[%s390 + $0x6c] sm:$0xf]
        %v476 = vld [vmem:[%s390 + $0x70] sm:$0xf]
        %v477 = vld [vmem:[%s390 + $0x74] sm:$0xf]
        %v478 = vld [vmem:[%s390 + $0x78] sm:$0xf]
        %v479 = vld [vmem:[%s390 + $0x7c] sm:$0xf]
        %v480 = vld [vmem:[%s390 + $0x80] sm:$0xf]
        %v481 = vld [vmem:[%s390 + $0x84] sm:$0xf]
        %v482 = vld [vmem:[%s390 + $0x88] sm:$0xf]
        %v483 = vld [vmem:[%s390 + $0x8c] sm:$0xf]
        %v484 = vld [vmem:[%s390 + $0x90] sm:$0xf]
        %v485 = vld [vmem:[%s390 + $0x94] sm:$0xf]
        %v486 = vld [vmem:[%s390 + $0x98] sm:$0xf]
        %v487 = vld [vmem:[%s390 + $0x9c] sm:$0xf]
        %v488 = vld [vmem:[%s390 + $0xa0] sm:$0xf]
        %v489 = vld [vmem:[%s390 + $0xa4] sm:$0xf]
        %v490 = vld [vmem:[%s390 + $0xa8] sm:$0xf]
        %v491 = vld [vmem:[%s390 + $0xac] sm:$0xf]
        %v492 = vld [vmem:[%s390 + $0xb0] sm:$0xf]
        %v493 = vld [vmem:[%s390 + $0xb4] sm:$0xf]
        %v494 = vld [vmem:[%s390 + $0xb8] sm:$0xf]
        %v495 = vld [vmem:[%s390 + $0xbc] sm:$0xf]
        %v496 = vld [vmem:[%s390 + $0xc0] sm:$0xf]
        %v497 = vld [vmem:[%s390 + $0xc4] sm:$0xf]
        %v498 = vld [vmem:[%s390 + $0xc8] sm:$0xf]
        %v499 = vld [vmem:[%s390 + $0xcc] sm:$0xf]
        %v500 = vld [vmem:[%s390 + $0xd0] sm:$0xf]
        %v501 = vld [vmem:[%s390 + $0xd4] sm:$0xf]
        %v502 = vld [vmem:[%s390 + $0xd8] sm:$0xf]
        %v503 = vld [vmem:[%s390 + $0xdc] sm:$0xf]
        %v504 = vld [vmem:[%s390 + $0xe0] sm:$0xf]
        %v505 = vld [vmem:[%s390 + $0xe4] sm:$0xf]
        %v506 = vld [vmem:[%s390 + $0xe8] sm:$0xf]
        %v507 = vld [vmem:[%s390 + $0xec] sm:$0xf]
        %v508 = vld [vmem:[%s390 + $0xf0] sm:$0xf]
        %v509 = vld [vmem:[%s390 + $0xf4] sm:$0xf]
        %v510 = vld [vmem:[%s390 + $0xf8] sm:$0xf]
        %v511 = vld [vmem:[%s390 + $0xfc] sm:$0xf]
        %v512 = vld [vmem:[#allocation6] sm:$0xff]
        %v513 = vld [vmem:[#allocation6 + $0x8] sm:$0xff]
        %v514 = vld [vmem:[#allocation6 + $0x10] sm:$0xff]
        %v515 = vld [vmem:[#allocation6 + $0x18] sm:$0xff]
        %v516 = vld [vmem:[#allocation6 + $0x20] sm:$0xff]
        %v517 = vld [vmem:[#allocation6 + $0x28] sm:$0xff]
        %v518 = vld [vmem:[#allocation6 + $0x30] sm:$0xff]
        %v519 = vld [vmem:[#allocation6 + $0x38] sm:$0xff]
        %v520 = vld [vmem:[#allocation6 + $0x40] sm:$0xff]
        %v521 = vld [vmem:[#allocation6 + $0x48] sm:$0xff]
        %v522 = vld [vmem:[#allocation6 + $0x50] sm:$0xff]
        %v523 = vld [vmem:[#allocation6 + $0x58] sm:$0xff]
        %v524 = vld [vmem:[#allocation6 + $0x60] sm:$0xff]
        %v525 = vld [vmem:[#allocation6 + $0x68] sm:$0xff]
        %v526 = vld [vmem:[#allocation6 + $0x70] sm:$0xff]
        %v527 = vld [vmem:[#allocation6 + $0x78] sm:$0xff]
        %v528 = vld [vmem:[#allocation6 + $0x80] sm:$0xff]
        %v529 = vld [vmem:[#allocation6 + $0x88] sm:$0xff]
        %v530 = vld [vmem:[#allocation6 + $0x90] sm:$0xff]
        %v531 = vld [vmem:[#allocation6 + $0x98] sm:$0xff]
        %v532 = vld [vmem:[#allocation6 + $0xa0] sm:$0xff]
        %v533 = vld [vmem:[#allocation6 + $0xa8] sm:$0xff]
        %v534 = vld [vmem:[#allocation6 + $0xb0] sm:$0xff]
        %v535 = vld [vmem:[#allocation6 + $0xb8] sm:$0xff]
        %s536 = scalar_lea.vmem %s390, 256 [#allocation3]
        %v537 = vld [vmem:[%s536] sm:$0xf]
        %v538 = vld [vmem:[%s536 + $0x4] sm:$0xf]
        %v539 = vld [vmem:[%s536 + $0x8] sm:$0xf]
        %v540 = vld [vmem:[%s536 + $0xc] sm:$0xf]
        %v541 = vld [vmem:[%s536 + $0x10] sm:$0xf]
        %v542 = vld [vmem:[%s536 + $0x14] sm:$0xf]
        %v543 = vld [vmem:[%s536 + $0x18] sm:$0xf]
        %v544 = vld [vmem:[%s536 + $0x1c] sm:$0xf]
        %v545 = vld [vmem:[%s536 + $0x20] sm:$0xf]
        %v546 = vld [vmem:[%s536 + $0x24] sm:$0xf]
        %v547 = vld [vmem:[%s536 + $0x28] sm:$0xf]
        %v548 = vld [vmem:[%s536 + $0x2c] sm:$0xf]
        %v549 = vld [vmem:[%s536 + $0x30] sm:$0xf]
        %v550 = vld [vmem:[%s536 + $0x34] sm:$0xf]
        %v551 = vld [vmem:[%s536 + $0x38] sm:$0xf]
        %v552 = vld [vmem:[%s536 + $0x3c] sm:$0xf]
        %v553 = vld [vmem:[%s536 + $0x40] sm:$0xf]
        %v554 = vld [vmem:[%s536 + $0x44] sm:$0xf]
        %v555 = vld [vmem:[%s536 + $0x48] sm:$0xf]
        %v556 = vld [vmem:[%s536 + $0x4c] sm:$0xf]
        %v557 = vld [vmem:[%s536 + $0x50] sm:$0xf]
        %v558 = vld [vmem:[%s536 + $0x54] sm:$0xf]
        %v559 = vld [vmem:[%s536 + $0x58] sm:$0xf]
        %v560 = vld [vmem:[%s536 + $0x5c] sm:$0xf]
        %v561 = vld [vmem:[%s536 + $0x60] sm:$0xf]
        %v562 = vld [vmem:[%s536 + $0x64] sm:$0xf]
        %v563 = vld [vmem:[%s536 + $0x68] sm:$0xf]
        %v564 = vld [vmem:[%s536 + $0x6c] sm:$0xf]
        %v565 = vld [vmem:[%s536 + $0x70] sm:$0xf]
        %v566 = vld [vmem:[%s536 + $0x74] sm:$0xf]
        %v567 = vld [vmem:[%s536 + $0x78] sm:$0xf]
        %v568 = vld [vmem:[%s536 + $0x7c] sm:$0xf]
        %v569 = vld [vmem:[%s536 + $0x80] sm:$0xf]
        %v570 = vld [vmem:[%s536 + $0x84] sm:$0xf]
        %v571 = vld [vmem:[%s536 + $0x88] sm:$0xf]
        %v572 = vld [vmem:[%s536 + $0x8c] sm:$0xf]
        %v573 = vld [vmem:[%s536 + $0x90] sm:$0xf]
        %v574 = vld [vmem:[%s536 + $0x94] sm:$0xf]
        %v575 = vld [vmem:[%s536 + $0x98] sm:$0xf]
        %v576 = vld [vmem:[%s536 + $0x9c] sm:$0xf]
        %v577 = vld [vmem:[%s536 + $0xa0] sm:$0xf]
        %v578 = vld [vmem:[%s536 + $0xa4] sm:$0xf]
        %v579 = vld [vmem:[%s536 + $0xa8] sm:$0xf]
        %v580 = vld [vmem:[%s536 + $0xac] sm:$0xf]
        %v581 = vld [vmem:[%s536 + $0xb0] sm:$0xf]
        %v582 = vld [vmem:[%s536 + $0xb4] sm:$0xf]
        %v583 = vld [vmem:[%s536 + $0xb8] sm:$0xf]
        %v584 = vld [vmem:[%s536 + $0xbc] sm:$0xf]
        %v585 = vld [vmem:[%s536 + $0xc0] sm:$0xf]
        %v586 = vld [vmem:[%s536 + $0xc4] sm:$0xf]
        %v587 = vld [vmem:[%s536 + $0xc8] sm:$0xf]
        %v588 = vld [vmem:[%s536 + $0xcc] sm:$0xf]
        %v589 = vld [vmem:[%s536 + $0xd0] sm:$0xf]
        %v590 = vld [vmem:[%s536 + $0xd4] sm:$0xf]
        %v591 = vld [vmem:[%s536 + $0xd8] sm:$0xf]
        %v592 = vld [vmem:[%s536 + $0xdc] sm:$0xf]
        %v593 = vld [vmem:[%s536 + $0xe0] sm:$0xf]
        %v594 = vld [vmem:[%s536 + $0xe4] sm:$0xf]
        %v595 = vld [vmem:[%s536 + $0xe8] sm:$0xf]
        %v596 = vld [vmem:[%s536 + $0xec] sm:$0xf]
        %v597 = vld [vmem:[%s536 + $0xf0] sm:$0xf]
        %v598 = vld [vmem:[%s536 + $0xf4] sm:$0xf]
        %v599 = vld [vmem:[%s536 + $0xf8] sm:$0xf]
        %v600 = vld [vmem:[%s536 + $0xfc] sm:$0xf]
        %s601 = scalar_lea.vmem [#allocation6], 192
        %v602 = vld [vmem:[%s601] sm:$0xff]
        %v603 = vld [vmem:[%s601 + $0x8] sm:$0xff]
        %v604 = vld [vmem:[%s601 + $0x10] sm:$0xff]
        %v605 = vld [vmem:[%s601 + $0x18] sm:$0xff]
        %v606 = vld [vmem:[%s601 + $0x20] sm:$0xff]
        %v607 = vld [vmem:[%s601 + $0x28] sm:$0xff]
        %v608 = vld [vmem:[%s601 + $0x30] sm:$0xff]
        %v609 = vld [vmem:[%s601 + $0x38] sm:$0xff]
        %v610 = vld [vmem:[%s601 + $0x40] sm:$0xff]
        %v611 = vld [vmem:[%s601 + $0x48] sm:$0xff]
        %v612 = vld [vmem:[%s601 + $0x50] sm:$0xff]
        %v613 = vld [vmem:[%s601 + $0x58] sm:$0xff]
        %v614 = vld [vmem:[%s601 + $0x60] sm:$0xff]
        %v615 = vld [vmem:[%s601 + $0x68] sm:$0xff]
        %v616 = vld [vmem:[%s601 + $0x70] sm:$0xff]
        %v617 = vld [vmem:[%s601 + $0x78] sm:$0xff]
        %v618 = vld [vmem:[%s601 + $0x80] sm:$0xff]
        %v619 = vld [vmem:[%s601 + $0x88] sm:$0xff]
        %v620 = vld [vmem:[%s601 + $0x90] sm:$0xff]
        %v621 = vld [vmem:[%s601 + $0x98] sm:$0xff]
        %v622 = vld [vmem:[%s601 + $0xa0] sm:$0xff]
        %v623 = vld [vmem:[%s601 + $0xa8] sm:$0xff]
        %v624 = vld [vmem:[%s601 + $0xb0] sm:$0xff]
        %v625 = vld [vmem:[%s601 + $0xb8] sm:$0xff]
        %v690 = vunpack.c.l.b16 %v537
        %v691 = vunpack.c.l.b16 %v538
        %v692 = vunpack.c.l.b16 %v539
        %v693 = vunpack.c.l.b16 %v540
        %v694 = vunpack.c.l.b16 %v541
        %v695 = vunpack.c.l.b16 %v542
        %v696 = vunpack.c.l.b16 %v543
        %v697 = vunpack.c.l.b16 %v544
        %v698 = vunpack.c.l.b16 %v545
        %v699 = vunpack.c.l.b16 %v546
        %v700 = vunpack.c.l.b16 %v547
        %v701 = vunpack.c.l.b16 %v548
        %v702 = vunpack.c.l.b16 %v549
        %v703 = vunpack.c.l.b16 %v550
        %v704 = vunpack.c.l.b16 %v551
        %v705 = vunpack.c.l.b16 %v552
        %v706 = vunpack.c.l.b16 %v553
        %v707 = vunpack.c.l.b16 %v554
        %v708 = vunpack.c.l.b16 %v555
        %v709 = vunpack.c.l.b16 %v556
        %v710 = vunpack.c.l.b16 %v557
        %v711 = vunpack.c.l.b16 %v558
        %v712 = vunpack.c.l.b16 %v559
        %v713 = vunpack.c.l.b16 %v560
        %v714 = vunpack.c.l.b16 %v561
        %v715 = vunpack.c.l.b16 %v562
        %v716 = vunpack.c.l.b16 %v563
        %v717 = vunpack.c.l.b16 %v564
        %v718 = vunpack.c.l.b16 %v565
        %v719 = vunpack.c.l.b16 %v566
        %v720 = vunpack.c.l.b16 %v567
        %v721 = vunpack.c.l.b16 %v568
        %v722 = vunpack.c.l.b16 %v569
        %v723 = vunpack.c.l.b16 %v570
        %v724 = vunpack.c.l.b16 %v571
        %v725 = vunpack.c.l.b16 %v572
        %v726 = vunpack.c.l.b16 %v573
        %v727 = vunpack.c.l.b16 %v574
        %v728 = vunpack.c.l.b16 %v575
        %v729 = vunpack.c.l.b16 %v576
        %v730 = vunpack.c.l.b16 %v577
        %v731 = vunpack.c.l.b16 %v578
        %v732 = vunpack.c.l.b16 %v579
        %v733 = vunpack.c.l.b16 %v580
        %v734 = vunpack.c.l.b16 %v581
        %v735 = vunpack.c.l.b16 %v582
        %v736 = vunpack.c.l.b16 %v583
        %v737 = vunpack.c.l.b16 %v584
        %v738 = vunpack.c.l.b16 %v585
        %v739 = vunpack.c.l.b16 %v586
        %v740 = vunpack.c.l.b16 %v587
        %v741 = vunpack.c.l.b16 %v588
        %v742 = vunpack.c.l.b16 %v589
        %v743 = vunpack.c.l.b16 %v590
        %v744 = vunpack.c.l.b16 %v591
        %v745 = vunpack.c.l.b16 %v592
        %v746 = vunpack.c.l.b16 %v593
        %v747 = vunpack.c.l.b16 %v594
        %v748 = vunpack.c.l.b16 %v595
        %v749 = vunpack.c.l.b16 %v596
        %v750 = vunpack.c.l.b16 %v597
        %v751 = vunpack.c.l.b16 %v598
        %v752 = vunpack.c.l.b16 %v599
        %v753 = vunpack.c.l.b16 %v600
        %v754 = vpack.c.b16 %v691, %v690
        %v755 = vpack.c.b16 %v693, %v692
        %v756 = vpack.c.b16 %v695, %v694
        %v757 = vpack.c.b16 %v697, %v696
        %v758 = vpack.c.b16 %v699, %v698
        %v759 = vpack.c.b16 %v701, %v700
        %v760 = vpack.c.b16 %v703, %v702
        %v761 = vpack.c.b16 %v705, %v704
        %v762 = vpack.c.b16 %v707, %v706
        %v763 = vpack.c.b16 %v709, %v708
        %v764 = vpack.c.b16 %v711, %v710
        %v765 = vpack.c.b16 %v713, %v712
        %v766 = vpack.c.b16 %v715, %v714
        %v767 = vpack.c.b16 %v717, %v716
        %v768 = vpack.c.b16 %v719, %v718
        %v769 = vpack.c.b16 %v721, %v720
        %v770 = vpack.c.b16 %v723, %v722
        %v771 = vpack.c.b16 %v725, %v724
        %v772 = vpack.c.b16 %v727, %v726
        %v773 = vpack.c.b16 %v729, %v728
        %v774 = vpack.c.b16 %v731, %v730
        %v775 = vpack.c.b16 %v733, %v732
        %v776 = vpack.c.b16 %v735, %v734
        %v777 = vpack.c.b16 %v737, %v736
        %v778 = vpack.c.b16 %v739, %v738
        %v779 = vpack.c.b16 %v741, %v740
        %v780 = vpack.c.b16 %v743, %v742
        %v781 = vpack.c.b16 %v745, %v744
        %v782 = vpack.c.b16 %v747, %v746
        %v783 = vpack.c.b16 %v749, %v748
        %v784 = vpack.c.b16 %v751, %v750
        %v785 = vpack.c.b16 %v753, %v752
        %v810 = vunpack.c.l.b16 %v602
        %v811 = vunpack.c.h.b16 %v602
        %v812 = vunpack.c.l.b16 %v603
        %v813 = vunpack.c.h.b16 %v603
        %v814 = vunpack.c.l.b16 %v604
        %v815 = vunpack.c.h.b16 %v604
        %v816 = vunpack.c.l.b16 %v605
        %v817 = vunpack.c.h.b16 %v605
        %v818 = vunpack.c.l.b16 %v606
        %v819 = vunpack.c.h.b16 %v606
        %v820 = vunpack.c.l.b16 %v607
        %v821 = vunpack.c.h.b16 %v607
        %v822 = vunpack.c.l.b16 %v608
        %v823 = vunpack.c.h.b16 %v608
        %v824 = vunpack.c.l.b16 %v609
        %v825 = vunpack.c.h.b16 %v609
        %v826 = vunpack.c.l.b16 %v610
        %v827 = vunpack.c.h.b16 %v610
        %v828 = vunpack.c.l.b16 %v611
        %v829 = vunpack.c.h.b16 %v611
        %v830 = vunpack.c.l.b16 %v612
        %v831 = vunpack.c.h.b16 %v612
        %v832 = vunpack.c.l.b16 %v613
        %v833 = vunpack.c.h.b16 %v613
        %v834 = vunpack.c.l.b16 %v614
        %v835 = vunpack.c.h.b16 %v614
        %v836 = vunpack.c.l.b16 %v615
        %v837 = vunpack.c.h.b16 %v615
        %v838 = vunpack.c.l.b16 %v616
        %v839 = vunpack.c.h.b16 %v616
        %v840 = vunpack.c.l.b16 %v617
        %v841 = vunpack.c.h.b16 %v617
        %v842 = vunpack.c.l.b16 %v618
        %v843 = vunpack.c.h.b16 %v618
        %v844 = vunpack.c.l.b16 %v619
        %v845 = vunpack.c.h.b16 %v619
        %v846 = vunpack.c.l.b16 %v620
        %v847 = vunpack.c.h.b16 %v620
        %v848 = vunpack.c.l.b16 %v621
        %v849 = vunpack.c.h.b16 %v621
        %v850 = vunpack.c.l.b16 %v622
        %v851 = vunpack.c.h.b16 %v622
        %v852 = vunpack.c.l.b16 %v623
        %v853 = vunpack.c.h.b16 %v623
        %v854 = vunpack.c.l.b16 %v624
        %v855 = vunpack.c.h.b16 %v624
        %v856 = vunpack.c.l.b16 %v625
        %v857 = vunpack.c.h.b16 %v625
        %v858 = vpack.c.b16 %v814, %v810
        %v859 = vpack.c.b16 %v815, %v811
        %v860 = vpack.c.b16 %v816, %v812
        %v861 = vpack.c.b16 %v817, %v813
        %v862 = vpack.c.b16 %v822, %v818
        %v863 = vpack.c.b16 %v823, %v819
        %v864 = vpack.c.b16 %v824, %v820
        %v865 = vpack.c.b16 %v825, %v821
        %v866 = vpack.c.b16 %v830, %v826
        %v867 = vpack.c.b16 %v831, %v827
        %v868 = vpack.c.b16 %v832, %v828
        %v869 = vpack.c.b16 %v833, %v829
        %v870 = vpack.c.b16 %v838, %v834
        %v871 = vpack.c.b16 %v839, %v835
        %v872 = vpack.c.b16 %v840, %v836
        %v873 = vpack.c.b16 %v841, %v837
        %v874 = vpack.c.b16 %v846, %v842
        %v875 = vpack.c.b16 %v847, %v843
        %v876 = vpack.c.b16 %v848, %v844
        %v877 = vpack.c.b16 %v849, %v845
        %v878 = vpack.c.b16 %v854, %v850
        %v879 = vpack.c.b16 %v855, %v851
        %v880 = vpack.c.b16 %v856, %v852
        %v881 = vpack.c.b16 %v857, %v853
        %vm906 = vcmask 785408
        %v908 = vsel %vm906, %v754, 0
        %v911 = vsel %vm906, %v755, 0
        %v914 = vsel %vm906, %v756, 0
        %v917 = vsel %vm906, %v757, 0
        %v920 = vsel %vm906, %v758, 0
        %v923 = vsel %vm906, %v759, 0
        %v926 = vsel %vm906, %v760, 0
        %v929 = vsel %vm906, %v761, 0
        %v932 = vsel %vm906, %v762, 0
        %v935 = vsel %vm906, %v763, 0
        %v938 = vsel %vm906, %v764, 0
        %v941 = vsel %vm906, %v765, 0
        %v944 = vsel %vm906, %v766, 0
        %v947 = vsel %vm906, %v767, 0
        %v950 = vsel %vm906, %v768, 0
        %v953 = vsel %vm906, %v769, 0
        %v956 = vsel %vm906, %v770, 0
        %v959 = vsel %vm906, %v771, 0
        %v962 = vsel %vm906, %v772, 0
        %v965 = vsel %vm906, %v773, 0
        %v968 = vsel %vm906, %v774, 0
        %v971 = vsel %vm906, %v775, 0
        %v974 = vsel %vm906, %v776, 0
        %v977 = vsel %vm906, %v777, 0
        %v980 = vsel %vm906, %v778, 0
        %v983 = vsel %vm906, %v779, 0
        %v986 = vsel %vm906, %v780, 0
        %v989 = vsel %vm906, %v781, 0
        %v992 = vsel %vm906, %v782, 0
        %v995 = vsel %vm906, %v783, 0
        %v998 = vsel %vm906, %v784, 0
        %v1001 = vsel %vm906, %v785, 0
        %1003 = vmatprep.subr.bf16.mxu0 0
        %1004 = vmatpush1.bf16.msra.mxu0 0
        %1005 = vmatprep.subr.bf16.mxu0 0
        %1006 = vmatpush1.bf16.msra.mxu0 0
        %1007 = vmatprep.subr.bf16.mxu0 %v879
        %1008 = vmatpush1.bf16.msra.mxu0 %v878
        %1009 = vmatprep.subr.bf16.mxu0 %v875
        %1010 = vmatpush1.bf16.msra.mxu0 %v874
        %1011 = vmatprep.subr.bf16.mxu0 %v871
        %1012 = vmatpush1.bf16.msra.mxu0 %v870
        %1013 = vmatprep.subr.bf16.mxu0 %v867
        %1014 = vmatpush1.bf16.msra.mxu0 %v866
        %1015 = vmatprep.subr.bf16.mxu0 %v863
        %1016 = vmatpush1.bf16.msra.mxu0 %v862
        %1017 = vmatprep.subr.bf16.mxu0 %v859
        %1018 = vmatpush1.bf16.msra.mxu0 %v858
        %1019 = vmatprep.subr.bf16.mxu0 0
        %1020 = vmatpush2.bf16.msra.mxu0 0
        %1021 = vmatprep.subr.bf16.mxu0 0
        %1022 = vmatpush2.bf16.msra.mxu0 0
        %1023 = vmatprep.subr.bf16.mxu0 0
        %1024 = vmatpush2.bf16.msra.mxu0 0
        %1025 = vmatprep.subr.bf16.mxu0 0
        %1026 = vmatpush2.bf16.msra.mxu0 0
        %1027 = vmatprep.subr.bf16.mxu0 0
        %1028 = vmatpush2.bf16.msra.mxu0 0
        %1029 = vmatprep.subr.bf16.mxu0 0
        %1030 = vmatpush2.bf16.msra.mxu0 0
        %1031 = vmatprep.subr.bf16.mxu0 0
        %1032 = vmatpush2.bf16.msra.mxu0 0
        %1033 = vmatprep.subr.bf16.mxu0 0
        %1034 = vmatpush2.bf16.msra.mxu0 0
        %1035 = vmatprep.mubr.bf16.mxu0 0
        %1036 = vmatmul.mubr.bf16.gmra.mxu0 %v908
        %v1037 = vpop.f32.mrf.mxu0
        %v1038 = vadd.f32 0.0, %v1037
        %v1039 = vpop.f32.mrf.mxu0
        %v1040 = vadd.f32 0.0, %v1039
        %v1041 = vpop.f32.mrf.mxu0
        %v1042 = vadd.f32 0.0, %v1041
        %v1043 = vpop.f32.mrf.mxu0
        %v1044 = vadd.f32 0.0, %v1043
        %1045 = vmatprep.mubr.bf16.mxu0 0
        %1046 = vmatmul.mubr.bf16.gmra.mxu0 %v911
        %v1047 = vpop.f32.mrf.mxu0
        %v1048 = vadd.f32 0.0, %v1047
        %v1049 = vpop.f32.mrf.mxu0
        %v1050 = vadd.f32 0.0, %v1049
        %v1051 = vpop.f32.mrf.mxu0
        %v1052 = vadd.f32 0.0, %v1051
        %v1053 = vpop.f32.mrf.mxu0
        %v1054 = vadd.f32 0.0, %v1053
        %1055 = vmatprep.mubr.bf16.mxu0 0
        %1056 = vmatmul.mubr.bf16.gmra.mxu0 %v914
        %v1057 = vpop.f32.mrf.mxu0
        %v1058 = vadd.f32 0.0, %v1057
        %v1059 = vpop.f32.mrf.mxu0
        %v1060 = vadd.f32 0.0, %v1059
        %v1061 = vpop.f32.mrf.mxu0
        %v1062 = vadd.f32 0.0, %v1061
        %v1063 = vpop.f32.mrf.mxu0
        %v1064 = vadd.f32 0.0, %v1063
        %1065 = vmatprep.mubr.bf16.mxu0 0
        %1066 = vmatmul.mubr.bf16.gmra.mxu0 %v917
        %v1067 = vpop.f32.mrf.mxu0
        %v1068 = vadd.f32 0.0, %v1067
        %v1069 = vpop.f32.mrf.mxu0
        %v1070 = vadd.f32 0.0, %v1069
        %v1071 = vpop.f32.mrf.mxu0
        %v1072 = vadd.f32 0.0, %v1071
        %v1073 = vpop.f32.mrf.mxu0
        %v1074 = vadd.f32 0.0, %v1073
        %1075 = vmatprep.mubr.bf16.mxu0 0
        %1076 = vmatmul.mubr.bf16.gmra.mxu0 %v920
        %v1077 = vpop.f32.mrf.mxu0
        %v1078 = vadd.f32 0.0, %v1077
        %v1079 = vpop.f32.mrf.mxu0
        %v1080 = vadd.f32 0.0, %v1079
        %v1081 = vpop.f32.mrf.mxu0
        %v1082 = vadd.f32 0.0, %v1081
        %v1083 = vpop.f32.mrf.mxu0
        %v1084 = vadd.f32 0.0, %v1083
        %1085 = vmatprep.mubr.bf16.mxu0 0
        %1086 = vmatmul.mubr.bf16.gmra.mxu0 %v923
        %v1087 = vpop.f32.mrf.mxu0
        %v1088 = vadd.f32 0.0, %v1087
        %v1089 = vpop.f32.mrf.mxu0
        %v1090 = vadd.f32 0.0, %v1089
        %v1091 = vpop.f32.mrf.mxu0
        %v1092 = vadd.f32 0.0, %v1091
        %v1093 = vpop.f32.mrf.mxu0
        %v1094 = vadd.f32 0.0, %v1093
        %1095 = vmatprep.mubr.bf16.mxu0 0
        %1096 = vmatmul.mubr.bf16.gmra.mxu0 %v926
        %v1097 = vpop.f32.mrf.mxu0
        %v1098 = vadd.f32 0.0, %v1097
        %v1099 = vpop.f32.mrf.mxu0
        %v1100 = vadd.f32 0.0, %v1099
        %v1101 = vpop.f32.mrf.mxu0
        %v1102 = vadd.f32 0.0, %v1101
        %v1103 = vpop.f32.mrf.mxu0
        %v1104 = vadd.f32 0.0, %v1103
        %1105 = vmatprep.mubr.bf16.mxu0 0
        %1106 = vmatmul.mubr.bf16.gmra.mxu0 %v929
        %v1107 = vpop.f32.mrf.mxu0
        %v1108 = vadd.f32 0.0, %v1107
        %v1109 = vpop.f32.mrf.mxu0
        %v1110 = vadd.f32 0.0, %v1109
        %v1111 = vpop.f32.mrf.mxu0
        %v1112 = vadd.f32 0.0, %v1111
        %v1113 = vpop.f32.mrf.mxu0
        %v1114 = vadd.f32 0.0, %v1113
        %1115 = vmatprep.mubr.bf16.mxu0 0
        %1116 = vmatmul.mubr.bf16.gmra.mxu0 %v932
        %v1117 = vpop.f32.mrf.mxu0
        %v1118 = vadd.f32 0.0, %v1117
        %v1119 = vpop.f32.mrf.mxu0
        %v1120 = vadd.f32 0.0, %v1119
        %v1121 = vpop.f32.mrf.mxu0
        %v1122 = vadd.f32 0.0, %v1121
        %v1123 = vpop.f32.mrf.mxu0
        %v1124 = vadd.f32 0.0, %v1123
        %1125 = vmatprep.mubr.bf16.mxu0 0
        %1126 = vmatmul.mubr.bf16.gmra.mxu0 %v935
        %v1127 = vpop.f32.mrf.mxu0
        %v1128 = vadd.f32 0.0, %v1127
        %v1129 = vpop.f32.mrf.mxu0
        %v1130 = vadd.f32 0.0, %v1129
        %v1131 = vpop.f32.mrf.mxu0
        %v1132 = vadd.f32 0.0, %v1131
        %v1133 = vpop.f32.mrf.mxu0
        %v1134 = vadd.f32 0.0, %v1133
        %1135 = vmatprep.mubr.bf16.mxu0 0
        %1136 = vmatmul.mubr.bf16.gmra.mxu0 %v938
        %v1137 = vpop.f32.mrf.mxu0
        %v1138 = vadd.f32 0.0, %v1137
        %v1139 = vpop.f32.mrf.mxu0
        %v1140 = vadd.f32 0.0, %v1139
        %v1141 = vpop.f32.mrf.mxu0
        %v1142 = vadd.f32 0.0, %v1141
        %v1143 = vpop.f32.mrf.mxu0
        %v1144 = vadd.f32 0.0, %v1143
        %1145 = vmatprep.mubr.bf16.mxu0 0
        %1146 = vmatmul.mubr.bf16.gmra.mxu0 %v941
        %v1147 = vpop.f32.mrf.mxu0
        %v1148 = vadd.f32 0.0, %v1147
        %v1149 = vpop.f32.mrf.mxu0
        %v1150 = vadd.f32 0.0, %v1149
        %v1151 = vpop.f32.mrf.mxu0
        %v1152 = vadd.f32 0.0, %v1151
        %v1153 = vpop.f32.mrf.mxu0
        %v1154 = vadd.f32 0.0, %v1153
        %1155 = vmatprep.mubr.bf16.mxu0 0
        %1156 = vmatmul.mubr.bf16.gmra.mxu0 %v944
        %v1157 = vpop.f32.mrf.mxu0
        %v1158 = vadd.f32 0.0, %v1157
        %v1159 = vpop.f32.mrf.mxu0
        %v1160 = vadd.f32 0.0, %v1159
        %v1161 = vpop.f32.mrf.mxu0
        %v1162 = vadd.f32 0.0, %v1161
        %v1163 = vpop.f32.mrf.mxu0
        %v1164 = vadd.f32 0.0, %v1163
        %1165 = vmatprep.mubr.bf16.mxu0 0
        %1166 = vmatmul.mubr.bf16.gmra.mxu0 %v947
        %v1167 = vpop.f32.mrf.mxu0
        %v1168 = vadd.f32 0.0, %v1167
        %v1169 = vpop.f32.mrf.mxu0
        %v1170 = vadd.f32 0.0, %v1169
        %v1171 = vpop.f32.mrf.mxu0
        %v1172 = vadd.f32 0.0, %v1171
        %v1173 = vpop.f32.mrf.mxu0
        %v1174 = vadd.f32 0.0, %v1173
        %1175 = vmatprep.mubr.bf16.mxu0 0
        %1176 = vmatmul.mubr.bf16.gmra.mxu0 %v950
        %v1177 = vpop.f32.mrf.mxu0
        %v1178 = vadd.f32 0.0, %v1177
        %v1179 = vpop.f32.mrf.mxu0
        %v1180 = vadd.f32 0.0, %v1179
        %v1181 = vpop.f32.mrf.mxu0
        %v1182 = vadd.f32 0.0, %v1181
        %v1183 = vpop.f32.mrf.mxu0
        %v1184 = vadd.f32 0.0, %v1183
        %1185 = vmatprep.mubr.bf16.mxu0 0
        %1186 = vmatmul.mubr.bf16.gmra.mxu0 %v953
        %v1187 = vpop.f32.mrf.mxu0
        %v1188 = vadd.f32 0.0, %v1187
        %v1189 = vpop.f32.mrf.mxu0
        %v1190 = vadd.f32 0.0, %v1189
        %v1191 = vpop.f32.mrf.mxu0
        %v1192 = vadd.f32 0.0, %v1191
        %v1193 = vpop.f32.mrf.mxu0
        %v1194 = vadd.f32 0.0, %v1193
        %1195 = vmatprep.mubr.bf16.mxu0 0
        %1196 = vmatmul.mubr.bf16.gmra.mxu0 %v956
        %v1197 = vpop.f32.mrf.mxu0
        %v1198 = vadd.f32 0.0, %v1197
        %v1199 = vpop.f32.mrf.mxu0
        %v1200 = vadd.f32 0.0, %v1199
        %v1201 = vpop.f32.mrf.mxu0
        %v1202 = vadd.f32 0.0, %v1201
        %v1203 = vpop.f32.mrf.mxu0
        %v1204 = vadd.f32 0.0, %v1203
        %1205 = vmatprep.mubr.bf16.mxu0 0
        %1206 = vmatmul.mubr.bf16.gmra.mxu0 %v959
        %v1207 = vpop.f32.mrf.mxu0
        %v1208 = vadd.f32 0.0, %v1207
        %v1209 = vpop.f32.mrf.mxu0
        %v1210 = vadd.f32 0.0, %v1209
        %v1211 = vpop.f32.mrf.mxu0
        %v1212 = vadd.f32 0.0, %v1211
        %v1213 = vpop.f32.mrf.mxu0
        %v1214 = vadd.f32 0.0, %v1213
        %1215 = vmatprep.mubr.bf16.mxu0 0
        %1216 = vmatmul.mubr.bf16.gmra.mxu0 %v962
        %v1217 = vpop.f32.mrf.mxu0
        %v1218 = vadd.f32 0.0, %v1217
        %v1219 = vpop.f32.mrf.mxu0
        %v1220 = vadd.f32 0.0, %v1219
        %v1221 = vpop.f32.mrf.mxu0
        %v1222 = vadd.f32 0.0, %v1221
        %v1223 = vpop.f32.mrf.mxu0
        %v1224 = vadd.f32 0.0, %v1223
        %1225 = vmatprep.mubr.bf16.mxu0 0
        %1226 = vmatmul.mubr.bf16.gmra.mxu0 %v965
        %v1227 = vpop.f32.mrf.mxu0
        %v1228 = vadd.f32 0.0, %v1227
        %v1229 = vpop.f32.mrf.mxu0
        %v1230 = vadd.f32 0.0, %v1229
        %v1231 = vpop.f32.mrf.mxu0
        %v1232 = vadd.f32 0.0, %v1231
        %v1233 = vpop.f32.mrf.mxu0
        %v1234 = vadd.f32 0.0, %v1233
        %1235 = vmatprep.mubr.bf16.mxu0 0
        %1236 = vmatmul.mubr.bf16.gmra.mxu0 %v968
        %v1237 = vpop.f32.mrf.mxu0
        %v1238 = vadd.f32 0.0, %v1237
        %v1239 = vpop.f32.mrf.mxu0
        %v1240 = vadd.f32 0.0, %v1239
        %v1241 = vpop.f32.mrf.mxu0
        %v1242 = vadd.f32 0.0, %v1241
        %v1243 = vpop.f32.mrf.mxu0
        %v1244 = vadd.f32 0.0, %v1243
        %1245 = vmatprep.mubr.bf16.mxu0 0
        %1246 = vmatmul.mubr.bf16.gmra.mxu0 %v971
        %v1247 = vpop.f32.mrf.mxu0
        %v1248 = vadd.f32 0.0, %v1247
        %v1249 = vpop.f32.mrf.mxu0
        %v1250 = vadd.f32 0.0, %v1249
        %v1251 = vpop.f32.mrf.mxu0
        %v1252 = vadd.f32 0.0, %v1251
        %v1253 = vpop.f32.mrf.mxu0
        %v1254 = vadd.f32 0.0, %v1253
        %1255 = vmatprep.mubr.bf16.mxu0 0
        %1256 = vmatmul.mubr.bf16.gmra.mxu0 %v974
        %v1257 = vpop.f32.mrf.mxu0
        %v1258 = vadd.f32 0.0, %v1257
        %v1259 = vpop.f32.mrf.mxu0
        %v1260 = vadd.f32 0.0, %v1259
        %v1261 = vpop.f32.mrf.mxu0
        %v1262 = vadd.f32 0.0, %v1261
        %v1263 = vpop.f32.mrf.mxu0
        %v1264 = vadd.f32 0.0, %v1263
        %1265 = vmatprep.mubr.bf16.mxu0 0
        %1266 = vmatmul.mubr.bf16.gmra.mxu0 %v977
        %v1267 = vpop.f32.mrf.mxu0
        %v1268 = vadd.f32 0.0, %v1267
        %v1269 = vpop.f32.mrf.mxu0
        %v1270 = vadd.f32 0.0, %v1269
        %v1271 = vpop.f32.mrf.mxu0
        %v1272 = vadd.f32 0.0, %v1271
        %v1273 = vpop.f32.mrf.mxu0
        %v1274 = vadd.f32 0.0, %v1273
        %1275 = vmatprep.mubr.bf16.mxu0 0
        %1276 = vmatmul.mubr.bf16.gmra.mxu0 %v980
        %v1277 = vpop.f32.mrf.mxu0
        %v1278 = vadd.f32 0.0, %v1277
        %v1279 = vpop.f32.mrf.mxu0
        %v1280 = vadd.f32 0.0, %v1279
        %v1281 = vpop.f32.mrf.mxu0
        %v1282 = vadd.f32 0.0, %v1281
        %v1283 = vpop.f32.mrf.mxu0
        %v1284 = vadd.f32 0.0, %v1283
        %1285 = vmatprep.mubr.bf16.mxu0 0
        %1286 = vmatmul.mubr.bf16.gmra.mxu0 %v983
        %v1287 = vpop.f32.mrf.mxu0
        %v1288 = vadd.f32 0.0, %v1287
        %v1289 = vpop.f32.mrf.mxu0
        %v1290 = vadd.f32 0.0, %v1289
        %v1291 = vpop.f32.mrf.mxu0
        %v1292 = vadd.f32 0.0, %v1291
        %v1293 = vpop.f32.mrf.mxu0
        %v1294 = vadd.f32 0.0, %v1293
        %1295 = vmatprep.mubr.bf16.mxu0 0
        %1296 = vmatmul.mubr.bf16.gmra.mxu0 %v986
        %v1297 = vpop.f32.mrf.mxu0
        %v1298 = vadd.f32 0.0, %v1297
        %v1299 = vpop.f32.mrf.mxu0
        %v1300 = vadd.f32 0.0, %v1299
        %v1301 = vpop.f32.mrf.mxu0
        %v1302 = vadd.f32 0.0, %v1301
        %v1303 = vpop.f32.mrf.mxu0
        %v1304 = vadd.f32 0.0, %v1303
        %1305 = vmatprep.mubr.bf16.mxu0 0
        %1306 = vmatmul.mubr.bf16.gmra.mxu0 %v989
        %v1307 = vpop.f32.mrf.mxu0
        %v1308 = vadd.f32 0.0, %v1307
        %v1309 = vpop.f32.mrf.mxu0
        %v1310 = vadd.f32 0.0, %v1309
        %v1311 = vpop.f32.mrf.mxu0
        %v1312 = vadd.f32 0.0, %v1311
        %v1313 = vpop.f32.mrf.mxu0
        %v1314 = vadd.f32 0.0, %v1313
        %1315 = vmatprep.mubr.bf16.mxu0 0
        %1316 = vmatmul.mubr.bf16.gmra.mxu0 %v992
        %v1317 = vpop.f32.mrf.mxu0
        %v1318 = vadd.f32 0.0, %v1317
        %v1319 = vpop.f32.mrf.mxu0
        %v1320 = vadd.f32 0.0, %v1319
        %v1321 = vpop.f32.mrf.mxu0
        %v1322 = vadd.f32 0.0, %v1321
        %v1323 = vpop.f32.mrf.mxu0
        %v1324 = vadd.f32 0.0, %v1323
        %1325 = vmatprep.mubr.bf16.mxu0 0
        %1326 = vmatmul.mubr.bf16.gmra.mxu0 %v995
        %v1327 = vpop.f32.mrf.mxu0
        %v1328 = vadd.f32 0.0, %v1327
        %v1329 = vpop.f32.mrf.mxu0
        %v1330 = vadd.f32 0.0, %v1329
        %v1331 = vpop.f32.mrf.mxu0
        %v1332 = vadd.f32 0.0, %v1331
        %v1333 = vpop.f32.mrf.mxu0
        %v1334 = vadd.f32 0.0, %v1333
        %1335 = vmatprep.mubr.bf16.mxu0 0
        %1336 = vmatmul.mubr.bf16.gmra.mxu0 %v998
        %v1337 = vpop.f32.mrf.mxu0
        %v1338 = vadd.f32 0.0, %v1337
        %v1339 = vpop.f32.mrf.mxu0
        %v1340 = vadd.f32 0.0, %v1339
        %v1341 = vpop.f32.mrf.mxu0
        %v1342 = vadd.f32 0.0, %v1341
        %v1343 = vpop.f32.mrf.mxu0
        %v1344 = vadd.f32 0.0, %v1343
        %1345 = vmatprep.mubr.bf16.mxu0 0
        %1346 = vmatmul.mubr.bf16.gmra.mxu0 %v1001
        %v1347 = vpop.f32.mrf.mxu0
        %v1348 = vadd.f32 0.0, %v1347
        %v1349 = vpop.f32.mrf.mxu0
        %v1350 = vadd.f32 0.0, %v1349
        %v1351 = vpop.f32.mrf.mxu0
        %v1352 = vadd.f32 0.0, %v1351
        %v1353 = vpop.f32.mrf.mxu0
        %v1354 = vadd.f32 0.0, %v1353
        %1355 = vdwg.mxu0
        %1356 = vmatprep.subr.bf16.mxu0 0
        %1357 = vmatpush1.bf16.msra.mxu0 0
        %1358 = vmatprep.subr.bf16.mxu0 0
        %1359 = vmatpush1.bf16.msra.mxu0 0
        %1360 = vmatprep.subr.bf16.mxu0 %v881
        %1361 = vmatpush1.bf16.msra.mxu0 %v880
        %1362 = vmatprep.subr.bf16.mxu0 %v877
        %1363 = vmatpush1.bf16.msra.mxu0 %v876
        %1364 = vmatprep.subr.bf16.mxu0 %v873
        %1365 = vmatpush1.bf16.msra.mxu0 %v872
        %1366 = vmatprep.subr.bf16.mxu0 %v869
        %1367 = vmatpush1.bf16.msra.mxu0 %v868
        %1368 = vmatprep.subr.bf16.mxu0 %v865
        %1369 = vmatpush1.bf16.msra.mxu0 %v864
        %1370 = vmatprep.subr.bf16.mxu0 %v861
        %1371 = vmatpush1.bf16.msra.mxu0 %v860
        %1372 = vmatprep.subr.bf16.mxu0 0
        %1373 = vmatpush2.bf16.msra.mxu0 0
        %1374 = vmatprep.subr.bf16.mxu0 0
        %1375 = vmatpush2.bf16.msra.mxu0 0
        %1376 = vmatprep.subr.bf16.mxu0 0
        %1377 = vmatpush2.bf16.msra.mxu0 0
        %1378 = vmatprep.subr.bf16.mxu0 0
        %1379 = vmatpush2.bf16.msra.mxu0 0
        %1380 = vmatprep.subr.bf16.mxu0 0
        %1381 = vmatpush2.bf16.msra.mxu0 0
        %1382 = vmatprep.subr.bf16.mxu0 0
        %1383 = vmatpush2.bf16.msra.mxu0 0
        %1384 = vmatprep.subr.bf16.mxu0 0
        %1385 = vmatpush2.bf16.msra.mxu0 0
        %1386 = vmatprep.subr.bf16.mxu0 0
        %1387 = vmatpush2.bf16.msra.mxu0 0
        %1388 = vmatprep.mubr.bf16.mxu0 0
        %1389 = vmatmul.mubr.bf16.gmra.mxu0 %v908
        %v1390 = vpop.f32.mrf.mxu0
        %v1391 = vadd.f32 0.0, %v1390
        %v1392 = vpop.f32.mrf.mxu0
        %v1393 = vadd.f32 0.0, %v1392
        %v1394 = vpop.f32.mrf.mxu0
        %v1395 = vadd.f32 0.0, %v1394
        %v1396 = vpop.f32.mrf.mxu0
        %v1397 = vadd.f32 0.0, %v1396
        %1398 = vmatprep.mubr.bf16.mxu0 0
        %1399 = vmatmul.mubr.bf16.gmra.mxu0 %v911
        %v1400 = vpop.f32.mrf.mxu0
        %v1401 = vadd.f32 0.0, %v1400
        %v1402 = vpop.f32.mrf.mxu0
        %v1403 = vadd.f32 0.0, %v1402
        %v1404 = vpop.f32.mrf.mxu0
        %v1405 = vadd.f32 0.0, %v1404
        %v1406 = vpop.f32.mrf.mxu0
        %v1407 = vadd.f32 0.0, %v1406
        %1408 = vmatprep.mubr.bf16.mxu0 0
        %1409 = vmatmul.mubr.bf16.gmra.mxu0 %v914
        %v1410 = vpop.f32.mrf.mxu0
        %v1411 = vadd.f32 0.0, %v1410
        %v1412 = vpop.f32.mrf.mxu0
        %v1413 = vadd.f32 0.0, %v1412
        %v1414 = vpop.f32.mrf.mxu0
        %v1415 = vadd.f32 0.0, %v1414
        %v1416 = vpop.f32.mrf.mxu0
        %v1417 = vadd.f32 0.0, %v1416
        %1418 = vmatprep.mubr.bf16.mxu0 0
        %1419 = vmatmul.mubr.bf16.gmra.mxu0 %v917
        %v1420 = vpop.f32.mrf.mxu0
        %v1421 = vadd.f32 0.0, %v1420
        %v1422 = vpop.f32.mrf.mxu0
        %v1423 = vadd.f32 0.0, %v1422
        %v1424 = vpop.f32.mrf.mxu0
        %v1425 = vadd.f32 0.0, %v1424
        %v1426 = vpop.f32.mrf.mxu0
        %v1427 = vadd.f32 0.0, %v1426
        %1428 = vmatprep.mubr.bf16.mxu0 0
        %1429 = vmatmul.mubr.bf16.gmra.mxu0 %v920
        %v1430 = vpop.f32.mrf.mxu0
        %v1431 = vadd.f32 0.0, %v1430
        %v1432 = vpop.f32.mrf.mxu0
        %v1433 = vadd.f32 0.0, %v1432
        %v1434 = vpop.f32.mrf.mxu0
        %v1435 = vadd.f32 0.0, %v1434
        %v1436 = vpop.f32.mrf.mxu0
        %v1437 = vadd.f32 0.0, %v1436
        %1438 = vmatprep.mubr.bf16.mxu0 0
        %1439 = vmatmul.mubr.bf16.gmra.mxu0 %v923
        %v1440 = vpop.f32.mrf.mxu0
        %v1441 = vadd.f32 0.0, %v1440
        %v1442 = vpop.f32.mrf.mxu0
        %v1443 = vadd.f32 0.0, %v1442
        %v1444 = vpop.f32.mrf.mxu0
        %v1445 = vadd.f32 0.0, %v1444
        %v1446 = vpop.f32.mrf.mxu0
        %v1447 = vadd.f32 0.0, %v1446
        %1448 = vmatprep.mubr.bf16.mxu0 0
        %1449 = vmatmul.mubr.bf16.gmra.mxu0 %v926
        %v1450 = vpop.f32.mrf.mxu0
        %v1451 = vadd.f32 0.0, %v1450
        %v1452 = vpop.f32.mrf.mxu0
        %v1453 = vadd.f32 0.0, %v1452
        %v1454 = vpop.f32.mrf.mxu0
        %v1455 = vadd.f32 0.0, %v1454
        %v1456 = vpop.f32.mrf.mxu0
        %v1457 = vadd.f32 0.0, %v1456
        %1458 = vmatprep.mubr.bf16.mxu0 0
        %1459 = vmatmul.mubr.bf16.gmra.mxu0 %v929
        %v1460 = vpop.f32.mrf.mxu0
        %v1461 = vadd.f32 0.0, %v1460
        %v1462 = vpop.f32.mrf.mxu0
        %v1463 = vadd.f32 0.0, %v1462
        %v1464 = vpop.f32.mrf.mxu0
        %v1465 = vadd.f32 0.0, %v1464
        %v1466 = vpop.f32.mrf.mxu0
        %v1467 = vadd.f32 0.0, %v1466
        %1468 = vmatprep.mubr.bf16.mxu0 0
        %1469 = vmatmul.mubr.bf16.gmra.mxu0 %v932
        %v1470 = vpop.f32.mrf.mxu0
        %v1471 = vadd.f32 0.0, %v1470
        %v1472 = vpop.f32.mrf.mxu0
        %v1473 = vadd.f32 0.0, %v1472
        %v1474 = vpop.f32.mrf.mxu0
        %v1475 = vadd.f32 0.0, %v1474
        %v1476 = vpop.f32.mrf.mxu0
        %v1477 = vadd.f32 0.0, %v1476
        %1478 = vmatprep.mubr.bf16.mxu0 0
        %1479 = vmatmul.mubr.bf16.gmra.mxu0 %v935
        %v1480 = vpop.f32.mrf.mxu0
        %v1481 = vadd.f32 0.0, %v1480
        %v1482 = vpop.f32.mrf.mxu0
        %v1483 = vadd.f32 0.0, %v1482
        %v1484 = vpop.f32.mrf.mxu0
        %v1485 = vadd.f32 0.0, %v1484
        %v1486 = vpop.f32.mrf.mxu0
        %v1487 = vadd.f32 0.0, %v1486
        %1488 = vmatprep.mubr.bf16.mxu0 0
        %1489 = vmatmul.mubr.bf16.gmra.mxu0 %v938
        %v1490 = vpop.f32.mrf.mxu0
        %v1491 = vadd.f32 0.0, %v1490
        %v1492 = vpop.f32.mrf.mxu0
        %v1493 = vadd.f32 0.0, %v1492
        %v1494 = vpop.f32.mrf.mxu0
        %v1495 = vadd.f32 0.0, %v1494
        %v1496 = vpop.f32.mrf.mxu0
        %v1497 = vadd.f32 0.0, %v1496
        %1498 = vmatprep.mubr.bf16.mxu0 0
        %1499 = vmatmul.mubr.bf16.gmra.mxu0 %v941
        %v1500 = vpop.f32.mrf.mxu0
        %v1501 = vadd.f32 0.0, %v1500
        %v1502 = vpop.f32.mrf.mxu0
        %v1503 = vadd.f32 0.0, %v1502
        %v1504 = vpop.f32.mrf.mxu0
        %v1505 = vadd.f32 0.0, %v1504
        %v1506 = vpop.f32.mrf.mxu0
        %v1507 = vadd.f32 0.0, %v1506
        %1508 = vmatprep.mubr.bf16.mxu0 0
        %1509 = vmatmul.mubr.bf16.gmra.mxu0 %v944
        %v1510 = vpop.f32.mrf.mxu0
        %v1511 = vadd.f32 0.0, %v1510
        %v1512 = vpop.f32.mrf.mxu0
        %v1513 = vadd.f32 0.0, %v1512
        %v1514 = vpop.f32.mrf.mxu0
        %v1515 = vadd.f32 0.0, %v1514
        %v1516 = vpop.f32.mrf.mxu0
        %v1517 = vadd.f32 0.0, %v1516
        %1518 = vmatprep.mubr.bf16.mxu0 0
        %1519 = vmatmul.mubr.bf16.gmra.mxu0 %v947
        %v1520 = vpop.f32.mrf.mxu0
        %v1521 = vadd.f32 0.0, %v1520
        %v1522 = vpop.f32.mrf.mxu0
        %v1523 = vadd.f32 0.0, %v1522
        %v1524 = vpop.f32.mrf.mxu0
        %v1525 = vadd.f32 0.0, %v1524
        %v1526 = vpop.f32.mrf.mxu0
        %v1527 = vadd.f32 0.0, %v1526
        %1528 = vmatprep.mubr.bf16.mxu0 0
        %1529 = vmatmul.mubr.bf16.gmra.mxu0 %v950
        %v1530 = vpop.f32.mrf.mxu0
        %v1531 = vadd.f32 0.0, %v1530
        %v1532 = vpop.f32.mrf.mxu0
        %v1533 = vadd.f32 0.0, %v1532
        %v1534 = vpop.f32.mrf.mxu0
        %v1535 = vadd.f32 0.0, %v1534
        %v1536 = vpop.f32.mrf.mxu0
        %v1537 = vadd.f32 0.0, %v1536
        %1538 = vmatprep.mubr.bf16.mxu0 0
        %1539 = vmatmul.mubr.bf16.gmra.mxu0 %v953
        %v1540 = vpop.f32.mrf.mxu0
        %v1541 = vadd.f32 0.0, %v1540
        %v1542 = vpop.f32.mrf.mxu0
        %v1543 = vadd.f32 0.0, %v1542
        %v1544 = vpop.f32.mrf.mxu0
        %v1545 = vadd.f32 0.0, %v1544
        %v1546 = vpop.f32.mrf.mxu0
        %v1547 = vadd.f32 0.0, %v1546
        %1548 = vmatprep.mubr.bf16.mxu0 0
        %1549 = vmatmul.mubr.bf16.gmra.mxu0 %v956
        %v1550 = vpop.f32.mrf.mxu0
        %v1551 = vadd.f32 0.0, %v1550
        %v1552 = vpop.f32.mrf.mxu0
        %v1553 = vadd.f32 0.0, %v1552
        %v1554 = vpop.f32.mrf.mxu0
        %v1555 = vadd.f32 0.0, %v1554
        %v1556 = vpop.f32.mrf.mxu0
        %v1557 = vadd.f32 0.0, %v1556
        %1558 = vmatprep.mubr.bf16.mxu0 0
        %1559 = vmatmul.mubr.bf16.gmra.mxu0 %v959
        %v1560 = vpop.f32.mrf.mxu0
        %v1561 = vadd.f32 0.0, %v1560
        %v1562 = vpop.f32.mrf.mxu0
        %v1563 = vadd.f32 0.0, %v1562
        %v1564 = vpop.f32.mrf.mxu0
        %v1565 = vadd.f32 0.0, %v1564
        %v1566 = vpop.f32.mrf.mxu0
        %v1567 = vadd.f32 0.0, %v1566
        %1568 = vmatprep.mubr.bf16.mxu0 0
        %1569 = vmatmul.mubr.bf16.gmra.mxu0 %v962
        %v1570 = vpop.f32.mrf.mxu0
        %v1571 = vadd.f32 0.0, %v1570
        %v1572 = vpop.f32.mrf.mxu0
        %v1573 = vadd.f32 0.0, %v1572
        %v1574 = vpop.f32.mrf.mxu0
        %v1575 = vadd.f32 0.0, %v1574
        %v1576 = vpop.f32.mrf.mxu0
        %v1577 = vadd.f32 0.0, %v1576
        %1578 = vmatprep.mubr.bf16.mxu0 0
        %1579 = vmatmul.mubr.bf16.gmra.mxu0 %v965
        %v1580 = vpop.f32.mrf.mxu0
        %v1581 = vadd.f32 0.0, %v1580
        %v1582 = vpop.f32.mrf.mxu0
        %v1583 = vadd.f32 0.0, %v1582
        %v1584 = vpop.f32.mrf.mxu0
        %v1585 = vadd.f32 0.0, %v1584
        %v1586 = vpop.f32.mrf.mxu0
        %v1587 = vadd.f32 0.0, %v1586
        %1588 = vmatprep.mubr.bf16.mxu0 0
        %1589 = vmatmul.mubr.bf16.gmra.mxu0 %v968
        %v1590 = vpop.f32.mrf.mxu0
        %v1591 = vadd.f32 0.0, %v1590
        %v1592 = vpop.f32.mrf.mxu0
        %v1593 = vadd.f32 0.0, %v1592
        %v1594 = vpop.f32.mrf.mxu0
        %v1595 = vadd.f32 0.0, %v1594
        %v1596 = vpop.f32.mrf.mxu0
        %v1597 = vadd.f32 0.0, %v1596
        %1598 = vmatprep.mubr.bf16.mxu0 0
        %1599 = vmatmul.mubr.bf16.gmra.mxu0 %v971
        %v1600 = vpop.f32.mrf.mxu0
        %v1601 = vadd.f32 0.0, %v1600
        %v1602 = vpop.f32.mrf.mxu0
        %v1603 = vadd.f32 0.0, %v1602
        %v1604 = vpop.f32.mrf.mxu0
        %v1605 = vadd.f32 0.0, %v1604
        %v1606 = vpop.f32.mrf.mxu0
        %v1607 = vadd.f32 0.0, %v1606
        %1608 = vmatprep.mubr.bf16.mxu0 0
        %1609 = vmatmul.mubr.bf16.gmra.mxu0 %v974
        %v1610 = vpop.f32.mrf.mxu0
        %v1611 = vadd.f32 0.0, %v1610
        %v1612 = vpop.f32.mrf.mxu0
        %v1613 = vadd.f32 0.0, %v1612
        %v1614 = vpop.f32.mrf.mxu0
        %v1615 = vadd.f32 0.0, %v1614
        %v1616 = vpop.f32.mrf.mxu0
        %v1617 = vadd.f32 0.0, %v1616
        %1618 = vmatprep.mubr.bf16.mxu0 0
        %1619 = vmatmul.mubr.bf16.gmra.mxu0 %v977
        %v1620 = vpop.f32.mrf.mxu0
        %v1621 = vadd.f32 0.0, %v1620
        %v1622 = vpop.f32.mrf.mxu0
        %v1623 = vadd.f32 0.0, %v1622
        %v1624 = vpop.f32.mrf.mxu0
        %v1625 = vadd.f32 0.0, %v1624
        %v1626 = vpop.f32.mrf.mxu0
        %v1627 = vadd.f32 0.0, %v1626
        %1628 = vmatprep.mubr.bf16.mxu0 0
        %1629 = vmatmul.mubr.bf16.gmra.mxu0 %v980
        %v1630 = vpop.f32.mrf.mxu0
        %v1631 = vadd.f32 0.0, %v1630
        %v1632 = vpop.f32.mrf.mxu0
        %v1633 = vadd.f32 0.0, %v1632
        %v1634 = vpop.f32.mrf.mxu0
        %v1635 = vadd.f32 0.0, %v1634
        %v1636 = vpop.f32.mrf.mxu0
        %v1637 = vadd.f32 0.0, %v1636
        %1638 = vmatprep.mubr.bf16.mxu0 0
        %1639 = vmatmul.mubr.bf16.gmra.mxu0 %v983
        %v1640 = vpop.f32.mrf.mxu0
        %v1641 = vadd.f32 0.0, %v1640
        %v1642 = vpop.f32.mrf.mxu0
        %v1643 = vadd.f32 0.0, %v1642
        %v1644 = vpop.f32.mrf.mxu0
        %v1645 = vadd.f32 0.0, %v1644
        %v1646 = vpop.f32.mrf.mxu0
        %v1647 = vadd.f32 0.0, %v1646
        %1648 = vmatprep.mubr.bf16.mxu0 0
        %1649 = vmatmul.mubr.bf16.gmra.mxu0 %v986
        %v1650 = vpop.f32.mrf.mxu0
        %v1651 = vadd.f32 0.0, %v1650
        %v1652 = vpop.f32.mrf.mxu0
        %v1653 = vadd.f32 0.0, %v1652
        %v1654 = vpop.f32.mrf.mxu0
        %v1655 = vadd.f32 0.0, %v1654
        %v1656 = vpop.f32.mrf.mxu0
        %v1657 = vadd.f32 0.0, %v1656
        %1658 = vmatprep.mubr.bf16.mxu0 0
        %1659 = vmatmul.mubr.bf16.gmra.mxu0 %v989
        %v1660 = vpop.f32.mrf.mxu0
        %v1661 = vadd.f32 0.0, %v1660
        %v1662 = vpop.f32.mrf.mxu0
        %v1663 = vadd.f32 0.0, %v1662
        %v1664 = vpop.f32.mrf.mxu0
        %v1665 = vadd.f32 0.0, %v1664
        %v1666 = vpop.f32.mrf.mxu0
        %v1667 = vadd.f32 0.0, %v1666
        %1668 = vmatprep.mubr.bf16.mxu0 0
        %1669 = vmatmul.mubr.bf16.gmra.mxu0 %v992
        %v1670 = vpop.f32.mrf.mxu0
        %v1671 = vadd.f32 0.0, %v1670
        %v1672 = vpop.f32.mrf.mxu0
        %v1673 = vadd.f32 0.0, %v1672
        %v1674 = vpop.f32.mrf.mxu0
        %v1675 = vadd.f32 0.0, %v1674
        %v1676 = vpop.f32.mrf.mxu0
        %v1677 = vadd.f32 0.0, %v1676
        %1678 = vmatprep.mubr.bf16.mxu0 0
        %1679 = vmatmul.mubr.bf16.gmra.mxu0 %v995
        %v1680 = vpop.f32.mrf.mxu0
        %v1681 = vadd.f32 0.0, %v1680
        %v1682 = vpop.f32.mrf.mxu0
        %v1683 = vadd.f32 0.0, %v1682
        %v1684 = vpop.f32.mrf.mxu0
        %v1685 = vadd.f32 0.0, %v1684
        %v1686 = vpop.f32.mrf.mxu0
        %v1687 = vadd.f32 0.0, %v1686
        %1688 = vmatprep.mubr.bf16.mxu0 0
        %1689 = vmatmul.mubr.bf16.gmra.mxu0 %v998
        %v1690 = vpop.f32.mrf.mxu0
        %v1691 = vadd.f32 0.0, %v1690
        %v1692 = vpop.f32.mrf.mxu0
        %v1693 = vadd.f32 0.0, %v1692
        %v1694 = vpop.f32.mrf.mxu0
        %v1695 = vadd.f32 0.0, %v1694
        %v1696 = vpop.f32.mrf.mxu0
        %v1697 = vadd.f32 0.0, %v1696
        %1698 = vmatprep.mubr.bf16.mxu0 0
        %1699 = vmatmul.mubr.bf16.gmra.mxu0 %v1001
        %v1700 = vpop.f32.mrf.mxu0
        %v1701 = vadd.f32 0.0, %v1700
        %v1702 = vpop.f32.mrf.mxu0
        %v1703 = vadd.f32 0.0, %v1702
        %v1704 = vpop.f32.mrf.mxu0
        %v1705 = vadd.f32 0.0, %v1704
        %v1706 = vpop.f32.mrf.mxu0
        %v1707 = vadd.f32 0.0, %v1706
        %1708 = vdwg.mxu0
        %v1773 = vunpack.c.l.b16 %v448
        %v1774 = vunpack.c.l.b16 %v449
        %v1775 = vunpack.c.l.b16 %v450
        %v1776 = vunpack.c.l.b16 %v451
        %v1777 = vunpack.c.l.b16 %v452
        %v1778 = vunpack.c.l.b16 %v453
        %v1779 = vunpack.c.l.b16 %v454
        %v1780 = vunpack.c.l.b16 %v455
        %v1781 = vunpack.c.l.b16 %v456
        %v1782 = vunpack.c.l.b16 %v457
        %v1783 = vunpack.c.l.b16 %v458
        %v1784 = vunpack.c.l.b16 %v459
        %v1785 = vunpack.c.l.b16 %v460
        %v1786 = vunpack.c.l.b16 %v461
        %v1787 = vunpack.c.l.b16 %v462
        %v1788 = vunpack.c.l.b16 %v463
        %v1789 = vunpack.c.l.b16 %v464
        %v1790 = vunpack.c.l.b16 %v465
        %v1791 = vunpack.c.l.b16 %v466
        %v1792 = vunpack.c.l.b16 %v467
        %v1793 = vunpack.c.l.b16 %v468
        %v1794 = vunpack.c.l.b16 %v469
        %v1795 = vunpack.c.l.b16 %v470
        %v1796 = vunpack.c.l.b16 %v471
        %v1797 = vunpack.c.l.b16 %v472
        %v1798 = vunpack.c.l.b16 %v473
        %v1799 = vunpack.c.l.b16 %v474
        %v1800 = vunpack.c.l.b16 %v475
        %v1801 = vunpack.c.l.b16 %v476
        %v1802 = vunpack.c.l.b16 %v477
        %v1803 = vunpack.c.l.b16 %v478
        %v1804 = vunpack.c.l.b16 %v479
        %v1805 = vunpack.c.l.b16 %v480
        %v1806 = vunpack.c.l.b16 %v481
        %v1807 = vunpack.c.l.b16 %v482
        %v1808 = vunpack.c.l.b16 %v483
        %v1809 = vunpack.c.l.b16 %v484
        %v1810 = vunpack.c.l.b16 %v485
        %v1811 = vunpack.c.l.b16 %v486
        %v1812 = vunpack.c.l.b16 %v487
        %v1813 = vunpack.c.l.b16 %v488
        %v1814 = vunpack.c.l.b16 %v489
        %v1815 = vunpack.c.l.b16 %v490
        %v1816 = vunpack.c.l.b16 %v491
        %v1817 = vunpack.c.l.b16 %v492
        %v1818 = vunpack.c.l.b16 %v493
        %v1819 = vunpack.c.l.b16 %v494
        %v1820 = vunpack.c.l.b16 %v495
        %v1821 = vunpack.c.l.b16 %v496
        %v1822 = vunpack.c.l.b16 %v497
        %v1823 = vunpack.c.l.b16 %v498
        %v1824 = vunpack.c.l.b16 %v499
        %v1825 = vunpack.c.l.b16 %v500
        %v1826 = vunpack.c.l.b16 %v501
        %v1827 = vunpack.c.l.b16 %v502
        %v1828 = vunpack.c.l.b16 %v503
        %v1829 = vunpack.c.l.b16 %v504
        %v1830 = vunpack.c.l.b16 %v505
        %v1831 = vunpack.c.l.b16 %v506
        %v1832 = vunpack.c.l.b16 %v507
        %v1833 = vunpack.c.l.b16 %v508
        %v1834 = vunpack.c.l.b16 %v509
        %v1835 = vunpack.c.l.b16 %v510
        %v1836 = vunpack.c.l.b16 %v511
        %v1837 = vpack.c.b16 %v1774, %v1773
        %v1838 = vpack.c.b16 %v1776, %v1775
        %v1839 = vpack.c.b16 %v1778, %v1777
        %v1840 = vpack.c.b16 %v1780, %v1779
        %v1841 = vpack.c.b16 %v1782, %v1781
        %v1842 = vpack.c.b16 %v1784, %v1783
        %v1843 = vpack.c.b16 %v1786, %v1785
        %v1844 = vpack.c.b16 %v1788, %v1787
        %v1845 = vpack.c.b16 %v1790, %v1789
        %v1846 = vpack.c.b16 %v1792, %v1791
        %v1847 = vpack.c.b16 %v1794, %v1793
        %v1848 = vpack.c.b16 %v1796, %v1795
        %v1849 = vpack.c.b16 %v1798, %v1797
        %v1850 = vpack.c.b16 %v1800, %v1799
        %v1851 = vpack.c.b16 %v1802, %v1801
        %v1852 = vpack.c.b16 %v1804, %v1803
        %v1853 = vpack.c.b16 %v1806, %v1805
        %v1854 = vpack.c.b16 %v1808, %v1807
        %v1855 = vpack.c.b16 %v1810, %v1809
        %v1856 = vpack.c.b16 %v1812, %v1811
        %v1857 = vpack.c.b16 %v1814, %v1813
        %v1858 = vpack.c.b16 %v1816, %v1815
        %v1859 = vpack.c.b16 %v1818, %v1817
        %v1860 = vpack.c.b16 %v1820, %v1819
        %v1861 = vpack.c.b16 %v1822, %v1821
        %v1862 = vpack.c.b16 %v1824, %v1823
        %v1863 = vpack.c.b16 %v1826, %v1825
        %v1864 = vpack.c.b16 %v1828, %v1827
        %v1865 = vpack.c.b16 %v1830, %v1829
        %v1866 = vpack.c.b16 %v1832, %v1831
        %v1867 = vpack.c.b16 %v1834, %v1833
        %v1868 = vpack.c.b16 %v1836, %v1835
        %v1893 = vunpack.c.l.b16 %v512
        %v1894 = vunpack.c.h.b16 %v512
        %v1895 = vunpack.c.l.b16 %v513
        %v1896 = vunpack.c.h.b16 %v513
        %v1897 = vunpack.c.l.b16 %v514
        %v1898 = vunpack.c.h.b16 %v514
        %v1899 = vunpack.c.l.b16 %v515
        %v1900 = vunpack.c.h.b16 %v515
        %v1901 = vunpack.c.l.b16 %v516
        %v1902 = vunpack.c.h.b16 %v516
        %v1903 = vunpack.c.l.b16 %v517
        %v1904 = vunpack.c.h.b16 %v517
        %v1905 = vunpack.c.l.b16 %v518
        %v1906 = vunpack.c.h.b16 %v518
        %v1907 = vunpack.c.l.b16 %v519
        %v1908 = vunpack.c.h.b16 %v519
        %v1909 = vunpack.c.l.b16 %v520
        %v1910 = vunpack.c.h.b16 %v520
        %v1911 = vunpack.c.l.b16 %v521
        %v1912 = vunpack.c.h.b16 %v521
        %v1913 = vunpack.c.l.b16 %v522
        %v1914 = vunpack.c.h.b16 %v522
        %v1915 = vunpack.c.l.b16 %v523
        %v1916 = vunpack.c.h.b16 %v523
        %v1917 = vunpack.c.l.b16 %v524
        %v1918 = vunpack.c.h.b16 %v524
        %v1919 = vunpack.c.l.b16 %v525
        %v1920 = vunpack.c.h.b16 %v525
        %v1921 = vunpack.c.l.b16 %v526
        %v1922 = vunpack.c.h.b16 %v526
        %v1923 = vunpack.c.l.b16 %v527
        %v1924 = vunpack.c.h.b16 %v527
        %v1925 = vunpack.c.l.b16 %v528
        %v1926 = vunpack.c.h.b16 %v528
        %v1927 = vunpack.c.l.b16 %v529
        %v1928 = vunpack.c.h.b16 %v529
        %v1929 = vunpack.c.l.b16 %v530
        %v1930 = vunpack.c.h.b16 %v530
        %v1931 = vunpack.c.l.b16 %v531
        %v1932 = vunpack.c.h.b16 %v531
        %v1933 = vunpack.c.l.b16 %v532
        %v1934 = vunpack.c.h.b16 %v532
        %v1935 = vunpack.c.l.b16 %v533
        %v1936 = vunpack.c.h.b16 %v533
        %v1937 = vunpack.c.l.b16 %v534
        %v1938 = vunpack.c.h.b16 %v534
        %v1939 = vunpack.c.l.b16 %v535
        %v1940 = vunpack.c.h.b16 %v535
        %v1941 = vpack.c.b16 %v1897, %v1893
        %v1942 = vpack.c.b16 %v1898, %v1894
        %v1943 = vpack.c.b16 %v1899, %v1895
        %v1944 = vpack.c.b16 %v1900, %v1896
        %v1945 = vpack.c.b16 %v1905, %v1901
        %v1946 = vpack.c.b16 %v1906, %v1902
        %v1947 = vpack.c.b16 %v1907, %v1903
        %v1948 = vpack.c.b16 %v1908, %v1904
        %v1949 = vpack.c.b16 %v1913, %v1909
        %v1950 = vpack.c.b16 %v1914, %v1910
        %v1951 = vpack.c.b16 %v1915, %v1911
        %v1952 = vpack.c.b16 %v1916, %v1912
        %v1953 = vpack.c.b16 %v1921, %v1917
        %v1954 = vpack.c.b16 %v1922, %v1918
        %v1955 = vpack.c.b16 %v1923, %v1919
        %v1956 = vpack.c.b16 %v1924, %v1920
        %v1957 = vpack.c.b16 %v1929, %v1925
        %v1958 = vpack.c.b16 %v1930, %v1926
        %v1959 = vpack.c.b16 %v1931, %v1927
        %v1960 = vpack.c.b16 %v1932, %v1928
        %v1961 = vpack.c.b16 %v1937, %v1933
        %v1962 = vpack.c.b16 %v1938, %v1934
        %v1963 = vpack.c.b16 %v1939, %v1935
        %v1964 = vpack.c.b16 %v1940, %v1936
        %v1990 = vsel %vm906, %v1837, 0
        %v1993 = vsel %vm906, %v1838, 0
        %v1996 = vsel %vm906, %v1839, 0
        %v1999 = vsel %vm906, %v1840, 0
        %v2002 = vsel %vm906, %v1841, 0
        %v2005 = vsel %vm906, %v1842, 0
        %v2008 = vsel %vm906, %v1843, 0
        %v2011 = vsel %vm906, %v1844, 0
        %v2014 = vsel %vm906, %v1845, 0
        %v2017 = vsel %vm906, %v1846, 0
        %v2020 = vsel %vm906, %v1847, 0
        %v2023 = vsel %vm906, %v1848, 0
        %v2026 = vsel %vm906, %v1849, 0
        %v2029 = vsel %vm906, %v1850, 0
        %v2032 = vsel %vm906, %v1851, 0
        %v2035 = vsel %vm906, %v1852, 0
        %v2038 = vsel %vm906, %v1853, 0
        %v2041 = vsel %vm906, %v1854, 0
        %v2044 = vsel %vm906, %v1855, 0
        %v2047 = vsel %vm906, %v1856, 0
        %v2050 = vsel %vm906, %v1857, 0
        %v2053 = vsel %vm906, %v1858, 0
        %v2056 = vsel %vm906, %v1859, 0
        %v2059 = vsel %vm906, %v1860, 0
        %v2062 = vsel %vm906, %v1861, 0
        %v2065 = vsel %vm906, %v1862, 0
        %v2068 = vsel %vm906, %v1863, 0
        %v2071 = vsel %vm906, %v1864, 0
        %v2074 = vsel %vm906, %v1865, 0
        %v2077 = vsel %vm906, %v1866, 0
        %v2080 = vsel %vm906, %v1867, 0
        %v2083 = vsel %vm906, %v1868, 0
        %2085 = vmatprep.subr.bf16.mxu0 0
        %2086 = vmatpush1.bf16.msra.mxu0 0
        %2087 = vmatprep.subr.bf16.mxu0 0
        %2088 = vmatpush1.bf16.msra.mxu0 0
        %2089 = vmatprep.subr.bf16.mxu0 %v1962
        %2090 = vmatpush1.bf16.msra.mxu0 %v1961
        %2091 = vmatprep.subr.bf16.mxu0 %v1958
        %2092 = vmatpush1.bf16.msra.mxu0 %v1957
        %2093 = vmatprep.subr.bf16.mxu0 %v1954
        %2094 = vmatpush1.bf16.msra.mxu0 %v1953
        %2095 = vmatprep.subr.bf16.mxu0 %v1950
        %2096 = vmatpush1.bf16.msra.mxu0 %v1949
        %2097 = vmatprep.subr.bf16.mxu0 %v1946
        %2098 = vmatpush1.bf16.msra.mxu0 %v1945
        %2099 = vmatprep.subr.bf16.mxu0 %v1942
        %2100 = vmatpush1.bf16.msra.mxu0 %v1941
        %2101 = vmatprep.subr.bf16.mxu0 0
        %2102 = vmatpush2.bf16.msra.mxu0 0
        %2103 = vmatprep.subr.bf16.mxu0 0
        %2104 = vmatpush2.bf16.msra.mxu0 0
        %2105 = vmatprep.subr.bf16.mxu0 0
        %2106 = vmatpush2.bf16.msra.mxu0 0
        %2107 = vmatprep.subr.bf16.mxu0 0
        %2108 = vmatpush2.bf16.msra.mxu0 0
        %2109 = vmatprep.subr.bf16.mxu0 0
        %2110 = vmatpush2.bf16.msra.mxu0 0
        %2111 = vmatprep.subr.bf16.mxu0 0
        %2112 = vmatpush2.bf16.msra.mxu0 0
        %2113 = vmatprep.subr.bf16.mxu0 0
        %2114 = vmatpush2.bf16.msra.mxu0 0
        %2115 = vmatprep.subr.bf16.mxu0 0
        %2116 = vmatpush2.bf16.msra.mxu0 0
        %2117 = vmatprep.mubr.bf16.mxu0 0
        %2118 = vmatmul.mubr.bf16.gmra.mxu0 %v1990
        %v2119 = vpop.f32.mrf.mxu0
        %v2120 = vadd.f32 %v1038, %v2119
        %v2121 = vpop.f32.mrf.mxu0
        %v2122 = vadd.f32 %v1040, %v2121
        %v2123 = vpop.f32.mrf.mxu0
        %v2124 = vadd.f32 %v1042, %v2123
        %v2125 = vpop.f32.mrf.mxu0
        %v2126 = vadd.f32 %v1044, %v2125
        %2127 = vmatprep.mubr.bf16.mxu0 0
        %2128 = vmatmul.mubr.bf16.gmra.mxu0 %v1993
        %v2129 = vpop.f32.mrf.mxu0
        %v2130 = vadd.f32 %v1048, %v2129
        %v2131 = vpop.f32.mrf.mxu0
        %v2132 = vadd.f32 %v1050, %v2131
        %v2133 = vpop.f32.mrf.mxu0
        %v2134 = vadd.f32 %v1052, %v2133
        %v2135 = vpop.f32.mrf.mxu0
        %v2136 = vadd.f32 %v1054, %v2135
        %2137 = vmatprep.mubr.bf16.mxu0 0
        %2138 = vmatmul.mubr.bf16.gmra.mxu0 %v1996
        %v2139 = vpop.f32.mrf.mxu0
        %v2140 = vadd.f32 %v1058, %v2139
        %v2141 = vpop.f32.mrf.mxu0
        %v2142 = vadd.f32 %v1060, %v2141
        %v2143 = vpop.f32.mrf.mxu0
        %v2144 = vadd.f32 %v1062, %v2143
        %v2145 = vpop.f32.mrf.mxu0
        %v2146 = vadd.f32 %v1064, %v2145
        %2147 = vmatprep.mubr.bf16.mxu0 0
        %2148 = vmatmul.mubr.bf16.gmra.mxu0 %v1999
        %v2149 = vpop.f32.mrf.mxu0
        %v2150 = vadd.f32 %v1068, %v2149
        %v2151 = vpop.f32.mrf.mxu0
        %v2152 = vadd.f32 %v1070, %v2151
        %v2153 = vpop.f32.mrf.mxu0
        %v2154 = vadd.f32 %v1072, %v2153
        %v2155 = vpop.f32.mrf.mxu0
        %v2156 = vadd.f32 %v1074, %v2155
        %2157 = vmatprep.mubr.bf16.mxu0 0
        %2158 = vmatmul.mubr.bf16.gmra.mxu0 %v2002
        %v2159 = vpop.f32.mrf.mxu0
        %v2160 = vadd.f32 %v1078, %v2159
        %v2161 = vpop.f32.mrf.mxu0
        %v2162 = vadd.f32 %v1080, %v2161
        %v2163 = vpop.f32.mrf.mxu0
        %v2164 = vadd.f32 %v1082, %v2163
        %v2165 = vpop.f32.mrf.mxu0
        %v2166 = vadd.f32 %v1084, %v2165
        %2167 = vmatprep.mubr.bf16.mxu0 0
        %2168 = vmatmul.mubr.bf16.gmra.mxu0 %v2005
        %v2169 = vpop.f32.mrf.mxu0
        %v2170 = vadd.f32 %v1088, %v2169
        %v2171 = vpop.f32.mrf.mxu0
        %v2172 = vadd.f32 %v1090, %v2171
        %v2173 = vpop.f32.mrf.mxu0
        %v2174 = vadd.f32 %v1092, %v2173
        %v2175 = vpop.f32.mrf.mxu0
        %v2176 = vadd.f32 %v1094, %v2175
        %2177 = vmatprep.mubr.bf16.mxu0 0
        %2178 = vmatmul.mubr.bf16.gmra.mxu0 %v2008
        %v2179 = vpop.f32.mrf.mxu0
        %v2180 = vadd.f32 %v1098, %v2179
        %v2181 = vpop.f32.mrf.mxu0
        %v2182 = vadd.f32 %v1100, %v2181
        %v2183 = vpop.f32.mrf.mxu0
        %v2184 = vadd.f32 %v1102, %v2183
        %v2185 = vpop.f32.mrf.mxu0
        %v2186 = vadd.f32 %v1104, %v2185
        %2187 = vmatprep.mubr.bf16.mxu0 0
        %2188 = vmatmul.mubr.bf16.gmra.mxu0 %v2011
        %v2189 = vpop.f32.mrf.mxu0
        %v2190 = vadd.f32 %v1108, %v2189
        %v2191 = vpop.f32.mrf.mxu0
        %v2192 = vadd.f32 %v1110, %v2191
        %v2193 = vpop.f32.mrf.mxu0
        %v2194 = vadd.f32 %v1112, %v2193
        %v2195 = vpop.f32.mrf.mxu0
        %v2196 = vadd.f32 %v1114, %v2195
        %2197 = vmatprep.mubr.bf16.mxu0 0
        %2198 = vmatmul.mubr.bf16.gmra.mxu0 %v2014
        %v2199 = vpop.f32.mrf.mxu0
        %v2200 = vadd.f32 %v1118, %v2199
        %v2201 = vpop.f32.mrf.mxu0
        %v2202 = vadd.f32 %v1120, %v2201
        %v2203 = vpop.f32.mrf.mxu0
        %v2204 = vadd.f32 %v1122, %v2203
        %v2205 = vpop.f32.mrf.mxu0
        %v2206 = vadd.f32 %v1124, %v2205
        %2207 = vmatprep.mubr.bf16.mxu0 0
        %2208 = vmatmul.mubr.bf16.gmra.mxu0 %v2017
        %v2209 = vpop.f32.mrf.mxu0
        %v2210 = vadd.f32 %v1128, %v2209
        %v2211 = vpop.f32.mrf.mxu0
        %v2212 = vadd.f32 %v1130, %v2211
        %v2213 = vpop.f32.mrf.mxu0
        %v2214 = vadd.f32 %v1132, %v2213
        %v2215 = vpop.f32.mrf.mxu0
        %v2216 = vadd.f32 %v1134, %v2215
        %2217 = vmatprep.mubr.bf16.mxu0 0
        %2218 = vmatmul.mubr.bf16.gmra.mxu0 %v2020
        %v2219 = vpop.f32.mrf.mxu0
        %v2220 = vadd.f32 %v1138, %v2219
        %v2221 = vpop.f32.mrf.mxu0
        %v2222 = vadd.f32 %v1140, %v2221
        %v2223 = vpop.f32.mrf.mxu0
        %v2224 = vadd.f32 %v1142, %v2223
        %v2225 = vpop.f32.mrf.mxu0
        %v2226 = vadd.f32 %v1144, %v2225
        %2227 = vmatprep.mubr.bf16.mxu0 0
        %2228 = vmatmul.mubr.bf16.gmra.mxu0 %v2023
        %v2229 = vpop.f32.mrf.mxu0
        %v2230 = vadd.f32 %v1148, %v2229
        %v2231 = vpop.f32.mrf.mxu0
        %v2232 = vadd.f32 %v1150, %v2231
        %v2233 = vpop.f32.mrf.mxu0
        %v2234 = vadd.f32 %v1152, %v2233
        %v2235 = vpop.f32.mrf.mxu0
        %v2236 = vadd.f32 %v1154, %v2235
        %2237 = vmatprep.mubr.bf16.mxu0 0
        %2238 = vmatmul.mubr.bf16.gmra.mxu0 %v2026
        %v2239 = vpop.f32.mrf.mxu0
        %v2240 = vadd.f32 %v1158, %v2239
        %v2241 = vpop.f32.mrf.mxu0
        %v2242 = vadd.f32 %v1160, %v2241
        %v2243 = vpop.f32.mrf.mxu0
        %v2244 = vadd.f32 %v1162, %v2243
        %v2245 = vpop.f32.mrf.mxu0
        %v2246 = vadd.f32 %v1164, %v2245
        %2247 = vmatprep.mubr.bf16.mxu0 0
        %2248 = vmatmul.mubr.bf16.gmra.mxu0 %v2029
        %v2249 = vpop.f32.mrf.mxu0
        %v2250 = vadd.f32 %v1168, %v2249
        %v2251 = vpop.f32.mrf.mxu0
        %v2252 = vadd.f32 %v1170, %v2251
        %v2253 = vpop.f32.mrf.mxu0
        %v2254 = vadd.f32 %v1172, %v2253
        %v2255 = vpop.f32.mrf.mxu0
        %v2256 = vadd.f32 %v1174, %v2255
        %2257 = vmatprep.mubr.bf16.mxu0 0
        %2258 = vmatmul.mubr.bf16.gmra.mxu0 %v2032
        %v2259 = vpop.f32.mrf.mxu0
        %v2260 = vadd.f32 %v1178, %v2259
        %v2261 = vpop.f32.mrf.mxu0
        %v2262 = vadd.f32 %v1180, %v2261
        %v2263 = vpop.f32.mrf.mxu0
        %v2264 = vadd.f32 %v1182, %v2263
        %v2265 = vpop.f32.mrf.mxu0
        %v2266 = vadd.f32 %v1184, %v2265
        %2267 = vmatprep.mubr.bf16.mxu0 0
        %2268 = vmatmul.mubr.bf16.gmra.mxu0 %v2035
        %v2269 = vpop.f32.mrf.mxu0
        %v2270 = vadd.f32 %v1188, %v2269
        %v2271 = vpop.f32.mrf.mxu0
        %v2272 = vadd.f32 %v1190, %v2271
        %v2273 = vpop.f32.mrf.mxu0
        %v2274 = vadd.f32 %v1192, %v2273
        %v2275 = vpop.f32.mrf.mxu0
        %v2276 = vadd.f32 %v1194, %v2275
        %2277 = vmatprep.mubr.bf16.mxu0 0
        %2278 = vmatmul.mubr.bf16.gmra.mxu0 %v2038
        %v2279 = vpop.f32.mrf.mxu0
        %v2280 = vadd.f32 %v1198, %v2279
        %v2281 = vpop.f32.mrf.mxu0
        %v2282 = vadd.f32 %v1200, %v2281
        %v2283 = vpop.f32.mrf.mxu0
        %v2284 = vadd.f32 %v1202, %v2283
        %v2285 = vpop.f32.mrf.mxu0
        %v2286 = vadd.f32 %v1204, %v2285
        %2287 = vmatprep.mubr.bf16.mxu0 0
        %2288 = vmatmul.mubr.bf16.gmra.mxu0 %v2041
        %v2289 = vpop.f32.mrf.mxu0
        %v2290 = vadd.f32 %v1208, %v2289
        %v2291 = vpop.f32.mrf.mxu0
        %v2292 = vadd.f32 %v1210, %v2291
        %v2293 = vpop.f32.mrf.mxu0
        %v2294 = vadd.f32 %v1212, %v2293
        %v2295 = vpop.f32.mrf.mxu0
        %v2296 = vadd.f32 %v1214, %v2295
        %2297 = vmatprep.mubr.bf16.mxu0 0
        %2298 = vmatmul.mubr.bf16.gmra.mxu0 %v2044
        %v2299 = vpop.f32.mrf.mxu0
        %v2300 = vadd.f32 %v1218, %v2299
        %v2301 = vpop.f32.mrf.mxu0
        %v2302 = vadd.f32 %v1220, %v2301
        %v2303 = vpop.f32.mrf.mxu0
        %v2304 = vadd.f32 %v1222, %v2303
        %v2305 = vpop.f32.mrf.mxu0
        %v2306 = vadd.f32 %v1224, %v2305
        %2307 = vmatprep.mubr.bf16.mxu0 0
        %2308 = vmatmul.mubr.bf16.gmra.mxu0 %v2047
        %v2309 = vpop.f32.mrf.mxu0
        %v2310 = vadd.f32 %v1228, %v2309
        %v2311 = vpop.f32.mrf.mxu0
        %v2312 = vadd.f32 %v1230, %v2311
        %v2313 = vpop.f32.mrf.mxu0
        %v2314 = vadd.f32 %v1232, %v2313
        %v2315 = vpop.f32.mrf.mxu0
        %v2316 = vadd.f32 %v1234, %v2315
        %2317 = vmatprep.mubr.bf16.mxu0 0
        %2318 = vmatmul.mubr.bf16.gmra.mxu0 %v2050
        %v2319 = vpop.f32.mrf.mxu0
        %v2320 = vadd.f32 %v1238, %v2319
        %v2321 = vpop.f32.mrf.mxu0
        %v2322 = vadd.f32 %v1240, %v2321
        %v2323 = vpop.f32.mrf.mxu0
        %v2324 = vadd.f32 %v1242, %v2323
        %v2325 = vpop.f32.mrf.mxu0
        %v2326 = vadd.f32 %v1244, %v2325
        %2327 = vmatprep.mubr.bf16.mxu0 0
        %2328 = vmatmul.mubr.bf16.gmra.mxu0 %v2053
        %v2329 = vpop.f32.mrf.mxu0
        %v2330 = vadd.f32 %v1248, %v2329
        %v2331 = vpop.f32.mrf.mxu0
        %v2332 = vadd.f32 %v1250, %v2331
        %v2333 = vpop.f32.mrf.mxu0
        %v2334 = vadd.f32 %v1252, %v2333
        %v2335 = vpop.f32.mrf.mxu0
        %v2336 = vadd.f32 %v1254, %v2335
        %2337 = vmatprep.mubr.bf16.mxu0 0
        %2338 = vmatmul.mubr.bf16.gmra.mxu0 %v2056
        %v2339 = vpop.f32.mrf.mxu0
        %v2340 = vadd.f32 %v1258, %v2339
        %v2341 = vpop.f32.mrf.mxu0
        %v2342 = vadd.f32 %v1260, %v2341
        %v2343 = vpop.f32.mrf.mxu0
        %v2344 = vadd.f32 %v1262, %v2343
        %v2345 = vpop.f32.mrf.mxu0
        %v2346 = vadd.f32 %v1264, %v2345
        %2347 = vmatprep.mubr.bf16.mxu0 0
        %2348 = vmatmul.mubr.bf16.gmra.mxu0 %v2059
        %v2349 = vpop.f32.mrf.mxu0
        %v2350 = vadd.f32 %v1268, %v2349
        %v2351 = vpop.f32.mrf.mxu0
        %v2352 = vadd.f32 %v1270, %v2351
        %v2353 = vpop.f32.mrf.mxu0
        %v2354 = vadd.f32 %v1272, %v2353
        %v2355 = vpop.f32.mrf.mxu0
        %v2356 = vadd.f32 %v1274, %v2355
        %2357 = vmatprep.mubr.bf16.mxu0 0
        %2358 = vmatmul.mubr.bf16.gmra.mxu0 %v2062
        %v2359 = vpop.f32.mrf.mxu0
        %v2360 = vadd.f32 %v1278, %v2359
        %v2361 = vpop.f32.mrf.mxu0
        %v2362 = vadd.f32 %v1280, %v2361
        %v2363 = vpop.f32.mrf.mxu0
        %v2364 = vadd.f32 %v1282, %v2363
        %v2365 = vpop.f32.mrf.mxu0
        %v2366 = vadd.f32 %v1284, %v2365
        %2367 = vmatprep.mubr.bf16.mxu0 0
        %2368 = vmatmul.mubr.bf16.gmra.mxu0 %v2065
        %v2369 = vpop.f32.mrf.mxu0
        %v2370 = vadd.f32 %v1288, %v2369
        %v2371 = vpop.f32.mrf.mxu0
        %v2372 = vadd.f32 %v1290, %v2371
        %v2373 = vpop.f32.mrf.mxu0
        %v2374 = vadd.f32 %v1292, %v2373
        %v2375 = vpop.f32.mrf.mxu0
        %v2376 = vadd.f32 %v1294, %v2375
        %2377 = vmatprep.mubr.bf16.mxu0 0
        %2378 = vmatmul.mubr.bf16.gmra.mxu0 %v2068
        %v2379 = vpop.f32.mrf.mxu0
        %v2380 = vadd.f32 %v1298, %v2379
        %v2381 = vpop.f32.mrf.mxu0
        %v2382 = vadd.f32 %v1300, %v2381
        %v2383 = vpop.f32.mrf.mxu0
        %v2384 = vadd.f32 %v1302, %v2383
        %v2385 = vpop.f32.mrf.mxu0
        %v2386 = vadd.f32 %v1304, %v2385
        %2387 = vmatprep.mubr.bf16.mxu0 0
        %2388 = vmatmul.mubr.bf16.gmra.mxu0 %v2071
        %v2389 = vpop.f32.mrf.mxu0
        %v2390 = vadd.f32 %v1308, %v2389
        %v2391 = vpop.f32.mrf.mxu0
        %v2392 = vadd.f32 %v1310, %v2391
        %v2393 = vpop.f32.mrf.mxu0
        %v2394 = vadd.f32 %v1312, %v2393
        %v2395 = vpop.f32.mrf.mxu0
        %v2396 = vadd.f32 %v1314, %v2395
        %2397 = vmatprep.mubr.bf16.mxu0 0
        %2398 = vmatmul.mubr.bf16.gmra.mxu0 %v2074
        %v2399 = vpop.f32.mrf.mxu0
        %v2400 = vadd.f32 %v1318, %v2399
        %v2401 = vpop.f32.mrf.mxu0
        %v2402 = vadd.f32 %v1320, %v2401
        %v2403 = vpop.f32.mrf.mxu0
        %v2404 = vadd.f32 %v1322, %v2403
        %v2405 = vpop.f32.mrf.mxu0
        %v2406 = vadd.f32 %v1324, %v2405
        %2407 = vmatprep.mubr.bf16.mxu0 0
        %2408 = vmatmul.mubr.bf16.gmra.mxu0 %v2077
        %v2409 = vpop.f32.mrf.mxu0
        %v2410 = vadd.f32 %v1328, %v2409
        %v2411 = vpop.f32.mrf.mxu0
        %v2412 = vadd.f32 %v1330, %v2411
        %v2413 = vpop.f32.mrf.mxu0
        %v2414 = vadd.f32 %v1332, %v2413
        %v2415 = vpop.f32.mrf.mxu0
        %v2416 = vadd.f32 %v1334, %v2415
        %2417 = vmatprep.mubr.bf16.mxu0 0
        %2418 = vmatmul.mubr.bf16.gmra.mxu0 %v2080
        %v2419 = vpop.f32.mrf.mxu0
        %v2420 = vadd.f32 %v1338, %v2419
        %v2421 = vpop.f32.mrf.mxu0
        %v2422 = vadd.f32 %v1340, %v2421
        %v2423 = vpop.f32.mrf.mxu0
        %v2424 = vadd.f32 %v1342, %v2423
        %v2425 = vpop.f32.mrf.mxu0
        %v2426 = vadd.f32 %v1344, %v2425
        %2427 = vmatprep.mubr.bf16.mxu0 0
        %2428 = vmatmul.mubr.bf16.gmra.mxu0 %v2083
        %v2429 = vpop.f32.mrf.mxu0
        %v2430 = vadd.f32 %v1348, %v2429
        %v2431 = vpop.f32.mrf.mxu0
        %v2432 = vadd.f32 %v1350, %v2431
        %v2433 = vpop.f32.mrf.mxu0
        %v2434 = vadd.f32 %v1352, %v2433
        %v2435 = vpop.f32.mrf.mxu0
        %v2436 = vadd.f32 %v1354, %v2435
        %2437 = vdwg.mxu0
        %2438 = vmatprep.subr.bf16.mxu0 0
        %2439 = vmatpush1.bf16.msra.mxu0 0
        %2440 = vmatprep.subr.bf16.mxu0 0
        %2441 = vmatpush1.bf16.msra.mxu0 0
        %2442 = vmatprep.subr.bf16.mxu0 %v1964
        %2443 = vmatpush1.bf16.msra.mxu0 %v1963
        %2444 = vmatprep.subr.bf16.mxu0 %v1960
        %2445 = vmatpush1.bf16.msra.mxu0 %v1959
        %2446 = vmatprep.subr.bf16.mxu0 %v1956
        %2447 = vmatpush1.bf16.msra.mxu0 %v1955
        %2448 = vmatprep.subr.bf16.mxu0 %v1952
        %2449 = vmatpush1.bf16.msra.mxu0 %v1951
        %2450 = vmatprep.subr.bf16.mxu0 %v1948
        %2451 = vmatpush1.bf16.msra.mxu0 %v1947
        %2452 = vmatprep.subr.bf16.mxu0 %v1944
        %2453 = vmatpush1.bf16.msra.mxu0 %v1943
        %2454 = vmatprep.subr.bf16.mxu0 0
        %2455 = vmatpush2.bf16.msra.mxu0 0
        %2456 = vmatprep.subr.bf16.mxu0 0
        %2457 = vmatpush2.bf16.msra.mxu0 0
        %2458 = vmatprep.subr.bf16.mxu0 0
        %2459 = vmatpush2.bf16.msra.mxu0 0
        %2460 = vmatprep.subr.bf16.mxu0 0
        %2461 = vmatpush2.bf16.msra.mxu0 0
        %2462 = vmatprep.subr.bf16.mxu0 0
        %2463 = vmatpush2.bf16.msra.mxu0 0
        %2464 = vmatprep.subr.bf16.mxu0 0
        %2465 = vmatpush2.bf16.msra.mxu0 0
        %2466 = vmatprep.subr.bf16.mxu0 0
        %2467 = vmatpush2.bf16.msra.mxu0 0
        %2468 = vmatprep.subr.bf16.mxu0 0
        %2469 = vmatpush2.bf16.msra.mxu0 0
        %2470 = vmatprep.mubr.bf16.mxu0 0
        %2471 = vmatmul.mubr.bf16.gmra.mxu0 %v1990
        %v2472 = vpop.f32.mrf.mxu0
        %v2473 = vadd.f32 %v1391, %v2472
        %v2474 = vpop.f32.mrf.mxu0
        %v2475 = vadd.f32 %v1393, %v2474
        %v2476 = vpop.f32.mrf.mxu0
        %v2477 = vadd.f32 %v1395, %v2476
        %v2478 = vpop.f32.mrf.mxu0
        %v2479 = vadd.f32 %v1397, %v2478
        %2480 = vmatprep.mubr.bf16.mxu0 0
        %2481 = vmatmul.mubr.bf16.gmra.mxu0 %v1993
        %v2482 = vpop.f32.mrf.mxu0
        %v2483 = vadd.f32 %v1401, %v2482
        %v2484 = vpop.f32.mrf.mxu0
        %v2485 = vadd.f32 %v1403, %v2484
        %v2486 = vpop.f32.mrf.mxu0
        %v2487 = vadd.f32 %v1405, %v2486
        %v2488 = vpop.f32.mrf.mxu0
        %v2489 = vadd.f32 %v1407, %v2488
        %2490 = vmatprep.mubr.bf16.mxu0 0
        %2491 = vmatmul.mubr.bf16.gmra.mxu0 %v1996
        %v2492 = vpop.f32.mrf.mxu0
        %v2493 = vadd.f32 %v1411, %v2492
        %v2494 = vpop.f32.mrf.mxu0
        %v2495 = vadd.f32 %v1413, %v2494
        %v2496 = vpop.f32.mrf.mxu0
        %v2497 = vadd.f32 %v1415, %v2496
        %v2498 = vpop.f32.mrf.mxu0
        %v2499 = vadd.f32 %v1417, %v2498
        %2500 = vmatprep.mubr.bf16.mxu0 0
        %2501 = vmatmul.mubr.bf16.gmra.mxu0 %v1999
        %v2502 = vpop.f32.mrf.mxu0
        %v2503 = vadd.f32 %v1421, %v2502
        %v2504 = vpop.f32.mrf.mxu0
        %v2505 = vadd.f32 %v1423, %v2504
        %v2506 = vpop.f32.mrf.mxu0
        %v2507 = vadd.f32 %v1425, %v2506
        %v2508 = vpop.f32.mrf.mxu0
        %v2509 = vadd.f32 %v1427, %v2508
        %2510 = vmatprep.mubr.bf16.mxu0 0
        %2511 = vmatmul.mubr.bf16.gmra.mxu0 %v2002
        %v2512 = vpop.f32.mrf.mxu0
        %v2513 = vadd.f32 %v1431, %v2512
        %v2514 = vpop.f32.mrf.mxu0
        %v2515 = vadd.f32 %v1433, %v2514
        %v2516 = vpop.f32.mrf.mxu0
        %v2517 = vadd.f32 %v1435, %v2516
        %v2518 = vpop.f32.mrf.mxu0
        %v2519 = vadd.f32 %v1437, %v2518
        %2520 = vmatprep.mubr.bf16.mxu0 0
        %2521 = vmatmul.mubr.bf16.gmra.mxu0 %v2005
        %v2522 = vpop.f32.mrf.mxu0
        %v2523 = vadd.f32 %v1441, %v2522
        %v2524 = vpop.f32.mrf.mxu0
        %v2525 = vadd.f32 %v1443, %v2524
        %v2526 = vpop.f32.mrf.mxu0
        %v2527 = vadd.f32 %v1445, %v2526
        %v2528 = vpop.f32.mrf.mxu0
        %v2529 = vadd.f32 %v1447, %v2528
        %2530 = vmatprep.mubr.bf16.mxu0 0
        %2531 = vmatmul.mubr.bf16.gmra.mxu0 %v2008
        %v2532 = vpop.f32.mrf.mxu0
        %v2533 = vadd.f32 %v1451, %v2532
        %v2534 = vpop.f32.mrf.mxu0
        %v2535 = vadd.f32 %v1453, %v2534
        %v2536 = vpop.f32.mrf.mxu0
        %v2537 = vadd.f32 %v1455, %v2536
        %v2538 = vpop.f32.mrf.mxu0
        %v2539 = vadd.f32 %v1457, %v2538
        %2540 = vmatprep.mubr.bf16.mxu0 0
        %2541 = vmatmul.mubr.bf16.gmra.mxu0 %v2011
        %v2542 = vpop.f32.mrf.mxu0
        %v2543 = vadd.f32 %v1461, %v2542
        %v2544 = vpop.f32.mrf.mxu0
        %v2545 = vadd.f32 %v1463, %v2544
        %v2546 = vpop.f32.mrf.mxu0
        %v2547 = vadd.f32 %v1465, %v2546
        %v2548 = vpop.f32.mrf.mxu0
        %v2549 = vadd.f32 %v1467, %v2548
        %2550 = vmatprep.mubr.bf16.mxu0 0
        %2551 = vmatmul.mubr.bf16.gmra.mxu0 %v2014
        %v2552 = vpop.f32.mrf.mxu0
        %v2553 = vadd.f32 %v1471, %v2552
        %v2554 = vpop.f32.mrf.mxu0
        %v2555 = vadd.f32 %v1473, %v2554
        %v2556 = vpop.f32.mrf.mxu0
        %v2557 = vadd.f32 %v1475, %v2556
        %v2558 = vpop.f32.mrf.mxu0
        %v2559 = vadd.f32 %v1477, %v2558
        %2560 = vmatprep.mubr.bf16.mxu0 0
        %2561 = vmatmul.mubr.bf16.gmra.mxu0 %v2017
        %v2562 = vpop.f32.mrf.mxu0
        %v2563 = vadd.f32 %v1481, %v2562
        %v2564 = vpop.f32.mrf.mxu0
        %v2565 = vadd.f32 %v1483, %v2564
        %v2566 = vpop.f32.mrf.mxu0
        %v2567 = vadd.f32 %v1485, %v2566
        %v2568 = vpop.f32.mrf.mxu0
        %v2569 = vadd.f32 %v1487, %v2568
        %2570 = vmatprep.mubr.bf16.mxu0 0
        %2571 = vmatmul.mubr.bf16.gmra.mxu0 %v2020
        %v2572 = vpop.f32.mrf.mxu0
        %v2573 = vadd.f32 %v1491, %v2572
        %v2574 = vpop.f32.mrf.mxu0
        %v2575 = vadd.f32 %v1493, %v2574
        %v2576 = vpop.f32.mrf.mxu0
        %v2577 = vadd.f32 %v1495, %v2576
        %v2578 = vpop.f32.mrf.mxu0
        %v2579 = vadd.f32 %v1497, %v2578
        %2580 = vmatprep.mubr.bf16.mxu0 0
        %2581 = vmatmul.mubr.bf16.gmra.mxu0 %v2023
        %v2582 = vpop.f32.mrf.mxu0
        %v2583 = vadd.f32 %v1501, %v2582
        %v2584 = vpop.f32.mrf.mxu0
        %v2585 = vadd.f32 %v1503, %v2584
        %v2586 = vpop.f32.mrf.mxu0
        %v2587 = vadd.f32 %v1505, %v2586
        %v2588 = vpop.f32.mrf.mxu0
        %v2589 = vadd.f32 %v1507, %v2588
        %2590 = vmatprep.mubr.bf16.mxu0 0
        %2591 = vmatmul.mubr.bf16.gmra.mxu0 %v2026
        %v2592 = vpop.f32.mrf.mxu0
        %v2593 = vadd.f32 %v1511, %v2592
        %v2594 = vpop.f32.mrf.mxu0
        %v2595 = vadd.f32 %v1513, %v2594
        %v2596 = vpop.f32.mrf.mxu0
        %v2597 = vadd.f32 %v1515, %v2596
        %v2598 = vpop.f32.mrf.mxu0
        %v2599 = vadd.f32 %v1517, %v2598
        %2600 = vmatprep.mubr.bf16.mxu0 0
        %2601 = vmatmul.mubr.bf16.gmra.mxu0 %v2029
        %v2602 = vpop.f32.mrf.mxu0
        %v2603 = vadd.f32 %v1521, %v2602
        %v2604 = vpop.f32.mrf.mxu0
        %v2605 = vadd.f32 %v1523, %v2604
        %v2606 = vpop.f32.mrf.mxu0
        %v2607 = vadd.f32 %v1525, %v2606
        %v2608 = vpop.f32.mrf.mxu0
        %v2609 = vadd.f32 %v1527, %v2608
        %2610 = vmatprep.mubr.bf16.mxu0 0
        %2611 = vmatmul.mubr.bf16.gmra.mxu0 %v2032
        %v2612 = vpop.f32.mrf.mxu0
        %v2613 = vadd.f32 %v1531, %v2612
        %v2614 = vpop.f32.mrf.mxu0
        %v2615 = vadd.f32 %v1533, %v2614
        %v2616 = vpop.f32.mrf.mxu0
        %v2617 = vadd.f32 %v1535, %v2616
        %v2618 = vpop.f32.mrf.mxu0
        %v2619 = vadd.f32 %v1537, %v2618
        %2620 = vmatprep.mubr.bf16.mxu0 0
        %2621 = vmatmul.mubr.bf16.gmra.mxu0 %v2035
        %v2622 = vpop.f32.mrf.mxu0
        %v2623 = vadd.f32 %v1541, %v2622
        %v2624 = vpop.f32.mrf.mxu0
        %v2625 = vadd.f32 %v1543, %v2624
        %v2626 = vpop.f32.mrf.mxu0
        %v2627 = vadd.f32 %v1545, %v2626
        %v2628 = vpop.f32.mrf.mxu0
        %v2629 = vadd.f32 %v1547, %v2628
        %2630 = vmatprep.mubr.bf16.mxu0 0
        %2631 = vmatmul.mubr.bf16.gmra.mxu0 %v2038
        %v2632 = vpop.f32.mrf.mxu0
        %v2633 = vadd.f32 %v1551, %v2632
        %v2634 = vpop.f32.mrf.mxu0
        %v2635 = vadd.f32 %v1553, %v2634
        %v2636 = vpop.f32.mrf.mxu0
        %v2637 = vadd.f32 %v1555, %v2636
        %v2638 = vpop.f32.mrf.mxu0
        %v2639 = vadd.f32 %v1557, %v2638
        %2640 = vmatprep.mubr.bf16.mxu0 0
        %2641 = vmatmul.mubr.bf16.gmra.mxu0 %v2041
        %v2642 = vpop.f32.mrf.mxu0
        %v2643 = vadd.f32 %v1561, %v2642
        %v2644 = vpop.f32.mrf.mxu0
        %v2645 = vadd.f32 %v1563, %v2644
        %v2646 = vpop.f32.mrf.mxu0
        %v2647 = vadd.f32 %v1565, %v2646
        %v2648 = vpop.f32.mrf.mxu0
        %v2649 = vadd.f32 %v1567, %v2648
        %2650 = vmatprep.mubr.bf16.mxu0 0
        %2651 = vmatmul.mubr.bf16.gmra.mxu0 %v2044
        %v2652 = vpop.f32.mrf.mxu0
        %v2653 = vadd.f32 %v1571, %v2652
        %v2654 = vpop.f32.mrf.mxu0
        %v2655 = vadd.f32 %v1573, %v2654
        %v2656 = vpop.f32.mrf.mxu0
        %v2657 = vadd.f32 %v1575, %v2656
        %v2658 = vpop.f32.mrf.mxu0
        %v2659 = vadd.f32 %v1577, %v2658
        %2660 = vmatprep.mubr.bf16.mxu0 0
        %2661 = vmatmul.mubr.bf16.gmra.mxu0 %v2047
        %v2662 = vpop.f32.mrf.mxu0
        %v2663 = vadd.f32 %v1581, %v2662
        %v2664 = vpop.f32.mrf.mxu0
        %v2665 = vadd.f32 %v1583, %v2664
        %v2666 = vpop.f32.mrf.mxu0
        %v2667 = vadd.f32 %v1585, %v2666
        %v2668 = vpop.f32.mrf.mxu0
        %v2669 = vadd.f32 %v1587, %v2668
        %2670 = vmatprep.mubr.bf16.mxu0 0
        %2671 = vmatmul.mubr.bf16.gmra.mxu0 %v2050
        %v2672 = vpop.f32.mrf.mxu0
        %v2673 = vadd.f32 %v1591, %v2672
        %v2674 = vpop.f32.mrf.mxu0
        %v2675 = vadd.f32 %v1593, %v2674
        %v2676 = vpop.f32.mrf.mxu0
        %v2677 = vadd.f32 %v1595, %v2676
        %v2678 = vpop.f32.mrf.mxu0
        %v2679 = vadd.f32 %v1597, %v2678
        %2680 = vmatprep.mubr.bf16.mxu0 0
        %2681 = vmatmul.mubr.bf16.gmra.mxu0 %v2053
        %v2682 = vpop.f32.mrf.mxu0
        %v2683 = vadd.f32 %v1601, %v2682
        %v2684 = vpop.f32.mrf.mxu0
        %v2685 = vadd.f32 %v1603, %v2684
        %v2686 = vpop.f32.mrf.mxu0
        %v2687 = vadd.f32 %v1605, %v2686
        %v2688 = vpop.f32.mrf.mxu0
        %v2689 = vadd.f32 %v1607, %v2688
        %2690 = vmatprep.mubr.bf16.mxu0 0
        %2691 = vmatmul.mubr.bf16.gmra.mxu0 %v2056
        %v2692 = vpop.f32.mrf.mxu0
        %v2693 = vadd.f32 %v1611, %v2692
        %v2694 = vpop.f32.mrf.mxu0
        %v2695 = vadd.f32 %v1613, %v2694
        %v2696 = vpop.f32.mrf.mxu0
        %v2697 = vadd.f32 %v1615, %v2696
        %v2698 = vpop.f32.mrf.mxu0
        %v2699 = vadd.f32 %v1617, %v2698
        %2700 = vmatprep.mubr.bf16.mxu0 0
        %2701 = vmatmul.mubr.bf16.gmra.mxu0 %v2059
        %v2702 = vpop.f32.mrf.mxu0
        %v2703 = vadd.f32 %v1621, %v2702
        %v2704 = vpop.f32.mrf.mxu0
        %v2705 = vadd.f32 %v1623, %v2704
        %v2706 = vpop.f32.mrf.mxu0
        %v2707 = vadd.f32 %v1625, %v2706
        %v2708 = vpop.f32.mrf.mxu0
        %v2709 = vadd.f32 %v1627, %v2708
        %2710 = vmatprep.mubr.bf16.mxu0 0
        %2711 = vmatmul.mubr.bf16.gmra.mxu0 %v2062
        %v2712 = vpop.f32.mrf.mxu0
        %v2713 = vadd.f32 %v1631, %v2712
        %v2714 = vpop.f32.mrf.mxu0
        %v2715 = vadd.f32 %v1633, %v2714
        %v2716 = vpop.f32.mrf.mxu0
        %v2717 = vadd.f32 %v1635, %v2716
        %v2718 = vpop.f32.mrf.mxu0
        %v2719 = vadd.f32 %v1637, %v2718
        %2720 = vmatprep.mubr.bf16.mxu0 0
        %2721 = vmatmul.mubr.bf16.gmra.mxu0 %v2065
        %v2722 = vpop.f32.mrf.mxu0
        %v2723 = vadd.f32 %v1641, %v2722
        %v2724 = vpop.f32.mrf.mxu0
        %v2725 = vadd.f32 %v1643, %v2724
        %v2726 = vpop.f32.mrf.mxu0
        %v2727 = vadd.f32 %v1645, %v2726
        %v2728 = vpop.f32.mrf.mxu0
        %v2729 = vadd.f32 %v1647, %v2728
        %2730 = vmatprep.mubr.bf16.mxu0 0
        %2731 = vmatmul.mubr.bf16.gmra.mxu0 %v2068
        %v2732 = vpop.f32.mrf.mxu0
        %v2733 = vadd.f32 %v1651, %v2732
        %v2734 = vpop.f32.mrf.mxu0
        %v2735 = vadd.f32 %v1653, %v2734
        %v2736 = vpop.f32.mrf.mxu0
        %v2737 = vadd.f32 %v1655, %v2736
        %v2738 = vpop.f32.mrf.mxu0
        %v2739 = vadd.f32 %v1657, %v2738
        %2740 = vmatprep.mubr.bf16.mxu0 0
        %2741 = vmatmul.mubr.bf16.gmra.mxu0 %v2071
        %v2742 = vpop.f32.mrf.mxu0
        %v2743 = vadd.f32 %v1661, %v2742
        %v2744 = vpop.f32.mrf.mxu0
        %v2745 = vadd.f32 %v1663, %v2744
        %v2746 = vpop.f32.mrf.mxu0
        %v2747 = vadd.f32 %v1665, %v2746
        %v2748 = vpop.f32.mrf.mxu0
        %v2749 = vadd.f32 %v1667, %v2748
        %2750 = vmatprep.mubr.bf16.mxu0 0
        %2751 = vmatmul.mubr.bf16.gmra.mxu0 %v2074
        %v2752 = vpop.f32.mrf.mxu0
        %v2753 = vadd.f32 %v1671, %v2752
        %v2754 = vpop.f32.mrf.mxu0
        %v2755 = vadd.f32 %v1673, %v2754
        %v2756 = vpop.f32.mrf.mxu0
        %v2757 = vadd.f32 %v1675, %v2756
        %v2758 = vpop.f32.mrf.mxu0
        %v2759 = vadd.f32 %v1677, %v2758
        %2760 = vmatprep.mubr.bf16.mxu0 0
        %2761 = vmatmul.mubr.bf16.gmra.mxu0 %v2077
        %v2762 = vpop.f32.mrf.mxu0
        %v2763 = vadd.f32 %v1681, %v2762
        %v2764 = vpop.f32.mrf.mxu0
        %v2765 = vadd.f32 %v1683, %v2764
        %v2766 = vpop.f32.mrf.mxu0
        %v2767 = vadd.f32 %v1685, %v2766
        %v2768 = vpop.f32.mrf.mxu0
        %v2769 = vadd.f32 %v1687, %v2768
        %2770 = vmatprep.mubr.bf16.mxu0 0
        %2771 = vmatmul.mubr.bf16.gmra.mxu0 %v2080
        %v2772 = vpop.f32.mrf.mxu0
        %v2773 = vadd.f32 %v1691, %v2772
        %v2774 = vpop.f32.mrf.mxu0
        %v2775 = vadd.f32 %v1693, %v2774
        %v2776 = vpop.f32.mrf.mxu0
        %v2777 = vadd.f32 %v1695, %v2776
        %v2778 = vpop.f32.mrf.mxu0
        %v2779 = vadd.f32 %v1697, %v2778
        %2780 = vmatprep.mubr.bf16.mxu0 0
        %2781 = vmatmul.mubr.bf16.gmra.mxu0 %v2083
        %v2782 = vpop.f32.mrf.mxu0
        %v2783 = vadd.f32 %v1701, %v2782
        %v2784 = vpop.f32.mrf.mxu0
        %v2785 = vadd.f32 %v1703, %v2784
        %v2786 = vpop.f32.mrf.mxu0
        %v2787 = vadd.f32 %v1705, %v2786
        %v2788 = vpop.f32.mrf.mxu0
        %v2789 = vadd.f32 %v1707, %v2788
        %2790 = vdwg.mxu0
        %s2791 = scalar_lea.vmem %s390, 512 [#allocation3]
        %v2792 = vld [vmem:[%s2791] sm:$0xf]
        %v2793 = vld [vmem:[%s2791 + $0x4] sm:$0xf]
        %v2794 = vld [vmem:[%s2791 + $0x8] sm:$0xf]
        %v2795 = vld [vmem:[%s2791 + $0xc] sm:$0xf]
        %v2796 = vld [vmem:[%s2791 + $0x10] sm:$0xf]
        %v2797 = vld [vmem:[%s2791 + $0x14] sm:$0xf]
        %v2798 = vld [vmem:[%s2791 + $0x18] sm:$0xf]
        %v2799 = vld [vmem:[%s2791 + $0x1c] sm:$0xf]
        %v2800 = vld [vmem:[%s2791 + $0x20] sm:$0xf]
        %v2801 = vld [vmem:[%s2791 + $0x24] sm:$0xf]
        %v2802 = vld [vmem:[%s2791 + $0x28] sm:$0xf]
        %v2803 = vld [vmem:[%s2791 + $0x2c] sm:$0xf]
        %v2804 = vld [vmem:[%s2791 + $0x30] sm:$0xf]
        %v2805 = vld [vmem:[%s2791 + $0x34] sm:$0xf]
        %v2806 = vld [vmem:[%s2791 + $0x38] sm:$0xf]
        %v2807 = vld [vmem:[%s2791 + $0x3c] sm:$0xf]
        %v2808 = vld [vmem:[%s2791 + $0x40] sm:$0xf]
        %v2809 = vld [vmem:[%s2791 + $0x44] sm:$0xf]
        %v2810 = vld [vmem:[%s2791 + $0x48] sm:$0xf]
        %v2811 = vld [vmem:[%s2791 + $0x4c] sm:$0xf]
        %v2812 = vld [vmem:[%s2791 + $0x50] sm:$0xf]
        %v2813 = vld [vmem:[%s2791 + $0x54] sm:$0xf]
        %v2814 = vld [vmem:[%s2791 + $0x58] sm:$0xf]
        %v2815 = vld [vmem:[%s2791 + $0x5c] sm:$0xf]
        %v2816 = vld [vmem:[%s2791 + $0x60] sm:$0xf]
        %v2817 = vld [vmem:[%s2791 + $0x64] sm:$0xf]
        %v2818 = vld [vmem:[%s2791 + $0x68] sm:$0xf]
        %v2819 = vld [vmem:[%s2791 + $0x6c] sm:$0xf]
        %v2820 = vld [vmem:[%s2791 + $0x70] sm:$0xf]
        %v2821 = vld [vmem:[%s2791 + $0x74] sm:$0xf]
        %v2822 = vld [vmem:[%s2791 + $0x78] sm:$0xf]
        %v2823 = vld [vmem:[%s2791 + $0x7c] sm:$0xf]
        %v2824 = vld [vmem:[%s2791 + $0x80] sm:$0xf]
        %v2825 = vld [vmem:[%s2791 + $0x84] sm:$0xf]
        %v2826 = vld [vmem:[%s2791 + $0x88] sm:$0xf]
        %v2827 = vld [vmem:[%s2791 + $0x8c] sm:$0xf]
        %v2828 = vld [vmem:[%s2791 + $0x90] sm:$0xf]
        %v2829 = vld [vmem:[%s2791 + $0x94] sm:$0xf]
        %v2830 = vld [vmem:[%s2791 + $0x98] sm:$0xf]
        %v2831 = vld [vmem:[%s2791 + $0x9c] sm:$0xf]
        %v2832 = vld [vmem:[%s2791 + $0xa0] sm:$0xf]
        %v2833 = vld [vmem:[%s2791 + $0xa4] sm:$0xf]
        %v2834 = vld [vmem:[%s2791 + $0xa8] sm:$0xf]
        %v2835 = vld [vmem:[%s2791 + $0xac] sm:$0xf]
        %v2836 = vld [vmem:[%s2791 + $0xb0] sm:$0xf]
        %v2837 = vld [vmem:[%s2791 + $0xb4] sm:$0xf]
        %v2838 = vld [vmem:[%s2791 + $0xb8] sm:$0xf]
        %v2839 = vld [vmem:[%s2791 + $0xbc] sm:$0xf]
        %v2840 = vld [vmem:[%s2791 + $0xc0] sm:$0xf]
        %v2841 = vld [vmem:[%s2791 + $0xc4] sm:$0xf]
        %v2842 = vld [vmem:[%s2791 + $0xc8] sm:$0xf]
        %v2843 = vld [vmem:[%s2791 + $0xcc] sm:$0xf]
        %v2844 = vld [vmem:[%s2791 + $0xd0] sm:$0xf]
        %v2845 = vld [vmem:[%s2791 + $0xd4] sm:$0xf]
        %v2846 = vld [vmem:[%s2791 + $0xd8] sm:$0xf]
        %v2847 = vld [vmem:[%s2791 + $0xdc] sm:$0xf]
        %v2848 = vld [vmem:[%s2791 + $0xe0] sm:$0xf]
        %v2849 = vld [vmem:[%s2791 + $0xe4] sm:$0xf]
        %v2850 = vld [vmem:[%s2791 + $0xe8] sm:$0xf]
        %v2851 = vld [vmem:[%s2791 + $0xec] sm:$0xf]
        %v2852 = vld [vmem:[%s2791 + $0xf0] sm:$0xf]
        %v2853 = vld [vmem:[%s2791 + $0xf4] sm:$0xf]
        %v2854 = vld [vmem:[%s2791 + $0xf8] sm:$0xf]
        %v2855 = vld [vmem:[%s2791 + $0xfc] sm:$0xf]
        %s2856 = scalar_lea.vmem [#allocation6], 384
        %v2857 = vld [vmem:[%s2856] sm:$0xff]
        %v2858 = vld [vmem:[%s2856 + $0x8] sm:$0xff]
        %v2859 = vld [vmem:[%s2856 + $0x10] sm:$0xff]
        %v2860 = vld [vmem:[%s2856 + $0x18] sm:$0xff]
        %v2861 = vld [vmem:[%s2856 + $0x20] sm:$0xff]
        %v2862 = vld [vmem:[%s2856 + $0x28] sm:$0xff]
        %v2863 = vld [vmem:[%s2856 + $0x30] sm:$0xff]
        %v2864 = vld [vmem:[%s2856 + $0x38] sm:$0xff]
        %v2865 = vld [vmem:[%s2856 + $0x40] sm:$0xff]
        %v2866 = vld [vmem:[%s2856 + $0x48] sm:$0xff]
        %v2867 = vld [vmem:[%s2856 + $0x50] sm:$0xff]
        %v2868 = vld [vmem:[%s2856 + $0x58] sm:$0xff]
        %v2869 = vld [vmem:[%s2856 + $0x60] sm:$0xff]
        %v2870 = vld [vmem:[%s2856 + $0x68] sm:$0xff]
        %v2871 = vld [vmem:[%s2856 + $0x70] sm:$0xff]
        %v2872 = vld [vmem:[%s2856 + $0x78] sm:$0xff]
        %v2873 = vld [vmem:[%s2856 + $0x80] sm:$0xff]
        %v2874 = vld [vmem:[%s2856 + $0x88] sm:$0xff]
        %v2875 = vld [vmem:[%s2856 + $0x90] sm:$0xff]
        %v2876 = vld [vmem:[%s2856 + $0x98] sm:$0xff]
        %v2877 = vld [vmem:[%s2856 + $0xa0] sm:$0xff]
        %v2878 = vld [vmem:[%s2856 + $0xa8] sm:$0xff]
        %v2879 = vld [vmem:[%s2856 + $0xb0] sm:$0xff]
        %v2880 = vld [vmem:[%s2856 + $0xb8] sm:$0xff]
        %v2945 = vunpack.c.l.b16 %v2792
        %v2946 = vunpack.c.l.b16 %v2793
        %v2947 = vunpack.c.l.b16 %v2794
        %v2948 = vunpack.c.l.b16 %v2795
        %v2949 = vunpack.c.l.b16 %v2796
        %v2950 = vunpack.c.l.b16 %v2797
        %v2951 = vunpack.c.l.b16 %v2798
        %v2952 = vunpack.c.l.b16 %v2799
        %v2953 = vunpack.c.l.b16 %v2800
        %v2954 = vunpack.c.l.b16 %v2801
        %v2955 = vunpack.c.l.b16 %v2802
        %v2956 = vunpack.c.l.b16 %v2803
        %v2957 = vunpack.c.l.b16 %v2804
        %v2958 = vunpack.c.l.b16 %v2805
        %v2959 = vunpack.c.l.b16 %v2806
        %v2960 = vunpack.c.l.b16 %v2807
        %v2961 = vunpack.c.l.b16 %v2808
        %v2962 = vunpack.c.l.b16 %v2809
        %v2963 = vunpack.c.l.b16 %v2810
        %v2964 = vunpack.c.l.b16 %v2811
        %v2965 = vunpack.c.l.b16 %v2812
        %v2966 = vunpack.c.l.b16 %v2813
        %v2967 = vunpack.c.l.b16 %v2814
        %v2968 = vunpack.c.l.b16 %v2815
        %v2969 = vunpack.c.l.b16 %v2816
        %v2970 = vunpack.c.l.b16 %v2817
        %v2971 = vunpack.c.l.b16 %v2818
        %v2972 = vunpack.c.l.b16 %v2819
        %v2973 = vunpack.c.l.b16 %v2820
        %v2974 = vunpack.c.l.b16 %v2821
        %v2975 = vunpack.c.l.b16 %v2822
        %v2976 = vunpack.c.l.b16 %v2823
        %v2977 = vunpack.c.l.b16 %v2824
        %v2978 = vunpack.c.l.b16 %v2825
        %v2979 = vunpack.c.l.b16 %v2826
        %v2980 = vunpack.c.l.b16 %v2827
        %v2981 = vunpack.c.l.b16 %v2828
        %v2982 = vunpack.c.l.b16 %v2829
        %v2983 = vunpack.c.l.b16 %v2830
        %v2984 = vunpack.c.l.b16 %v2831
        %v2985 = vunpack.c.l.b16 %v2832
        %v2986 = vunpack.c.l.b16 %v2833
        %v2987 = vunpack.c.l.b16 %v2834
        %v2988 = vunpack.c.l.b16 %v2835
        %v2989 = vunpack.c.l.b16 %v2836
        %v2990 = vunpack.c.l.b16 %v2837
        %v2991 = vunpack.c.l.b16 %v2838
        %v2992 = vunpack.c.l.b16 %v2839
        %v2993 = vunpack.c.l.b16 %v2840
        %v2994 = vunpack.c.l.b16 %v2841
        %v2995 = vunpack.c.l.b16 %v2842
        %v2996 = vunpack.c.l.b16 %v2843
        %v2997 = vunpack.c.l.b16 %v2844
        %v2998 = vunpack.c.l.b16 %v2845
        %v2999 = vunpack.c.l.b16 %v2846
        %v3000 = vunpack.c.l.b16 %v2847
        %v3001 = vunpack.c.l.b16 %v2848
        %v3002 = vunpack.c.l.b16 %v2849
        %v3003 = vunpack.c.l.b16 %v2850
        %v3004 = vunpack.c.l.b16 %v2851
        %v3005 = vunpack.c.l.b16 %v2852
        %v3006 = vunpack.c.l.b16 %v2853
        %v3007 = vunpack.c.l.b16 %v2854
        %v3008 = vunpack.c.l.b16 %v2855
        %v3009 = vpack.c.b16 %v2946, %v2945
        %v3010 = vpack.c.b16 %v2948, %v2947
        %v3011 = vpack.c.b16 %v2950, %v2949
        %v3012 = vpack.c.b16 %v2952, %v2951
        %v3013 = vpack.c.b16 %v2954, %v2953
        %v3014 = vpack.c.b16 %v2956, %v2955
        %v3015 = vpack.c.b16 %v2958, %v2957
        %v3016 = vpack.c.b16 %v2960, %v2959
        %v3017 = vpack.c.b16 %v2962, %v2961
        %v3018 = vpack.c.b16 %v2964, %v2963
        %v3019 = vpack.c.b16 %v2966, %v2965
        %v3020 = vpack.c.b16 %v2968, %v2967
        %v3021 = vpack.c.b16 %v2970, %v2969
        %v3022 = vpack.c.b16 %v2972, %v2971
        %v3023 = vpack.c.b16 %v2974, %v2973
        %v3024 = vpack.c.b16 %v2976, %v2975
        %v3025 = vpack.c.b16 %v2978, %v2977
        %v3026 = vpack.c.b16 %v2980, %v2979
        %v3027 = vpack.c.b16 %v2982, %v2981
        %v3028 = vpack.c.b16 %v2984, %v2983
        %v3029 = vpack.c.b16 %v2986, %v2985
        %v3030 = vpack.c.b16 %v2988, %v2987
        %v3031 = vpack.c.b16 %v2990, %v2989
        %v3032 = vpack.c.b16 %v2992, %v2991
        %v3033 = vpack.c.b16 %v2994, %v2993
        %v3034 = vpack.c.b16 %v2996, %v2995
        %v3035 = vpack.c.b16 %v2998, %v2997
        %v3036 = vpack.c.b16 %v3000, %v2999
        %v3037 = vpack.c.b16 %v3002, %v3001
        %v3038 = vpack.c.b16 %v3004, %v3003
        %v3039 = vpack.c.b16 %v3006, %v3005
        %v3040 = vpack.c.b16 %v3008, %v3007
        %v3065 = vunpack.c.l.b16 %v2857
        %v3066 = vunpack.c.h.b16 %v2857
        %v3067 = vunpack.c.l.b16 %v2858
        %v3068 = vunpack.c.h.b16 %v2858
        %v3069 = vunpack.c.l.b16 %v2859
        %v3070 = vunpack.c.h.b16 %v2859
        %v3071 = vunpack.c.l.b16 %v2860
        %v3072 = vunpack.c.h.b16 %v2860
        %v3073 = vunpack.c.l.b16 %v2861
        %v3074 = vunpack.c.h.b16 %v2861
        %v3075 = vunpack.c.l.b16 %v2862
        %v3076 = vunpack.c.h.b16 %v2862
        %v3077 = vunpack.c.l.b16 %v2863
        %v3078 = vunpack.c.h.b16 %v2863
        %v3079 = vunpack.c.l.b16 %v2864
        %v3080 = vunpack.c.h.b16 %v2864
        %v3081 = vunpack.c.l.b16 %v2865
        %v3082 = vunpack.c.h.b16 %v2865
        %v3083 = vunpack.c.l.b16 %v2866
        %v3084 = vunpack.c.h.b16 %v2866
        %v3085 = vunpack.c.l.b16 %v2867
        %v3086 = vunpack.c.h.b16 %v2867
        %v3087 = vunpack.c.l.b16 %v2868
        %v3088 = vunpack.c.h.b16 %v2868
        %v3089 = vunpack.c.l.b16 %v2869
        %v3090 = vunpack.c.h.b16 %v2869
        %v3091 = vunpack.c.l.b16 %v2870
        %v3092 = vunpack.c.h.b16 %v2870
        %v3093 = vunpack.c.l.b16 %v2871
        %v3094 = vunpack.c.h.b16 %v2871
        %v3095 = vunpack.c.l.b16 %v2872
        %v3096 = vunpack.c.h.b16 %v2872
        %v3097 = vunpack.c.l.b16 %v2873
        %v3098 = vunpack.c.h.b16 %v2873
        %v3099 = vunpack.c.l.b16 %v2874
        %v3100 = vunpack.c.h.b16 %v2874
        %v3101 = vunpack.c.l.b16 %v2875
        %v3102 = vunpack.c.h.b16 %v2875
        %v3103 = vunpack.c.l.b16 %v2876
        %v3104 = vunpack.c.h.b16 %v2876
        %v3105 = vunpack.c.l.b16 %v2877
        %v3106 = vunpack.c.h.b16 %v2877
        %v3107 = vunpack.c.l.b16 %v2878
        %v3108 = vunpack.c.h.b16 %v2878
        %v3109 = vunpack.c.l.b16 %v2879
        %v3110 = vunpack.c.h.b16 %v2879
        %v3111 = vunpack.c.l.b16 %v2880
        %v3112 = vunpack.c.h.b16 %v2880
        %v3113 = vpack.c.b16 %v3069, %v3065
        %v3114 = vpack.c.b16 %v3070, %v3066
        %v3115 = vpack.c.b16 %v3071, %v3067
        %v3116 = vpack.c.b16 %v3072, %v3068
        %v3117 = vpack.c.b16 %v3077, %v3073
        %v3118 = vpack.c.b16 %v3078, %v3074
        %v3119 = vpack.c.b16 %v3079, %v3075
        %v3120 = vpack.c.b16 %v3080, %v3076
        %v3121 = vpack.c.b16 %v3085, %v3081
        %v3122 = vpack.c.b16 %v3086, %v3082
        %v3123 = vpack.c.b16 %v3087, %v3083
        %v3124 = vpack.c.b16 %v3088, %v3084
        %v3125 = vpack.c.b16 %v3093, %v3089
        %v3126 = vpack.c.b16 %v3094, %v3090
        %v3127 = vpack.c.b16 %v3095, %v3091
        %v3128 = vpack.c.b16 %v3096, %v3092
        %v3129 = vpack.c.b16 %v3101, %v3097
        %v3130 = vpack.c.b16 %v3102, %v3098
        %v3131 = vpack.c.b16 %v3103, %v3099
        %v3132 = vpack.c.b16 %v3104, %v3100
        %v3133 = vpack.c.b16 %v3109, %v3105
        %v3134 = vpack.c.b16 %v3110, %v3106
        %v3135 = vpack.c.b16 %v3111, %v3107
        %v3136 = vpack.c.b16 %v3112, %v3108
        %v3162 = vsel %vm906, %v3009, 0
        %v3165 = vsel %vm906, %v3010, 0
        %v3168 = vsel %vm906, %v3011, 0
        %v3171 = vsel %vm906, %v3012, 0
        %v3174 = vsel %vm906, %v3013, 0
        %v3177 = vsel %vm906, %v3014, 0
        %v3180 = vsel %vm906, %v3015, 0
        %v3183 = vsel %vm906, %v3016, 0
        %v3186 = vsel %vm906, %v3017, 0
        %v3189 = vsel %vm906, %v3018, 0
        %v3192 = vsel %vm906, %v3019, 0
        %v3195 = vsel %vm906, %v3020, 0
        %v3198 = vsel %vm906, %v3021, 0
        %v3201 = vsel %vm906, %v3022, 0
        %v3204 = vsel %vm906, %v3023, 0
        %v3207 = vsel %vm906, %v3024, 0
        %v3210 = vsel %vm906, %v3025, 0
        %v3213 = vsel %vm906, %v3026, 0
        %v3216 = vsel %vm906, %v3027, 0
        %v3219 = vsel %vm906, %v3028, 0
        %v3222 = vsel %vm906, %v3029, 0
        %v3225 = vsel %vm906, %v3030, 0
        %v3228 = vsel %vm906, %v3031, 0
        %v3231 = vsel %vm906, %v3032, 0
        %v3234 = vsel %vm906, %v3033, 0
        %v3237 = vsel %vm906, %v3034, 0
        %v3240 = vsel %vm906, %v3035, 0
        %v3243 = vsel %vm906, %v3036, 0
        %v3246 = vsel %vm906, %v3037, 0
        %v3249 = vsel %vm906, %v3038, 0
        %v3252 = vsel %vm906, %v3039, 0
        %v3255 = vsel %vm906, %v3040, 0
        %3257 = vmatprep.subr.bf16.mxu0 0
        %3258 = vmatpush1.bf16.msra.mxu0 0
        %3259 = vmatprep.subr.bf16.mxu0 0
        %3260 = vmatpush1.bf16.msra.mxu0 0
        %3261 = vmatprep.subr.bf16.mxu0 %v3134
        %3262 = vmatpush1.bf16.msra.mxu0 %v3133
        %3263 = vmatprep.subr.bf16.mxu0 %v3130
        %3264 = vmatpush1.bf16.msra.mxu0 %v3129
        %3265 = vmatprep.subr.bf16.mxu0 %v3126
        %3266 = vmatpush1.bf16.msra.mxu0 %v3125
        %3267 = vmatprep.subr.bf16.mxu0 %v3122
        %3268 = vmatpush1.bf16.msra.mxu0 %v3121
        %3269 = vmatprep.subr.bf16.mxu0 %v3118
        %3270 = vmatpush1.bf16.msra.mxu0 %v3117
        %3271 = vmatprep.subr.bf16.mxu0 %v3114
        %3272 = vmatpush1.bf16.msra.mxu0 %v3113
        %3273 = vmatprep.subr.bf16.mxu0 0
        %3274 = vmatpush2.bf16.msra.mxu0 0
        %3275 = vmatprep.subr.bf16.mxu0 0
        %3276 = vmatpush2.bf16.msra.mxu0 0
        %3277 = vmatprep.subr.bf16.mxu0 0
        %3278 = vmatpush2.bf16.msra.mxu0 0
        %3279 = vmatprep.subr.bf16.mxu0 0
        %3280 = vmatpush2.bf16.msra.mxu0 0
        %3281 = vmatprep.subr.bf16.mxu0 0
        %3282 = vmatpush2.bf16.msra.mxu0 0
        %3283 = vmatprep.subr.bf16.mxu0 0
        %3284 = vmatpush2.bf16.msra.mxu0 0
        %3285 = vmatprep.subr.bf16.mxu0 0
        %3286 = vmatpush2.bf16.msra.mxu0 0
        %3287 = vmatprep.subr.bf16.mxu0 0
        %3288 = vmatpush2.bf16.msra.mxu0 0
        %3289 = vmatprep.mubr.bf16.mxu0 0
        %3290 = vmatmul.mubr.bf16.gmra.mxu0 %v3162
        %v3291 = vpop.f32.mrf.mxu0
        %v3292 = vadd.f32 0.0, %v3291
        %v3293 = vpop.f32.mrf.mxu0
        %v3294 = vadd.f32 0.0, %v3293
        %v3295 = vpop.f32.mrf.mxu0
        %v3296 = vadd.f32 0.0, %v3295
        %v3297 = vpop.f32.mrf.mxu0
        %v3298 = vadd.f32 0.0, %v3297
        %3299 = vmatprep.mubr.bf16.mxu0 0
        %3300 = vmatmul.mubr.bf16.gmra.mxu0 %v3165
        %v3301 = vpop.f32.mrf.mxu0
        %v3302 = vadd.f32 0.0, %v3301
        %v3303 = vpop.f32.mrf.mxu0
        %v3304 = vadd.f32 0.0, %v3303
        %v3305 = vpop.f32.mrf.mxu0
        %v3306 = vadd.f32 0.0, %v3305
        %v3307 = vpop.f32.mrf.mxu0
        %v3308 = vadd.f32 0.0, %v3307
        %3309 = vmatprep.mubr.bf16.mxu0 0
        %3310 = vmatmul.mubr.bf16.gmra.mxu0 %v3168
        %v3311 = vpop.f32.mrf.mxu0
        %v3312 = vadd.f32 0.0, %v3311
        %v3313 = vpop.f32.mrf.mxu0
        %v3314 = vadd.f32 0.0, %v3313
        %v3315 = vpop.f32.mrf.mxu0
        %v3316 = vadd.f32 0.0, %v3315
        %v3317 = vpop.f32.mrf.mxu0
        %v3318 = vadd.f32 0.0, %v3317
        %3319 = vmatprep.mubr.bf16.mxu0 0
        %3320 = vmatmul.mubr.bf16.gmra.mxu0 %v3171
        %v3321 = vpop.f32.mrf.mxu0
        %v3322 = vadd.f32 0.0, %v3321
        %v3323 = vpop.f32.mrf.mxu0
        %v3324 = vadd.f32 0.0, %v3323
        %v3325 = vpop.f32.mrf.mxu0
        %v3326 = vadd.f32 0.0, %v3325
        %v3327 = vpop.f32.mrf.mxu0
        %v3328 = vadd.f32 0.0, %v3327
        %3329 = vmatprep.mubr.bf16.mxu0 0
        %3330 = vmatmul.mubr.bf16.gmra.mxu0 %v3174
        %v3331 = vpop.f32.mrf.mxu0
        %v3332 = vadd.f32 0.0, %v3331
        %v3333 = vpop.f32.mrf.mxu0
        %v3334 = vadd.f32 0.0, %v3333
        %v3335 = vpop.f32.mrf.mxu0
        %v3336 = vadd.f32 0.0, %v3335
        %v3337 = vpop.f32.mrf.mxu0
        %v3338 = vadd.f32 0.0, %v3337
        %3339 = vmatprep.mubr.bf16.mxu0 0
        %3340 = vmatmul.mubr.bf16.gmra.mxu0 %v3177
        %v3341 = vpop.f32.mrf.mxu0
        %v3342 = vadd.f32 0.0, %v3341
        %v3343 = vpop.f32.mrf.mxu0
        %v3344 = vadd.f32 0.0, %v3343
        %v3345 = vpop.f32.mrf.mxu0
        %v3346 = vadd.f32 0.0, %v3345
        %v3347 = vpop.f32.mrf.mxu0
        %v3348 = vadd.f32 0.0, %v3347
        %3349 = vmatprep.mubr.bf16.mxu0 0
        %3350 = vmatmul.mubr.bf16.gmra.mxu0 %v3180
        %v3351 = vpop.f32.mrf.mxu0
        %v3352 = vadd.f32 0.0, %v3351
        %v3353 = vpop.f32.mrf.mxu0
        %v3354 = vadd.f32 0.0, %v3353
        %v3355 = vpop.f32.mrf.mxu0
        %v3356 = vadd.f32 0.0, %v3355
        %v3357 = vpop.f32.mrf.mxu0
        %v3358 = vadd.f32 0.0, %v3357
        %3359 = vmatprep.mubr.bf16.mxu0 0
        %3360 = vmatmul.mubr.bf16.gmra.mxu0 %v3183
        %v3361 = vpop.f32.mrf.mxu0
        %v3362 = vadd.f32 0.0, %v3361
        %v3363 = vpop.f32.mrf.mxu0
        %v3364 = vadd.f32 0.0, %v3363
        %v3365 = vpop.f32.mrf.mxu0
        %v3366 = vadd.f32 0.0, %v3365
        %v3367 = vpop.f32.mrf.mxu0
        %v3368 = vadd.f32 0.0, %v3367
        %3369 = vmatprep.mubr.bf16.mxu0 0
        %3370 = vmatmul.mubr.bf16.gmra.mxu0 %v3186
        %v3371 = vpop.f32.mrf.mxu0
        %v3372 = vadd.f32 0.0, %v3371
        %v3373 = vpop.f32.mrf.mxu0
        %v3374 = vadd.f32 0.0, %v3373
        %v3375 = vpop.f32.mrf.mxu0
        %v3376 = vadd.f32 0.0, %v3375
        %v3377 = vpop.f32.mrf.mxu0
        %v3378 = vadd.f32 0.0, %v3377
        %3379 = vmatprep.mubr.bf16.mxu0 0
        %3380 = vmatmul.mubr.bf16.gmra.mxu0 %v3189
        %v3381 = vpop.f32.mrf.mxu0
        %v3382 = vadd.f32 0.0, %v3381
        %v3383 = vpop.f32.mrf.mxu0
        %v3384 = vadd.f32 0.0, %v3383
        %v3385 = vpop.f32.mrf.mxu0
        %v3386 = vadd.f32 0.0, %v3385
        %v3387 = vpop.f32.mrf.mxu0
        %v3388 = vadd.f32 0.0, %v3387
        %3389 = vmatprep.mubr.bf16.mxu0 0
        %3390 = vmatmul.mubr.bf16.gmra.mxu0 %v3192
        %v3391 = vpop.f32.mrf.mxu0
        %v3392 = vadd.f32 0.0, %v3391
        %v3393 = vpop.f32.mrf.mxu0
        %v3394 = vadd.f32 0.0, %v3393
        %v3395 = vpop.f32.mrf.mxu0
        %v3396 = vadd.f32 0.0, %v3395
        %v3397 = vpop.f32.mrf.mxu0
        %v3398 = vadd.f32 0.0, %v3397
        %3399 = vmatprep.mubr.bf16.mxu0 0
        %3400 = vmatmul.mubr.bf16.gmra.mxu0 %v3195
        %v3401 = vpop.f32.mrf.mxu0
        %v3402 = vadd.f32 0.0, %v3401
        %v3403 = vpop.f32.mrf.mxu0
        %v3404 = vadd.f32 0.0, %v3403
        %v3405 = vpop.f32.mrf.mxu0
        %v3406 = vadd.f32 0.0, %v3405
        %v3407 = vpop.f32.mrf.mxu0
        %v3408 = vadd.f32 0.0, %v3407
        %3409 = vmatprep.mubr.bf16.mxu0 0
        %3410 = vmatmul.mubr.bf16.gmra.mxu0 %v3198
        %v3411 = vpop.f32.mrf.mxu0
        %v3412 = vadd.f32 0.0, %v3411
        %v3413 = vpop.f32.mrf.mxu0
        %v3414 = vadd.f32 0.0, %v3413
        %v3415 = vpop.f32.mrf.mxu0
        %v3416 = vadd.f32 0.0, %v3415
        %v3417 = vpop.f32.mrf.mxu0
        %v3418 = vadd.f32 0.0, %v3417
        %3419 = vmatprep.mubr.bf16.mxu0 0
        %3420 = vmatmul.mubr.bf16.gmra.mxu0 %v3201
        %v3421 = vpop.f32.mrf.mxu0
        %v3422 = vadd.f32 0.0, %v3421
        %v3423 = vpop.f32.mrf.mxu0
        %v3424 = vadd.f32 0.0, %v3423
        %v3425 = vpop.f32.mrf.mxu0
        %v3426 = vadd.f32 0.0, %v3425
        %v3427 = vpop.f32.mrf.mxu0
        %v3428 = vadd.f32 0.0, %v3427
        %3429 = vmatprep.mubr.bf16.mxu0 0
        %3430 = vmatmul.mubr.bf16.gmra.mxu0 %v3204
        %v3431 = vpop.f32.mrf.mxu0
        %v3432 = vadd.f32 0.0, %v3431
        %v3433 = vpop.f32.mrf.mxu0
        %v3434 = vadd.f32 0.0, %v3433
        %v3435 = vpop.f32.mrf.mxu0
        %v3436 = vadd.f32 0.0, %v3435
        %v3437 = vpop.f32.mrf.mxu0
        %v3438 = vadd.f32 0.0, %v3437
        %3439 = vmatprep.mubr.bf16.mxu0 0
        %3440 = vmatmul.mubr.bf16.gmra.mxu0 %v3207
        %v3441 = vpop.f32.mrf.mxu0
        %v3442 = vadd.f32 0.0, %v3441
        %v3443 = vpop.f32.mrf.mxu0
        %v3444 = vadd.f32 0.0, %v3443
        %v3445 = vpop.f32.mrf.mxu0
        %v3446 = vadd.f32 0.0, %v3445
        %v3447 = vpop.f32.mrf.mxu0
        %v3448 = vadd.f32 0.0, %v3447
        %3449 = vmatprep.mubr.bf16.mxu0 0
        %3450 = vmatmul.mubr.bf16.gmra.mxu0 %v3210
        %v3451 = vpop.f32.mrf.mxu0
        %v3452 = vadd.f32 0.0, %v3451
        %v3453 = vpop.f32.mrf.mxu0
        %v3454 = vadd.f32 0.0, %v3453
        %v3455 = vpop.f32.mrf.mxu0
        %v3456 = vadd.f32 0.0, %v3455
        %v3457 = vpop.f32.mrf.mxu0
        %v3458 = vadd.f32 0.0, %v3457
        %3459 = vmatprep.mubr.bf16.mxu0 0
        %3460 = vmatmul.mubr.bf16.gmra.mxu0 %v3213
        %v3461 = vpop.f32.mrf.mxu0
        %v3462 = vadd.f32 0.0, %v3461
        %v3463 = vpop.f32.mrf.mxu0
        %v3464 = vadd.f32 0.0, %v3463
        %v3465 = vpop.f32.mrf.mxu0
        %v3466 = vadd.f32 0.0, %v3465
        %v3467 = vpop.f32.mrf.mxu0
        %v3468 = vadd.f32 0.0, %v3467
        %3469 = vmatprep.mubr.bf16.mxu0 0
        %3470 = vmatmul.mubr.bf16.gmra.mxu0 %v3216
        %v3471 = vpop.f32.mrf.mxu0
        %v3472 = vadd.f32 0.0, %v3471
        %v3473 = vpop.f32.mrf.mxu0
        %v3474 = vadd.f32 0.0, %v3473
        %v3475 = vpop.f32.mrf.mxu0
        %v3476 = vadd.f32 0.0, %v3475
        %v3477 = vpop.f32.mrf.mxu0
        %v3478 = vadd.f32 0.0, %v3477
        %3479 = vmatprep.mubr.bf16.mxu0 0
        %3480 = vmatmul.mubr.bf16.gmra.mxu0 %v3219
        %v3481 = vpop.f32.mrf.mxu0
        %v3482 = vadd.f32 0.0, %v3481
        %v3483 = vpop.f32.mrf.mxu0
        %v3484 = vadd.f32 0.0, %v3483
        %v3485 = vpop.f32.mrf.mxu0
        %v3486 = vadd.f32 0.0, %v3485
        %v3487 = vpop.f32.mrf.mxu0
        %v3488 = vadd.f32 0.0, %v3487
        %3489 = vmatprep.mubr.bf16.mxu0 0
        %3490 = vmatmul.mubr.bf16.gmra.mxu0 %v3222
        %v3491 = vpop.f32.mrf.mxu0
        %v3492 = vadd.f32 0.0, %v3491
        %v3493 = vpop.f32.mrf.mxu0
        %v3494 = vadd.f32 0.0, %v3493
        %v3495 = vpop.f32.mrf.mxu0
        %v3496 = vadd.f32 0.0, %v3495
        %v3497 = vpop.f32.mrf.mxu0
        %v3498 = vadd.f32 0.0, %v3497
        %3499 = vmatprep.mubr.bf16.mxu0 0
        %3500 = vmatmul.mubr.bf16.gmra.mxu0 %v3225
        %v3501 = vpop.f32.mrf.mxu0
        %v3502 = vadd.f32 0.0, %v3501
        %v3503 = vpop.f32.mrf.mxu0
        %v3504 = vadd.f32 0.0, %v3503
        %v3505 = vpop.f32.mrf.mxu0
        %v3506 = vadd.f32 0.0, %v3505
        %v3507 = vpop.f32.mrf.mxu0
        %v3508 = vadd.f32 0.0, %v3507
        %3509 = vmatprep.mubr.bf16.mxu0 0
        %3510 = vmatmul.mubr.bf16.gmra.mxu0 %v3228
        %v3511 = vpop.f32.mrf.mxu0
        %v3512 = vadd.f32 0.0, %v3511
        %v3513 = vpop.f32.mrf.mxu0
        %v3514 = vadd.f32 0.0, %v3513
        %v3515 = vpop.f32.mrf.mxu0
        %v3516 = vadd.f32 0.0, %v3515
        %v3517 = vpop.f32.mrf.mxu0
        %v3518 = vadd.f32 0.0, %v3517
        %3519 = vmatprep.mubr.bf16.mxu0 0
        %3520 = vmatmul.mubr.bf16.gmra.mxu0 %v3231
        %v3521 = vpop.f32.mrf.mxu0
        %v3522 = vadd.f32 0.0, %v3521
        %v3523 = vpop.f32.mrf.mxu0
        %v3524 = vadd.f32 0.0, %v3523
        %v3525 = vpop.f32.mrf.mxu0
        %v3526 = vadd.f32 0.0, %v3525
        %v3527 = vpop.f32.mrf.mxu0
        %v3528 = vadd.f32 0.0, %v3527
        %3529 = vmatprep.mubr.bf16.mxu0 0
        %3530 = vmatmul.mubr.bf16.gmra.mxu0 %v3234
        %v3531 = vpop.f32.mrf.mxu0
        %v3532 = vadd.f32 0.0, %v3531
        %v3533 = vpop.f32.mrf.mxu0
        %v3534 = vadd.f32 0.0, %v3533
        %v3535 = vpop.f32.mrf.mxu0
        %v3536 = vadd.f32 0.0, %v3535
        %v3537 = vpop.f32.mrf.mxu0
        %v3538 = vadd.f32 0.0, %v3537
        %3539 = vmatprep.mubr.bf16.mxu0 0
        %3540 = vmatmul.mubr.bf16.gmra.mxu0 %v3237
        %v3541 = vpop.f32.mrf.mxu0
        %v3542 = vadd.f32 0.0, %v3541
        %v3543 = vpop.f32.mrf.mxu0
        %v3544 = vadd.f32 0.0, %v3543
        %v3545 = vpop.f32.mrf.mxu0
        %v3546 = vadd.f32 0.0, %v3545
        %v3547 = vpop.f32.mrf.mxu0
        %v3548 = vadd.f32 0.0, %v3547
        %3549 = vmatprep.mubr.bf16.mxu0 0
        %3550 = vmatmul.mubr.bf16.gmra.mxu0 %v3240
        %v3551 = vpop.f32.mrf.mxu0
        %v3552 = vadd.f32 0.0, %v3551
        %v3553 = vpop.f32.mrf.mxu0
        %v3554 = vadd.f32 0.0, %v3553
        %v3555 = vpop.f32.mrf.mxu0
        %v3556 = vadd.f32 0.0, %v3555
        %v3557 = vpop.f32.mrf.mxu0
        %v3558 = vadd.f32 0.0, %v3557
        %3559 = vmatprep.mubr.bf16.mxu0 0
        %3560 = vmatmul.mubr.bf16.gmra.mxu0 %v3243
        %v3561 = vpop.f32.mrf.mxu0
        %v3562 = vadd.f32 0.0, %v3561
        %v3563 = vpop.f32.mrf.mxu0
        %v3564 = vadd.f32 0.0, %v3563
        %v3565 = vpop.f32.mrf.mxu0
        %v3566 = vadd.f32 0.0, %v3565
        %v3567 = vpop.f32.mrf.mxu0
        %v3568 = vadd.f32 0.0, %v3567
        %3569 = vmatprep.mubr.bf16.mxu0 0
        %3570 = vmatmul.mubr.bf16.gmra.mxu0 %v3246
        %v3571 = vpop.f32.mrf.mxu0
        %v3572 = vadd.f32 0.0, %v3571
        %v3573 = vpop.f32.mrf.mxu0
        %v3574 = vadd.f32 0.0, %v3573
        %v3575 = vpop.f32.mrf.mxu0
        %v3576 = vadd.f32 0.0, %v3575
        %v3577 = vpop.f32.mrf.mxu0
        %v3578 = vadd.f32 0.0, %v3577
        %3579 = vmatprep.mubr.bf16.mxu0 0
        %3580 = vmatmul.mubr.bf16.gmra.mxu0 %v3249
        %v3581 = vpop.f32.mrf.mxu0
        %v3582 = vadd.f32 0.0, %v3581
        %v3583 = vpop.f32.mrf.mxu0
        %v3584 = vadd.f32 0.0, %v3583
        %v3585 = vpop.f32.mrf.mxu0
        %v3586 = vadd.f32 0.0, %v3585
        %v3587 = vpop.f32.mrf.mxu0
        %v3588 = vadd.f32 0.0, %v3587
        %3589 = vmatprep.mubr.bf16.mxu0 0
        %3590 = vmatmul.mubr.bf16.gmra.mxu0 %v3252
        %v3591 = vpop.f32.mrf.mxu0
        %v3592 = vadd.f32 0.0, %v3591
        %v3593 = vpop.f32.mrf.mxu0
        %v3594 = vadd.f32 0.0, %v3593
        %v3595 = vpop.f32.mrf.mxu0
        %v3596 = vadd.f32 0.0, %v3595
        %v3597 = vpop.f32.mrf.mxu0
        %v3598 = vadd.f32 0.0, %v3597
        %3599 = vmatprep.mubr.bf16.mxu0 0
        %3600 = vmatmul.mubr.bf16.gmra.mxu0 %v3255
        %v3601 = vpop.f32.mrf.mxu0
        %v3602 = vadd.f32 0.0, %v3601
        %v3603 = vpop.f32.mrf.mxu0
        %v3604 = vadd.f32 0.0, %v3603
        %v3605 = vpop.f32.mrf.mxu0
        %v3606 = vadd.f32 0.0, %v3605
        %v3607 = vpop.f32.mrf.mxu0
        %v3608 = vadd.f32 0.0, %v3607
        %3609 = vdwg.mxu0
        %3610 = vmatprep.subr.bf16.mxu0 0
        %3611 = vmatpush1.bf16.msra.mxu0 0
        %3612 = vmatprep.subr.bf16.mxu0 0
        %3613 = vmatpush1.bf16.msra.mxu0 0
        %3614 = vmatprep.subr.bf16.mxu0 %v3136
        %3615 = vmatpush1.bf16.msra.mxu0 %v3135
        %3616 = vmatprep.subr.bf16.mxu0 %v3132
        %3617 = vmatpush1.bf16.msra.mxu0 %v3131
        %3618 = vmatprep.subr.bf16.mxu0 %v3128
        %3619 = vmatpush1.bf16.msra.mxu0 %v3127
        %3620 = vmatprep.subr.bf16.mxu0 %v3124
        %3621 = vmatpush1.bf16.msra.mxu0 %v3123
        %3622 = vmatprep.subr.bf16.mxu0 %v3120
        %3623 = vmatpush1.bf16.msra.mxu0 %v3119
        %3624 = vmatprep.subr.bf16.mxu0 %v3116
        %3625 = vmatpush1.bf16.msra.mxu0 %v3115
        %3626 = vmatprep.subr.bf16.mxu0 0
        %3627 = vmatpush2.bf16.msra.mxu0 0
        %3628 = vmatprep.subr.bf16.mxu0 0
        %3629 = vmatpush2.bf16.msra.mxu0 0
        %3630 = vmatprep.subr.bf16.mxu0 0
        %3631 = vmatpush2.bf16.msra.mxu0 0
        %3632 = vmatprep.subr.bf16.mxu0 0
        %3633 = vmatpush2.bf16.msra.mxu0 0
        %3634 = vmatprep.subr.bf16.mxu0 0
        %3635 = vmatpush2.bf16.msra.mxu0 0
        %3636 = vmatprep.subr.bf16.mxu0 0
        %3637 = vmatpush2.bf16.msra.mxu0 0
        %3638 = vmatprep.subr.bf16.mxu0 0
        %3639 = vmatpush2.bf16.msra.mxu0 0
        %3640 = vmatprep.subr.bf16.mxu0 0
        %3641 = vmatpush2.bf16.msra.mxu0 0
        %3642 = vmatprep.mubr.bf16.mxu0 0
        %3643 = vmatmul.mubr.bf16.gmra.mxu0 %v3162
        %v3644 = vpop.f32.mrf.mxu0
        %v3645 = vadd.f32 0.0, %v3644
        %v3646 = vpop.f32.mrf.mxu0
        %v3647 = vadd.f32 0.0, %v3646
        %v3648 = vpop.f32.mrf.mxu0
        %v3649 = vadd.f32 0.0, %v3648
        %v3650 = vpop.f32.mrf.mxu0
        %v3651 = vadd.f32 0.0, %v3650
        %3652 = vmatprep.mubr.bf16.mxu0 0
        %3653 = vmatmul.mubr.bf16.gmra.mxu0 %v3165
        %v3654 = vpop.f32.mrf.mxu0
        %v3655 = vadd.f32 0.0, %v3654
        %v3656 = vpop.f32.mrf.mxu0
        %v3657 = vadd.f32 0.0, %v3656
        %v3658 = vpop.f32.mrf.mxu0
        %v3659 = vadd.f32 0.0, %v3658
        %v3660 = vpop.f32.mrf.mxu0
        %v3661 = vadd.f32 0.0, %v3660
        %3662 = vmatprep.mubr.bf16.mxu0 0
        %3663 = vmatmul.mubr.bf16.gmra.mxu0 %v3168
        %v3664 = vpop.f32.mrf.mxu0
        %v3665 = vadd.f32 0.0, %v3664
        %v3666 = vpop.f32.mrf.mxu0
        %v3667 = vadd.f32 0.0, %v3666
        %v3668 = vpop.f32.mrf.mxu0
        %v3669 = vadd.f32 0.0, %v3668
        %v3670 = vpop.f32.mrf.mxu0
        %v3671 = vadd.f32 0.0, %v3670
        %3672 = vmatprep.mubr.bf16.mxu0 0
        %3673 = vmatmul.mubr.bf16.gmra.mxu0 %v3171
        %v3674 = vpop.f32.mrf.mxu0
        %v3675 = vadd.f32 0.0, %v3674
        %v3676 = vpop.f32.mrf.mxu0
        %v3677 = vadd.f32 0.0, %v3676
        %v3678 = vpop.f32.mrf.mxu0
        %v3679 = vadd.f32 0.0, %v3678
        %v3680 = vpop.f32.mrf.mxu0
        %v3681 = vadd.f32 0.0, %v3680
        %3682 = vmatprep.mubr.bf16.mxu0 0
        %3683 = vmatmul.mubr.bf16.gmra.mxu0 %v3174
        %v3684 = vpop.f32.mrf.mxu0
        %v3685 = vadd.f32 0.0, %v3684
        %v3686 = vpop.f32.mrf.mxu0
        %v3687 = vadd.f32 0.0, %v3686
        %v3688 = vpop.f32.mrf.mxu0
        %v3689 = vadd.f32 0.0, %v3688
        %v3690 = vpop.f32.mrf.mxu0
        %v3691 = vadd.f32 0.0, %v3690
        %3692 = vmatprep.mubr.bf16.mxu0 0
        %3693 = vmatmul.mubr.bf16.gmra.mxu0 %v3177
        %v3694 = vpop.f32.mrf.mxu0
        %v3695 = vadd.f32 0.0, %v3694
        %v3696 = vpop.f32.mrf.mxu0
        %v3697 = vadd.f32 0.0, %v3696
        %v3698 = vpop.f32.mrf.mxu0
        %v3699 = vadd.f32 0.0, %v3698
        %v3700 = vpop.f32.mrf.mxu0
        %v3701 = vadd.f32 0.0, %v3700
        %3702 = vmatprep.mubr.bf16.mxu0 0
        %3703 = vmatmul.mubr.bf16.gmra.mxu0 %v3180
        %v3704 = vpop.f32.mrf.mxu0
        %v3705 = vadd.f32 0.0, %v3704
        %v3706 = vpop.f32.mrf.mxu0
        %v3707 = vadd.f32 0.0, %v3706
        %v3708 = vpop.f32.mrf.mxu0
        %v3709 = vadd.f32 0.0, %v3708
        %v3710 = vpop.f32.mrf.mxu0
        %v3711 = vadd.f32 0.0, %v3710
        %3712 = vmatprep.mubr.bf16.mxu0 0
        %3713 = vmatmul.mubr.bf16.gmra.mxu0 %v3183
        %v3714 = vpop.f32.mrf.mxu0
        %v3715 = vadd.f32 0.0, %v3714
        %v3716 = vpop.f32.mrf.mxu0
        %v3717 = vadd.f32 0.0, %v3716
        %v3718 = vpop.f32.mrf.mxu0
        %v3719 = vadd.f32 0.0, %v3718
        %v3720 = vpop.f32.mrf.mxu0
        %v3721 = vadd.f32 0.0, %v3720
        %3722 = vmatprep.mubr.bf16.mxu0 0
        %3723 = vmatmul.mubr.bf16.gmra.mxu0 %v3186
        %v3724 = vpop.f32.mrf.mxu0
        %v3725 = vadd.f32 0.0, %v3724
        %v3726 = vpop.f32.mrf.mxu0
        %v3727 = vadd.f32 0.0, %v3726
        %v3728 = vpop.f32.mrf.mxu0
        %v3729 = vadd.f32 0.0, %v3728
        %v3730 = vpop.f32.mrf.mxu0
        %v3731 = vadd.f32 0.0, %v3730
        %3732 = vmatprep.mubr.bf16.mxu0 0
        %3733 = vmatmul.mubr.bf16.gmra.mxu0 %v3189
        %v3734 = vpop.f32.mrf.mxu0
        %v3735 = vadd.f32 0.0, %v3734
        %v3736 = vpop.f32.mrf.mxu0
        %v3737 = vadd.f32 0.0, %v3736
        %v3738 = vpop.f32.mrf.mxu0
        %v3739 = vadd.f32 0.0, %v3738
        %v3740 = vpop.f32.mrf.mxu0
        %v3741 = vadd.f32 0.0, %v3740
        %3742 = vmatprep.mubr.bf16.mxu0 0
        %3743 = vmatmul.mubr.bf16.gmra.mxu0 %v3192
        %v3744 = vpop.f32.mrf.mxu0
        %v3745 = vadd.f32 0.0, %v3744
        %v3746 = vpop.f32.mrf.mxu0
        %v3747 = vadd.f32 0.0, %v3746
        %v3748 = vpop.f32.mrf.mxu0
        %v3749 = vadd.f32 0.0, %v3748
        %v3750 = vpop.f32.mrf.mxu0
        %v3751 = vadd.f32 0.0, %v3750
        %3752 = vmatprep.mubr.bf16.mxu0 0
        %3753 = vmatmul.mubr.bf16.gmra.mxu0 %v3195
        %v3754 = vpop.f32.mrf.mxu0
        %v3755 = vadd.f32 0.0, %v3754
        %v3756 = vpop.f32.mrf.mxu0
        %v3757 = vadd.f32 0.0, %v3756
        %v3758 = vpop.f32.mrf.mxu0
        %v3759 = vadd.f32 0.0, %v3758
        %v3760 = vpop.f32.mrf.mxu0
        %v3761 = vadd.f32 0.0, %v3760
        %3762 = vmatprep.mubr.bf16.mxu0 0
        %3763 = vmatmul.mubr.bf16.gmra.mxu0 %v3198
        %v3764 = vpop.f32.mrf.mxu0
        %v3765 = vadd.f32 0.0, %v3764
        %v3766 = vpop.f32.mrf.mxu0
        %v3767 = vadd.f32 0.0, %v3766
        %v3768 = vpop.f32.mrf.mxu0
        %v3769 = vadd.f32 0.0, %v3768
        %v3770 = vpop.f32.mrf.mxu0
        %v3771 = vadd.f32 0.0, %v3770
        %3772 = vmatprep.mubr.bf16.mxu0 0
        %3773 = vmatmul.mubr.bf16.gmra.mxu0 %v3201
        %v3774 = vpop.f32.mrf.mxu0
        %v3775 = vadd.f32 0.0, %v3774
        %v3776 = vpop.f32.mrf.mxu0
        %v3777 = vadd.f32 0.0, %v3776
        %v3778 = vpop.f32.mrf.mxu0
        %v3779 = vadd.f32 0.0, %v3778
        %v3780 = vpop.f32.mrf.mxu0
        %v3781 = vadd.f32 0.0, %v3780
        %3782 = vmatprep.mubr.bf16.mxu0 0
        %3783 = vmatmul.mubr.bf16.gmra.mxu0 %v3204
        %v3784 = vpop.f32.mrf.mxu0
        %v3785 = vadd.f32 0.0, %v3784
        %v3786 = vpop.f32.mrf.mxu0
        %v3787 = vadd.f32 0.0, %v3786
        %v3788 = vpop.f32.mrf.mxu0
        %v3789 = vadd.f32 0.0, %v3788
        %v3790 = vpop.f32.mrf.mxu0
        %v3791 = vadd.f32 0.0, %v3790
        %3792 = vmatprep.mubr.bf16.mxu0 0
        %3793 = vmatmul.mubr.bf16.gmra.mxu0 %v3207
        %v3794 = vpop.f32.mrf.mxu0
        %v3795 = vadd.f32 0.0, %v3794
        %v3796 = vpop.f32.mrf.mxu0
        %v3797 = vadd.f32 0.0, %v3796
        %v3798 = vpop.f32.mrf.mxu0
        %v3799 = vadd.f32 0.0, %v3798
        %v3800 = vpop.f32.mrf.mxu0
        %v3801 = vadd.f32 0.0, %v3800
        %3802 = vmatprep.mubr.bf16.mxu0 0
        %3803 = vmatmul.mubr.bf16.gmra.mxu0 %v3210
        %v3804 = vpop.f32.mrf.mxu0
        %v3805 = vadd.f32 0.0, %v3804
        %v3806 = vpop.f32.mrf.mxu0
        %v3807 = vadd.f32 0.0, %v3806
        %v3808 = vpop.f32.mrf.mxu0
        %v3809 = vadd.f32 0.0, %v3808
        %v3810 = vpop.f32.mrf.mxu0
        %v3811 = vadd.f32 0.0, %v3810
        %3812 = vmatprep.mubr.bf16.mxu0 0
        %3813 = vmatmul.mubr.bf16.gmra.mxu0 %v3213
        %v3814 = vpop.f32.mrf.mxu0
        %v3815 = vadd.f32 0.0, %v3814
        %v3816 = vpop.f32.mrf.mxu0
        %v3817 = vadd.f32 0.0, %v3816
        %v3818 = vpop.f32.mrf.mxu0
        %v3819 = vadd.f32 0.0, %v3818
        %v3820 = vpop.f32.mrf.mxu0
        %v3821 = vadd.f32 0.0, %v3820
        %3822 = vmatprep.mubr.bf16.mxu0 0
        %3823 = vmatmul.mubr.bf16.gmra.mxu0 %v3216
        %v3824 = vpop.f32.mrf.mxu0
        %v3825 = vadd.f32 0.0, %v3824
        %v3826 = vpop.f32.mrf.mxu0
        %v3827 = vadd.f32 0.0, %v3826
        %v3828 = vpop.f32.mrf.mxu0
        %v3829 = vadd.f32 0.0, %v3828
        %v3830 = vpop.f32.mrf.mxu0
        %v3831 = vadd.f32 0.0, %v3830
        %3832 = vmatprep.mubr.bf16.mxu0 0
        %3833 = vmatmul.mubr.bf16.gmra.mxu0 %v3219
        %v3834 = vpop.f32.mrf.mxu0
        %v3835 = vadd.f32 0.0, %v3834
        %v3836 = vpop.f32.mrf.mxu0
        %v3837 = vadd.f32 0.0, %v3836
        %v3838 = vpop.f32.mrf.mxu0
        %v3839 = vadd.f32 0.0, %v3838
        %v3840 = vpop.f32.mrf.mxu0
        %v3841 = vadd.f32 0.0, %v3840
        %3842 = vmatprep.mubr.bf16.mxu0 0
        %3843 = vmatmul.mubr.bf16.gmra.mxu0 %v3222
        %v3844 = vpop.f32.mrf.mxu0
        %v3845 = vadd.f32 0.0, %v3844
        %v3846 = vpop.f32.mrf.mxu0
        %v3847 = vadd.f32 0.0, %v3846
        %v3848 = vpop.f32.mrf.mxu0
        %v3849 = vadd.f32 0.0, %v3848
        %v3850 = vpop.f32.mrf.mxu0
        %v3851 = vadd.f32 0.0, %v3850
        %3852 = vmatprep.mubr.bf16.mxu0 0
        %3853 = vmatmul.mubr.bf16.gmra.mxu0 %v3225
        %v3854 = vpop.f32.mrf.mxu0
        %v3855 = vadd.f32 0.0, %v3854
        %v3856 = vpop.f32.mrf.mxu0
        %v3857 = vadd.f32 0.0, %v3856
        %v3858 = vpop.f32.mrf.mxu0
        %v3859 = vadd.f32 0.0, %v3858
        %v3860 = vpop.f32.mrf.mxu0
        %v3861 = vadd.f32 0.0, %v3860
        %3862 = vmatprep.mubr.bf16.mxu0 0
        %3863 = vmatmul.mubr.bf16.gmra.mxu0 %v3228
        %v3864 = vpop.f32.mrf.mxu0
        %v3865 = vadd.f32 0.0, %v3864
        %v3866 = vpop.f32.mrf.mxu0
        %v3867 = vadd.f32 0.0, %v3866
        %v3868 = vpop.f32.mrf.mxu0
        %v3869 = vadd.f32 0.0, %v3868
        %v3870 = vpop.f32.mrf.mxu0
        %v3871 = vadd.f32 0.0, %v3870
        %3872 = vmatprep.mubr.bf16.mxu0 0
        %3873 = vmatmul.mubr.bf16.gmra.mxu0 %v3231
        %v3874 = vpop.f32.mrf.mxu0
        %v3875 = vadd.f32 0.0, %v3874
        %v3876 = vpop.f32.mrf.mxu0
        %v3877 = vadd.f32 0.0, %v3876
        %v3878 = vpop.f32.mrf.mxu0
        %v3879 = vadd.f32 0.0, %v3878
        %v3880 = vpop.f32.mrf.mxu0
        %v3881 = vadd.f32 0.0, %v3880
        %3882 = vmatprep.mubr.bf16.mxu0 0
        %3883 = vmatmul.mubr.bf16.gmra.mxu0 %v3234
        %v3884 = vpop.f32.mrf.mxu0
        %v3885 = vadd.f32 0.0, %v3884
        %v3886 = vpop.f32.mrf.mxu0
        %v3887 = vadd.f32 0.0, %v3886
        %v3888 = vpop.f32.mrf.mxu0
        %v3889 = vadd.f32 0.0, %v3888
        %v3890 = vpop.f32.mrf.mxu0
        %v3891 = vadd.f32 0.0, %v3890
        %3892 = vmatprep.mubr.bf16.mxu0 0
        %3893 = vmatmul.mubr.bf16.gmra.mxu0 %v3237
        %v3894 = vpop.f32.mrf.mxu0
        %v3895 = vadd.f32 0.0, %v3894
        %v3896 = vpop.f32.mrf.mxu0
        %v3897 = vadd.f32 0.0, %v3896
        %v3898 = vpop.f32.mrf.mxu0
        %v3899 = vadd.f32 0.0, %v3898
        %v3900 = vpop.f32.mrf.mxu0
        %v3901 = vadd.f32 0.0, %v3900
        %3902 = vmatprep.mubr.bf16.mxu0 0
        %3903 = vmatmul.mubr.bf16.gmra.mxu0 %v3240
        %v3904 = vpop.f32.mrf.mxu0
        %v3905 = vadd.f32 0.0, %v3904
        %v3906 = vpop.f32.mrf.mxu0
        %v3907 = vadd.f32 0.0, %v3906
        %v3908 = vpop.f32.mrf.mxu0
        %v3909 = vadd.f32 0.0, %v3908
        %v3910 = vpop.f32.mrf.mxu0
        %v3911 = vadd.f32 0.0, %v3910
        %3912 = vmatprep.mubr.bf16.mxu0 0
        %3913 = vmatmul.mubr.bf16.gmra.mxu0 %v3243
        %v3914 = vpop.f32.mrf.mxu0
        %v3915 = vadd.f32 0.0, %v3914
        %v3916 = vpop.f32.mrf.mxu0
        %v3917 = vadd.f32 0.0, %v3916
        %v3918 = vpop.f32.mrf.mxu0
        %v3919 = vadd.f32 0.0, %v3918
        %v3920 = vpop.f32.mrf.mxu0
        %v3921 = vadd.f32 0.0, %v3920
        %3922 = vmatprep.mubr.bf16.mxu0 0
        %3923 = vmatmul.mubr.bf16.gmra.mxu0 %v3246
        %v3924 = vpop.f32.mrf.mxu0
        %v3925 = vadd.f32 0.0, %v3924
        %v3926 = vpop.f32.mrf.mxu0
        %v3927 = vadd.f32 0.0, %v3926
        %v3928 = vpop.f32.mrf.mxu0
        %v3929 = vadd.f32 0.0, %v3928
        %v3930 = vpop.f32.mrf.mxu0
        %v3931 = vadd.f32 0.0, %v3930
        %3932 = vmatprep.mubr.bf16.mxu0 0
        %3933 = vmatmul.mubr.bf16.gmra.mxu0 %v3249
        %v3934 = vpop.f32.mrf.mxu0
        %v3935 = vadd.f32 0.0, %v3934
        %v3936 = vpop.f32.mrf.mxu0
        %v3937 = vadd.f32 0.0, %v3936
        %v3938 = vpop.f32.mrf.mxu0
        %v3939 = vadd.f32 0.0, %v3938
        %v3940 = vpop.f32.mrf.mxu0
        %v3941 = vadd.f32 0.0, %v3940
        %3942 = vmatprep.mubr.bf16.mxu0 0
        %3943 = vmatmul.mubr.bf16.gmra.mxu0 %v3252
        %v3944 = vpop.f32.mrf.mxu0
        %v3945 = vadd.f32 0.0, %v3944
        %v3946 = vpop.f32.mrf.mxu0
        %v3947 = vadd.f32 0.0, %v3946
        %v3948 = vpop.f32.mrf.mxu0
        %v3949 = vadd.f32 0.0, %v3948
        %v3950 = vpop.f32.mrf.mxu0
        %v3951 = vadd.f32 0.0, %v3950
        %3952 = vmatprep.mubr.bf16.mxu0 0
        %3953 = vmatmul.mubr.bf16.gmra.mxu0 %v3255
        %v3954 = vpop.f32.mrf.mxu0
        %v3955 = vadd.f32 0.0, %v3954
        %v3956 = vpop.f32.mrf.mxu0
        %v3957 = vadd.f32 0.0, %v3956
        %v3958 = vpop.f32.mrf.mxu0
        %v3959 = vadd.f32 0.0, %v3958
        %v3960 = vpop.f32.mrf.mxu0
        %v3961 = vadd.f32 0.0, %v3960
        %3962 = vdwg.mxu0
        %v3963 = vadd.f32 %v2120, %v3292
        %v3964 = vadd.f32 %v2122, %v3294
        %v3965 = vadd.f32 %v2473, %v3645
        %v3966 = vadd.f32 %v2475, %v3647
        %v3967 = vadd.f32 %v2124, %v3296
        %v3968 = vadd.f32 %v2126, %v3298
        %v3969 = vadd.f32 %v2477, %v3649
        %v3970 = vadd.f32 %v2479, %v3651
        %v3971 = vadd.f32 %v2130, %v3302
        %v3972 = vadd.f32 %v2132, %v3304
        %v3973 = vadd.f32 %v2483, %v3655
        %v3974 = vadd.f32 %v2485, %v3657
        %v3975 = vadd.f32 %v2134, %v3306
        %v3976 = vadd.f32 %v2136, %v3308
        %v3977 = vadd.f32 %v2487, %v3659
        %v3978 = vadd.f32 %v2489, %v3661
        %v3979 = vadd.f32 %v2140, %v3312
        %v3980 = vadd.f32 %v2142, %v3314
        %v3981 = vadd.f32 %v2493, %v3665
        %v3982 = vadd.f32 %v2495, %v3667
        %v3983 = vadd.f32 %v2144, %v3316
        %v3984 = vadd.f32 %v2146, %v3318
        %v3985 = vadd.f32 %v2497, %v3669
        %v3986 = vadd.f32 %v2499, %v3671
        %v3987 = vadd.f32 %v2150, %v3322
        %v3988 = vadd.f32 %v2152, %v3324
        %v3989 = vadd.f32 %v2503, %v3675
        %v3990 = vadd.f32 %v2505, %v3677
        %v3991 = vadd.f32 %v2154, %v3326
        %v3992 = vadd.f32 %v2156, %v3328
        %v3993 = vadd.f32 %v2507, %v3679
        %v3994 = vadd.f32 %v2509, %v3681
        %v3995 = vadd.f32 %v2160, %v3332
        %v3996 = vadd.f32 %v2162, %v3334
        %v3997 = vadd.f32 %v2513, %v3685
        %v3998 = vadd.f32 %v2515, %v3687
        %v3999 = vadd.f32 %v2164, %v3336
        %v4000 = vadd.f32 %v2166, %v3338
        %v4001 = vadd.f32 %v2517, %v3689
        %v4002 = vadd.f32 %v2519, %v3691
        %v4003 = vadd.f32 %v2170, %v3342
        %v4004 = vadd.f32 %v2172, %v3344
        %v4005 = vadd.f32 %v2523, %v3695
        %v4006 = vadd.f32 %v2525, %v3697
        %v4007 = vadd.f32 %v2174, %v3346
        %v4008 = vadd.f32 %v2176, %v3348
        %v4009 = vadd.f32 %v2527, %v3699
        %v4010 = vadd.f32 %v2529, %v3701
        %v4011 = vadd.f32 %v2180, %v3352
        %v4012 = vadd.f32 %v2182, %v3354
        %v4013 = vadd.f32 %v2533, %v3705
        %v4014 = vadd.f32 %v2535, %v3707
        %v4015 = vadd.f32 %v2184, %v3356
        %v4016 = vadd.f32 %v2186, %v3358
        %v4017 = vadd.f32 %v2537, %v3709
        %v4018 = vadd.f32 %v2539, %v3711
        %v4019 = vadd.f32 %v2190, %v3362
        %v4020 = vadd.f32 %v2192, %v3364
        %v4021 = vadd.f32 %v2543, %v3715
        %v4022 = vadd.f32 %v2545, %v3717
        %v4023 = vadd.f32 %v2194, %v3366
        %v4024 = vadd.f32 %v2196, %v3368
        %v4025 = vadd.f32 %v2547, %v3719
        %v4026 = vadd.f32 %v2549, %v3721
        %v4027 = vadd.f32 %v2200, %v3372
        %v4028 = vadd.f32 %v2202, %v3374
        %v4029 = vadd.f32 %v2553, %v3725
        %v4030 = vadd.f32 %v2555, %v3727
        %v4031 = vadd.f32 %v2204, %v3376
        %v4032 = vadd.f32 %v2206, %v3378
        %v4033 = vadd.f32 %v2557, %v3729
        %v4034 = vadd.f32 %v2559, %v3731
        %v4035 = vadd.f32 %v2210, %v3382
        %v4036 = vadd.f32 %v2212, %v3384
        %v4037 = vadd.f32 %v2563, %v3735
        %v4038 = vadd.f32 %v2565, %v3737
        %v4039 = vadd.f32 %v2214, %v3386
        %v4040 = vadd.f32 %v2216, %v3388
        %v4041 = vadd.f32 %v2567, %v3739
        %v4042 = vadd.f32 %v2569, %v3741
        %v4043 = vadd.f32 %v2220, %v3392
        %v4044 = vadd.f32 %v2222, %v3394
        %v4045 = vadd.f32 %v2573, %v3745
        %v4046 = vadd.f32 %v2575, %v3747
        %v4047 = vadd.f32 %v2224, %v3396
        %v4048 = vadd.f32 %v2226, %v3398
        %v4049 = vadd.f32 %v2577, %v3749
        %v4050 = vadd.f32 %v2579, %v3751
        %v4051 = vadd.f32 %v2230, %v3402
        %v4052 = vadd.f32 %v2232, %v3404
        %v4053 = vadd.f32 %v2583, %v3755
        %v4054 = vadd.f32 %v2585, %v3757
        %v4055 = vadd.f32 %v2234, %v3406
        %v4056 = vadd.f32 %v2236, %v3408
        %v4057 = vadd.f32 %v2587, %v3759
        %v4058 = vadd.f32 %v2589, %v3761
        %v4059 = vadd.f32 %v2240, %v3412
        %v4060 = vadd.f32 %v2242, %v3414
        %v4061 = vadd.f32 %v2593, %v3765
        %v4062 = vadd.f32 %v2595, %v3767
        %v4063 = vadd.f32 %v2244, %v3416
        %v4064 = vadd.f32 %v2246, %v3418
        %v4065 = vadd.f32 %v2597, %v3769
        %v4066 = vadd.f32 %v2599, %v3771
        %v4067 = vadd.f32 %v2250, %v3422
        %v4068 = vadd.f32 %v2252, %v3424
        %v4069 = vadd.f32 %v2603, %v3775
        %v4070 = vadd.f32 %v2605, %v3777
        %v4071 = vadd.f32 %v2254, %v3426
        %v4072 = vadd.f32 %v2256, %v3428
        %v4073 = vadd.f32 %v2607, %v3779
        %v4074 = vadd.f32 %v2609, %v3781
        %v4075 = vadd.f32 %v2260, %v3432
        %v4076 = vadd.f32 %v2262, %v3434
        %v4077 = vadd.f32 %v2613, %v3785
        %v4078 = vadd.f32 %v2615, %v3787
        %v4079 = vadd.f32 %v2264, %v3436
        %v4080 = vadd.f32 %v2266, %v3438
        %v4081 = vadd.f32 %v2617, %v3789
        %v4082 = vadd.f32 %v2619, %v3791
        %v4083 = vadd.f32 %v2270, %v3442
        %v4084 = vadd.f32 %v2272, %v3444
        %v4085 = vadd.f32 %v2623, %v3795
        %v4086 = vadd.f32 %v2625, %v3797
        %v4087 = vadd.f32 %v2274, %v3446
        %v4088 = vadd.f32 %v2276, %v3448
        %v4089 = vadd.f32 %v2627, %v3799
        %v4090 = vadd.f32 %v2629, %v3801
        %v4091 = vadd.f32 %v2280, %v3452
        %v4092 = vadd.f32 %v2282, %v3454
        %v4093 = vadd.f32 %v2633, %v3805
        %v4094 = vadd.f32 %v2635, %v3807
        %v4095 = vadd.f32 %v2284, %v3456
        %v4096 = vadd.f32 %v2286, %v3458
        %v4097 = vadd.f32 %v2637, %v3809
        %v4098 = vadd.f32 %v2639, %v3811
        %v4099 = vadd.f32 %v2290, %v3462
        %v4100 = vadd.f32 %v2292, %v3464
        %v4101 = vadd.f32 %v2643, %v3815
        %v4102 = vadd.f32 %v2645, %v3817
        %v4103 = vadd.f32 %v2294, %v3466
        %v4104 = vadd.f32 %v2296, %v3468
        %v4105 = vadd.f32 %v2647, %v3819
        %v4106 = vadd.f32 %v2649, %v3821
        %v4107 = vadd.f32 %v2300, %v3472
        %v4108 = vadd.f32 %v2302, %v3474
        %v4109 = vadd.f32 %v2653, %v3825
        %v4110 = vadd.f32 %v2655, %v3827
        %v4111 = vadd.f32 %v2304, %v3476
        %v4112 = vadd.f32 %v2306, %v3478
        %v4113 = vadd.f32 %v2657, %v3829
        %v4114 = vadd.f32 %v2659, %v3831
        %v4115 = vadd.f32 %v2310, %v3482
        %v4116 = vadd.f32 %v2312, %v3484
        %v4117 = vadd.f32 %v2663, %v3835
        %v4118 = vadd.f32 %v2665, %v3837
        %v4119 = vadd.f32 %v2314, %v3486
        %v4120 = vadd.f32 %v2316, %v3488
        %v4121 = vadd.f32 %v2667, %v3839
        %v4122 = vadd.f32 %v2669, %v3841
        %v4123 = vadd.f32 %v2320, %v3492
        %v4124 = vadd.f32 %v2322, %v3494
        %v4125 = vadd.f32 %v2673, %v3845
        %v4126 = vadd.f32 %v2675, %v3847
        %v4127 = vadd.f32 %v2324, %v3496
        %v4128 = vadd.f32 %v2326, %v3498
        %v4129 = vadd.f32 %v2677, %v3849
        %v4130 = vadd.f32 %v2679, %v3851
        %v4131 = vadd.f32 %v2330, %v3502
        %v4132 = vadd.f32 %v2332, %v3504
        %v4133 = vadd.f32 %v2683, %v3855
        %v4134 = vadd.f32 %v2685, %v3857
        %v4135 = vadd.f32 %v2334, %v3506
        %v4136 = vadd.f32 %v2336, %v3508
        %v4137 = vadd.f32 %v2687, %v3859
        %v4138 = vadd.f32 %v2689, %v3861
        %v4139 = vadd.f32 %v2340, %v3512
        %v4140 = vadd.f32 %v2342, %v3514
        %v4141 = vadd.f32 %v2693, %v3865
        %v4142 = vadd.f32 %v2695, %v3867
        %v4143 = vadd.f32 %v2344, %v3516
        %v4144 = vadd.f32 %v2346, %v3518
        %v4145 = vadd.f32 %v2697, %v3869
        %v4146 = vadd.f32 %v2699, %v3871
        %v4147 = vadd.f32 %v2350, %v3522
        %v4148 = vadd.f32 %v2352, %v3524
        %v4149 = vadd.f32 %v2703, %v3875
        %v4150 = vadd.f32 %v2705, %v3877
        %v4151 = vadd.f32 %v2354, %v3526
        %v4152 = vadd.f32 %v2356, %v3528
        %v4153 = vadd.f32 %v2707, %v3879
        %v4154 = vadd.f32 %v2709, %v3881
        %v4155 = vadd.f32 %v2360, %v3532
        %v4156 = vadd.f32 %v2362, %v3534
        %v4157 = vadd.f32 %v2713, %v3885
        %v4158 = vadd.f32 %v2715, %v3887
        %v4159 = vadd.f32 %v2364, %v3536
        %v4160 = vadd.f32 %v2366, %v3538
        %v4161 = vadd.f32 %v2717, %v3889
        %v4162 = vadd.f32 %v2719, %v3891
        %v4163 = vadd.f32 %v2370, %v3542
        %v4164 = vadd.f32 %v2372, %v3544
        %v4165 = vadd.f32 %v2723, %v3895
        %v4166 = vadd.f32 %v2725, %v3897
        %v4167 = vadd.f32 %v2374, %v3546
        %v4168 = vadd.f32 %v2376, %v3548
        %v4169 = vadd.f32 %v2727, %v3899
        %v4170 = vadd.f32 %v2729, %v3901
        %v4171 = vadd.f32 %v2380, %v3552
        %v4172 = vadd.f32 %v2382, %v3554
        %v4173 = vadd.f32 %v2733, %v3905
        %v4174 = vadd.f32 %v2735, %v3907
        %v4175 = vadd.f32 %v2384, %v3556
        %v4176 = vadd.f32 %v2386, %v3558
        %v4177 = vadd.f32 %v2737, %v3909
        %v4178 = vadd.f32 %v2739, %v3911
        %v4179 = vadd.f32 %v2390, %v3562
        %v4180 = vadd.f32 %v2392, %v3564
        %v4181 = vadd.f32 %v2743, %v3915
        %v4182 = vadd.f32 %v2745, %v3917
        %v4183 = vadd.f32 %v2394, %v3566
        %v4184 = vadd.f32 %v2396, %v3568
        %v4185 = vadd.f32 %v2747, %v3919
        %v4186 = vadd.f32 %v2749, %v3921
        %v4187 = vadd.f32 %v2400, %v3572
        %v4188 = vadd.f32 %v2402, %v3574
        %v4189 = vadd.f32 %v2753, %v3925
        %v4190 = vadd.f32 %v2755, %v3927
        %v4191 = vadd.f32 %v2404, %v3576
        %v4192 = vadd.f32 %v2406, %v3578
        %v4193 = vadd.f32 %v2757, %v3929
        %v4194 = vadd.f32 %v2759, %v3931
        %v4195 = vadd.f32 %v2410, %v3582
        %v4196 = vadd.f32 %v2412, %v3584
        %v4197 = vadd.f32 %v2763, %v3935
        %v4198 = vadd.f32 %v2765, %v3937
        %v4199 = vadd.f32 %v2414, %v3586
        %v4200 = vadd.f32 %v2416, %v3588
        %v4201 = vadd.f32 %v2767, %v3939
        %v4202 = vadd.f32 %v2769, %v3941
        %v4203 = vadd.f32 %v2420, %v3592
        %v4204 = vadd.f32 %v2422, %v3594
        %v4205 = vadd.f32 %v2773, %v3945
        %v4206 = vadd.f32 %v2775, %v3947
        %v4207 = vadd.f32 %v2424, %v3596
        %v4208 = vadd.f32 %v2426, %v3598
        %v4209 = vadd.f32 %v2777, %v3949
        %v4210 = vadd.f32 %v2779, %v3951
        %v4211 = vadd.f32 %v2430, %v3602
        %v4212 = vadd.f32 %v2432, %v3604
        %v4213 = vadd.f32 %v2783, %v3955
        %v4214 = vadd.f32 %v2785, %v3957
        %v4215 = vadd.f32 %v2434, %v3606
        %v4216 = vadd.f32 %v2436, %v3608
        %v4217 = vadd.f32 %v2787, %v3959
        %v4218 = vadd.f32 %v2789, %v3961
        %v4219 = vld [vmem:[#allocation8] sm:$0xf]
        %v4221 = vlaneseq
        %v4222 = vshrl.u32 %v4221, 7
        %v4223 = vsub.s32 0, %v4222
        %v4224 = vrot.slane %v4219, %v4223
        %v4225 = vlaneseq
        %v4226 = vshrl.u32 %v4225, 7
        %v4227 = vsub.s32 1, %v4226
        %v4228 = vrot.slane %v4219, %v4227
        %v4229 = vlaneseq
        %v4230 = vshrl.u32 %v4229, 7
        %v4231 = vsub.s32 2, %v4230
        %v4232 = vrot.slane %v4219, %v4231
        %v4233 = vlaneseq
        %v4234 = vshrl.u32 %v4233, 7
        %v4235 = vsub.s32 3, %v4234
        %v4236 = vrot.slane %v4219, %v4235
        %v4241 = vmul.f32 %v3963, %v4224
        %v4242 = vmul.f32 %v3964, %v4228
        %v4243 = vmul.f32 %v3965, %v4232
        %v4244 = vmul.f32 %v3966, %v4236
        %v4245 = vmul.f32 %v3967, %v4224
        %v4246 = vmul.f32 %v3968, %v4228
        %v4247 = vmul.f32 %v3969, %v4232
        %v4248 = vmul.f32 %v3970, %v4236
        %v4249 = vmul.f32 %v3971, %v4224
        %v4250 = vmul.f32 %v3972, %v4228
        %v4251 = vmul.f32 %v3973, %v4232
        %v4252 = vmul.f32 %v3974, %v4236
        %v4253 = vmul.f32 %v3975, %v4224
        %v4254 = vmul.f32 %v3976, %v4228
        %v4255 = vmul.f32 %v3977, %v4232
        %v4256 = vmul.f32 %v3978, %v4236
        %v4257 = vmul.f32 %v3979, %v4224
        %v4258 = vmul.f32 %v3980, %v4228
        %v4259 = vmul.f32 %v3981, %v4232
        %v4260 = vmul.f32 %v3982, %v4236
        %v4261 = vmul.f32 %v3983, %v4224
        %v4262 = vmul.f32 %v3984, %v4228
        %v4263 = vmul.f32 %v3985, %v4232
        %v4264 = vmul.f32 %v3986, %v4236
        %v4265 = vmul.f32 %v3987, %v4224
        %v4266 = vmul.f32 %v3988, %v4228
        %v4267 = vmul.f32 %v3989, %v4232
        %v4268 = vmul.f32 %v3990, %v4236
        %v4269 = vmul.f32 %v3991, %v4224
        %v4270 = vmul.f32 %v3992, %v4228
        %v4271 = vmul.f32 %v3993, %v4232
        %v4272 = vmul.f32 %v3994, %v4236
        %v4273 = vmul.f32 %v3995, %v4224
        %v4274 = vmul.f32 %v3996, %v4228
        %v4275 = vmul.f32 %v3997, %v4232
        %v4276 = vmul.f32 %v3998, %v4236
        %v4277 = vmul.f32 %v3999, %v4224
        %v4278 = vmul.f32 %v4000, %v4228
        %v4279 = vmul.f32 %v4001, %v4232
        %v4280 = vmul.f32 %v4002, %v4236
        %v4281 = vmul.f32 %v4003, %v4224
        %v4282 = vmul.f32 %v4004, %v4228
        %v4283 = vmul.f32 %v4005, %v4232
        %v4284 = vmul.f32 %v4006, %v4236
        %v4285 = vmul.f32 %v4007, %v4224
        %v4286 = vmul.f32 %v4008, %v4228
        %v4287 = vmul.f32 %v4009, %v4232
        %v4288 = vmul.f32 %v4010, %v4236
        %v4289 = vmul.f32 %v4011, %v4224
        %v4290 = vmul.f32 %v4012, %v4228
        %v4291 = vmul.f32 %v4013, %v4232
        %v4292 = vmul.f32 %v4014, %v4236
        %v4293 = vmul.f32 %v4015, %v4224
        %v4294 = vmul.f32 %v4016, %v4228
        %v4295 = vmul.f32 %v4017, %v4232
        %v4296 = vmul.f32 %v4018, %v4236
        %v4297 = vmul.f32 %v4019, %v4224
        %v4298 = vmul.f32 %v4020, %v4228
        %v4299 = vmul.f32 %v4021, %v4232
        %v4300 = vmul.f32 %v4022, %v4236
        %v4301 = vmul.f32 %v4023, %v4224
        %v4302 = vmul.f32 %v4024, %v4228
        %v4303 = vmul.f32 %v4025, %v4232
        %v4304 = vmul.f32 %v4026, %v4236
        %v4305 = vmul.f32 %v4027, %v4224
        %v4306 = vmul.f32 %v4028, %v4228
        %v4307 = vmul.f32 %v4029, %v4232
        %v4308 = vmul.f32 %v4030, %v4236
        %v4309 = vmul.f32 %v4031, %v4224
        %v4310 = vmul.f32 %v4032, %v4228
        %v4311 = vmul.f32 %v4033, %v4232
        %v4312 = vmul.f32 %v4034, %v4236
        %v4313 = vmul.f32 %v4035, %v4224
        %v4314 = vmul.f32 %v4036, %v4228
        %v4315 = vmul.f32 %v4037, %v4232
        %v4316 = vmul.f32 %v4038, %v4236
        %v4317 = vmul.f32 %v4039, %v4224
        %v4318 = vmul.f32 %v4040, %v4228
        %v4319 = vmul.f32 %v4041, %v4232
        %v4320 = vmul.f32 %v4042, %v4236
        %v4321 = vmul.f32 %v4043, %v4224
        %v4322 = vmul.f32 %v4044, %v4228
        %v4323 = vmul.f32 %v4045, %v4232
        %v4324 = vmul.f32 %v4046, %v4236
        %v4325 = vmul.f32 %v4047, %v4224
        %v4326 = vmul.f32 %v4048, %v4228
        %v4327 = vmul.f32 %v4049, %v4232
        %v4328 = vmul.f32 %v4050, %v4236
        %v4329 = vmul.f32 %v4051, %v4224
        %v4330 = vmul.f32 %v4052, %v4228
        %v4331 = vmul.f32 %v4053, %v4232
        %v4332 = vmul.f32 %v4054, %v4236
        %v4333 = vmul.f32 %v4055, %v4224
        %v4334 = vmul.f32 %v4056, %v4228
        %v4335 = vmul.f32 %v4057, %v4232
        %v4336 = vmul.f32 %v4058, %v4236
        %v4337 = vmul.f32 %v4059, %v4224
        %v4338 = vmul.f32 %v4060, %v4228
        %v4339 = vmul.f32 %v4061, %v4232
        %v4340 = vmul.f32 %v4062, %v4236
        %v4341 = vmul.f32 %v4063, %v4224
        %v4342 = vmul.f32 %v4064, %v4228
        %v4343 = vmul.f32 %v4065, %v4232
        %v4344 = vmul.f32 %v4066, %v4236
        %v4345 = vmul.f32 %v4067, %v4224
        %v4346 = vmul.f32 %v4068, %v4228
        %v4347 = vmul.f32 %v4069, %v4232
        %v4348 = vmul.f32 %v4070, %v4236
        %v4349 = vmul.f32 %v4071, %v4224
        %v4350 = vmul.f32 %v4072, %v4228
        %v4351 = vmul.f32 %v4073, %v4232
        %v4352 = vmul.f32 %v4074, %v4236
        %v4353 = vmul.f32 %v4075, %v4224
        %v4354 = vmul.f32 %v4076, %v4228
        %v4355 = vmul.f32 %v4077, %v4232
        %v4356 = vmul.f32 %v4078, %v4236
        %v4357 = vmul.f32 %v4079, %v4224
        %v4358 = vmul.f32 %v4080, %v4228
        %v4359 = vmul.f32 %v4081, %v4232
        %v4360 = vmul.f32 %v4082, %v4236
        %v4361 = vmul.f32 %v4083, %v4224
        %v4362 = vmul.f32 %v4084, %v4228
        %v4363 = vmul.f32 %v4085, %v4232
        %v4364 = vmul.f32 %v4086, %v4236
        %v4365 = vmul.f32 %v4087, %v4224
        %v4366 = vmul.f32 %v4088, %v4228
        %v4367 = vmul.f32 %v4089, %v4232
        %v4368 = vmul.f32 %v4090, %v4236
        %v4369 = vmul.f32 %v4091, %v4224
        %v4370 = vmul.f32 %v4092, %v4228
        %v4371 = vmul.f32 %v4093, %v4232
        %v4372 = vmul.f32 %v4094, %v4236
        %v4373 = vmul.f32 %v4095, %v4224
        %v4374 = vmul.f32 %v4096, %v4228
        %v4375 = vmul.f32 %v4097, %v4232
        %v4376 = vmul.f32 %v4098, %v4236
        %v4377 = vmul.f32 %v4099, %v4224
        %v4378 = vmul.f32 %v4100, %v4228
        %v4379 = vmul.f32 %v4101, %v4232
        %v4380 = vmul.f32 %v4102, %v4236
        %v4381 = vmul.f32 %v4103, %v4224
        %v4382 = vmul.f32 %v4104, %v4228
        %v4383 = vmul.f32 %v4105, %v4232
        %v4384 = vmul.f32 %v4106, %v4236
        %v4385 = vmul.f32 %v4107, %v4224
        %v4386 = vmul.f32 %v4108, %v4228
        %v4387 = vmul.f32 %v4109, %v4232
        %v4388 = vmul.f32 %v4110, %v4236
        %v4389 = vmul.f32 %v4111, %v4224
        %v4390 = vmul.f32 %v4112, %v4228
        %v4391 = vmul.f32 %v4113, %v4232
        %v4392 = vmul.f32 %v4114, %v4236
        %v4393 = vmul.f32 %v4115, %v4224
        %v4394 = vmul.f32 %v4116, %v4228
        %v4395 = vmul.f32 %v4117, %v4232
        %v4396 = vmul.f32 %v4118, %v4236
        %v4397 = vmul.f32 %v4119, %v4224
        %v4398 = vmul.f32 %v4120, %v4228
        %v4399 = vmul.f32 %v4121, %v4232
        %v4400 = vmul.f32 %v4122, %v4236
        %v4401 = vmul.f32 %v4123, %v4224
        %v4402 = vmul.f32 %v4124, %v4228
        %v4403 = vmul.f32 %v4125, %v4232
        %v4404 = vmul.f32 %v4126, %v4236
        %v4405 = vmul.f32 %v4127, %v4224
        %v4406 = vmul.f32 %v4128, %v4228
        %v4407 = vmul.f32 %v4129, %v4232
        %v4408 = vmul.f32 %v4130, %v4236
        %v4409 = vmul.f32 %v4131, %v4224
        %v4410 = vmul.f32 %v4132, %v4228
        %v4411 = vmul.f32 %v4133, %v4232
        %v4412 = vmul.f32 %v4134, %v4236
        %v4413 = vmul.f32 %v4135, %v4224
        %v4414 = vmul.f32 %v4136, %v4228
        %v4415 = vmul.f32 %v4137, %v4232
        %v4416 = vmul.f32 %v4138, %v4236
        %v4417 = vmul.f32 %v4139, %v4224
        %v4418 = vmul.f32 %v4140, %v4228
        %v4419 = vmul.f32 %v4141, %v4232
        %v4420 = vmul.f32 %v4142, %v4236
        %v4421 = vmul.f32 %v4143, %v4224
        %v4422 = vmul.f32 %v4144, %v4228
        %v4423 = vmul.f32 %v4145, %v4232
        %v4424 = vmul.f32 %v4146, %v4236
        %v4425 = vmul.f32 %v4147, %v4224
        %v4426 = vmul.f32 %v4148, %v4228
        %v4427 = vmul.f32 %v4149, %v4232
        %v4428 = vmul.f32 %v4150, %v4236
        %v4429 = vmul.f32 %v4151, %v4224
        %v4430 = vmul.f32 %v4152, %v4228
        %v4431 = vmul.f32 %v4153, %v4232
        %v4432 = vmul.f32 %v4154, %v4236
        %v4433 = vmul.f32 %v4155, %v4224
        %v4434 = vmul.f32 %v4156, %v4228
        %v4435 = vmul.f32 %v4157, %v4232
        %v4436 = vmul.f32 %v4158, %v4236
        %v4437 = vmul.f32 %v4159, %v4224
        %v4438 = vmul.f32 %v4160, %v4228
        %v4439 = vmul.f32 %v4161, %v4232
        %v4440 = vmul.f32 %v4162, %v4236
        %v4441 = vmul.f32 %v4163, %v4224
        %v4442 = vmul.f32 %v4164, %v4228
        %v4443 = vmul.f32 %v4165, %v4232
        %v4444 = vmul.f32 %v4166, %v4236
        %v4445 = vmul.f32 %v4167, %v4224
        %v4446 = vmul.f32 %v4168, %v4228
        %v4447 = vmul.f32 %v4169, %v4232
        %v4448 = vmul.f32 %v4170, %v4236
        %v4449 = vmul.f32 %v4171, %v4224
        %v4450 = vmul.f32 %v4172, %v4228
        %v4451 = vmul.f32 %v4173, %v4232
        %v4452 = vmul.f32 %v4174, %v4236
        %v4453 = vmul.f32 %v4175, %v4224
        %v4454 = vmul.f32 %v4176, %v4228
        %v4455 = vmul.f32 %v4177, %v4232
        %v4456 = vmul.f32 %v4178, %v4236
        %v4457 = vmul.f32 %v4179, %v4224
        %v4458 = vmul.f32 %v4180, %v4228
        %v4459 = vmul.f32 %v4181, %v4232
        %v4460 = vmul.f32 %v4182, %v4236
        %v4461 = vmul.f32 %v4183, %v4224
        %v4462 = vmul.f32 %v4184, %v4228
        %v4463 = vmul.f32 %v4185, %v4232
        %v4464 = vmul.f32 %v4186, %v4236
        %v4465 = vmul.f32 %v4187, %v4224
        %v4466 = vmul.f32 %v4188, %v4228
        %v4467 = vmul.f32 %v4189, %v4232
        %v4468 = vmul.f32 %v4190, %v4236
        %v4469 = vmul.f32 %v4191, %v4224
        %v4470 = vmul.f32 %v4192, %v4228
        %v4471 = vmul.f32 %v4193, %v4232
        %v4472 = vmul.f32 %v4194, %v4236
        %v4473 = vmul.f32 %v4195, %v4224
        %v4474 = vmul.f32 %v4196, %v4228
        %v4475 = vmul.f32 %v4197, %v4232
        %v4476 = vmul.f32 %v4198, %v4236
        %v4477 = vmul.f32 %v4199, %v4224
        %v4478 = vmul.f32 %v4200, %v4228
        %v4479 = vmul.f32 %v4201, %v4232
        %v4480 = vmul.f32 %v4202, %v4236
        %v4481 = vmul.f32 %v4203, %v4224
        %v4482 = vmul.f32 %v4204, %v4228
        %v4483 = vmul.f32 %v4205, %v4232
        %v4484 = vmul.f32 %v4206, %v4236
        %v4485 = vmul.f32 %v4207, %v4224
        %v4486 = vmul.f32 %v4208, %v4228
        %v4487 = vmul.f32 %v4209, %v4232
        %v4488 = vmul.f32 %v4210, %v4236
        %v4489 = vmul.f32 %v4211, %v4224
        %v4490 = vmul.f32 %v4212, %v4228
        %v4491 = vmul.f32 %v4213, %v4232
        %v4492 = vmul.f32 %v4214, %v4236
        %v4493 = vmul.f32 %v4215, %v4224
        %v4494 = vmul.f32 %v4216, %v4228
        %v4495 = vmul.f32 %v4217, %v4232
        %v4496 = vmul.f32 %v4218, %v4236
        %v4497 = vld [vmem:[%s3] sm:$0xf]
        %v4499 = vlaneseq
        %v4500 = vshrl.u32 %v4499, 7
        %v4501 = vsub.s32 0, %v4500
        %v4502 = vrot.slane %v4497, %v4501
        %v4503 = vlaneseq
        %v4504 = vshrl.u32 %v4503, 7
        %v4505 = vsub.s32 1, %v4504
        %v4506 = vrot.slane %v4497, %v4505
        %v4507 = vlaneseq
        %v4508 = vshrl.u32 %v4507, 7
        %v4509 = vsub.s32 2, %v4508
        %v4510 = vrot.slane %v4497, %v4509
        %v4511 = vlaneseq
        %v4512 = vshrl.u32 %v4511, 7
        %v4513 = vsub.s32 3, %v4512
        %v4514 = vrot.slane %v4497, %v4513
        %v4519 = vadd.f32 %v4241, %v4502
        %v4520 = vadd.f32 %v4242, %v4506
        %v4521 = vadd.f32 %v4243, %v4510
        %v4522 = vadd.f32 %v4244, %v4514
        %v4523 = vadd.f32 %v4245, %v4502
        %v4524 = vadd.f32 %v4246, %v4506
        %v4525 = vadd.f32 %v4247, %v4510
        %v4526 = vadd.f32 %v4248, %v4514
        %v4527 = vadd.f32 %v4249, %v4502
        %v4528 = vadd.f32 %v4250, %v4506
        %v4529 = vadd.f32 %v4251, %v4510
        %v4530 = vadd.f32 %v4252, %v4514
        %v4531 = vadd.f32 %v4253, %v4502
        %v4532 = vadd.f32 %v4254, %v4506
        %v4533 = vadd.f32 %v4255, %v4510
        %v4534 = vadd.f32 %v4256, %v4514
        %v4535 = vadd.f32 %v4257, %v4502
        %v4536 = vadd.f32 %v4258, %v4506
        %v4537 = vadd.f32 %v4259, %v4510
        %v4538 = vadd.f32 %v4260, %v4514
        %v4539 = vadd.f32 %v4261, %v4502
        %v4540 = vadd.f32 %v4262, %v4506
        %v4541 = vadd.f32 %v4263, %v4510
        %v4542 = vadd.f32 %v4264, %v4514
        %v4543 = vadd.f32 %v4265, %v4502
        %v4544 = vadd.f32 %v4266, %v4506
        %v4545 = vadd.f32 %v4267, %v4510
        %v4546 = vadd.f32 %v4268, %v4514
        %v4547 = vadd.f32 %v4269, %v4502
        %v4548 = vadd.f32 %v4270, %v4506
        %v4549 = vadd.f32 %v4271, %v4510
        %v4550 = vadd.f32 %v4272, %v4514
        %v4551 = vadd.f32 %v4273, %v4502
        %v4552 = vadd.f32 %v4274, %v4506
        %v4553 = vadd.f32 %v4275, %v4510
        %v4554 = vadd.f32 %v4276, %v4514
        %v4555 = vadd.f32 %v4277, %v4502
        %v4556 = vadd.f32 %v4278, %v4506
        %v4557 = vadd.f32 %v4279, %v4510
        %v4558 = vadd.f32 %v4280, %v4514
        %v4559 = vadd.f32 %v4281, %v4502
        %v4560 = vadd.f32 %v4282, %v4506
        %v4561 = vadd.f32 %v4283, %v4510
        %v4562 = vadd.f32 %v4284, %v4514
        %v4563 = vadd.f32 %v4285, %v4502
        %v4564 = vadd.f32 %v4286, %v4506
        %v4565 = vadd.f32 %v4287, %v4510
        %v4566 = vadd.f32 %v4288, %v4514
        %v4567 = vadd.f32 %v4289, %v4502
        %v4568 = vadd.f32 %v4290, %v4506
        %v4569 = vadd.f32 %v4291, %v4510
        %v4570 = vadd.f32 %v4292, %v4514
        %v4571 = vadd.f32 %v4293, %v4502
        %v4572 = vadd.f32 %v4294, %v4506
        %v4573 = vadd.f32 %v4295, %v4510
        %v4574 = vadd.f32 %v4296, %v4514
        %v4575 = vadd.f32 %v4297, %v4502
        %v4576 = vadd.f32 %v4298, %v4506
        %v4577 = vadd.f32 %v4299, %v4510
        %v4578 = vadd.f32 %v4300, %v4514
        %v4579 = vadd.f32 %v4301, %v4502
        %v4580 = vadd.f32 %v4302, %v4506
        %v4581 = vadd.f32 %v4303, %v4510
        %v4582 = vadd.f32 %v4304, %v4514
        %v4583 = vadd.f32 %v4305, %v4502
        %v4584 = vadd.f32 %v4306, %v4506
        %v4585 = vadd.f32 %v4307, %v4510
        %v4586 = vadd.f32 %v4308, %v4514
        %v4587 = vadd.f32 %v4309, %v4502
        %v4588 = vadd.f32 %v4310, %v4506
        %v4589 = vadd.f32 %v4311, %v4510
        %v4590 = vadd.f32 %v4312, %v4514
        %v4591 = vadd.f32 %v4313, %v4502
        %v4592 = vadd.f32 %v4314, %v4506
        %v4593 = vadd.f32 %v4315, %v4510
        %v4594 = vadd.f32 %v4316, %v4514
        %v4595 = vadd.f32 %v4317, %v4502
        %v4596 = vadd.f32 %v4318, %v4506
        %v4597 = vadd.f32 %v4319, %v4510
        %v4598 = vadd.f32 %v4320, %v4514
        %v4599 = vadd.f32 %v4321, %v4502
        %v4600 = vadd.f32 %v4322, %v4506
        %v4601 = vadd.f32 %v4323, %v4510
        %v4602 = vadd.f32 %v4324, %v4514
        %v4603 = vadd.f32 %v4325, %v4502
        %v4604 = vadd.f32 %v4326, %v4506
        %v4605 = vadd.f32 %v4327, %v4510
        %v4606 = vadd.f32 %v4328, %v4514
        %v4607 = vadd.f32 %v4329, %v4502
        %v4608 = vadd.f32 %v4330, %v4506
        %v4609 = vadd.f32 %v4331, %v4510
        %v4610 = vadd.f32 %v4332, %v4514
        %v4611 = vadd.f32 %v4333, %v4502
        %v4612 = vadd.f32 %v4334, %v4506
        %v4613 = vadd.f32 %v4335, %v4510
        %v4614 = vadd.f32 %v4336, %v4514
        %v4615 = vadd.f32 %v4337, %v4502
        %v4616 = vadd.f32 %v4338, %v4506
        %v4617 = vadd.f32 %v4339, %v4510
        %v4618 = vadd.f32 %v4340, %v4514
        %v4619 = vadd.f32 %v4341, %v4502
        %v4620 = vadd.f32 %v4342, %v4506
        %v4621 = vadd.f32 %v4343, %v4510
        %v4622 = vadd.f32 %v4344, %v4514
        %v4623 = vadd.f32 %v4345, %v4502
        %v4624 = vadd.f32 %v4346, %v4506
        %v4625 = vadd.f32 %v4347, %v4510
        %v4626 = vadd.f32 %v4348, %v4514
        %v4627 = vadd.f32 %v4349, %v4502
        %v4628 = vadd.f32 %v4350, %v4506
        %v4629 = vadd.f32 %v4351, %v4510
        %v4630 = vadd.f32 %v4352, %v4514
        %v4631 = vadd.f32 %v4353, %v4502
        %v4632 = vadd.f32 %v4354, %v4506
        %v4633 = vadd.f32 %v4355, %v4510
        %v4634 = vadd.f32 %v4356, %v4514
        %v4635 = vadd.f32 %v4357, %v4502
        %v4636 = vadd.f32 %v4358, %v4506
        %v4637 = vadd.f32 %v4359, %v4510
        %v4638 = vadd.f32 %v4360, %v4514
        %v4639 = vadd.f32 %v4361, %v4502
        %v4640 = vadd.f32 %v4362, %v4506
        %v4641 = vadd.f32 %v4363, %v4510
        %v4642 = vadd.f32 %v4364, %v4514
        %v4643 = vadd.f32 %v4365, %v4502
        %v4644 = vadd.f32 %v4366, %v4506
        %v4645 = vadd.f32 %v4367, %v4510
        %v4646 = vadd.f32 %v4368, %v4514
        %v4647 = vadd.f32 %v4369, %v4502
        %v4648 = vadd.f32 %v4370, %v4506
        %v4649 = vadd.f32 %v4371, %v4510
        %v4650 = vadd.f32 %v4372, %v4514
        %v4651 = vadd.f32 %v4373, %v4502
        %v4652 = vadd.f32 %v4374, %v4506
        %v4653 = vadd.f32 %v4375, %v4510
        %v4654 = vadd.f32 %v4376, %v4514
        %v4655 = vadd.f32 %v4377, %v4502
        %v4656 = vadd.f32 %v4378, %v4506
        %v4657 = vadd.f32 %v4379, %v4510
        %v4658 = vadd.f32 %v4380, %v4514
        %v4659 = vadd.f32 %v4381, %v4502
        %v4660 = vadd.f32 %v4382, %v4506
        %v4661 = vadd.f32 %v4383, %v4510
        %v4662 = vadd.f32 %v4384, %v4514
        %v4663 = vadd.f32 %v4385, %v4502
        %v4664 = vadd.f32 %v4386, %v4506
        %v4665 = vadd.f32 %v4387, %v4510
        %v4666 = vadd.f32 %v4388, %v4514
        %v4667 = vadd.f32 %v4389, %v4502
        %v4668 = vadd.f32 %v4390, %v4506
        %v4669 = vadd.f32 %v4391, %v4510
        %v4670 = vadd.f32 %v4392, %v4514
        %v4671 = vadd.f32 %v4393, %v4502
        %v4672 = vadd.f32 %v4394, %v4506
        %v4673 = vadd.f32 %v4395, %v4510
        %v4674 = vadd.f32 %v4396, %v4514
        %v4675 = vadd.f32 %v4397, %v4502
        %v4676 = vadd.f32 %v4398, %v4506
        %v4677 = vadd.f32 %v4399, %v4510
        %v4678 = vadd.f32 %v4400, %v4514
        %v4679 = vadd.f32 %v4401, %v4502
        %v4680 = vadd.f32 %v4402, %v4506
        %v4681 = vadd.f32 %v4403, %v4510
        %v4682 = vadd.f32 %v4404, %v4514
        %v4683 = vadd.f32 %v4405, %v4502
        %v4684 = vadd.f32 %v4406, %v4506
        %v4685 = vadd.f32 %v4407, %v4510
        %v4686 = vadd.f32 %v4408, %v4514
        %v4687 = vadd.f32 %v4409, %v4502
        %v4688 = vadd.f32 %v4410, %v4506
        %v4689 = vadd.f32 %v4411, %v4510
        %v4690 = vadd.f32 %v4412, %v4514
        %v4691 = vadd.f32 %v4413, %v4502
        %v4692 = vadd.f32 %v4414, %v4506
        %v4693 = vadd.f32 %v4415, %v4510
        %v4694 = vadd.f32 %v4416, %v4514
        %v4695 = vadd.f32 %v4417, %v4502
        %v4696 = vadd.f32 %v4418, %v4506
        %v4697 = vadd.f32 %v4419, %v4510
        %v4698 = vadd.f32 %v4420, %v4514
        %v4699 = vadd.f32 %v4421, %v4502
        %v4700 = vadd.f32 %v4422, %v4506
        %v4701 = vadd.f32 %v4423, %v4510
        %v4702 = vadd.f32 %v4424, %v4514
        %v4703 = vadd.f32 %v4425, %v4502
        %v4704 = vadd.f32 %v4426, %v4506
        %v4705 = vadd.f32 %v4427, %v4510
        %v4706 = vadd.f32 %v4428, %v4514
        %v4707 = vadd.f32 %v4429, %v4502
        %v4708 = vadd.f32 %v4430, %v4506
        %v4709 = vadd.f32 %v4431, %v4510
        %v4710 = vadd.f32 %v4432, %v4514
        %v4711 = vadd.f32 %v4433, %v4502
        %v4712 = vadd.f32 %v4434, %v4506
        %v4713 = vadd.f32 %v4435, %v4510
        %v4714 = vadd.f32 %v4436, %v4514
        %v4715 = vadd.f32 %v4437, %v4502
        %v4716 = vadd.f32 %v4438, %v4506
        %v4717 = vadd.f32 %v4439, %v4510
        %v4718 = vadd.f32 %v4440, %v4514
        %v4719 = vadd.f32 %v4441, %v4502
        %v4720 = vadd.f32 %v4442, %v4506
        %v4721 = vadd.f32 %v4443, %v4510
        %v4722 = vadd.f32 %v4444, %v4514
        %v4723 = vadd.f32 %v4445, %v4502
        %v4724 = vadd.f32 %v4446, %v4506
        %v4725 = vadd.f32 %v4447, %v4510
        %v4726 = vadd.f32 %v4448, %v4514
        %v4727 = vadd.f32 %v4449, %v4502
        %v4728 = vadd.f32 %v4450, %v4506
        %v4729 = vadd.f32 %v4451, %v4510
        %v4730 = vadd.f32 %v4452, %v4514
        %v4731 = vadd.f32 %v4453, %v4502
        %v4732 = vadd.f32 %v4454, %v4506
        %v4733 = vadd.f32 %v4455, %v4510
        %v4734 = vadd.f32 %v4456, %v4514
        %v4735 = vadd.f32 %v4457, %v4502
        %v4736 = vadd.f32 %v4458, %v4506
        %v4737 = vadd.f32 %v4459, %v4510
        %v4738 = vadd.f32 %v4460, %v4514
        %v4739 = vadd.f32 %v4461, %v4502
        %v4740 = vadd.f32 %v4462, %v4506
        %v4741 = vadd.f32 %v4463, %v4510
        %v4742 = vadd.f32 %v4464, %v4514
        %v4743 = vadd.f32 %v4465, %v4502
        %v4744 = vadd.f32 %v4466, %v4506
        %v4745 = vadd.f32 %v4467, %v4510
        %v4746 = vadd.f32 %v4468, %v4514
        %v4747 = vadd.f32 %v4469, %v4502
        %v4748 = vadd.f32 %v4470, %v4506
        %v4749 = vadd.f32 %v4471, %v4510
        %v4750 = vadd.f32 %v4472, %v4514
        %v4751 = vadd.f32 %v4473, %v4502
        %v4752 = vadd.f32 %v4474, %v4506
        %v4753 = vadd.f32 %v4475, %v4510
        %v4754 = vadd.f32 %v4476, %v4514
        %v4755 = vadd.f32 %v4477, %v4502
        %v4756 = vadd.f32 %v4478, %v4506
        %v4757 = vadd.f32 %v4479, %v4510
        %v4758 = vadd.f32 %v4480, %v4514
        %v4759 = vadd.f32 %v4481, %v4502
        %v4760 = vadd.f32 %v4482, %v4506
        %v4761 = vadd.f32 %v4483, %v4510
        %v4762 = vadd.f32 %v4484, %v4514
        %v4763 = vadd.f32 %v4485, %v4502
        %v4764 = vadd.f32 %v4486, %v4506
        %v4765 = vadd.f32 %v4487, %v4510
        %v4766 = vadd.f32 %v4488, %v4514
        %v4767 = vadd.f32 %v4489, %v4502
        %v4768 = vadd.f32 %v4490, %v4506
        %v4769 = vadd.f32 %v4491, %v4510
        %v4770 = vadd.f32 %v4492, %v4514
        %v4771 = vadd.f32 %v4493, %v4502
        %v4772 = vadd.f32 %v4494, %v4506
        %v4773 = vadd.f32 %v4495, %v4510
        %v4774 = vadd.f32 %v4496, %v4514
        %v4775 = vmax.f32 %v4519, 0.0
        %v4776 = vmax.f32 %v4520, 0.0
        %v4777 = vmax.f32 %v4521, 0.0
        %v4778 = vmax.f32 %v4522, 0.0
        %v4779 = vmax.f32 %v4523, 0.0
        %v4780 = vmax.f32 %v4524, 0.0
        %v4781 = vmax.f32 %v4525, 0.0
        %v4782 = vmax.f32 %v4526, 0.0
        %v4783 = vmax.f32 %v4527, 0.0
        %v4784 = vmax.f32 %v4528, 0.0
        %v4785 = vmax.f32 %v4529, 0.0
        %v4786 = vmax.f32 %v4530, 0.0
        %v4787 = vmax.f32 %v4531, 0.0
        %v4788 = vmax.f32 %v4532, 0.0
        %v4789 = vmax.f32 %v4533, 0.0
        %v4790 = vmax.f32 %v4534, 0.0
        %v4791 = vmax.f32 %v4535, 0.0
        %v4792 = vmax.f32 %v4536, 0.0
        %v4793 = vmax.f32 %v4537, 0.0
        %v4794 = vmax.f32 %v4538, 0.0
        %v4795 = vmax.f32 %v4539, 0.0
        %v4796 = vmax.f32 %v4540, 0.0
        %v4797 = vmax.f32 %v4541, 0.0
        %v4798 = vmax.f32 %v4542, 0.0
        %v4799 = vmax.f32 %v4543, 0.0
        %v4800 = vmax.f32 %v4544, 0.0
        %v4801 = vmax.f32 %v4545, 0.0
        %v4802 = vmax.f32 %v4546, 0.0
        %v4803 = vmax.f32 %v4547, 0.0
        %v4804 = vmax.f32 %v4548, 0.0
        %v4805 = vmax.f32 %v4549, 0.0
        %v4806 = vmax.f32 %v4550, 0.0
        %v4807 = vmax.f32 %v4551, 0.0
        %v4808 = vmax.f32 %v4552, 0.0
        %v4809 = vmax.f32 %v4553, 0.0
        %v4810 = vmax.f32 %v4554, 0.0
        %v4811 = vmax.f32 %v4555, 0.0
        %v4812 = vmax.f32 %v4556, 0.0
        %v4813 = vmax.f32 %v4557, 0.0
        %v4814 = vmax.f32 %v4558, 0.0
        %v4815 = vmax.f32 %v4559, 0.0
        %v4816 = vmax.f32 %v4560, 0.0
        %v4817 = vmax.f32 %v4561, 0.0
        %v4818 = vmax.f32 %v4562, 0.0
        %v4819 = vmax.f32 %v4563, 0.0
        %v4820 = vmax.f32 %v4564, 0.0
        %v4821 = vmax.f32 %v4565, 0.0
        %v4822 = vmax.f32 %v4566, 0.0
        %v4823 = vmax.f32 %v4567, 0.0
        %v4824 = vmax.f32 %v4568, 0.0
        %v4825 = vmax.f32 %v4569, 0.0
        %v4826 = vmax.f32 %v4570, 0.0
        %v4827 = vmax.f32 %v4571, 0.0
        %v4828 = vmax.f32 %v4572, 0.0
        %v4829 = vmax.f32 %v4573, 0.0
        %v4830 = vmax.f32 %v4574, 0.0
        %v4831 = vmax.f32 %v4575, 0.0
        %v4832 = vmax.f32 %v4576, 0.0
        %v4833 = vmax.f32 %v4577, 0.0
        %v4834 = vmax.f32 %v4578, 0.0
        %v4835 = vmax.f32 %v4579, 0.0
        %v4836 = vmax.f32 %v4580, 0.0
        %v4837 = vmax.f32 %v4581, 0.0
        %v4838 = vmax.f32 %v4582, 0.0
        %v4839 = vmax.f32 %v4583, 0.0
        %v4840 = vmax.f32 %v4584, 0.0
        %v4841 = vmax.f32 %v4585, 0.0
        %v4842 = vmax.f32 %v4586, 0.0
        %v4843 = vmax.f32 %v4587, 0.0
        %v4844 = vmax.f32 %v4588, 0.0
        %v4845 = vmax.f32 %v4589, 0.0
        %v4846 = vmax.f32 %v4590, 0.0
        %v4847 = vmax.f32 %v4591, 0.0
        %v4848 = vmax.f32 %v4592, 0.0
        %v4849 = vmax.f32 %v4593, 0.0
        %v4850 = vmax.f32 %v4594, 0.0
        %v4851 = vmax.f32 %v4595, 0.0
        %v4852 = vmax.f32 %v4596, 0.0
        %v4853 = vmax.f32 %v4597, 0.0
        %v4854 = vmax.f32 %v4598, 0.0
        %v4855 = vmax.f32 %v4599, 0.0
        %v4856 = vmax.f32 %v4600, 0.0
        %v4857 = vmax.f32 %v4601, 0.0
        %v4858 = vmax.f32 %v4602, 0.0
        %v4859 = vmax.f32 %v4603, 0.0
        %v4860 = vmax.f32 %v4604, 0.0
        %v4861 = vmax.f32 %v4605, 0.0
        %v4862 = vmax.f32 %v4606, 0.0
        %v4863 = vmax.f32 %v4607, 0.0
        %v4864 = vmax.f32 %v4608, 0.0
        %v4865 = vmax.f32 %v4609, 0.0
        %v4866 = vmax.f32 %v4610, 0.0
        %v4867 = vmax.f32 %v4611, 0.0
        %v4868 = vmax.f32 %v4612, 0.0
        %v4869 = vmax.f32 %v4613, 0.0
        %v4870 = vmax.f32 %v4614, 0.0
        %v4871 = vmax.f32 %v4615, 0.0
        %v4872 = vmax.f32 %v4616, 0.0
        %v4873 = vmax.f32 %v4617, 0.0
        %v4874 = vmax.f32 %v4618, 0.0
        %v4875 = vmax.f32 %v4619, 0.0
        %v4876 = vmax.f32 %v4620, 0.0
        %v4877 = vmax.f32 %v4621, 0.0
        %v4878 = vmax.f32 %v4622, 0.0
        %v4879 = vmax.f32 %v4623, 0.0
        %v4880 = vmax.f32 %v4624, 0.0
        %v4881 = vmax.f32 %v4625, 0.0
        %v4882 = vmax.f32 %v4626, 0.0
        %v4883 = vmax.f32 %v4627, 0.0
        %v4884 = vmax.f32 %v4628, 0.0
        %v4885 = vmax.f32 %v4629, 0.0
        %v4886 = vmax.f32 %v4630, 0.0
        %v4887 = vmax.f32 %v4631, 0.0
        %v4888 = vmax.f32 %v4632, 0.0
        %v4889 = vmax.f32 %v4633, 0.0
        %v4890 = vmax.f32 %v4634, 0.0
        %v4891 = vmax.f32 %v4635, 0.0
        %v4892 = vmax.f32 %v4636, 0.0
        %v4893 = vmax.f32 %v4637, 0.0
        %v4894 = vmax.f32 %v4638, 0.0
        %v4895 = vmax.f32 %v4639, 0.0
        %v4896 = vmax.f32 %v4640, 0.0
        %v4897 = vmax.f32 %v4641, 0.0
        %v4898 = vmax.f32 %v4642, 0.0
        %v4899 = vmax.f32 %v4643, 0.0
        %v4900 = vmax.f32 %v4644, 0.0
        %v4901 = vmax.f32 %v4645, 0.0
        %v4902 = vmax.f32 %v4646, 0.0
        %v4903 = vmax.f32 %v4647, 0.0
        %v4904 = vmax.f32 %v4648, 0.0
        %v4905 = vmax.f32 %v4649, 0.0
        %v4906 = vmax.f32 %v4650, 0.0
        %v4907 = vmax.f32 %v4651, 0.0
        %v4908 = vmax.f32 %v4652, 0.0
        %v4909 = vmax.f32 %v4653, 0.0
        %v4910 = vmax.f32 %v4654, 0.0
        %v4911 = vmax.f32 %v4655, 0.0
        %v4912 = vmax.f32 %v4656, 0.0
        %v4913 = vmax.f32 %v4657, 0.0
        %v4914 = vmax.f32 %v4658, 0.0
        %v4915 = vmax.f32 %v4659, 0.0
        %v4916 = vmax.f32 %v4660, 0.0
        %v4917 = vmax.f32 %v4661, 0.0
        %v4918 = vmax.f32 %v4662, 0.0
        %v4919 = vmax.f32 %v4663, 0.0
        %v4920 = vmax.f32 %v4664, 0.0
        %v4921 = vmax.f32 %v4665, 0.0
        %v4922 = vmax.f32 %v4666, 0.0
        %v4923 = vmax.f32 %v4667, 0.0
        %v4924 = vmax.f32 %v4668, 0.0
        %v4925 = vmax.f32 %v4669, 0.0
        %v4926 = vmax.f32 %v4670, 0.0
        %v4927 = vmax.f32 %v4671, 0.0
        %v4928 = vmax.f32 %v4672, 0.0
        %v4929 = vmax.f32 %v4673, 0.0
        %v4930 = vmax.f32 %v4674, 0.0
        %v4931 = vmax.f32 %v4675, 0.0
        %v4932 = vmax.f32 %v4676, 0.0
        %v4933 = vmax.f32 %v4677, 0.0
        %v4934 = vmax.f32 %v4678, 0.0
        %v4935 = vmax.f32 %v4679, 0.0
        %v4936 = vmax.f32 %v4680, 0.0
        %v4937 = vmax.f32 %v4681, 0.0
        %v4938 = vmax.f32 %v4682, 0.0
        %v4939 = vmax.f32 %v4683, 0.0
        %v4940 = vmax.f32 %v4684, 0.0
        %v4941 = vmax.f32 %v4685, 0.0
        %v4942 = vmax.f32 %v4686, 0.0
        %v4943 = vmax.f32 %v4687, 0.0
        %v4944 = vmax.f32 %v4688, 0.0
        %v4945 = vmax.f32 %v4689, 0.0
        %v4946 = vmax.f32 %v4690, 0.0
        %v4947 = vmax.f32 %v4691, 0.0
        %v4948 = vmax.f32 %v4692, 0.0
        %v4949 = vmax.f32 %v4693, 0.0
        %v4950 = vmax.f32 %v4694, 0.0
        %v4951 = vmax.f32 %v4695, 0.0
        %v4952 = vmax.f32 %v4696, 0.0
        %v4953 = vmax.f32 %v4697, 0.0
        %v4954 = vmax.f32 %v4698, 0.0
        %v4955 = vmax.f32 %v4699, 0.0
        %v4956 = vmax.f32 %v4700, 0.0
        %v4957 = vmax.f32 %v4701, 0.0
        %v4958 = vmax.f32 %v4702, 0.0
        %v4959 = vmax.f32 %v4703, 0.0
        %v4960 = vmax.f32 %v4704, 0.0
        %v4961 = vmax.f32 %v4705, 0.0
        %v4962 = vmax.f32 %v4706, 0.0
        %v4963 = vmax.f32 %v4707, 0.0
        %v4964 = vmax.f32 %v4708, 0.0
        %v4965 = vmax.f32 %v4709, 0.0
        %v4966 = vmax.f32 %v4710, 0.0
        %v4967 = vmax.f32 %v4711, 0.0
        %v4968 = vmax.f32 %v4712, 0.0
        %v4969 = vmax.f32 %v4713, 0.0
        %v4970 = vmax.f32 %v4714, 0.0
        %v4971 = vmax.f32 %v4715, 0.0
        %v4972 = vmax.f32 %v4716, 0.0
        %v4973 = vmax.f32 %v4717, 0.0
        %v4974 = vmax.f32 %v4718, 0.0
        %v4975 = vmax.f32 %v4719, 0.0
        %v4976 = vmax.f32 %v4720, 0.0
        %v4977 = vmax.f32 %v4721, 0.0
        %v4978 = vmax.f32 %v4722, 0.0
        %v4979 = vmax.f32 %v4723, 0.0
        %v4980 = vmax.f32 %v4724, 0.0
        %v4981 = vmax.f32 %v4725, 0.0
        %v4982 = vmax.f32 %v4726, 0.0
        %v4983 = vmax.f32 %v4727, 0.0
        %v4984 = vmax.f32 %v4728, 0.0
        %v4985 = vmax.f32 %v4729, 0.0
        %v4986 = vmax.f32 %v4730, 0.0
        %v4987 = vmax.f32 %v4731, 0.0
        %v4988 = vmax.f32 %v4732, 0.0
        %v4989 = vmax.f32 %v4733, 0.0
        %v4990 = vmax.f32 %v4734, 0.0
        %v4991 = vmax.f32 %v4735, 0.0
        %v4992 = vmax.f32 %v4736, 0.0
        %v4993 = vmax.f32 %v4737, 0.0
        %v4994 = vmax.f32 %v4738, 0.0
        %v4995 = vmax.f32 %v4739, 0.0
        %v4996 = vmax.f32 %v4740, 0.0
        %v4997 = vmax.f32 %v4741, 0.0
        %v4998 = vmax.f32 %v4742, 0.0
        %v4999 = vmax.f32 %v4743, 0.0
        %v5000 = vmax.f32 %v4744, 0.0
        %v5001 = vmax.f32 %v4745, 0.0
        %v5002 = vmax.f32 %v4746, 0.0
        %v5003 = vmax.f32 %v4747, 0.0
        %v5004 = vmax.f32 %v4748, 0.0
        %v5005 = vmax.f32 %v4749, 0.0
        %v5006 = vmax.f32 %v4750, 0.0
        %v5007 = vmax.f32 %v4751, 0.0
        %v5008 = vmax.f32 %v4752, 0.0
        %v5009 = vmax.f32 %v4753, 0.0
        %v5010 = vmax.f32 %v4754, 0.0
        %v5011 = vmax.f32 %v4755, 0.0
        %v5012 = vmax.f32 %v4756, 0.0
        %v5013 = vmax.f32 %v4757, 0.0
        %v5014 = vmax.f32 %v4758, 0.0
        %v5015 = vmax.f32 %v4759, 0.0
        %v5016 = vmax.f32 %v4760, 0.0
        %v5017 = vmax.f32 %v4761, 0.0
        %v5018 = vmax.f32 %v4762, 0.0
        %v5019 = vmax.f32 %v4763, 0.0
        %v5020 = vmax.f32 %v4764, 0.0
        %v5021 = vmax.f32 %v4765, 0.0
        %v5022 = vmax.f32 %v4766, 0.0
        %v5023 = vmax.f32 %v4767, 0.0
        %v5024 = vmax.f32 %v4768, 0.0
        %v5025 = vmax.f32 %v4769, 0.0
        %v5026 = vmax.f32 %v4770, 0.0
        %v5027 = vmax.f32 %v4771, 0.0
        %v5028 = vmax.f32 %v4772, 0.0
        %v5029 = vmax.f32 %v4773, 0.0
        %v5030 = vmax.f32 %v4774, 0.0
        %v5031 = vmax.f32 %v4775, %v4777
        %v5032 = vmax.f32 %v4776, %v4778
        %v5033 = vmax.f32 %v4779, %v4781
        %v5034 = vmax.f32 %v4780, %v4782
        %v5035 = vmax.f32 %v4783, %v4785
        %v5036 = vmax.f32 %v4784, %v4786
        %v5037 = vmax.f32 %v4787, %v4789
        %v5038 = vmax.f32 %v4788, %v4790
        %v5039 = vmax.f32 %v4791, %v4793
        %v5040 = vmax.f32 %v4792, %v4794
        %v5041 = vmax.f32 %v4795, %v4797
        %v5042 = vmax.f32 %v4796, %v4798
        %v5043 = vmax.f32 %v4799, %v4801
        %v5044 = vmax.f32 %v4800, %v4802
        %v5045 = vmax.f32 %v4803, %v4805
        %v5046 = vmax.f32 %v4804, %v4806
        %v5047 = vmax.f32 %v4807, %v4809
        %v5048 = vmax.f32 %v4808, %v4810
        %v5049 = vmax.f32 %v4811, %v4813
        %v5050 = vmax.f32 %v4812, %v4814
        %v5051 = vmax.f32 %v4815, %v4817
        %v5052 = vmax.f32 %v4816, %v4818
        %v5053 = vmax.f32 %v4819, %v4821
        %v5054 = vmax.f32 %v4820, %v4822
        %v5055 = vmax.f32 %v4823, %v4825
        %v5056 = vmax.f32 %v4824, %v4826
        %v5057 = vmax.f32 %v4827, %v4829
        %v5058 = vmax.f32 %v4828, %v4830
        %v5059 = vmax.f32 %v4831, %v4833
        %v5060 = vmax.f32 %v4832, %v4834
        %v5061 = vmax.f32 %v4835, %v4837
        %v5062 = vmax.f32 %v4836, %v4838
        %v5063 = vmax.f32 %v4839, %v4841
        %v5064 = vmax.f32 %v4840, %v4842
        %v5065 = vmax.f32 %v4843, %v4845
        %v5066 = vmax.f32 %v4844, %v4846
        %v5067 = vmax.f32 %v4847, %v4849
        %v5068 = vmax.f32 %v4848, %v4850
        %v5069 = vmax.f32 %v4851, %v4853
        %v5070 = vmax.f32 %v4852, %v4854
        %v5071 = vmax.f32 %v4855, %v4857
        %v5072 = vmax.f32 %v4856, %v4858
        %v5073 = vmax.f32 %v4859, %v4861
        %v5074 = vmax.f32 %v4860, %v4862
        %v5075 = vmax.f32 %v4863, %v4865
        %v5076 = vmax.f32 %v4864, %v4866
        %v5077 = vmax.f32 %v4867, %v4869
        %v5078 = vmax.f32 %v4868, %v4870
        %v5079 = vmax.f32 %v4871, %v4873
        %v5080 = vmax.f32 %v4872, %v4874
        %v5081 = vmax.f32 %v4875, %v4877
        %v5082 = vmax.f32 %v4876, %v4878
        %v5083 = vmax.f32 %v4879, %v4881
        %v5084 = vmax.f32 %v4880, %v4882
        %v5085 = vmax.f32 %v4883, %v4885
        %v5086 = vmax.f32 %v4884, %v4886
        %v5087 = vmax.f32 %v4887, %v4889
        %v5088 = vmax.f32 %v4888, %v4890
        %v5089 = vmax.f32 %v4891, %v4893
        %v5090 = vmax.f32 %v4892, %v4894
        %v5091 = vmax.f32 %v4895, %v4897
        %v5092 = vmax.f32 %v4896, %v4898
        %v5093 = vmax.f32 %v4899, %v4901
        %v5094 = vmax.f32 %v4900, %v4902
        %v5095 = vmax.f32 %v4903, %v4905
        %v5096 = vmax.f32 %v4904, %v4906
        %v5097 = vmax.f32 %v4907, %v4909
        %v5098 = vmax.f32 %v4908, %v4910
        %v5099 = vmax.f32 %v4911, %v4913
        %v5100 = vmax.f32 %v4912, %v4914
        %v5101 = vmax.f32 %v4915, %v4917
        %v5102 = vmax.f32 %v4916, %v4918
        %v5103 = vmax.f32 %v4919, %v4921
        %v5104 = vmax.f32 %v4920, %v4922
        %v5105 = vmax.f32 %v4923, %v4925
        %v5106 = vmax.f32 %v4924, %v4926
        %v5107 = vmax.f32 %v4927, %v4929
        %v5108 = vmax.f32 %v4928, %v4930
        %v5109 = vmax.f32 %v4931, %v4933
        %v5110 = vmax.f32 %v4932, %v4934
        %v5111 = vmax.f32 %v4935, %v4937
        %v5112 = vmax.f32 %v4936, %v4938
        %v5113 = vmax.f32 %v4939, %v4941
        %v5114 = vmax.f32 %v4940, %v4942
        %v5115 = vmax.f32 %v4943, %v4945
        %v5116 = vmax.f32 %v4944, %v4946
        %v5117 = vmax.f32 %v4947, %v4949
        %v5118 = vmax.f32 %v4948, %v4950
        %v5119 = vmax.f32 %v4951, %v4953
        %v5120 = vmax.f32 %v4952, %v4954
        %v5121 = vmax.f32 %v4955, %v4957
        %v5122 = vmax.f32 %v4956, %v4958
        %v5123 = vmax.f32 %v4959, %v4961
        %v5124 = vmax.f32 %v4960, %v4962
        %v5125 = vmax.f32 %v4963, %v4965
        %v5126 = vmax.f32 %v4964, %v4966
        %v5127 = vmax.f32 %v4967, %v4969
        %v5128 = vmax.f32 %v4968, %v4970
        %v5129 = vmax.f32 %v4971, %v4973
        %v5130 = vmax.f32 %v4972, %v4974
        %v5131 = vmax.f32 %v4975, %v4977
        %v5132 = vmax.f32 %v4976, %v4978
        %v5133 = vmax.f32 %v4979, %v4981
        %v5134 = vmax.f32 %v4980, %v4982
        %v5135 = vmax.f32 %v4983, %v4985
        %v5136 = vmax.f32 %v4984, %v4986
        %v5137 = vmax.f32 %v4987, %v4989
        %v5138 = vmax.f32 %v4988, %v4990
        %v5139 = vmax.f32 %v4991, %v4993
        %v5140 = vmax.f32 %v4992, %v4994
        %v5141 = vmax.f32 %v4995, %v4997
        %v5142 = vmax.f32 %v4996, %v4998
        %v5143 = vmax.f32 %v4999, %v5001
        %v5144 = vmax.f32 %v5000, %v5002
        %v5145 = vmax.f32 %v5003, %v5005
        %v5146 = vmax.f32 %v5004, %v5006
        %v5147 = vmax.f32 %v5007, %v5009
        %v5148 = vmax.f32 %v5008, %v5010
        %v5149 = vmax.f32 %v5011, %v5013
        %v5150 = vmax.f32 %v5012, %v5014
        %v5151 = vmax.f32 %v5015, %v5017
        %v5152 = vmax.f32 %v5016, %v5018
        %v5153 = vmax.f32 %v5019, %v5021
        %v5154 = vmax.f32 %v5020, %v5022
        %v5155 = vmax.f32 %v5023, %v5025
        %v5156 = vmax.f32 %v5024, %v5026
        %v5157 = vmax.f32 %v5027, %v5029
        %v5158 = vmax.f32 %v5028, %v5030
        %v5159 = vmax.f32 %v5031, %v5035
        %v5160 = vmax.f32 %v5032, %v5036
        %v5161 = vmax.f32 %v5033, %v5037
        %v5162 = vmax.f32 %v5034, %v5038
        %v5163 = vmax.f32 %v5039, %v5043
        %v5164 = vmax.f32 %v5040, %v5044
        %v5165 = vmax.f32 %v5041, %v5045
        %v5166 = vmax.f32 %v5042, %v5046
        %v5167 = vmax.f32 %v5047, %v5051
        %v5168 = vmax.f32 %v5048, %v5052
        %v5169 = vmax.f32 %v5049, %v5053
        %v5170 = vmax.f32 %v5050, %v5054
        %v5171 = vmax.f32 %v5055, %v5059
        %v5172 = vmax.f32 %v5056, %v5060
        %v5173 = vmax.f32 %v5057, %v5061
        %v5174 = vmax.f32 %v5058, %v5062
        %v5175 = vmax.f32 %v5063, %v5067
        %v5176 = vmax.f32 %v5064, %v5068
        %v5177 = vmax.f32 %v5065, %v5069
        %v5178 = vmax.f32 %v5066, %v5070
        %v5179 = vmax.f32 %v5071, %v5075
        %v5180 = vmax.f32 %v5072, %v5076
        %v5181 = vmax.f32 %v5073, %v5077
        %v5182 = vmax.f32 %v5074, %v5078
        %v5183 = vmax.f32 %v5079, %v5083
        %v5184 = vmax.f32 %v5080, %v5084
        %v5185 = vmax.f32 %v5081, %v5085
        %v5186 = vmax.f32 %v5082, %v5086
        %v5187 = vmax.f32 %v5087, %v5091
        %v5188 = vmax.f32 %v5088, %v5092
        %v5189 = vmax.f32 %v5089, %v5093
        %v5190 = vmax.f32 %v5090, %v5094
        %v5191 = vmax.f32 %v5095, %v5099
        %v5192 = vmax.f32 %v5096, %v5100
        %v5193 = vmax.f32 %v5097, %v5101
        %v5194 = vmax.f32 %v5098, %v5102
        %v5195 = vmax.f32 %v5103, %v5107
        %v5196 = vmax.f32 %v5104, %v5108
        %v5197 = vmax.f32 %v5105, %v5109
        %v5198 = vmax.f32 %v5106, %v5110
        %v5199 = vmax.f32 %v5111, %v5115
        %v5200 = vmax.f32 %v5112, %v5116
        %v5201 = vmax.f32 %v5113, %v5117
        %v5202 = vmax.f32 %v5114, %v5118
        %v5203 = vmax.f32 %v5119, %v5123
        %v5204 = vmax.f32 %v5120, %v5124
        %v5205 = vmax.f32 %v5121, %v5125
        %v5206 = vmax.f32 %v5122, %v5126
        %v5207 = vmax.f32 %v5127, %v5131
        %v5208 = vmax.f32 %v5128, %v5132
        %v5209 = vmax.f32 %v5129, %v5133
        %v5210 = vmax.f32 %v5130, %v5134
        %v5211 = vmax.f32 %v5135, %v5139
        %v5212 = vmax.f32 %v5136, %v5140
        %v5213 = vmax.f32 %v5137, %v5141
        %v5214 = vmax.f32 %v5138, %v5142
        %v5215 = vmax.f32 %v5143, %v5147
        %v5216 = vmax.f32 %v5144, %v5148
        %v5217 = vmax.f32 %v5145, %v5149
        %v5218 = vmax.f32 %v5146, %v5150
        %v5219 = vmax.f32 %v5151, %v5155
        %v5220 = vmax.f32 %v5152, %v5156
        %v5221 = vmax.f32 %v5153, %v5157
        %v5222 = vmax.f32 %v5154, %v5158
        %5223 = vst [vmem:[#allocation2] sm:$0xff] 0
        %5224 = vst [vmem:[#allocation2 + $0x8] sm:$0xff] 0
        %s5225 = scalar_lea.vmem [#allocation2], 272
        %5226 = vst [vmem:[%s5225] sm:$0xff] 0
        %5227 = vst [vmem:[%s5225 + $0x8] sm:$0xff] 0
        %v5228 = vpack.c.bf16 %v5161, %v5159
        %v5229 = vpack.c.bf16 %v5162, %v5160
        %v5230 = vpack.c.bf16 %v5165, %v5163
        %v5231 = vpack.c.bf16 %v5166, %v5164
        %v5232 = vpack.c.bf16 %v5169, %v5167
        %v5233 = vpack.c.bf16 %v5170, %v5168
        %v5234 = vpack.c.bf16 %v5173, %v5171
        %v5235 = vpack.c.bf16 %v5174, %v5172
        %v5236 = vpack.c.bf16 %v5177, %v5175
        %v5237 = vpack.c.bf16 %v5178, %v5176
        %v5238 = vpack.c.bf16 %v5181, %v5179
        %v5239 = vpack.c.bf16 %v5182, %v5180
        %v5240 = vpack.c.bf16 %v5185, %v5183
        %v5241 = vpack.c.bf16 %v5186, %v5184
        %v5242 = vpack.c.bf16 %v5189, %v5187
        %v5243 = vpack.c.bf16 %v5190, %v5188
        %v5244 = vpack.c.bf16 %v5193, %v5191
        %v5245 = vpack.c.bf16 %v5194, %v5192
        %v5246 = vpack.c.bf16 %v5197, %v5195
        %v5247 = vpack.c.bf16 %v5198, %v5196
        %v5248 = vpack.c.bf16 %v5201, %v5199
        %v5249 = vpack.c.bf16 %v5202, %v5200
        %v5250 = vpack.c.bf16 %v5205, %v5203
        %v5251 = vpack.c.bf16 %v5206, %v5204
        %v5252 = vpack.c.bf16 %v5209, %v5207
        %v5253 = vpack.c.bf16 %v5210, %v5208
        %v5254 = vpack.c.bf16 %v5213, %v5211
        %v5255 = vpack.c.bf16 %v5214, %v5212
        %v5256 = vpack.c.bf16 %v5217, %v5215
        %v5257 = vpack.c.bf16 %v5218, %v5216
        %v5258 = vpack.c.bf16 %v5221, %v5219
        %v5259 = vpack.c.bf16 %v5222, %v5220
        %v5292 = vunpack.c.l.b16 %v5228
        %v5293 = vunpack.c.l.b16 %v5229
        %v5294 = vunpack.c.h.b16 %v5228
        %v5295 = vunpack.c.h.b16 %v5229
        %v5296 = vunpack.c.l.b16 %v5230
        %v5297 = vunpack.c.l.b16 %v5231
        %v5298 = vunpack.c.h.b16 %v5230
        %v5299 = vunpack.c.h.b16 %v5231
        %v5300 = vunpack.c.l.b16 %v5232
        %v5301 = vunpack.c.l.b16 %v5233
        %v5302 = vunpack.c.h.b16 %v5232
        %v5303 = vunpack.c.h.b16 %v5233
        %v5304 = vunpack.c.l.b16 %v5234
        %v5305 = vunpack.c.l.b16 %v5235
        %v5306 = vunpack.c.h.b16 %v5234
        %v5307 = vunpack.c.h.b16 %v5235
        %v5308 = vunpack.c.l.b16 %v5236
        %v5309 = vunpack.c.l.b16 %v5237
        %v5310 = vunpack.c.h.b16 %v5236
        %v5311 = vunpack.c.h.b16 %v5237
        %v5312 = vunpack.c.l.b16 %v5238
        %v5313 = vunpack.c.l.b16 %v5239
        %v5314 = vunpack.c.h.b16 %v5238
        %v5315 = vunpack.c.h.b16 %v5239
        %v5316 = vunpack.c.l.b16 %v5240
        %v5317 = vunpack.c.l.b16 %v5241
        %v5318 = vunpack.c.h.b16 %v5240
        %v5319 = vunpack.c.h.b16 %v5241
        %v5320 = vunpack.c.l.b16 %v5242
        %v5321 = vunpack.c.l.b16 %v5243
        %v5322 = vunpack.c.h.b16 %v5242
        %v5323 = vunpack.c.h.b16 %v5243
        %v5324 = vunpack.c.l.b16 %v5244
        %v5325 = vunpack.c.l.b16 %v5245
        %v5326 = vunpack.c.h.b16 %v5244
        %v5327 = vunpack.c.h.b16 %v5245
        %v5328 = vunpack.c.l.b16 %v5246
        %v5329 = vunpack.c.l.b16 %v5247
        %v5330 = vunpack.c.h.b16 %v5246
        %v5331 = vunpack.c.h.b16 %v5247
        %v5332 = vunpack.c.l.b16 %v5248
        %v5333 = vunpack.c.l.b16 %v5249
        %v5334 = vunpack.c.h.b16 %v5248
        %v5335 = vunpack.c.h.b16 %v5249
        %v5336 = vunpack.c.l.b16 %v5250
        %v5337 = vunpack.c.l.b16 %v5251
        %v5338 = vunpack.c.h.b16 %v5250
        %v5339 = vunpack.c.h.b16 %v5251
        %v5340 = vunpack.c.l.b16 %v5252
        %v5341 = vunpack.c.l.b16 %v5253
        %v5342 = vunpack.c.h.b16 %v5252
        %v5343 = vunpack.c.h.b16 %v5253
        %v5344 = vunpack.c.l.b16 %v5254
        %v5345 = vunpack.c.l.b16 %v5255
        %v5346 = vunpack.c.h.b16 %v5254
        %v5347 = vunpack.c.h.b16 %v5255
        %v5348 = vunpack.c.l.b16 %v5256
        %v5349 = vunpack.c.l.b16 %v5257
        %v5350 = vunpack.c.h.b16 %v5256
        %v5351 = vunpack.c.h.b16 %v5257
        %v5352 = vunpack.c.l.b16 %v5258
        %v5353 = vunpack.c.l.b16 %v5259
        %v5354 = vunpack.c.h.b16 %v5258
        %v5355 = vunpack.c.h.b16 %v5259
        %v5356 = vpack.c.b16 %v5293, %v5292
        %v5357 = vpack.c.b16 %v5295, %v5294
        %v5358 = vpack.c.b16 %v5297, %v5296
        %v5359 = vpack.c.b16 %v5299, %v5298
        %v5360 = vpack.c.b16 %v5301, %v5300
        %v5361 = vpack.c.b16 %v5303, %v5302
        %v5362 = vpack.c.b16 %v5305, %v5304
        %v5363 = vpack.c.b16 %v5307, %v5306
        %v5364 = vpack.c.b16 %v5309, %v5308
        %v5365 = vpack.c.b16 %v5311, %v5310
        %v5366 = vpack.c.b16 %v5313, %v5312
        %v5367 = vpack.c.b16 %v5315, %v5314
        %v5368 = vpack.c.b16 %v5317, %v5316
        %v5369 = vpack.c.b16 %v5319, %v5318
        %v5370 = vpack.c.b16 %v5321, %v5320
        %v5371 = vpack.c.b16 %v5323, %v5322
        %v5372 = vpack.c.b16 %v5325, %v5324
        %v5373 = vpack.c.b16 %v5327, %v5326
        %v5374 = vpack.c.b16 %v5329, %v5328
        %v5375 = vpack.c.b16 %v5331, %v5330
        %v5376 = vpack.c.b16 %v5333, %v5332
        %v5377 = vpack.c.b16 %v5335, %v5334
        %v5378 = vpack.c.b16 %v5337, %v5336
        %v5379 = vpack.c.b16 %v5339, %v5338
        %v5380 = vpack.c.b16 %v5341, %v5340
        %v5381 = vpack.c.b16 %v5343, %v5342
        %v5382 = vpack.c.b16 %v5345, %v5344
        %v5383 = vpack.c.b16 %v5347, %v5346
        %v5384 = vpack.c.b16 %v5349, %v5348
        %v5385 = vpack.c.b16 %v5351, %v5350
        %v5386 = vpack.c.b16 %v5353, %v5352
        %v5387 = vpack.c.b16 %v5355, %v5354
        %s5420 = scalar_lea.vmem [#allocation2], 16
        %5421 = vst [vmem:[%s5420] sm:$0xff] %v5356
        %5422 = vst [vmem:[%s5420 + $0x8] sm:$0xff] %v5357
        %5423 = vst [vmem:[%s5420 + $0x10] sm:$0xff] %v5358
        %5424 = vst [vmem:[%s5420 + $0x18] sm:$0xff] %v5359
        %5425 = vst [vmem:[%s5420 + $0x20] sm:$0xff] %v5360
        %5426 = vst [vmem:[%s5420 + $0x28] sm:$0xff] %v5361
        %5427 = vst [vmem:[%s5420 + $0x30] sm:$0xff] %v5362
        %5428 = vst [vmem:[%s5420 + $0x38] sm:$0xff] %v5363
        %5429 = vst [vmem:[%s5420 + $0x40] sm:$0xff] %v5364
        %5430 = vst [vmem:[%s5420 + $0x48] sm:$0xff] %v5365
        %5431 = vst [vmem:[%s5420 + $0x50] sm:$0xff] %v5366
        %5432 = vst [vmem:[%s5420 + $0x58] sm:$0xff] %v5367
        %5433 = vst [vmem:[%s5420 + $0x60] sm:$0xff] %v5368
        %5434 = vst [vmem:[%s5420 + $0x68] sm:$0xff] %v5369
        %5435 = vst [vmem:[%s5420 + $0x70] sm:$0xff] %v5370
        %5436 = vst [vmem:[%s5420 + $0x78] sm:$0xff] %v5371
        %5437 = vst [vmem:[%s5420 + $0x80] sm:$0xff] %v5372
        %5438 = vst [vmem:[%s5420 + $0x88] sm:$0xff] %v5373
        %5439 = vst [vmem:[%s5420 + $0x90] sm:$0xff] %v5374
        %5440 = vst [vmem:[%s5420 + $0x98] sm:$0xff] %v5375
        %5441 = vst [vmem:[%s5420 + $0xa0] sm:$0xff] %v5376
        %5442 = vst [vmem:[%s5420 + $0xa8] sm:$0xff] %v5377
        %5443 = vst [vmem:[%s5420 + $0xb0] sm:$0xff] %v5378
        %5444 = vst [vmem:[%s5420 + $0xb8] sm:$0xff] %v5379
        %5445 = vst [vmem:[%s5420 + $0xc0] sm:$0xff] %v5380
        %5446 = vst [vmem:[%s5420 + $0xc8] sm:$0xff] %v5381
        %5447 = vst [vmem:[%s5420 + $0xd0] sm:$0xff] %v5382
        %5448 = vst [vmem:[%s5420 + $0xd8] sm:$0xff] %v5383
        %5449 = vst [vmem:[%s5420 + $0xe0] sm:$0xff] %v5384
        %5450 = vst [vmem:[%s5420 + $0xe8] sm:$0xff] %v5385
        %5451 = vst [vmem:[%s5420 + $0xf0] sm:$0xff] %v5386
        %5452 = vst [vmem:[%s5420 + $0xf8] sm:$0xff] %v5387
        %v5453 = vld [vmem:[#allocation2] sm:$0xff]
        %v5454 = vld [vmem:[#allocation2 + $0x8] sm:$0xff]
        %v5455 = vld [vmem:[#allocation2 + $0x10] sm:$0xff]
        %v5456 = vld [vmem:[#allocation2 + $0x18] sm:$0xff]
        %v5457 = vld [vmem:[#allocation2 + $0x20] sm:$0xff]
        %v5458 = vld [vmem:[#allocation2 + $0x28] sm:$0xff]
        %v5459 = vld [vmem:[#allocation2 + $0x30] sm:$0xff]
        %v5460 = vld [vmem:[#allocation2 + $0x38] sm:$0xff]
        %v5461 = vld [vmem:[#allocation2 + $0x40] sm:$0xff]
        %v5462 = vld [vmem:[#allocation2 + $0x48] sm:$0xff]
        %v5463 = vld [vmem:[#allocation2 + $0x50] sm:$0xff]
        %v5464 = vld [vmem:[#allocation2 + $0x58] sm:$0xff]
        %v5465 = vld [vmem:[#allocation2 + $0x60] sm:$0xff]
        %v5466 = vld [vmem:[#allocation2 + $0x68] sm:$0xff]
        %v5467 = vld [vmem:[#allocation2 + $0x70] sm:$0xff]
        %v5468 = vld [vmem:[#allocation2 + $0x78] sm:$0xff]
        %v5469 = vld [vmem:[#allocation2 + $0x80] sm:$0xff]
        %v5470 = vld [vmem:[#allocation2 + $0x88] sm:$0xff]
        %v5471 = vld [vmem:[#allocation2 + $0x90] sm:$0xff]
        %v5472 = vld [vmem:[#allocation2 + $0x98] sm:$0xff]
        %v5473 = vld [vmem:[#allocation2 + $0xa0] sm:$0xff]
        %v5474 = vld [vmem:[#allocation2 + $0xa8] sm:$0xff]
        %v5475 = vld [vmem:[#allocation2 + $0xb0] sm:$0xff]
        %v5476 = vld [vmem:[#allocation2 + $0xb8] sm:$0xff]
        %v5477 = vld [vmem:[#allocation2 + $0xc0] sm:$0xff]
        %v5478 = vld [vmem:[#allocation2 + $0xc8] sm:$0xff]
        %v5479 = vld [vmem:[#allocation2 + $0xd0] sm:$0xff]
        %v5480 = vld [vmem:[#allocation2 + $0xd8] sm:$0xff]
        %v5481 = vld [vmem:[#allocation2 + $0xe0] sm:$0xff]
        %v5482 = vld [vmem:[#allocation2 + $0xe8] sm:$0xff]
        %v5483 = vld [vmem:[#allocation2 + $0xf0] sm:$0xff]
        %v5484 = vld [vmem:[#allocation2 + $0xf8] sm:$0xff]
        %v5485 = vld [vmem:[#allocation9] sm:$0xff]
        %v5486 = vld [vmem:[#allocation9 + $0x8] sm:$0xff]
        %v5487 = vld [vmem:[#allocation9 + $0x10] sm:$0xff]
        %v5488 = vld [vmem:[#allocation9 + $0x18] sm:$0xff]
        %v5489 = vld [vmem:[#allocation9 + $0x20] sm:$0xff]
        %v5490 = vld [vmem:[#allocation9 + $0x28] sm:$0xff]
        %v5491 = vld [vmem:[#allocation9 + $0x30] sm:$0xff]
        %v5492 = vld [vmem:[#allocation9 + $0x38] sm:$0xff]
        %v5493 = vld [vmem:[#allocation9 + $0x40] sm:$0xff]
        %v5494 = vld [vmem:[#allocation9 + $0x48] sm:$0xff]
        %v5495 = vld [vmem:[#allocation9 + $0x50] sm:$0xff]
        %v5496 = vld [vmem:[#allocation9 + $0x58] sm:$0xff]
        %v5497 = vld [vmem:[#allocation9 + $0x60] sm:$0xff]
        %v5498 = vld [vmem:[#allocation9 + $0x68] sm:$0xff]
        %v5499 = vld [vmem:[#allocation9 + $0x70] sm:$0xff]
        %v5500 = vld [vmem:[#allocation9 + $0x78] sm:$0xff]
        %v5501 = vld [vmem:[#allocation9 + $0x80] sm:$0xff]
        %v5502 = vld [vmem:[#allocation9 + $0x88] sm:$0xff]
        %v5503 = vld [vmem:[#allocation9 + $0x90] sm:$0xff]
        %v5504 = vld [vmem:[#allocation9 + $0x98] sm:$0xff]
        %v5505 = vld [vmem:[#allocation9 + $0xa0] sm:$0xff]
        %v5506 = vld [vmem:[#allocation9 + $0xa8] sm:$0xff]
        %v5507 = vld [vmem:[#allocation9 + $0xb0] sm:$0xff]
        %v5508 = vld [vmem:[#allocation9 + $0xb8] sm:$0xff]
        %v5509 = vld [vmem:[#allocation9 + $0xc0] sm:$0xff]
        %v5510 = vld [vmem:[#allocation9 + $0xc8] sm:$0xff]
        %v5511 = vld [vmem:[#allocation9 + $0xd0] sm:$0xff]
        %v5512 = vld [vmem:[#allocation9 + $0xd8] sm:$0xff]
        %v5513 = vld [vmem:[#allocation9 + $0xe0] sm:$0xff]
        %v5514 = vld [vmem:[#allocation9 + $0xe8] sm:$0xff]
        %v5515 = vld [vmem:[#allocation9 + $0xf0] sm:$0xff]
        %v5516 = vld [vmem:[#allocation9 + $0xf8] sm:$0xff]
        %v5517 = vld [vmem:[#allocation9 + $0x100] sm:$0xff]
        %v5518 = vld [vmem:[#allocation9 + $0x108] sm:$0xff]
        %v5519 = vld [vmem:[#allocation9 + $0x110] sm:$0xff]
        %v5520 = vld [vmem:[#allocation9 + $0x118] sm:$0xff]
        %v5521 = vld [vmem:[#allocation9 + $0x120] sm:$0xff]
        %v5522 = vld [vmem:[#allocation9 + $0x128] sm:$0xff]
        %v5523 = vld [vmem:[#allocation9 + $0x130] sm:$0xff]
        %v5524 = vld [vmem:[#allocation9 + $0x138] sm:$0xff]
        %v5525 = vld [vmem:[#allocation9 + $0x140] sm:$0xff]
        %v5526 = vld [vmem:[#allocation9 + $0x148] sm:$0xff]
        %v5527 = vld [vmem:[#allocation9 + $0x150] sm:$0xff]
        %v5528 = vld [vmem:[#allocation9 + $0x158] sm:$0xff]
        %v5529 = vld [vmem:[#allocation9 + $0x160] sm:$0xff]
        %v5530 = vld [vmem:[#allocation9 + $0x168] sm:$0xff]
        %v5531 = vld [vmem:[#allocation9 + $0x170] sm:$0xff]
        %v5532 = vld [vmem:[#allocation9 + $0x178] sm:$0xff]
        %v5533 = vld [vmem:[#allocation9 + $0x180] sm:$0xff]
        %v5534 = vld [vmem:[#allocation9 + $0x188] sm:$0xff]
        %v5535 = vld [vmem:[#allocation9 + $0x190] sm:$0xff]
        %v5536 = vld [vmem:[#allocation9 + $0x198] sm:$0xff]
        %v5537 = vld [vmem:[#allocation9 + $0x1a0] sm:$0xff]
        %v5538 = vld [vmem:[#allocation9 + $0x1a8] sm:$0xff]
        %v5539 = vld [vmem:[#allocation9 + $0x1b0] sm:$0xff]
        %v5540 = vld [vmem:[#allocation9 + $0x1b8] sm:$0xff]
        %v5541 = vld [vmem:[#allocation9 + $0x1c0] sm:$0xff]
        %v5542 = vld [vmem:[#allocation9 + $0x1c8] sm:$0xff]
        %v5543 = vld [vmem:[#allocation9 + $0x1d0] sm:$0xff]
        %v5544 = vld [vmem:[#allocation9 + $0x1d8] sm:$0xff]
        %v5545 = vld [vmem:[#allocation9 + $0x1e0] sm:$0xff]
        %v5546 = vld [vmem:[#allocation9 + $0x1e8] sm:$0xff]
        %v5547 = vld [vmem:[#allocation9 + $0x1f0] sm:$0xff]
        %v5548 = vld [vmem:[#allocation9 + $0x1f8] sm:$0xff]
        %v5549 = vld [vmem:[%s5420] sm:$0xff]
        %v5550 = vld [vmem:[%s5420 + $0x8] sm:$0xff]
        %v5551 = vld [vmem:[%s5420 + $0x10] sm:$0xff]
        %v5552 = vld [vmem:[%s5420 + $0x18] sm:$0xff]
        %v5553 = vld [vmem:[%s5420 + $0x20] sm:$0xff]
        %v5554 = vld [vmem:[%s5420 + $0x28] sm:$0xff]
        %v5555 = vld [vmem:[%s5420 + $0x30] sm:$0xff]
        %v5556 = vld [vmem:[%s5420 + $0x38] sm:$0xff]
        %v5557 = vld [vmem:[%s5420 + $0x40] sm:$0xff]
        %v5558 = vld [vmem:[%s5420 + $0x48] sm:$0xff]
        %v5559 = vld [vmem:[%s5420 + $0x50] sm:$0xff]
        %v5560 = vld [vmem:[%s5420 + $0x58] sm:$0xff]
        %v5561 = vld [vmem:[%s5420 + $0x60] sm:$0xff]
        %v5562 = vld [vmem:[%s5420 + $0x68] sm:$0xff]
        %v5563 = vld [vmem:[%s5420 + $0x70] sm:$0xff]
        %v5564 = vld [vmem:[%s5420 + $0x78] sm:$0xff]
        %v5565 = vld [vmem:[%s5420 + $0x80] sm:$0xff]
        %v5566 = vld [vmem:[%s5420 + $0x88] sm:$0xff]
        %v5567 = vld [vmem:[%s5420 + $0x90] sm:$0xff]
        %v5568 = vld [vmem:[%s5420 + $0x98] sm:$0xff]
        %v5569 = vld [vmem:[%s5420 + $0xa0] sm:$0xff]
        %v5570 = vld [vmem:[%s5420 + $0xa8] sm:$0xff]
        %v5571 = vld [vmem:[%s5420 + $0xb0] sm:$0xff]
        %v5572 = vld [vmem:[%s5420 + $0xb8] sm:$0xff]
        %v5573 = vld [vmem:[%s5420 + $0xc0] sm:$0xff]
        %v5574 = vld [vmem:[%s5420 + $0xc8] sm:$0xff]
        %v5575 = vld [vmem:[%s5420 + $0xd0] sm:$0xff]
        %v5576 = vld [vmem:[%s5420 + $0xd8] sm:$0xff]
        %v5577 = vld [vmem:[%s5420 + $0xe0] sm:$0xff]
        %v5578 = vld [vmem:[%s5420 + $0xe8] sm:$0xff]
        %v5579 = vld [vmem:[%s5420 + $0xf0] sm:$0xff]
        %v5580 = vld [vmem:[%s5420 + $0xf8] sm:$0xff]
        %s5581 = scalar_lea.vmem [#allocation9], 512
        %v5582 = vld [vmem:[%s5581] sm:$0xff]
        %v5583 = vld [vmem:[%s5581 + $0x8] sm:$0xff]
        %v5584 = vld [vmem:[%s5581 + $0x10] sm:$0xff]
        %v5585 = vld [vmem:[%s5581 + $0x18] sm:$0xff]
        %v5586 = vld [vmem:[%s5581 + $0x20] sm:$0xff]
        %v5587 = vld [vmem:[%s5581 + $0x28] sm:$0xff]
        %v5588 = vld [vmem:[%s5581 + $0x30] sm:$0xff]
        %v5589 = vld [vmem:[%s5581 + $0x38] sm:$0xff]
        %v5590 = vld [vmem:[%s5581 + $0x40] sm:$0xff]
        %v5591 = vld [vmem:[%s5581 + $0x48] sm:$0xff]
        %v5592 = vld [vmem:[%s5581 + $0x50] sm:$0xff]
        %v5593 = vld [vmem:[%s5581 + $0x58] sm:$0xff]
        %v5594 = vld [vmem:[%s5581 + $0x60] sm:$0xff]
        %v5595 = vld [vmem:[%s5581 + $0x68] sm:$0xff]
        %v5596 = vld [vmem:[%s5581 + $0x70] sm:$0xff]
        %v5597 = vld [vmem:[%s5581 + $0x78] sm:$0xff]
        %v5598 = vld [vmem:[%s5581 + $0x80] sm:$0xff]
        %v5599 = vld [vmem:[%s5581 + $0x88] sm:$0xff]
        %v5600 = vld [vmem:[%s5581 + $0x90] sm:$0xff]
        %v5601 = vld [vmem:[%s5581 + $0x98] sm:$0xff]
        %v5602 = vld [vmem:[%s5581 + $0xa0] sm:$0xff]
        %v5603 = vld [vmem:[%s5581 + $0xa8] sm:$0xff]
        %v5604 = vld [vmem:[%s5581 + $0xb0] sm:$0xff]
        %v5605 = vld [vmem:[%s5581 + $0xb8] sm:$0xff]
        %v5606 = vld [vmem:[%s5581 + $0xc0] sm:$0xff]
        %v5607 = vld [vmem:[%s5581 + $0xc8] sm:$0xff]
        %v5608 = vld [vmem:[%s5581 + $0xd0] sm:$0xff]
        %v5609 = vld [vmem:[%s5581 + $0xd8] sm:$0xff]
        %v5610 = vld [vmem:[%s5581 + $0xe0] sm:$0xff]
        %v5611 = vld [vmem:[%s5581 + $0xe8] sm:$0xff]
        %v5612 = vld [vmem:[%s5581 + $0xf0] sm:$0xff]
        %v5613 = vld [vmem:[%s5581 + $0xf8] sm:$0xff]
        %v5614 = vld [vmem:[%s5581 + $0x100] sm:$0xff]
        %v5615 = vld [vmem:[%s5581 + $0x108] sm:$0xff]
        %v5616 = vld [vmem:[%s5581 + $0x110] sm:$0xff]
        %v5617 = vld [vmem:[%s5581 + $0x118] sm:$0xff]
        %v5618 = vld [vmem:[%s5581 + $0x120] sm:$0xff]
        %v5619 = vld [vmem:[%s5581 + $0x128] sm:$0xff]
        %v5620 = vld [vmem:[%s5581 + $0x130] sm:$0xff]
        %v5621 = vld [vmem:[%s5581 + $0x138] sm:$0xff]
        %v5622 = vld [vmem:[%s5581 + $0x140] sm:$0xff]
        %v5623 = vld [vmem:[%s5581 + $0x148] sm:$0xff]
        %v5624 = vld [vmem:[%s5581 + $0x150] sm:$0xff]
        %v5625 = vld [vmem:[%s5581 + $0x158] sm:$0xff]
        %v5626 = vld [vmem:[%s5581 + $0x160] sm:$0xff]
        %v5627 = vld [vmem:[%s5581 + $0x168] sm:$0xff]
        %v5628 = vld [vmem:[%s5581 + $0x170] sm:$0xff]
        %v5629 = vld [vmem:[%s5581 + $0x178] sm:$0xff]
        %v5630 = vld [vmem:[%s5581 + $0x180] sm:$0xff]
        %v5631 = vld [vmem:[%s5581 + $0x188] sm:$0xff]
        %v5632 = vld [vmem:[%s5581 + $0x190] sm:$0xff]
        %v5633 = vld [vmem:[%s5581 + $0x198] sm:$0xff]
        %v5634 = vld [vmem:[%s5581 + $0x1a0] sm:$0xff]
        %v5635 = vld [vmem:[%s5581 + $0x1a8] sm:$0xff]
        %v5636 = vld [vmem:[%s5581 + $0x1b0] sm:$0xff]
        %v5637 = vld [vmem:[%s5581 + $0x1b8] sm:$0xff]
        %v5638 = vld [vmem:[%s5581 + $0x1c0] sm:$0xff]
        %v5639 = vld [vmem:[%s5581 + $0x1c8] sm:$0xff]
        %v5640 = vld [vmem:[%s5581 + $0x1d0] sm:$0xff]
        %v5641 = vld [vmem:[%s5581 + $0x1d8] sm:$0xff]
        %v5642 = vld [vmem:[%s5581 + $0x1e0] sm:$0xff]
        %v5643 = vld [vmem:[%s5581 + $0x1e8] sm:$0xff]
        %v5644 = vld [vmem:[%s5581 + $0x1f0] sm:$0xff]
        %v5645 = vld [vmem:[%s5581 + $0x1f8] sm:$0xff]
        %v5678 = vunpack.c.l.b16 %v5549
        %v5679 = vunpack.c.h.b16 %v5549
        %v5680 = vunpack.c.l.b16 %v5550
        %v5681 = vunpack.c.h.b16 %v5550
        %v5682 = vunpack.c.l.b16 %v5551
        %v5683 = vunpack.c.h.b16 %v5551
        %v5684 = vunpack.c.l.b16 %v5552
        %v5685 = vunpack.c.h.b16 %v5552
        %v5686 = vunpack.c.l.b16 %v5553
        %v5687 = vunpack.c.h.b16 %v5553
        %v5688 = vunpack.c.l.b16 %v5554
        %v5689 = vunpack.c.h.b16 %v5554
        %v5690 = vunpack.c.l.b16 %v5555
        %v5691 = vunpack.c.h.b16 %v5555
        %v5692 = vunpack.c.l.b16 %v5556
        %v5693 = vunpack.c.h.b16 %v5556
        %v5694 = vunpack.c.l.b16 %v5557
        %v5695 = vunpack.c.h.b16 %v5557
        %v5696 = vunpack.c.l.b16 %v5558
        %v5697 = vunpack.c.h.b16 %v5558
        %v5698 = vunpack.c.l.b16 %v5559
        %v5699 = vunpack.c.h.b16 %v5559
        %v5700 = vunpack.c.l.b16 %v5560
        %v5701 = vunpack.c.h.b16 %v5560
        %v5702 = vunpack.c.l.b16 %v5561
        %v5703 = vunpack.c.h.b16 %v5561
        %v5704 = vunpack.c.l.b16 %v5562
        %v5705 = vunpack.c.h.b16 %v5562
        %v5706 = vunpack.c.l.b16 %v5563
        %v5707 = vunpack.c.h.b16 %v5563
        %v5708 = vunpack.c.l.b16 %v5564
        %v5709 = vunpack.c.h.b16 %v5564
        %v5710 = vunpack.c.l.b16 %v5565
        %v5711 = vunpack.c.h.b16 %v5565
        %v5712 = vunpack.c.l.b16 %v5566
        %v5713 = vunpack.c.h.b16 %v5566
        %v5714 = vunpack.c.l.b16 %v5567
        %v5715 = vunpack.c.h.b16 %v5567
        %v5716 = vunpack.c.l.b16 %v5568
        %v5717 = vunpack.c.h.b16 %v5568
        %v5718 = vunpack.c.l.b16 %v5569
        %v5719 = vunpack.c.h.b16 %v5569
        %v5720 = vunpack.c.l.b16 %v5570
        %v5721 = vunpack.c.h.b16 %v5570
        %v5722 = vunpack.c.l.b16 %v5571
        %v5723 = vunpack.c.h.b16 %v5571
        %v5724 = vunpack.c.l.b16 %v5572
        %v5725 = vunpack.c.h.b16 %v5572
        %v5726 = vunpack.c.l.b16 %v5573
        %v5727 = vunpack.c.h.b16 %v5573
        %v5728 = vunpack.c.l.b16 %v5574
        %v5729 = vunpack.c.h.b16 %v5574
        %v5730 = vunpack.c.l.b16 %v5575
        %v5731 = vunpack.c.h.b16 %v5575
        %v5732 = vunpack.c.l.b16 %v5576
        %v5733 = vunpack.c.h.b16 %v5576
        %v5734 = vunpack.c.l.b16 %v5577
        %v5735 = vunpack.c.h.b16 %v5577
        %v5736 = vunpack.c.l.b16 %v5578
        %v5737 = vunpack.c.h.b16 %v5578
        %v5738 = vunpack.c.l.b16 %v5579
        %v5739 = vunpack.c.h.b16 %v5579
        %v5740 = vunpack.c.l.b16 %v5580
        %v5741 = vunpack.c.h.b16 %v5580
        %v5742 = vpack.c.b16 %v5680, %v5678
        %v5743 = vpack.c.b16 %v5681, %v5679
        %v5744 = vpack.c.b16 %v5684, %v5682
        %v5745 = vpack.c.b16 %v5685, %v5683
        %v5746 = vpack.c.b16 %v5688, %v5686
        %v5747 = vpack.c.b16 %v5689, %v5687
        %v5748 = vpack.c.b16 %v5692, %v5690
        %v5749 = vpack.c.b16 %v5693, %v5691
        %v5750 = vpack.c.b16 %v5696, %v5694
        %v5751 = vpack.c.b16 %v5697, %v5695
        %v5752 = vpack.c.b16 %v5700, %v5698
        %v5753 = vpack.c.b16 %v5701, %v5699
        %v5754 = vpack.c.b16 %v5704, %v5702
        %v5755 = vpack.c.b16 %v5705, %v5703
        %v5756 = vpack.c.b16 %v5708, %v5706
        %v5757 = vpack.c.b16 %v5709, %v5707
        %v5758 = vpack.c.b16 %v5712, %v5710
        %v5759 = vpack.c.b16 %v5713, %v5711
        %v5760 = vpack.c.b16 %v5716, %v5714
        %v5761 = vpack.c.b16 %v5717, %v5715
        %v5762 = vpack.c.b16 %v5720, %v5718
        %v5763 = vpack.c.b16 %v5721, %v5719
        %v5764 = vpack.c.b16 %v5724, %v5722
        %v5765 = vpack.c.b16 %v5725, %v5723
        %v5766 = vpack.c.b16 %v5728, %v5726
        %v5767 = vpack.c.b16 %v5729, %v5727
        %v5768 = vpack.c.b16 %v5732, %v5730
        %v5769 = vpack.c.b16 %v5733, %v5731
        %v5770 = vpack.c.b16 %v5736, %v5734
        %v5771 = vpack.c.b16 %v5737, %v5735
        %v5772 = vpack.c.b16 %v5740, %v5738
        %v5773 = vpack.c.b16 %v5741, %v5739
        %v5870 = vunpack.c.l.b16 %v5582
        %v5871 = vunpack.c.h.b16 %v5582
        %v5872 = vunpack.c.l.b16 %v5583
        %v5873 = vunpack.c.h.b16 %v5583
        %v5874 = vunpack.c.l.b16 %v5584
        %v5875 = vunpack.c.h.b16 %v5584
        %v5876 = vunpack.c.l.b16 %v5585
        %v5877 = vunpack.c.h.b16 %v5585
        %v5878 = vunpack.c.l.b16 %v5586
        %v5879 = vunpack.c.h.b16 %v5586
        %v5880 = vunpack.c.l.b16 %v5587
        %v5881 = vunpack.c.h.b16 %v5587
        %v5882 = vunpack.c.l.b16 %v5588
        %v5883 = vunpack.c.h.b16 %v5588
        %v5884 = vunpack.c.l.b16 %v5589
        %v5885 = vunpack.c.h.b16 %v5589
        %v5886 = vunpack.c.l.b16 %v5590
        %v5887 = vunpack.c.h.b16 %v5590
        %v5888 = vunpack.c.l.b16 %v5591
        %v5889 = vunpack.c.h.b16 %v5591
        %v5890 = vunpack.c.l.b16 %v5592
        %v5891 = vunpack.c.h.b16 %v5592
        %v5892 = vunpack.c.l.b16 %v5593
        %v5893 = vunpack.c.h.b16 %v5593
        %v5894 = vunpack.c.l.b16 %v5594
        %v5895 = vunpack.c.h.b16 %v5594
        %v5896 = vunpack.c.l.b16 %v5595
        %v5897 = vunpack.c.h.b16 %v5595
        %v5898 = vunpack.c.l.b16 %v5596
        %v5899 = vunpack.c.h.b16 %v5596
        %v5900 = vunpack.c.l.b16 %v5597
        %v5901 = vunpack.c.h.b16 %v5597
        %v5902 = vunpack.c.l.b16 %v5598
        %v5903 = vunpack.c.h.b16 %v5598
        %v5904 = vunpack.c.l.b16 %v5599
        %v5905 = vunpack.c.h.b16 %v5599
        %v5906 = vunpack.c.l.b16 %v5600
        %v5907 = vunpack.c.h.b16 %v5600
        %v5908 = vunpack.c.l.b16 %v5601
        %v5909 = vunpack.c.h.b16 %v5601
        %v5910 = vunpack.c.l.b16 %v5602
        %v5911 = vunpack.c.h.b16 %v5602
        %v5912 = vunpack.c.l.b16 %v5603
        %v5913 = vunpack.c.h.b16 %v5603
        %v5914 = vunpack.c.l.b16 %v5604
        %v5915 = vunpack.c.h.b16 %v5604
        %v5916 = vunpack.c.l.b16 %v5605
        %v5917 = vunpack.c.h.b16 %v5605
        %v5918 = vunpack.c.l.b16 %v5606
        %v5919 = vunpack.c.h.b16 %v5606
        %v5920 = vunpack.c.l.b16 %v5607
        %v5921 = vunpack.c.h.b16 %v5607
        %v5922 = vunpack.c.l.b16 %v5608
        %v5923 = vunpack.c.h.b16 %v5608
        %v5924 = vunpack.c.l.b16 %v5609
        %v5925 = vunpack.c.h.b16 %v5609
        %v5926 = vunpack.c.l.b16 %v5610
        %v5927 = vunpack.c.h.b16 %v5610
        %v5928 = vunpack.c.l.b16 %v5611
        %v5929 = vunpack.c.h.b16 %v5611
        %v5930 = vunpack.c.l.b16 %v5612
        %v5931 = vunpack.c.h.b16 %v5612
        %v5932 = vunpack.c.l.b16 %v5613
        %v5933 = vunpack.c.h.b16 %v5613
        %v5934 = vunpack.c.l.b16 %v5614
        %v5935 = vunpack.c.h.b16 %v5614
        %v5936 = vunpack.c.l.b16 %v5615
        %v5937 = vunpack.c.h.b16 %v5615
        %v5938 = vunpack.c.l.b16 %v5616
        %v5939 = vunpack.c.h.b16 %v5616
        %v5940 = vunpack.c.l.b16 %v5617
        %v5941 = vunpack.c.h.b16 %v5617
        %v5942 = vunpack.c.l.b16 %v5618
        %v5943 = vunpack.c.h.b16 %v5618
        %v5944 = vunpack.c.l.b16 %v5619
        %v5945 = vunpack.c.h.b16 %v5619
        %v5946 = vunpack.c.l.b16 %v5620
        %v5947 = vunpack.c.h.b16 %v5620
        %v5948 = vunpack.c.l.b16 %v5621
        %v5949 = vunpack.c.h.b16 %v5621
        %v5950 = vunpack.c.l.b16 %v5622
        %v5951 = vunpack.c.h.b16 %v5622
        %v5952 = vunpack.c.l.b16 %v5623
        %v5953 = vunpack.c.h.b16 %v5623
        %v5954 = vunpack.c.l.b16 %v5624
        %v5955 = vunpack.c.h.b16 %v5624
        %v5956 = vunpack.c.l.b16 %v5625
        %v5957 = vunpack.c.h.b16 %v5625
        %v5958 = vunpack.c.l.b16 %v5626
        %v5959 = vunpack.c.h.b16 %v5626
        %v5960 = vunpack.c.l.b16 %v5627
        %v5961 = vunpack.c.h.b16 %v5627
        %v5962 = vunpack.c.l.b16 %v5628
        %v5963 = vunpack.c.h.b16 %v5628
        %v5964 = vunpack.c.l.b16 %v5629
        %v5965 = vunpack.c.h.b16 %v5629
        %v5966 = vunpack.c.l.b16 %v5630
        %v5967 = vunpack.c.h.b16 %v5630
        %v5968 = vunpack.c.l.b16 %v5631
        %v5969 = vunpack.c.h.b16 %v5631
        %v5970 = vunpack.c.l.b16 %v5632
        %v5971 = vunpack.c.h.b16 %v5632
        %v5972 = vunpack.c.l.b16 %v5633
        %v5973 = vunpack.c.h.b16 %v5633
        %v5974 = vunpack.c.l.b16 %v5634
        %v5975 = vunpack.c.h.b16 %v5634
        %v5976 = vunpack.c.l.b16 %v5635
        %v5977 = vunpack.c.h.b16 %v5635
        %v5978 = vunpack.c.l.b16 %v5636
        %v5979 = vunpack.c.h.b16 %v5636
        %v5980 = vunpack.c.l.b16 %v5637
        %v5981 = vunpack.c.h.b16 %v5637
        %v5982 = vunpack.c.l.b16 %v5638
        %v5983 = vunpack.c.h.b16 %v5638
        %v5984 = vunpack.c.l.b16 %v5639
        %v5985 = vunpack.c.h.b16 %v5639
        %v5986 = vunpack.c.l.b16 %v5640
        %v5987 = vunpack.c.h.b16 %v5640
        %v5988 = vunpack.c.l.b16 %v5641
        %v5989 = vunpack.c.h.b16 %v5641
        %v5990 = vunpack.c.l.b16 %v5642
        %v5991 = vunpack.c.h.b16 %v5642
        %v5992 = vunpack.c.l.b16 %v5643
        %v5993 = vunpack.c.h.b16 %v5643
        %v5994 = vunpack.c.l.b16 %v5644
        %v5995 = vunpack.c.h.b16 %v5644
        %v5996 = vunpack.c.l.b16 %v5645
        %v5997 = vunpack.c.h.b16 %v5645
        %v5998 = vpack.c.b16 %v5874, %v5870
        %v5999 = vpack.c.b16 %v5875, %v5871
        %v6000 = vpack.c.b16 %v5876, %v5872
        %v6001 = vpack.c.b16 %v5877, %v5873
        %v6002 = vpack.c.b16 %v5882, %v5878
        %v6003 = vpack.c.b16 %v5883, %v5879
        %v6004 = vpack.c.b16 %v5884, %v5880
        %v6005 = vpack.c.b16 %v5885, %v5881
        %v6006 = vpack.c.b16 %v5890, %v5886
        %v6007 = vpack.c.b16 %v5891, %v5887
        %v6008 = vpack.c.b16 %v5892, %v5888
        %v6009 = vpack.c.b16 %v5893, %v5889
        %v6010 = vpack.c.b16 %v5898, %v5894
        %v6011 = vpack.c.b16 %v5899, %v5895
        %v6012 = vpack.c.b16 %v5900, %v5896
        %v6013 = vpack.c.b16 %v5901, %v5897
        %v6014 = vpack.c.b16 %v5906, %v5902
        %v6015 = vpack.c.b16 %v5907, %v5903
        %v6016 = vpack.c.b16 %v5908, %v5904
        %v6017 = vpack.c.b16 %v5909, %v5905
        %v6018 = vpack.c.b16 %v5914, %v5910
        %v6019 = vpack.c.b16 %v5915, %v5911
        %v6020 = vpack.c.b16 %v5916, %v5912
        %v6021 = vpack.c.b16 %v5917, %v5913
        %v6022 = vpack.c.b16 %v5922, %v5918
        %v6023 = vpack.c.b16 %v5923, %v5919
        %v6024 = vpack.c.b16 %v5924, %v5920
        %v6025 = vpack.c.b16 %v5925, %v5921
        %v6026 = vpack.c.b16 %v5930, %v5926
        %v6027 = vpack.c.b16 %v5931, %v5927
        %v6028 = vpack.c.b16 %v5932, %v5928
        %v6029 = vpack.c.b16 %v5933, %v5929
        %v6030 = vpack.c.b16 %v5938, %v5934
        %v6031 = vpack.c.b16 %v5939, %v5935
        %v6032 = vpack.c.b16 %v5940, %v5936
        %v6033 = vpack.c.b16 %v5941, %v5937
        %v6034 = vpack.c.b16 %v5946, %v5942
        %v6035 = vpack.c.b16 %v5947, %v5943
        %v6036 = vpack.c.b16 %v5948, %v5944
        %v6037 = vpack.c.b16 %v5949, %v5945
        %v6038 = vpack.c.b16 %v5954, %v5950
        %v6039 = vpack.c.b16 %v5955, %v5951
        %v6040 = vpack.c.b16 %v5956, %v5952
        %v6041 = vpack.c.b16 %v5957, %v5953
        %v6042 = vpack.c.b16 %v5962, %v5958
        %v6043 = vpack.c.b16 %v5963, %v5959
        %v6044 = vpack.c.b16 %v5964, %v5960
        %v6045 = vpack.c.b16 %v5965, %v5961
        %v6046 = vpack.c.b16 %v5970, %v5966
        %v6047 = vpack.c.b16 %v5971, %v5967
        %v6048 = vpack.c.b16 %v5972, %v5968
        %v6049 = vpack.c.b16 %v5973, %v5969
        %v6050 = vpack.c.b16 %v5978, %v5974
        %v6051 = vpack.c.b16 %v5979, %v5975
        %v6052 = vpack.c.b16 %v5980, %v5976
        %v6053 = vpack.c.b16 %v5981, %v5977
        %v6054 = vpack.c.b16 %v5986, %v5982
        %v6055 = vpack.c.b16 %v5987, %v5983
        %v6056 = vpack.c.b16 %v5988, %v5984
        %v6057 = vpack.c.b16 %v5989, %v5985
        %v6058 = vpack.c.b16 %v5994, %v5990
        %v6059 = vpack.c.b16 %v5995, %v5991
        %v6060 = vpack.c.b16 %v5996, %v5992
        %v6061 = vpack.c.b16 %v5997, %v5993
        %6126 = vmatprep.subr.bf16.mxu0 %v6027
        %6127 = vmatpush1.bf16.msra.mxu0 %v6026
        %6128 = vmatprep.subr.bf16.mxu0 %v6023
        %6129 = vmatpush1.bf16.msra.mxu0 %v6022
        %6130 = vmatprep.subr.bf16.mxu0 %v6019
        %6131 = vmatpush1.bf16.msra.mxu0 %v6018
        %6132 = vmatprep.subr.bf16.mxu0 %v6015
        %6133 = vmatpush1.bf16.msra.mxu0 %v6014
        %6134 = vmatprep.subr.bf16.mxu0 %v6011
        %6135 = vmatpush1.bf16.msra.mxu0 %v6010
        %6136 = vmatprep.subr.bf16.mxu0 %v6007
        %6137 = vmatpush1.bf16.msra.mxu0 %v6006
        %6138 = vmatprep.subr.bf16.mxu0 %v6003
        %6139 = vmatpush1.bf16.msra.mxu0 %v6002
        %6140 = vmatprep.subr.bf16.mxu0 %v5999
        %6141 = vmatpush1.bf16.msra.mxu0 %v5998
        %6142 = vmatprep.subr.bf16.mxu0 %v6059
        %6143 = vmatpush2.bf16.msra.mxu0 %v6058
        %6144 = vmatprep.subr.bf16.mxu0 %v6055
        %6145 = vmatpush2.bf16.msra.mxu0 %v6054
        %6146 = vmatprep.subr.bf16.mxu0 %v6051
        %6147 = vmatpush2.bf16.msra.mxu0 %v6050
        %6148 = vmatprep.subr.bf16.mxu0 %v6047
        %6149 = vmatpush2.bf16.msra.mxu0 %v6046
        %6150 = vmatprep.subr.bf16.mxu0 %v6043
        %6151 = vmatpush2.bf16.msra.mxu0 %v6042
        %6152 = vmatprep.subr.bf16.mxu0 %v6039
        %6153 = vmatpush2.bf16.msra.mxu0 %v6038
        %6154 = vmatprep.subr.bf16.mxu0 %v6035
        %6155 = vmatpush2.bf16.msra.mxu0 %v6034
        %6156 = vmatprep.subr.bf16.mxu0 %v6031
        %6157 = vmatpush2.bf16.msra.mxu0 %v6030
        %6158 = vmatprep.mubr.bf16.mxu0 %v5743
        %6159 = vmatmul.mubr.bf16.gmra.mxu0 %v5742
        %v6160 = vpop.f32.mrf.mxu0
        %v6161 = vadd.f32 0.0, %v6160
        %v6162 = vpop.f32.mrf.mxu0
        %v6163 = vadd.f32 0.0, %v6162
        %v6164 = vpop.f32.mrf.mxu0
        %v6165 = vadd.f32 0.0, %v6164
        %v6166 = vpop.f32.mrf.mxu0
        %v6167 = vadd.f32 0.0, %v6166
        %6168 = vmatprep.mubr.bf16.mxu0 %v5745
        %6169 = vmatmul.mubr.bf16.gmra.mxu0 %v5744
        %v6170 = vpop.f32.mrf.mxu0
        %v6171 = vadd.f32 0.0, %v6170
        %v6172 = vpop.f32.mrf.mxu0
        %v6173 = vadd.f32 0.0, %v6172
        %v6174 = vpop.f32.mrf.mxu0
        %v6175 = vadd.f32 0.0, %v6174
        %v6176 = vpop.f32.mrf.mxu0
        %v6177 = vadd.f32 0.0, %v6176
        %6178 = vmatprep.mubr.bf16.mxu0 %v5747
        %6179 = vmatmul.mubr.bf16.gmra.mxu0 %v5746
        %v6180 = vpop.f32.mrf.mxu0
        %v6181 = vadd.f32 0.0, %v6180
        %v6182 = vpop.f32.mrf.mxu0
        %v6183 = vadd.f32 0.0, %v6182
        %v6184 = vpop.f32.mrf.mxu0
        %v6185 = vadd.f32 0.0, %v6184
        %v6186 = vpop.f32.mrf.mxu0
        %v6187 = vadd.f32 0.0, %v6186
        %6188 = vmatprep.mubr.bf16.mxu0 %v5749
        %6189 = vmatmul.mubr.bf16.gmra.mxu0 %v5748
        %v6190 = vpop.f32.mrf.mxu0
        %v6191 = vadd.f32 0.0, %v6190
        %v6192 = vpop.f32.mrf.mxu0
        %v6193 = vadd.f32 0.0, %v6192
        %v6194 = vpop.f32.mrf.mxu0
        %v6195 = vadd.f32 0.0, %v6194
        %v6196 = vpop.f32.mrf.mxu0
        %v6197 = vadd.f32 0.0, %v6196
        %6198 = vmatprep.mubr.bf16.mxu0 %v5751
        %6199 = vmatmul.mubr.bf16.gmra.mxu0 %v5750
        %v6200 = vpop.f32.mrf.mxu0
        %v6201 = vadd.f32 0.0, %v6200
        %v6202 = vpop.f32.mrf.mxu0
        %v6203 = vadd.f32 0.0, %v6202
        %v6204 = vpop.f32.mrf.mxu0
        %v6205 = vadd.f32 0.0, %v6204
        %v6206 = vpop.f32.mrf.mxu0
        %v6207 = vadd.f32 0.0, %v6206
        %6208 = vmatprep.mubr.bf16.mxu0 %v5753
        %6209 = vmatmul.mubr.bf16.gmra.mxu0 %v5752
        %v6210 = vpop.f32.mrf.mxu0
        %v6211 = vadd.f32 0.0, %v6210
        %v6212 = vpop.f32.mrf.mxu0
        %v6213 = vadd.f32 0.0, %v6212
        %v6214 = vpop.f32.mrf.mxu0
        %v6215 = vadd.f32 0.0, %v6214
        %v6216 = vpop.f32.mrf.mxu0
        %v6217 = vadd.f32 0.0, %v6216
        %6218 = vmatprep.mubr.bf16.mxu0 %v5755
        %6219 = vmatmul.mubr.bf16.gmra.mxu0 %v5754
        %v6220 = vpop.f32.mrf.mxu0
        %v6221 = vadd.f32 0.0, %v6220
        %v6222 = vpop.f32.mrf.mxu0
        %v6223 = vadd.f32 0.0, %v6222
        %v6224 = vpop.f32.mrf.mxu0
        %v6225 = vadd.f32 0.0, %v6224
        %v6226 = vpop.f32.mrf.mxu0
        %v6227 = vadd.f32 0.0, %v6226
        %6228 = vmatprep.mubr.bf16.mxu0 %v5757
        %6229 = vmatmul.mubr.bf16.gmra.mxu0 %v5756
        %v6230 = vpop.f32.mrf.mxu0
        %v6231 = vadd.f32 0.0, %v6230
        %v6232 = vpop.f32.mrf.mxu0
        %v6233 = vadd.f32 0.0, %v6232
        %v6234 = vpop.f32.mrf.mxu0
        %v6235 = vadd.f32 0.0, %v6234
        %v6236 = vpop.f32.mrf.mxu0
        %v6237 = vadd.f32 0.0, %v6236
        %6238 = vmatprep.mubr.bf16.mxu0 %v5759
        %6239 = vmatmul.mubr.bf16.gmra.mxu0 %v5758
        %v6240 = vpop.f32.mrf.mxu0
        %v6241 = vadd.f32 0.0, %v6240
        %v6242 = vpop.f32.mrf.mxu0
        %v6243 = vadd.f32 0.0, %v6242
        %v6244 = vpop.f32.mrf.mxu0
        %v6245 = vadd.f32 0.0, %v6244
        %v6246 = vpop.f32.mrf.mxu0
        %v6247 = vadd.f32 0.0, %v6246
        %6248 = vmatprep.mubr.bf16.mxu0 %v5761
        %6249 = vmatmul.mubr.bf16.gmra.mxu0 %v5760
        %v6250 = vpop.f32.mrf.mxu0
        %v6251 = vadd.f32 0.0, %v6250
        %v6252 = vpop.f32.mrf.mxu0
        %v6253 = vadd.f32 0.0, %v6252
        %v6254 = vpop.f32.mrf.mxu0
        %v6255 = vadd.f32 0.0, %v6254
        %v6256 = vpop.f32.mrf.mxu0
        %v6257 = vadd.f32 0.0, %v6256
        %6258 = vmatprep.mubr.bf16.mxu0 %v5763
        %6259 = vmatmul.mubr.bf16.gmra.mxu0 %v5762
        %v6260 = vpop.f32.mrf.mxu0
        %v6261 = vadd.f32 0.0, %v6260
        %v6262 = vpop.f32.mrf.mxu0
        %v6263 = vadd.f32 0.0, %v6262
        %v6264 = vpop.f32.mrf.mxu0
        %v6265 = vadd.f32 0.0, %v6264
        %v6266 = vpop.f32.mrf.mxu0
        %v6267 = vadd.f32 0.0, %v6266
        %6268 = vmatprep.mubr.bf16.mxu0 %v5765
        %6269 = vmatmul.mubr.bf16.gmra.mxu0 %v5764
        %v6270 = vpop.f32.mrf.mxu0
        %v6271 = vadd.f32 0.0, %v6270
        %v6272 = vpop.f32.mrf.mxu0
        %v6273 = vadd.f32 0.0, %v6272
        %v6274 = vpop.f32.mrf.mxu0
        %v6275 = vadd.f32 0.0, %v6274
        %v6276 = vpop.f32.mrf.mxu0
        %v6277 = vadd.f32 0.0, %v6276
        %6278 = vmatprep.mubr.bf16.mxu0 %v5767
        %6279 = vmatmul.mubr.bf16.gmra.mxu0 %v5766
        %v6280 = vpop.f32.mrf.mxu0
        %v6281 = vadd.f32 0.0, %v6280
        %v6282 = vpop.f32.mrf.mxu0
        %v6283 = vadd.f32 0.0, %v6282
        %v6284 = vpop.f32.mrf.mxu0
        %v6285 = vadd.f32 0.0, %v6284
        %v6286 = vpop.f32.mrf.mxu0
        %v6287 = vadd.f32 0.0, %v6286
        %6288 = vmatprep.mubr.bf16.mxu0 %v5769
        %6289 = vmatmul.mubr.bf16.gmra.mxu0 %v5768
        %v6290 = vpop.f32.mrf.mxu0
        %v6291 = vadd.f32 0.0, %v6290
        %v6292 = vpop.f32.mrf.mxu0
        %v6293 = vadd.f32 0.0, %v6292
        %v6294 = vpop.f32.mrf.mxu0
        %v6295 = vadd.f32 0.0, %v6294
        %v6296 = vpop.f32.mrf.mxu0
        %v6297 = vadd.f32 0.0, %v6296
        %6298 = vmatprep.mubr.bf16.mxu0 %v5771
        %6299 = vmatmul.mubr.bf16.gmra.mxu0 %v5770
        %v6300 = vpop.f32.mrf.mxu0
        %v6301 = vadd.f32 0.0, %v6300
        %v6302 = vpop.f32.mrf.mxu0
        %v6303 = vadd.f32 0.0, %v6302
        %v6304 = vpop.f32.mrf.mxu0
        %v6305 = vadd.f32 0.0, %v6304
        %v6306 = vpop.f32.mrf.mxu0
        %v6307 = vadd.f32 0.0, %v6306
        %6308 = vmatprep.mubr.bf16.mxu0 %v5773
        %6309 = vmatmul.mubr.bf16.gmra.mxu0 %v5772
        %v6310 = vpop.f32.mrf.mxu0
        %v6311 = vadd.f32 0.0, %v6310
        %v6312 = vpop.f32.mrf.mxu0
        %v6313 = vadd.f32 0.0, %v6312
        %v6314 = vpop.f32.mrf.mxu0
        %v6315 = vadd.f32 0.0, %v6314
        %v6316 = vpop.f32.mrf.mxu0
        %v6317 = vadd.f32 0.0, %v6316
        %6318 = vdwg.mxu0
        %6319 = vmatprep.subr.bf16.mxu0 %v6029
        %6320 = vmatpush1.bf16.msra.mxu0 %v6028
        %6321 = vmatprep.subr.bf16.mxu0 %v6025
        %6322 = vmatpush1.bf16.msra.mxu0 %v6024
        %6323 = vmatprep.subr.bf16.mxu0 %v6021
        %6324 = vmatpush1.bf16.msra.mxu0 %v6020
        %6325 = vmatprep.subr.bf16.mxu0 %v6017
        %6326 = vmatpush1.bf16.msra.mxu0 %v6016
        %6327 = vmatprep.subr.bf16.mxu0 %v6013
        %6328 = vmatpush1.bf16.msra.mxu0 %v6012
        %6329 = vmatprep.subr.bf16.mxu0 %v6009
        %6330 = vmatpush1.bf16.msra.mxu0 %v6008
        %6331 = vmatprep.subr.bf16.mxu0 %v6005
        %6332 = vmatpush1.bf16.msra.mxu0 %v6004
        %6333 = vmatprep.subr.bf16.mxu0 %v6001
        %6334 = vmatpush1.bf16.msra.mxu0 %v6000
        %6335 = vmatprep.subr.bf16.mxu0 %v6061
        %6336 = vmatpush2.bf16.msra.mxu0 %v6060
        %6337 = vmatprep.subr.bf16.mxu0 %v6057
        %6338 = vmatpush2.bf16.msra.mxu0 %v6056
        %6339 = vmatprep.subr.bf16.mxu0 %v6053
        %6340 = vmatpush2.bf16.msra.mxu0 %v6052
        %6341 = vmatprep.subr.bf16.mxu0 %v6049
        %6342 = vmatpush2.bf16.msra.mxu0 %v6048
        %6343 = vmatprep.subr.bf16.mxu0 %v6045
        %6344 = vmatpush2.bf16.msra.mxu0 %v6044
        %6345 = vmatprep.subr.bf16.mxu0 %v6041
        %6346 = vmatpush2.bf16.msra.mxu0 %v6040
        %6347 = vmatprep.subr.bf16.mxu0 %v6037
        %6348 = vmatpush2.bf16.msra.mxu0 %v6036
        %6349 = vmatprep.subr.bf16.mxu0 %v6033
        %6350 = vmatpush2.bf16.msra.mxu0 %v6032
        %6351 = vmatprep.mubr.bf16.mxu0 %v5743
        %6352 = vmatmul.mubr.bf16.gmra.mxu0 %v5742
        %v6353 = vpop.f32.mrf.mxu0
        %v6354 = vadd.f32 0.0, %v6353
        %v6355 = vpop.f32.mrf.mxu0
        %v6356 = vadd.f32 0.0, %v6355
        %v6357 = vpop.f32.mrf.mxu0
        %v6358 = vadd.f32 0.0, %v6357
        %v6359 = vpop.f32.mrf.mxu0
        %v6360 = vadd.f32 0.0, %v6359
        %6361 = vmatprep.mubr.bf16.mxu0 %v5745
        %6362 = vmatmul.mubr.bf16.gmra.mxu0 %v5744
        %v6363 = vpop.f32.mrf.mxu0
        %v6364 = vadd.f32 0.0, %v6363
        %v6365 = vpop.f32.mrf.mxu0
        %v6366 = vadd.f32 0.0, %v6365
        %v6367 = vpop.f32.mrf.mxu0
        %v6368 = vadd.f32 0.0, %v6367
        %v6369 = vpop.f32.mrf.mxu0
        %v6370 = vadd.f32 0.0, %v6369
        %6371 = vmatprep.mubr.bf16.mxu0 %v5747
        %6372 = vmatmul.mubr.bf16.gmra.mxu0 %v5746
        %v6373 = vpop.f32.mrf.mxu0
        %v6374 = vadd.f32 0.0, %v6373
        %v6375 = vpop.f32.mrf.mxu0
        %v6376 = vadd.f32 0.0, %v6375
        %v6377 = vpop.f32.mrf.mxu0
        %v6378 = vadd.f32 0.0, %v6377
        %v6379 = vpop.f32.mrf.mxu0
        %v6380 = vadd.f32 0.0, %v6379
        %6381 = vmatprep.mubr.bf16.mxu0 %v5749
        %6382 = vmatmul.mubr.bf16.gmra.mxu0 %v5748
        %v6383 = vpop.f32.mrf.mxu0
        %v6384 = vadd.f32 0.0, %v6383
        %v6385 = vpop.f32.mrf.mxu0
        %v6386 = vadd.f32 0.0, %v6385
        %v6387 = vpop.f32.mrf.mxu0
        %v6388 = vadd.f32 0.0, %v6387
        %v6389 = vpop.f32.mrf.mxu0
        %v6390 = vadd.f32 0.0, %v6389
        %6391 = vmatprep.mubr.bf16.mxu0 %v5751
        %6392 = vmatmul.mubr.bf16.gmra.mxu0 %v5750
        %v6393 = vpop.f32.mrf.mxu0
        %v6394 = vadd.f32 0.0, %v6393
        %v6395 = vpop.f32.mrf.mxu0
        %v6396 = vadd.f32 0.0, %v6395
        %v6397 = vpop.f32.mrf.mxu0
        %v6398 = vadd.f32 0.0, %v6397
        %v6399 = vpop.f32.mrf.mxu0
        %v6400 = vadd.f32 0.0, %v6399
        %6401 = vmatprep.mubr.bf16.mxu0 %v5753
        %6402 = vmatmul.mubr.bf16.gmra.mxu0 %v5752
        %v6403 = vpop.f32.mrf.mxu0
        %v6404 = vadd.f32 0.0, %v6403
        %v6405 = vpop.f32.mrf.mxu0
        %v6406 = vadd.f32 0.0, %v6405
        %v6407 = vpop.f32.mrf.mxu0
        %v6408 = vadd.f32 0.0, %v6407
        %v6409 = vpop.f32.mrf.mxu0
        %v6410 = vadd.f32 0.0, %v6409
        %6411 = vmatprep.mubr.bf16.mxu0 %v5755
        %6412 = vmatmul.mubr.bf16.gmra.mxu0 %v5754
        %v6413 = vpop.f32.mrf.mxu0
        %v6414 = vadd.f32 0.0, %v6413
        %v6415 = vpop.f32.mrf.mxu0
        %v6416 = vadd.f32 0.0, %v6415
        %v6417 = vpop.f32.mrf.mxu0
        %v6418 = vadd.f32 0.0, %v6417
        %v6419 = vpop.f32.mrf.mxu0
        %v6420 = vadd.f32 0.0, %v6419
        %6421 = vmatprep.mubr.bf16.mxu0 %v5757
        %6422 = vmatmul.mubr.bf16.gmra.mxu0 %v5756
        %v6423 = vpop.f32.mrf.mxu0
        %v6424 = vadd.f32 0.0, %v6423
        %v6425 = vpop.f32.mrf.mxu0
        %v6426 = vadd.f32 0.0, %v6425
        %v6427 = vpop.f32.mrf.mxu0
        %v6428 = vadd.f32 0.0, %v6427
        %v6429 = vpop.f32.mrf.mxu0
        %v6430 = vadd.f32 0.0, %v6429
        %6431 = vmatprep.mubr.bf16.mxu0 %v5759
        %6432 = vmatmul.mubr.bf16.gmra.mxu0 %v5758
        %v6433 = vpop.f32.mrf.mxu0
        %v6434 = vadd.f32 0.0, %v6433
        %v6435 = vpop.f32.mrf.mxu0
        %v6436 = vadd.f32 0.0, %v6435
        %v6437 = vpop.f32.mrf.mxu0
        %v6438 = vadd.f32 0.0, %v6437
        %v6439 = vpop.f32.mrf.mxu0
        %v6440 = vadd.f32 0.0, %v6439
        %6441 = vmatprep.mubr.bf16.mxu0 %v5761
        %6442 = vmatmul.mubr.bf16.gmra.mxu0 %v5760
        %v6443 = vpop.f32.mrf.mxu0
        %v6444 = vadd.f32 0.0, %v6443
        %v6445 = vpop.f32.mrf.mxu0
        %v6446 = vadd.f32 0.0, %v6445
        %v6447 = vpop.f32.mrf.mxu0
        %v6448 = vadd.f32 0.0, %v6447
        %v6449 = vpop.f32.mrf.mxu0
        %v6450 = vadd.f32 0.0, %v6449
        %6451 = vmatprep.mubr.bf16.mxu0 %v5763
        %6452 = vmatmul.mubr.bf16.gmra.mxu0 %v5762
        %v6453 = vpop.f32.mrf.mxu0
        %v6454 = vadd.f32 0.0, %v6453
        %v6455 = vpop.f32.mrf.mxu0
        %v6456 = vadd.f32 0.0, %v6455
        %v6457 = vpop.f32.mrf.mxu0
        %v6458 = vadd.f32 0.0, %v6457
        %v6459 = vpop.f32.mrf.mxu0
        %v6460 = vadd.f32 0.0, %v6459
        %6461 = vmatprep.mubr.bf16.mxu0 %v5765
        %6462 = vmatmul.mubr.bf16.gmra.mxu0 %v5764
        %v6463 = vpop.f32.mrf.mxu0
        %v6464 = vadd.f32 0.0, %v6463
        %v6465 = vpop.f32.mrf.mxu0
        %v6466 = vadd.f32 0.0, %v6465
        %v6467 = vpop.f32.mrf.mxu0
        %v6468 = vadd.f32 0.0, %v6467
        %v6469 = vpop.f32.mrf.mxu0
        %v6470 = vadd.f32 0.0, %v6469
        %6471 = vmatprep.mubr.bf16.mxu0 %v5767
        %6472 = vmatmul.mubr.bf16.gmra.mxu0 %v5766
        %v6473 = vpop.f32.mrf.mxu0
        %v6474 = vadd.f32 0.0, %v6473
        %v6475 = vpop.f32.mrf.mxu0
        %v6476 = vadd.f32 0.0, %v6475
        %v6477 = vpop.f32.mrf.mxu0
        %v6478 = vadd.f32 0.0, %v6477
        %v6479 = vpop.f32.mrf.mxu0
        %v6480 = vadd.f32 0.0, %v6479
        %6481 = vmatprep.mubr.bf16.mxu0 %v5769
        %6482 = vmatmul.mubr.bf16.gmra.mxu0 %v5768
        %v6483 = vpop.f32.mrf.mxu0
        %v6484 = vadd.f32 0.0, %v6483
        %v6485 = vpop.f32.mrf.mxu0
        %v6486 = vadd.f32 0.0, %v6485
        %v6487 = vpop.f32.mrf.mxu0
        %v6488 = vadd.f32 0.0, %v6487
        %v6489 = vpop.f32.mrf.mxu0
        %v6490 = vadd.f32 0.0, %v6489
        %6491 = vmatprep.mubr.bf16.mxu0 %v5771
        %6492 = vmatmul.mubr.bf16.gmra.mxu0 %v5770
        %v6493 = vpop.f32.mrf.mxu0
        %v6494 = vadd.f32 0.0, %v6493
        %v6495 = vpop.f32.mrf.mxu0
        %v6496 = vadd.f32 0.0, %v6495
        %v6497 = vpop.f32.mrf.mxu0
        %v6498 = vadd.f32 0.0, %v6497
        %v6499 = vpop.f32.mrf.mxu0
        %v6500 = vadd.f32 0.0, %v6499
        %6501 = vmatprep.mubr.bf16.mxu0 %v5773
        %6502 = vmatmul.mubr.bf16.gmra.mxu0 %v5772
        %v6503 = vpop.f32.mrf.mxu0
        %v6504 = vadd.f32 0.0, %v6503
        %v6505 = vpop.f32.mrf.mxu0
        %v6506 = vadd.f32 0.0, %v6505
        %v6507 = vpop.f32.mrf.mxu0
        %v6508 = vadd.f32 0.0, %v6507
        %v6509 = vpop.f32.mrf.mxu0
        %v6510 = vadd.f32 0.0, %v6509
        %6511 = vdwg.mxu0
        %v6544 = vunpack.c.l.b16 %v5453
        %v6545 = vunpack.c.h.b16 %v5453
        %v6546 = vunpack.c.l.b16 %v5454
        %v6547 = vunpack.c.h.b16 %v5454
        %v6548 = vunpack.c.l.b16 %v5455
        %v6549 = vunpack.c.h.b16 %v5455
        %v6550 = vunpack.c.l.b16 %v5456
        %v6551 = vunpack.c.h.b16 %v5456
        %v6552 = vunpack.c.l.b16 %v5457
        %v6553 = vunpack.c.h.b16 %v5457
        %v6554 = vunpack.c.l.b16 %v5458
        %v6555 = vunpack.c.h.b16 %v5458
        %v6556 = vunpack.c.l.b16 %v5459
        %v6557 = vunpack.c.h.b16 %v5459
        %v6558 = vunpack.c.l.b16 %v5460
        %v6559 = vunpack.c.h.b16 %v5460
        %v6560 = vunpack.c.l.b16 %v5461
        %v6561 = vunpack.c.h.b16 %v5461
        %v6562 = vunpack.c.l.b16 %v5462
        %v6563 = vunpack.c.h.b16 %v5462
        %v6564 = vunpack.c.l.b16 %v5463
        %v6565 = vunpack.c.h.b16 %v5463
        %v6566 = vunpack.c.l.b16 %v5464
        %v6567 = vunpack.c.h.b16 %v5464
        %v6568 = vunpack.c.l.b16 %v5465
        %v6569 = vunpack.c.h.b16 %v5465
        %v6570 = vunpack.c.l.b16 %v5466
        %v6571 = vunpack.c.h.b16 %v5466
        %v6572 = vunpack.c.l.b16 %v5467
        %v6573 = vunpack.c.h.b16 %v5467
        %v6574 = vunpack.c.l.b16 %v5468
        %v6575 = vunpack.c.h.b16 %v5468
        %v6576 = vunpack.c.l.b16 %v5469
        %v6577 = vunpack.c.h.b16 %v5469
        %v6578 = vunpack.c.l.b16 %v5470
        %v6579 = vunpack.c.h.b16 %v5470
        %v6580 = vunpack.c.l.b16 %v5471
        %v6581 = vunpack.c.h.b16 %v5471
        %v6582 = vunpack.c.l.b16 %v5472
        %v6583 = vunpack.c.h.b16 %v5472
        %v6584 = vunpack.c.l.b16 %v5473
        %v6585 = vunpack.c.h.b16 %v5473
        %v6586 = vunpack.c.l.b16 %v5474
        %v6587 = vunpack.c.h.b16 %v5474
        %v6588 = vunpack.c.l.b16 %v5475
        %v6589 = vunpack.c.h.b16 %v5475
        %v6590 = vunpack.c.l.b16 %v5476
        %v6591 = vunpack.c.h.b16 %v5476
        %v6592 = vunpack.c.l.b16 %v5477
        %v6593 = vunpack.c.h.b16 %v5477
        %v6594 = vunpack.c.l.b16 %v5478
        %v6595 = vunpack.c.h.b16 %v5478
        %v6596 = vunpack.c.l.b16 %v5479
        %v6597 = vunpack.c.h.b16 %v5479
        %v6598 = vunpack.c.l.b16 %v5480
        %v6599 = vunpack.c.h.b16 %v5480
        %v6600 = vunpack.c.l.b16 %v5481
        %v6601 = vunpack.c.h.b16 %v5481
        %v6602 = vunpack.c.l.b16 %v5482
        %v6603 = vunpack.c.h.b16 %v5482
        %v6604 = vunpack.c.l.b16 %v5483
        %v6605 = vunpack.c.h.b16 %v5483
        %v6606 = vunpack.c.l.b16 %v5484
        %v6607 = vunpack.c.h.b16 %v5484
        %v6608 = vpack.c.b16 %v6546, %v6544
        %v6609 = vpack.c.b16 %v6547, %v6545
        %v6610 = vpack.c.b16 %v6550, %v6548
        %v6611 = vpack.c.b16 %v6551, %v6549
        %v6612 = vpack.c.b16 %v6554, %v6552
        %v6613 = vpack.c.b16 %v6555, %v6553
        %v6614 = vpack.c.b16 %v6558, %v6556
        %v6615 = vpack.c.b16 %v6559, %v6557
        %v6616 = vpack.c.b16 %v6562, %v6560
        %v6617 = vpack.c.b16 %v6563, %v6561
        %v6618 = vpack.c.b16 %v6566, %v6564
        %v6619 = vpack.c.b16 %v6567, %v6565
        %v6620 = vpack.c.b16 %v6570, %v6568
        %v6621 = vpack.c.b16 %v6571, %v6569
        %v6622 = vpack.c.b16 %v6574, %v6572
        %v6623 = vpack.c.b16 %v6575, %v6573
        %v6624 = vpack.c.b16 %v6578, %v6576
        %v6625 = vpack.c.b16 %v6579, %v6577
        %v6626 = vpack.c.b16 %v6582, %v6580
        %v6627 = vpack.c.b16 %v6583, %v6581
        %v6628 = vpack.c.b16 %v6586, %v6584
        %v6629 = vpack.c.b16 %v6587, %v6585
        %v6630 = vpack.c.b16 %v6590, %v6588
        %v6631 = vpack.c.b16 %v6591, %v6589
        %v6632 = vpack.c.b16 %v6594, %v6592
        %v6633 = vpack.c.b16 %v6595, %v6593
        %v6634 = vpack.c.b16 %v6598, %v6596
        %v6635 = vpack.c.b16 %v6599, %v6597
        %v6636 = vpack.c.b16 %v6602, %v6600
        %v6637 = vpack.c.b16 %v6603, %v6601
        %v6638 = vpack.c.b16 %v6606, %v6604
        %v6639 = vpack.c.b16 %v6607, %v6605
        %v6736 = vunpack.c.l.b16 %v5485
        %v6737 = vunpack.c.h.b16 %v5485
        %v6738 = vunpack.c.l.b16 %v5486
        %v6739 = vunpack.c.h.b16 %v5486
        %v6740 = vunpack.c.l.b16 %v5487
        %v6741 = vunpack.c.h.b16 %v5487
        %v6742 = vunpack.c.l.b16 %v5488
        %v6743 = vunpack.c.h.b16 %v5488
        %v6744 = vunpack.c.l.b16 %v5489
        %v6745 = vunpack.c.h.b16 %v5489
        %v6746 = vunpack.c.l.b16 %v5490
        %v6747 = vunpack.c.h.b16 %v5490
        %v6748 = vunpack.c.l.b16 %v5491
        %v6749 = vunpack.c.h.b16 %v5491
        %v6750 = vunpack.c.l.b16 %v5492
        %v6751 = vunpack.c.h.b16 %v5492
        %v6752 = vunpack.c.l.b16 %v5493
        %v6753 = vunpack.c.h.b16 %v5493
        %v6754 = vunpack.c.l.b16 %v5494
        %v6755 = vunpack.c.h.b16 %v5494
        %v6756 = vunpack.c.l.b16 %v5495
        %v6757 = vunpack.c.h.b16 %v5495
        %v6758 = vunpack.c.l.b16 %v5496
        %v6759 = vunpack.c.h.b16 %v5496
        %v6760 = vunpack.c.l.b16 %v5497
        %v6761 = vunpack.c.h.b16 %v5497
        %v6762 = vunpack.c.l.b16 %v5498
        %v6763 = vunpack.c.h.b16 %v5498
        %v6764 = vunpack.c.l.b16 %v5499
        %v6765 = vunpack.c.h.b16 %v5499
        %v6766 = vunpack.c.l.b16 %v5500
        %v6767 = vunpack.c.h.b16 %v5500
        %v6768 = vunpack.c.l.b16 %v5501
        %v6769 = vunpack.c.h.b16 %v5501
        %v6770 = vunpack.c.l.b16 %v5502
        %v6771 = vunpack.c.h.b16 %v5502
        %v6772 = vunpack.c.l.b16 %v5503
        %v6773 = vunpack.c.h.b16 %v5503
        %v6774 = vunpack.c.l.b16 %v5504
        %v6775 = vunpack.c.h.b16 %v5504
        %v6776 = vunpack.c.l.b16 %v5505
        %v6777 = vunpack.c.h.b16 %v5505
        %v6778 = vunpack.c.l.b16 %v5506
        %v6779 = vunpack.c.h.b16 %v5506
        %v6780 = vunpack.c.l.b16 %v5507
        %v6781 = vunpack.c.h.b16 %v5507
        %v6782 = vunpack.c.l.b16 %v5508
        %v6783 = vunpack.c.h.b16 %v5508
        %v6784 = vunpack.c.l.b16 %v5509
        %v6785 = vunpack.c.h.b16 %v5509
        %v6786 = vunpack.c.l.b16 %v5510
        %v6787 = vunpack.c.h.b16 %v5510
        %v6788 = vunpack.c.l.b16 %v5511
        %v6789 = vunpack.c.h.b16 %v5511
        %v6790 = vunpack.c.l.b16 %v5512
        %v6791 = vunpack.c.h.b16 %v5512
        %v6792 = vunpack.c.l.b16 %v5513
        %v6793 = vunpack.c.h.b16 %v5513
        %v6794 = vunpack.c.l.b16 %v5514
        %v6795 = vunpack.c.h.b16 %v5514
        %v6796 = vunpack.c.l.b16 %v5515
        %v6797 = vunpack.c.h.b16 %v5515
        %v6798 = vunpack.c.l.b16 %v5516
        %v6799 = vunpack.c.h.b16 %v5516
        %v6800 = vunpack.c.l.b16 %v5517
        %v6801 = vunpack.c.h.b16 %v5517
        %v6802 = vunpack.c.l.b16 %v5518
        %v6803 = vunpack.c.h.b16 %v5518
        %v6804 = vunpack.c.l.b16 %v5519
        %v6805 = vunpack.c.h.b16 %v5519
        %v6806 = vunpack.c.l.b16 %v5520
        %v6807 = vunpack.c.h.b16 %v5520
        %v6808 = vunpack.c.l.b16 %v5521
        %v6809 = vunpack.c.h.b16 %v5521
        %v6810 = vunpack.c.l.b16 %v5522
        %v6811 = vunpack.c.h.b16 %v5522
        %v6812 = vunpack.c.l.b16 %v5523
        %v6813 = vunpack.c.h.b16 %v5523
        %v6814 = vunpack.c.l.b16 %v5524
        %v6815 = vunpack.c.h.b16 %v5524
        %v6816 = vunpack.c.l.b16 %v5525
        %v6817 = vunpack.c.h.b16 %v5525
        %v6818 = vunpack.c.l.b16 %v5526
        %v6819 = vunpack.c.h.b16 %v5526
        %v6820 = vunpack.c.l.b16 %v5527
        %v6821 = vunpack.c.h.b16 %v5527
        %v6822 = vunpack.c.l.b16 %v5528
        %v6823 = vunpack.c.h.b16 %v5528
        %v6824 = vunpack.c.l.b16 %v5529
        %v6825 = vunpack.c.h.b16 %v5529
        %v6826 = vunpack.c.l.b16 %v5530
        %v6827 = vunpack.c.h.b16 %v5530
        %v6828 = vunpack.c.l.b16 %v5531
        %v6829 = vunpack.c.h.b16 %v5531
        %v6830 = vunpack.c.l.b16 %v5532
        %v6831 = vunpack.c.h.b16 %v5532
        %v6832 = vunpack.c.l.b16 %v5533
        %v6833 = vunpack.c.h.b16 %v5533
        %v6834 = vunpack.c.l.b16 %v5534
        %v6835 = vunpack.c.h.b16 %v5534
        %v6836 = vunpack.c.l.b16 %v5535
        %v6837 = vunpack.c.h.b16 %v5535
        %v6838 = vunpack.c.l.b16 %v5536
        %v6839 = vunpack.c.h.b16 %v5536
        %v6840 = vunpack.c.l.b16 %v5537
        %v6841 = vunpack.c.h.b16 %v5537
        %v6842 = vunpack.c.l.b16 %v5538
        %v6843 = vunpack.c.h.b16 %v5538
        %v6844 = vunpack.c.l.b16 %v5539
        %v6845 = vunpack.c.h.b16 %v5539
        %v6846 = vunpack.c.l.b16 %v5540
        %v6847 = vunpack.c.h.b16 %v5540
        %v6848 = vunpack.c.l.b16 %v5541
        %v6849 = vunpack.c.h.b16 %v5541
        %v6850 = vunpack.c.l.b16 %v5542
        %v6851 = vunpack.c.h.b16 %v5542
        %v6852 = vunpack.c.l.b16 %v5543
        %v6853 = vunpack.c.h.b16 %v5543
        %v6854 = vunpack.c.l.b16 %v5544
        %v6855 = vunpack.c.h.b16 %v5544
        %v6856 = vunpack.c.l.b16 %v5545
        %v6857 = vunpack.c.h.b16 %v5545
        %v6858 = vunpack.c.l.b16 %v5546
        %v6859 = vunpack.c.h.b16 %v5546
        %v6860 = vunpack.c.l.b16 %v5547
        %v6861 = vunpack.c.h.b16 %v5547
        %v6862 = vunpack.c.l.b16 %v5548
        %v6863 = vunpack.c.h.b16 %v5548
        %v6864 = vpack.c.b16 %v6740, %v6736
        %v6865 = vpack.c.b16 %v6741, %v6737
        %v6866 = vpack.c.b16 %v6742, %v6738
        %v6867 = vpack.c.b16 %v6743, %v6739
        %v6868 = vpack.c.b16 %v6748, %v6744
        %v6869 = vpack.c.b16 %v6749, %v6745
        %v6870 = vpack.c.b16 %v6750, %v6746
        %v6871 = vpack.c.b16 %v6751, %v6747
        %v6872 = vpack.c.b16 %v6756, %v6752
        %v6873 = vpack.c.b16 %v6757, %v6753
        %v6874 = vpack.c.b16 %v6758, %v6754
        %v6875 = vpack.c.b16 %v6759, %v6755
        %v6876 = vpack.c.b16 %v6764, %v6760
        %v6877 = vpack.c.b16 %v6765, %v6761
        %v6878 = vpack.c.b16 %v6766, %v6762
        %v6879 = vpack.c.b16 %v6767, %v6763
        %v6880 = vpack.c.b16 %v6772, %v6768
        %v6881 = vpack.c.b16 %v6773, %v6769
        %v6882 = vpack.c.b16 %v6774, %v6770
        %v6883 = vpack.c.b16 %v6775, %v6771
        %v6884 = vpack.c.b16 %v6780, %v6776
        %v6885 = vpack.c.b16 %v6781, %v6777
        %v6886 = vpack.c.b16 %v6782, %v6778
        %v6887 = vpack.c.b16 %v6783, %v6779
        %v6888 = vpack.c.b16 %v6788, %v6784
        %v6889 = vpack.c.b16 %v6789, %v6785
        %v6890 = vpack.c.b16 %v6790, %v6786
        %v6891 = vpack.c.b16 %v6791, %v6787
        %v6892 = vpack.c.b16 %v6796, %v6792
        %v6893 = vpack.c.b16 %v6797, %v6793
        %v6894 = vpack.c.b16 %v6798, %v6794
        %v6895 = vpack.c.b16 %v6799, %v6795
        %v6896 = vpack.c.b16 %v6804, %v6800
        %v6897 = vpack.c.b16 %v6805, %v6801
        %v6898 = vpack.c.b16 %v6806, %v6802
        %v6899 = vpack.c.b16 %v6807, %v6803
        %v6900 = vpack.c.b16 %v6812, %v6808
        %v6901 = vpack.c.b16 %v6813, %v6809
        %v6902 = vpack.c.b16 %v6814, %v6810
        %v6903 = vpack.c.b16 %v6815, %v6811
        %v6904 = vpack.c.b16 %v6820, %v6816
        %v6905 = vpack.c.b16 %v6821, %v6817
        %v6906 = vpack.c.b16 %v6822, %v6818
        %v6907 = vpack.c.b16 %v6823, %v6819
        %v6908 = vpack.c.b16 %v6828, %v6824
        %v6909 = vpack.c.b16 %v6829, %v6825
        %v6910 = vpack.c.b16 %v6830, %v6826
        %v6911 = vpack.c.b16 %v6831, %v6827
        %v6912 = vpack.c.b16 %v6836, %v6832
        %v6913 = vpack.c.b16 %v6837, %v6833
        %v6914 = vpack.c.b16 %v6838, %v6834
        %v6915 = vpack.c.b16 %v6839, %v6835
        %v6916 = vpack.c.b16 %v6844, %v6840
        %v6917 = vpack.c.b16 %v6845, %v6841
        %v6918 = vpack.c.b16 %v6846, %v6842
        %v6919 = vpack.c.b16 %v6847, %v6843
        %v6920 = vpack.c.b16 %v6852, %v6848
        %v6921 = vpack.c.b16 %v6853, %v6849
        %v6922 = vpack.c.b16 %v6854, %v6850
        %v6923 = vpack.c.b16 %v6855, %v6851
        %v6924 = vpack.c.b16 %v6860, %v6856
        %v6925 = vpack.c.b16 %v6861, %v6857
        %v6926 = vpack.c.b16 %v6862, %v6858
        %v6927 = vpack.c.b16 %v6863, %v6859
        %6992 = vmatprep.subr.bf16.mxu0 %v6893
        %6993 = vmatpush1.bf16.msra.mxu0 %v6892
        %6994 = vmatprep.subr.bf16.mxu0 %v6889
        %6995 = vmatpush1.bf16.msra.mxu0 %v6888
        %6996 = vmatprep.subr.bf16.mxu0 %v6885
        %6997 = vmatpush1.bf16.msra.mxu0 %v6884
        %6998 = vmatprep.subr.bf16.mxu0 %v6881
        %6999 = vmatpush1.bf16.msra.mxu0 %v6880
        %7000 = vmatprep.subr.bf16.mxu0 %v6877
        %7001 = vmatpush1.bf16.msra.mxu0 %v6876
        %7002 = vmatprep.subr.bf16.mxu0 %v6873
        %7003 = vmatpush1.bf16.msra.mxu0 %v6872
        %7004 = vmatprep.subr.bf16.mxu0 %v6869
        %7005 = vmatpush1.bf16.msra.mxu0 %v6868
        %7006 = vmatprep.subr.bf16.mxu0 %v6865
        %7007 = vmatpush1.bf16.msra.mxu0 %v6864
        %7008 = vmatprep.subr.bf16.mxu0 %v6925
        %7009 = vmatpush2.bf16.msra.mxu0 %v6924
        %7010 = vmatprep.subr.bf16.mxu0 %v6921
        %7011 = vmatpush2.bf16.msra.mxu0 %v6920
        %7012 = vmatprep.subr.bf16.mxu0 %v6917
        %7013 = vmatpush2.bf16.msra.mxu0 %v6916
        %7014 = vmatprep.subr.bf16.mxu0 %v6913
        %7015 = vmatpush2.bf16.msra.mxu0 %v6912
        %7016 = vmatprep.subr.bf16.mxu0 %v6909
        %7017 = vmatpush2.bf16.msra.mxu0 %v6908
        %7018 = vmatprep.subr.bf16.mxu0 %v6905
        %7019 = vmatpush2.bf16.msra.mxu0 %v6904
        %7020 = vmatprep.subr.bf16.mxu0 %v6901
        %7021 = vmatpush2.bf16.msra.mxu0 %v6900
        %7022 = vmatprep.subr.bf16.mxu0 %v6897
        %7023 = vmatpush2.bf16.msra.mxu0 %v6896
        %7024 = vmatprep.mubr.bf16.mxu0 %v6609
        %7025 = vmatmul.mubr.bf16.gmra.mxu0 %v6608
        %v7026 = vpop.f32.mrf.mxu0
        %v7027 = vadd.f32 %v6161, %v7026
        %v7028 = vpop.f32.mrf.mxu0
        %v7029 = vadd.f32 %v6163, %v7028
        %v7030 = vpop.f32.mrf.mxu0
        %v7031 = vadd.f32 %v6165, %v7030
        %v7032 = vpop.f32.mrf.mxu0
        %v7033 = vadd.f32 %v6167, %v7032
        %7034 = vmatprep.mubr.bf16.mxu0 %v6611
        %7035 = vmatmul.mubr.bf16.gmra.mxu0 %v6610
        %v7036 = vpop.f32.mrf.mxu0
        %v7037 = vadd.f32 %v6171, %v7036
        %v7038 = vpop.f32.mrf.mxu0
        %v7039 = vadd.f32 %v6173, %v7038
        %v7040 = vpop.f32.mrf.mxu0
        %v7041 = vadd.f32 %v6175, %v7040
        %v7042 = vpop.f32.mrf.mxu0
        %v7043 = vadd.f32 %v6177, %v7042
        %7044 = vmatprep.mubr.bf16.mxu0 %v6613
        %7045 = vmatmul.mubr.bf16.gmra.mxu0 %v6612
        %v7046 = vpop.f32.mrf.mxu0
        %v7047 = vadd.f32 %v6181, %v7046
        %v7048 = vpop.f32.mrf.mxu0
        %v7049 = vadd.f32 %v6183, %v7048
        %v7050 = vpop.f32.mrf.mxu0
        %v7051 = vadd.f32 %v6185, %v7050
        %v7052 = vpop.f32.mrf.mxu0
        %v7053 = vadd.f32 %v6187, %v7052
        %7054 = vmatprep.mubr.bf16.mxu0 %v6615
        %7055 = vmatmul.mubr.bf16.gmra.mxu0 %v6614
        %v7056 = vpop.f32.mrf.mxu0
        %v7057 = vadd.f32 %v6191, %v7056
        %v7058 = vpop.f32.mrf.mxu0
        %v7059 = vadd.f32 %v6193, %v7058
        %v7060 = vpop.f32.mrf.mxu0
        %v7061 = vadd.f32 %v6195, %v7060
        %v7062 = vpop.f32.mrf.mxu0
        %v7063 = vadd.f32 %v6197, %v7062
        %7064 = vmatprep.mubr.bf16.mxu0 %v6617
        %7065 = vmatmul.mubr.bf16.gmra.mxu0 %v6616
        %v7066 = vpop.f32.mrf.mxu0
        %v7067 = vadd.f32 %v6201, %v7066
        %v7068 = vpop.f32.mrf.mxu0
        %v7069 = vadd.f32 %v6203, %v7068
        %v7070 = vpop.f32.mrf.mxu0
        %v7071 = vadd.f32 %v6205, %v7070
        %v7072 = vpop.f32.mrf.mxu0
        %v7073 = vadd.f32 %v6207, %v7072
        %7074 = vmatprep.mubr.bf16.mxu0 %v6619
        %7075 = vmatmul.mubr.bf16.gmra.mxu0 %v6618
        %v7076 = vpop.f32.mrf.mxu0
        %v7077 = vadd.f32 %v6211, %v7076
        %v7078 = vpop.f32.mrf.mxu0
        %v7079 = vadd.f32 %v6213, %v7078
        %v7080 = vpop.f32.mrf.mxu0
        %v7081 = vadd.f32 %v6215, %v7080
        %v7082 = vpop.f32.mrf.mxu0
        %v7083 = vadd.f32 %v6217, %v7082
        %7084 = vmatprep.mubr.bf16.mxu0 %v6621
        %7085 = vmatmul.mubr.bf16.gmra.mxu0 %v6620
        %v7086 = vpop.f32.mrf.mxu0
        %v7087 = vadd.f32 %v6221, %v7086
        %v7088 = vpop.f32.mrf.mxu0
        %v7089 = vadd.f32 %v6223, %v7088
        %v7090 = vpop.f32.mrf.mxu0
        %v7091 = vadd.f32 %v6225, %v7090
        %v7092 = vpop.f32.mrf.mxu0
        %v7093 = vadd.f32 %v6227, %v7092
        %7094 = vmatprep.mubr.bf16.mxu0 %v6623
        %7095 = vmatmul.mubr.bf16.gmra.mxu0 %v6622
        %v7096 = vpop.f32.mrf.mxu0
        %v7097 = vadd.f32 %v6231, %v7096
        %v7098 = vpop.f32.mrf.mxu0
        %v7099 = vadd.f32 %v6233, %v7098
        %v7100 = vpop.f32.mrf.mxu0
        %v7101 = vadd.f32 %v6235, %v7100
        %v7102 = vpop.f32.mrf.mxu0
        %v7103 = vadd.f32 %v6237, %v7102
        %7104 = vmatprep.mubr.bf16.mxu0 %v6625
        %7105 = vmatmul.mubr.bf16.gmra.mxu0 %v6624
        %v7106 = vpop.f32.mrf.mxu0
        %v7107 = vadd.f32 %v6241, %v7106
        %v7108 = vpop.f32.mrf.mxu0
        %v7109 = vadd.f32 %v6243, %v7108
        %v7110 = vpop.f32.mrf.mxu0
        %v7111 = vadd.f32 %v6245, %v7110
        %v7112 = vpop.f32.mrf.mxu0
        %v7113 = vadd.f32 %v6247, %v7112
        %7114 = vmatprep.mubr.bf16.mxu0 %v6627
        %7115 = vmatmul.mubr.bf16.gmra.mxu0 %v6626
        %v7116 = vpop.f32.mrf.mxu0
        %v7117 = vadd.f32 %v6251, %v7116
        %v7118 = vpop.f32.mrf.mxu0
        %v7119 = vadd.f32 %v6253, %v7118
        %v7120 = vpop.f32.mrf.mxu0
        %v7121 = vadd.f32 %v6255, %v7120
        %v7122 = vpop.f32.mrf.mxu0
        %v7123 = vadd.f32 %v6257, %v7122
        %7124 = vmatprep.mubr.bf16.mxu0 %v6629
        %7125 = vmatmul.mubr.bf16.gmra.mxu0 %v6628
        %v7126 = vpop.f32.mrf.mxu0
        %v7127 = vadd.f32 %v6261, %v7126
        %v7128 = vpop.f32.mrf.mxu0
        %v7129 = vadd.f32 %v6263, %v7128
        %v7130 = vpop.f32.mrf.mxu0
        %v7131 = vadd.f32 %v6265, %v7130
        %v7132 = vpop.f32.mrf.mxu0
        %v7133 = vadd.f32 %v6267, %v7132
        %7134 = vmatprep.mubr.bf16.mxu0 %v6631
        %7135 = vmatmul.mubr.bf16.gmra.mxu0 %v6630
        %v7136 = vpop.f32.mrf.mxu0
        %v7137 = vadd.f32 %v6271, %v7136
        %v7138 = vpop.f32.mrf.mxu0
        %v7139 = vadd.f32 %v6273, %v7138
        %v7140 = vpop.f32.mrf.mxu0
        %v7141 = vadd.f32 %v6275, %v7140
        %v7142 = vpop.f32.mrf.mxu0
        %v7143 = vadd.f32 %v6277, %v7142
        %7144 = vmatprep.mubr.bf16.mxu0 %v6633
        %7145 = vmatmul.mubr.bf16.gmra.mxu0 %v6632
        %v7146 = vpop.f32.mrf.mxu0
        %v7147 = vadd.f32 %v6281, %v7146
        %v7148 = vpop.f32.mrf.mxu0
        %v7149 = vadd.f32 %v6283, %v7148
        %v7150 = vpop.f32.mrf.mxu0
        %v7151 = vadd.f32 %v6285, %v7150
        %v7152 = vpop.f32.mrf.mxu0
        %v7153 = vadd.f32 %v6287, %v7152
        %7154 = vmatprep.mubr.bf16.mxu0 %v6635
        %7155 = vmatmul.mubr.bf16.gmra.mxu0 %v6634
        %v7156 = vpop.f32.mrf.mxu0
        %v7157 = vadd.f32 %v6291, %v7156
        %v7158 = vpop.f32.mrf.mxu0
        %v7159 = vadd.f32 %v6293, %v7158
        %v7160 = vpop.f32.mrf.mxu0
        %v7161 = vadd.f32 %v6295, %v7160
        %v7162 = vpop.f32.mrf.mxu0
        %v7163 = vadd.f32 %v6297, %v7162
        %7164 = vmatprep.mubr.bf16.mxu0 %v6637
        %7165 = vmatmul.mubr.bf16.gmra.mxu0 %v6636
        %v7166 = vpop.f32.mrf.mxu0
        %v7167 = vadd.f32 %v6301, %v7166
        %v7168 = vpop.f32.mrf.mxu0
        %v7169 = vadd.f32 %v6303, %v7168
        %v7170 = vpop.f32.mrf.mxu0
        %v7171 = vadd.f32 %v6305, %v7170
        %v7172 = vpop.f32.mrf.mxu0
        %v7173 = vadd.f32 %v6307, %v7172
        %7174 = vmatprep.mubr.bf16.mxu0 %v6639
        %7175 = vmatmul.mubr.bf16.gmra.mxu0 %v6638
        %v7176 = vpop.f32.mrf.mxu0
        %v7177 = vadd.f32 %v6311, %v7176
        %v7178 = vpop.f32.mrf.mxu0
        %v7179 = vadd.f32 %v6313, %v7178
        %v7180 = vpop.f32.mrf.mxu0
        %v7181 = vadd.f32 %v6315, %v7180
        %v7182 = vpop.f32.mrf.mxu0
        %v7183 = vadd.f32 %v6317, %v7182
        %7184 = vdwg.mxu0
        %7185 = vmatprep.subr.bf16.mxu0 %v6895
        %7186 = vmatpush1.bf16.msra.mxu0 %v6894
        %7187 = vmatprep.subr.bf16.mxu0 %v6891
        %7188 = vmatpush1.bf16.msra.mxu0 %v6890
        %7189 = vmatprep.subr.bf16.mxu0 %v6887
        %7190 = vmatpush1.bf16.msra.mxu0 %v6886
        %7191 = vmatprep.subr.bf16.mxu0 %v6883
        %7192 = vmatpush1.bf16.msra.mxu0 %v6882
        %7193 = vmatprep.subr.bf16.mxu0 %v6879
        %7194 = vmatpush1.bf16.msra.mxu0 %v6878
        %7195 = vmatprep.subr.bf16.mxu0 %v6875
        %7196 = vmatpush1.bf16.msra.mxu0 %v6874
        %7197 = vmatprep.subr.bf16.mxu0 %v6871
        %7198 = vmatpush1.bf16.msra.mxu0 %v6870
        %7199 = vmatprep.subr.bf16.mxu0 %v6867
        %7200 = vmatpush1.bf16.msra.mxu0 %v6866
        %7201 = vmatprep.subr.bf16.mxu0 %v6927
        %7202 = vmatpush2.bf16.msra.mxu0 %v6926
        %7203 = vmatprep.subr.bf16.mxu0 %v6923
        %7204 = vmatpush2.bf16.msra.mxu0 %v6922
        %7205 = vmatprep.subr.bf16.mxu0 %v6919
        %7206 = vmatpush2.bf16.msra.mxu0 %v6918
        %7207 = vmatprep.subr.bf16.mxu0 %v6915
        %7208 = vmatpush2.bf16.msra.mxu0 %v6914
        %7209 = vmatprep.subr.bf16.mxu0 %v6911
        %7210 = vmatpush2.bf16.msra.mxu0 %v6910
        %7211 = vmatprep.subr.bf16.mxu0 %v6907
        %7212 = vmatpush2.bf16.msra.mxu0 %v6906
        %7213 = vmatprep.subr.bf16.mxu0 %v6903
        %7214 = vmatpush2.bf16.msra.mxu0 %v6902
        %7215 = vmatprep.subr.bf16.mxu0 %v6899
        %7216 = vmatpush2.bf16.msra.mxu0 %v6898
        %7217 = vmatprep.mubr.bf16.mxu0 %v6609
        %7218 = vmatmul.mubr.bf16.gmra.mxu0 %v6608
        %v7219 = vpop.f32.mrf.mxu0
        %v7220 = vadd.f32 %v6354, %v7219
        %v7221 = vpop.f32.mrf.mxu0
        %v7222 = vadd.f32 %v6356, %v7221
        %v7223 = vpop.f32.mrf.mxu0
        %v7224 = vadd.f32 %v6358, %v7223
        %v7225 = vpop.f32.mrf.mxu0
        %v7226 = vadd.f32 %v6360, %v7225
        %7227 = vmatprep.mubr.bf16.mxu0 %v6611
        %7228 = vmatmul.mubr.bf16.gmra.mxu0 %v6610
        %v7229 = vpop.f32.mrf.mxu0
        %v7230 = vadd.f32 %v6364, %v7229
        %v7231 = vpop.f32.mrf.mxu0
        %v7232 = vadd.f32 %v6366, %v7231
        %v7233 = vpop.f32.mrf.mxu0
        %v7234 = vadd.f32 %v6368, %v7233
        %v7235 = vpop.f32.mrf.mxu0
        %v7236 = vadd.f32 %v6370, %v7235
        %7237 = vmatprep.mubr.bf16.mxu0 %v6613
        %7238 = vmatmul.mubr.bf16.gmra.mxu0 %v6612
        %v7239 = vpop.f32.mrf.mxu0
        %v7240 = vadd.f32 %v6374, %v7239
        %v7241 = vpop.f32.mrf.mxu0
        %v7242 = vadd.f32 %v6376, %v7241
        %v7243 = vpop.f32.mrf.mxu0
        %v7244 = vadd.f32 %v6378, %v7243
        %v7245 = vpop.f32.mrf.mxu0
        %v7246 = vadd.f32 %v6380, %v7245
        %7247 = vmatprep.mubr.bf16.mxu0 %v6615
        %7248 = vmatmul.mubr.bf16.gmra.mxu0 %v6614
        %v7249 = vpop.f32.mrf.mxu0
        %v7250 = vadd.f32 %v6384, %v7249
        %v7251 = vpop.f32.mrf.mxu0
        %v7252 = vadd.f32 %v6386, %v7251
        %v7253 = vpop.f32.mrf.mxu0
        %v7254 = vadd.f32 %v6388, %v7253
        %v7255 = vpop.f32.mrf.mxu0
        %v7256 = vadd.f32 %v6390, %v7255
        %7257 = vmatprep.mubr.bf16.mxu0 %v6617
        %7258 = vmatmul.mubr.bf16.gmra.mxu0 %v6616
        %v7259 = vpop.f32.mrf.mxu0
        %v7260 = vadd.f32 %v6394, %v7259
        %v7261 = vpop.f32.mrf.mxu0
        %v7262 = vadd.f32 %v6396, %v7261
        %v7263 = vpop.f32.mrf.mxu0
        %v7264 = vadd.f32 %v6398, %v7263
        %v7265 = vpop.f32.mrf.mxu0
        %v7266 = vadd.f32 %v6400, %v7265
        %7267 = vmatprep.mubr.bf16.mxu0 %v6619
        %7268 = vmatmul.mubr.bf16.gmra.mxu0 %v6618
        %v7269 = vpop.f32.mrf.mxu0
        %v7270 = vadd.f32 %v6404, %v7269
        %v7271 = vpop.f32.mrf.mxu0
        %v7272 = vadd.f32 %v6406, %v7271
        %v7273 = vpop.f32.mrf.mxu0
        %v7274 = vadd.f32 %v6408, %v7273
        %v7275 = vpop.f32.mrf.mxu0
        %v7276 = vadd.f32 %v6410, %v7275
        %7277 = vmatprep.mubr.bf16.mxu0 %v6621
        %7278 = vmatmul.mubr.bf16.gmra.mxu0 %v6620
        %v7279 = vpop.f32.mrf.mxu0
        %v7280 = vadd.f32 %v6414, %v7279
        %v7281 = vpop.f32.mrf.mxu0
        %v7282 = vadd.f32 %v6416, %v7281
        %v7283 = vpop.f32.mrf.mxu0
        %v7284 = vadd.f32 %v6418, %v7283
        %v7285 = vpop.f32.mrf.mxu0
        %v7286 = vadd.f32 %v6420, %v7285
        %7287 = vmatprep.mubr.bf16.mxu0 %v6623
        %7288 = vmatmul.mubr.bf16.gmra.mxu0 %v6622
        %v7289 = vpop.f32.mrf.mxu0
        %v7290 = vadd.f32 %v6424, %v7289
        %v7291 = vpop.f32.mrf.mxu0
        %v7292 = vadd.f32 %v6426, %v7291
        %v7293 = vpop.f32.mrf.mxu0
        %v7294 = vadd.f32 %v6428, %v7293
        %v7295 = vpop.f32.mrf.mxu0
        %v7296 = vadd.f32 %v6430, %v7295
        %7297 = vmatprep.mubr.bf16.mxu0 %v6625
        %7298 = vmatmul.mubr.bf16.gmra.mxu0 %v6624
        %v7299 = vpop.f32.mrf.mxu0
        %v7300 = vadd.f32 %v6434, %v7299
        %v7301 = vpop.f32.mrf.mxu0
        %v7302 = vadd.f32 %v6436, %v7301
        %v7303 = vpop.f32.mrf.mxu0
        %v7304 = vadd.f32 %v6438, %v7303
        %v7305 = vpop.f32.mrf.mxu0
        %v7306 = vadd.f32 %v6440, %v7305
        %7307 = vmatprep.mubr.bf16.mxu0 %v6627
        %7308 = vmatmul.mubr.bf16.gmra.mxu0 %v6626
        %v7309 = vpop.f32.mrf.mxu0
        %v7310 = vadd.f32 %v6444, %v7309
        %v7311 = vpop.f32.mrf.mxu0
        %v7312 = vadd.f32 %v6446, %v7311
        %v7313 = vpop.f32.mrf.mxu0
        %v7314 = vadd.f32 %v6448, %v7313
        %v7315 = vpop.f32.mrf.mxu0
        %v7316 = vadd.f32 %v6450, %v7315
        %7317 = vmatprep.mubr.bf16.mxu0 %v6629
        %7318 = vmatmul.mubr.bf16.gmra.mxu0 %v6628
        %v7319 = vpop.f32.mrf.mxu0
        %v7320 = vadd.f32 %v6454, %v7319
        %v7321 = vpop.f32.mrf.mxu0
        %v7322 = vadd.f32 %v6456, %v7321
        %v7323 = vpop.f32.mrf.mxu0
        %v7324 = vadd.f32 %v6458, %v7323
        %v7325 = vpop.f32.mrf.mxu0
        %v7326 = vadd.f32 %v6460, %v7325
        %7327 = vmatprep.mubr.bf16.mxu0 %v6631
        %7328 = vmatmul.mubr.bf16.gmra.mxu0 %v6630
        %v7329 = vpop.f32.mrf.mxu0
        %v7330 = vadd.f32 %v6464, %v7329
        %v7331 = vpop.f32.mrf.mxu0
        %v7332 = vadd.f32 %v6466, %v7331
        %v7333 = vpop.f32.mrf.mxu0
        %v7334 = vadd.f32 %v6468, %v7333
        %v7335 = vpop.f32.mrf.mxu0
        %v7336 = vadd.f32 %v6470, %v7335
        %7337 = vmatprep.mubr.bf16.mxu0 %v6633
        %7338 = vmatmul.mubr.bf16.gmra.mxu0 %v6632
        %v7339 = vpop.f32.mrf.mxu0
        %v7340 = vadd.f32 %v6474, %v7339
        %v7341 = vpop.f32.mrf.mxu0
        %v7342 = vadd.f32 %v6476, %v7341
        %v7343 = vpop.f32.mrf.mxu0
        %v7344 = vadd.f32 %v6478, %v7343
        %v7345 = vpop.f32.mrf.mxu0
        %v7346 = vadd.f32 %v6480, %v7345
        %7347 = vmatprep.mubr.bf16.mxu0 %v6635
        %7348 = vmatmul.mubr.bf16.gmra.mxu0 %v6634
        %v7349 = vpop.f32.mrf.mxu0
        %v7350 = vadd.f32 %v6484, %v7349
        %v7351 = vpop.f32.mrf.mxu0
        %v7352 = vadd.f32 %v6486, %v7351
        %v7353 = vpop.f32.mrf.mxu0
        %v7354 = vadd.f32 %v6488, %v7353
        %v7355 = vpop.f32.mrf.mxu0
        %v7356 = vadd.f32 %v6490, %v7355
        %7357 = vmatprep.mubr.bf16.mxu0 %v6637
        %7358 = vmatmul.mubr.bf16.gmra.mxu0 %v6636
        %v7359 = vpop.f32.mrf.mxu0
        %v7360 = vadd.f32 %v6494, %v7359
        %v7361 = vpop.f32.mrf.mxu0
        %v7362 = vadd.f32 %v6496, %v7361
        %v7363 = vpop.f32.mrf.mxu0
        %v7364 = vadd.f32 %v6498, %v7363
        %v7365 = vpop.f32.mrf.mxu0
        %v7366 = vadd.f32 %v6500, %v7365
        %7367 = vmatprep.mubr.bf16.mxu0 %v6639
        %7368 = vmatmul.mubr.bf16.gmra.mxu0 %v6638
        %v7369 = vpop.f32.mrf.mxu0
        %v7370 = vadd.f32 %v6504, %v7369
        %v7371 = vpop.f32.mrf.mxu0
        %v7372 = vadd.f32 %v6506, %v7371
        %v7373 = vpop.f32.mrf.mxu0
        %v7374 = vadd.f32 %v6508, %v7373
        %v7375 = vpop.f32.mrf.mxu0
        %v7376 = vadd.f32 %v6510, %v7375
        %7377 = vdwg.mxu0
        %s7378 = scalar_lea.vmem [#allocation2], 32
        %v7379 = vld [vmem:[%s7378] sm:$0xff]
        %v7380 = vld [vmem:[%s7378 + $0x8] sm:$0xff]
        %v7381 = vld [vmem:[%s7378 + $0x10] sm:$0xff]
        %v7382 = vld [vmem:[%s7378 + $0x18] sm:$0xff]
        %v7383 = vld [vmem:[%s7378 + $0x20] sm:$0xff]
        %v7384 = vld [vmem:[%s7378 + $0x28] sm:$0xff]
        %v7385 = vld [vmem:[%s7378 + $0x30] sm:$0xff]
        %v7386 = vld [vmem:[%s7378 + $0x38] sm:$0xff]
        %v7387 = vld [vmem:[%s7378 + $0x40] sm:$0xff]
        %v7388 = vld [vmem:[%s7378 + $0x48] sm:$0xff]
        %v7389 = vld [vmem:[%s7378 + $0x50] sm:$0xff]
        %v7390 = vld [vmem:[%s7378 + $0x58] sm:$0xff]
        %v7391 = vld [vmem:[%s7378 + $0x60] sm:$0xff]
        %v7392 = vld [vmem:[%s7378 + $0x68] sm:$0xff]
        %v7393 = vld [vmem:[%s7378 + $0x70] sm:$0xff]
        %v7394 = vld [vmem:[%s7378 + $0x78] sm:$0xff]
        %v7395 = vld [vmem:[%s7378 + $0x80] sm:$0xff]
        %v7396 = vld [vmem:[%s7378 + $0x88] sm:$0xff]
        %v7397 = vld [vmem:[%s7378 + $0x90] sm:$0xff]
        %v7398 = vld [vmem:[%s7378 + $0x98] sm:$0xff]
        %v7399 = vld [vmem:[%s7378 + $0xa0] sm:$0xff]
        %v7400 = vld [vmem:[%s7378 + $0xa8] sm:$0xff]
        %v7401 = vld [vmem:[%s7378 + $0xb0] sm:$0xff]
        %v7402 = vld [vmem:[%s7378 + $0xb8] sm:$0xff]
        %v7403 = vld [vmem:[%s7378 + $0xc0] sm:$0xff]
        %v7404 = vld [vmem:[%s7378 + $0xc8] sm:$0xff]
        %v7405 = vld [vmem:[%s7378 + $0xd0] sm:$0xff]
        %v7406 = vld [vmem:[%s7378 + $0xd8] sm:$0xff]
        %v7407 = vld [vmem:[%s7378 + $0xe0] sm:$0xff]
        %v7408 = vld [vmem:[%s7378 + $0xe8] sm:$0xff]
        %v7409 = vld [vmem:[%s7378 + $0xf0] sm:$0xff]
        %v7410 = vld [vmem:[%s7378 + $0xf8] sm:$0xff]
        %s7411 = scalar_lea.vmem [#allocation9], 1024
        %v7412 = vld [vmem:[%s7411] sm:$0xff]
        %v7413 = vld [vmem:[%s7411 + $0x8] sm:$0xff]
        %v7414 = vld [vmem:[%s7411 + $0x10] sm:$0xff]
        %v7415 = vld [vmem:[%s7411 + $0x18] sm:$0xff]
        %v7416 = vld [vmem:[%s7411 + $0x20] sm:$0xff]
        %v7417 = vld [vmem:[%s7411 + $0x28] sm:$0xff]
        %v7418 = vld [vmem:[%s7411 + $0x30] sm:$0xff]
        %v7419 = vld [vmem:[%s7411 + $0x38] sm:$0xff]
        %v7420 = vld [vmem:[%s7411 + $0x40] sm:$0xff]
        %v7421 = vld [vmem:[%s7411 + $0x48] sm:$0xff]
        %v7422 = vld [vmem:[%s7411 + $0x50] sm:$0xff]
        %v7423 = vld [vmem:[%s7411 + $0x58] sm:$0xff]
        %v7424 = vld [vmem:[%s7411 + $0x60] sm:$0xff]
        %v7425 = vld [vmem:[%s7411 + $0x68] sm:$0xff]
        %v7426 = vld [vmem:[%s7411 + $0x70] sm:$0xff]
        %v7427 = vld [vmem:[%s7411 + $0x78] sm:$0xff]
        %v7428 = vld [vmem:[%s7411 + $0x80] sm:$0xff]
        %v7429 = vld [vmem:[%s7411 + $0x88] sm:$0xff]
        %v7430 = vld [vmem:[%s7411 + $0x90] sm:$0xff]
        %v7431 = vld [vmem:[%s7411 + $0x98] sm:$0xff]
        %v7432 = vld [vmem:[%s7411 + $0xa0] sm:$0xff]
        %v7433 = vld [vmem:[%s7411 + $0xa8] sm:$0xff]
        %v7434 = vld [vmem:[%s7411 + $0xb0] sm:$0xff]
        %v7435 = vld [vmem:[%s7411 + $0xb8] sm:$0xff]
        %v7436 = vld [vmem:[%s7411 + $0xc0] sm:$0xff]
        %v7437 = vld [vmem:[%s7411 + $0xc8] sm:$0xff]
        %v7438 = vld [vmem:[%s7411 + $0xd0] sm:$0xff]
        %v7439 = vld [vmem:[%s7411 + $0xd8] sm:$0xff]
        %v7440 = vld [vmem:[%s7411 + $0xe0] sm:$0xff]
        %v7441 = vld [vmem:[%s7411 + $0xe8] sm:$0xff]
        %v7442 = vld [vmem:[%s7411 + $0xf0] sm:$0xff]
        %v7443 = vld [vmem:[%s7411 + $0xf8] sm:$0xff]
        %v7444 = vld [vmem:[%s7411 + $0x100] sm:$0xff]
        %v7445 = vld [vmem:[%s7411 + $0x108] sm:$0xff]
        %v7446 = vld [vmem:[%s7411 + $0x110] sm:$0xff]
        %v7447 = vld [vmem:[%s7411 + $0x118] sm:$0xff]
        %v7448 = vld [vmem:[%s7411 + $0x120] sm:$0xff]
        %v7449 = vld [vmem:[%s7411 + $0x128] sm:$0xff]
        %v7450 = vld [vmem:[%s7411 + $0x130] sm:$0xff]
        %v7451 = vld [vmem:[%s7411 + $0x138] sm:$0xff]
        %v7452 = vld [vmem:[%s7411 + $0x140] sm:$0xff]
        %v7453 = vld [vmem:[%s7411 + $0x148] sm:$0xff]
        %v7454 = vld [vmem:[%s7411 + $0x150] sm:$0xff]
        %v7455 = vld [vmem:[%s7411 + $0x158] sm:$0xff]
        %v7456 = vld [vmem:[%s7411 + $0x160] sm:$0xff]
        %v7457 = vld [vmem:[%s7411 + $0x168] sm:$0xff]
        %v7458 = vld [vmem:[%s7411 + $0x170] sm:$0xff]
        %v7459 = vld [vmem:[%s7411 + $0x178] sm:$0xff]
        %v7460 = vld [vmem:[%s7411 + $0x180] sm:$0xff]
        %v7461 = vld [vmem:[%s7411 + $0x188] sm:$0xff]
        %v7462 = vld [vmem:[%s7411 + $0x190] sm:$0xff]
        %v7463 = vld [vmem:[%s7411 + $0x198] sm:$0xff]
        %v7464 = vld [vmem:[%s7411 + $0x1a0] sm:$0xff]
        %v7465 = vld [vmem:[%s7411 + $0x1a8] sm:$0xff]
        %v7466 = vld [vmem:[%s7411 + $0x1b0] sm:$0xff]
        %v7467 = vld [vmem:[%s7411 + $0x1b8] sm:$0xff]
        %v7468 = vld [vmem:[%s7411 + $0x1c0] sm:$0xff]
        %v7469 = vld [vmem:[%s7411 + $0x1c8] sm:$0xff]
        %v7470 = vld [vmem:[%s7411 + $0x1d0] sm:$0xff]
        %v7471 = vld [vmem:[%s7411 + $0x1d8] sm:$0xff]
        %v7472 = vld [vmem:[%s7411 + $0x1e0] sm:$0xff]
        %v7473 = vld [vmem:[%s7411 + $0x1e8] sm:$0xff]
        %v7474 = vld [vmem:[%s7411 + $0x1f0] sm:$0xff]
        %v7475 = vld [vmem:[%s7411 + $0x1f8] sm:$0xff]
        %v7508 = vunpack.c.l.b16 %v7379
        %v7509 = vunpack.c.h.b16 %v7379
        %v7510 = vunpack.c.l.b16 %v7380
        %v7511 = vunpack.c.h.b16 %v7380
        %v7512 = vunpack.c.l.b16 %v7381
        %v7513 = vunpack.c.h.b16 %v7381
        %v7514 = vunpack.c.l.b16 %v7382
        %v7515 = vunpack.c.h.b16 %v7382
        %v7516 = vunpack.c.l.b16 %v7383
        %v7517 = vunpack.c.h.b16 %v7383
        %v7518 = vunpack.c.l.b16 %v7384
        %v7519 = vunpack.c.h.b16 %v7384
        %v7520 = vunpack.c.l.b16 %v7385
        %v7521 = vunpack.c.h.b16 %v7385
        %v7522 = vunpack.c.l.b16 %v7386
        %v7523 = vunpack.c.h.b16 %v7386
        %v7524 = vunpack.c.l.b16 %v7387
        %v7525 = vunpack.c.h.b16 %v7387
        %v7526 = vunpack.c.l.b16 %v7388
        %v7527 = vunpack.c.h.b16 %v7388
        %v7528 = vunpack.c.l.b16 %v7389
        %v7529 = vunpack.c.h.b16 %v7389
        %v7530 = vunpack.c.l.b16 %v7390
        %v7531 = vunpack.c.h.b16 %v7390
        %v7532 = vunpack.c.l.b16 %v7391
        %v7533 = vunpack.c.h.b16 %v7391
        %v7534 = vunpack.c.l.b16 %v7392
        %v7535 = vunpack.c.h.b16 %v7392
        %v7536 = vunpack.c.l.b16 %v7393
        %v7537 = vunpack.c.h.b16 %v7393
        %v7538 = vunpack.c.l.b16 %v7394
        %v7539 = vunpack.c.h.b16 %v7394
        %v7540 = vunpack.c.l.b16 %v7395
        %v7541 = vunpack.c.h.b16 %v7395
        %v7542 = vunpack.c.l.b16 %v7396
        %v7543 = vunpack.c.h.b16 %v7396
        %v7544 = vunpack.c.l.b16 %v7397
        %v7545 = vunpack.c.h.b16 %v7397
        %v7546 = vunpack.c.l.b16 %v7398
        %v7547 = vunpack.c.h.b16 %v7398
        %v7548 = vunpack.c.l.b16 %v7399
        %v7549 = vunpack.c.h.b16 %v7399
        %v7550 = vunpack.c.l.b16 %v7400
        %v7551 = vunpack.c.h.b16 %v7400
        %v7552 = vunpack.c.l.b16 %v7401
        %v7553 = vunpack.c.h.b16 %v7401
        %v7554 = vunpack.c.l.b16 %v7402
        %v7555 = vunpack.c.h.b16 %v7402
        %v7556 = vunpack.c.l.b16 %v7403
        %v7557 = vunpack.c.h.b16 %v7403
        %v7558 = vunpack.c.l.b16 %v7404
        %v7559 = vunpack.c.h.b16 %v7404
        %v7560 = vunpack.c.l.b16 %v7405
        %v7561 = vunpack.c.h.b16 %v7405
        %v7562 = vunpack.c.l.b16 %v7406
        %v7563 = vunpack.c.h.b16 %v7406
        %v7564 = vunpack.c.l.b16 %v7407
        %v7565 = vunpack.c.h.b16 %v7407
        %v7566 = vunpack.c.l.b16 %v7408
        %v7567 = vunpack.c.h.b16 %v7408
        %v7568 = vunpack.c.l.b16 %v7409
        %v7569 = vunpack.c.h.b16 %v7409
        %v7570 = vunpack.c.l.b16 %v7410
        %v7571 = vunpack.c.h.b16 %v7410
        %v7572 = vpack.c.b16 %v7510, %v7508
        %v7573 = vpack.c.b16 %v7511, %v7509
        %v7574 = vpack.c.b16 %v7514, %v7512
        %v7575 = vpack.c.b16 %v7515, %v7513
        %v7576 = vpack.c.b16 %v7518, %v7516
        %v7577 = vpack.c.b16 %v7519, %v7517
        %v7578 = vpack.c.b16 %v7522, %v7520
        %v7579 = vpack.c.b16 %v7523, %v7521
        %v7580 = vpack.c.b16 %v7526, %v7524
        %v7581 = vpack.c.b16 %v7527, %v7525
        %v7582 = vpack.c.b16 %v7530, %v7528
        %v7583 = vpack.c.b16 %v7531, %v7529
        %v7584 = vpack.c.b16 %v7534, %v7532
        %v7585 = vpack.c.b16 %v7535, %v7533
        %v7586 = vpack.c.b16 %v7538, %v7536
        %v7587 = vpack.c.b16 %v7539, %v7537
        %v7588 = vpack.c.b16 %v7542, %v7540
        %v7589 = vpack.c.b16 %v7543, %v7541
        %v7590 = vpack.c.b16 %v7546, %v7544
        %v7591 = vpack.c.b16 %v7547, %v7545
        %v7592 = vpack.c.b16 %v7550, %v7548
        %v7593 = vpack.c.b16 %v7551, %v7549
        %v7594 = vpack.c.b16 %v7554, %v7552
        %v7595 = vpack.c.b16 %v7555, %v7553
        %v7596 = vpack.c.b16 %v7558, %v7556
        %v7597 = vpack.c.b16 %v7559, %v7557
        %v7598 = vpack.c.b16 %v7562, %v7560
        %v7599 = vpack.c.b16 %v7563, %v7561
        %v7600 = vpack.c.b16 %v7566, %v7564
        %v7601 = vpack.c.b16 %v7567, %v7565
        %v7602 = vpack.c.b16 %v7570, %v7568
        %v7603 = vpack.c.b16 %v7571, %v7569
        %v7700 = vunpack.c.l.b16 %v7412
        %v7701 = vunpack.c.h.b16 %v7412
        %v7702 = vunpack.c.l.b16 %v7413
        %v7703 = vunpack.c.h.b16 %v7413
        %v7704 = vunpack.c.l.b16 %v7414
        %v7705 = vunpack.c.h.b16 %v7414
        %v7706 = vunpack.c.l.b16 %v7415
        %v7707 = vunpack.c.h.b16 %v7415
        %v7708 = vunpack.c.l.b16 %v7416
        %v7709 = vunpack.c.h.b16 %v7416
        %v7710 = vunpack.c.l.b16 %v7417
        %v7711 = vunpack.c.h.b16 %v7417
        %v7712 = vunpack.c.l.b16 %v7418
        %v7713 = vunpack.c.h.b16 %v7418
        %v7714 = vunpack.c.l.b16 %v7419
        %v7715 = vunpack.c.h.b16 %v7419
        %v7716 = vunpack.c.l.b16 %v7420
        %v7717 = vunpack.c.h.b16 %v7420
        %v7718 = vunpack.c.l.b16 %v7421
        %v7719 = vunpack.c.h.b16 %v7421
        %v7720 = vunpack.c.l.b16 %v7422
        %v7721 = vunpack.c.h.b16 %v7422
        %v7722 = vunpack.c.l.b16 %v7423
        %v7723 = vunpack.c.h.b16 %v7423
        %v7724 = vunpack.c.l.b16 %v7424
        %v7725 = vunpack.c.h.b16 %v7424
        %v7726 = vunpack.c.l.b16 %v7425
        %v7727 = vunpack.c.h.b16 %v7425
        %v7728 = vunpack.c.l.b16 %v7426
        %v7729 = vunpack.c.h.b16 %v7426
        %v7730 = vunpack.c.l.b16 %v7427
        %v7731 = vunpack.c.h.b16 %v7427
        %v7732 = vunpack.c.l.b16 %v7428
        %v7733 = vunpack.c.h.b16 %v7428
        %v7734 = vunpack.c.l.b16 %v7429
        %v7735 = vunpack.c.h.b16 %v7429
        %v7736 = vunpack.c.l.b16 %v7430
        %v7737 = vunpack.c.h.b16 %v7430
        %v7738 = vunpack.c.l.b16 %v7431
        %v7739 = vunpack.c.h.b16 %v7431
        %v7740 = vunpack.c.l.b16 %v7432
        %v7741 = vunpack.c.h.b16 %v7432
        %v7742 = vunpack.c.l.b16 %v7433
        %v7743 = vunpack.c.h.b16 %v7433
        %v7744 = vunpack.c.l.b16 %v7434
        %v7745 = vunpack.c.h.b16 %v7434
        %v7746 = vunpack.c.l.b16 %v7435
        %v7747 = vunpack.c.h.b16 %v7435
        %v7748 = vunpack.c.l.b16 %v7436
        %v7749 = vunpack.c.h.b16 %v7436
        %v7750 = vunpack.c.l.b16 %v7437
        %v7751 = vunpack.c.h.b16 %v7437
        %v7752 = vunpack.c.l.b16 %v7438
        %v7753 = vunpack.c.h.b16 %v7438
        %v7754 = vunpack.c.l.b16 %v7439
        %v7755 = vunpack.c.h.b16 %v7439
        %v7756 = vunpack.c.l.b16 %v7440
        %v7757 = vunpack.c.h.b16 %v7440
        %v7758 = vunpack.c.l.b16 %v7441
        %v7759 = vunpack.c.h.b16 %v7441
        %v7760 = vunpack.c.l.b16 %v7442
        %v7761 = vunpack.c.h.b16 %v7442
        %v7762 = vunpack.c.l.b16 %v7443
        %v7763 = vunpack.c.h.b16 %v7443
        %v7764 = vunpack.c.l.b16 %v7444
        %v7765 = vunpack.c.h.b16 %v7444
        %v7766 = vunpack.c.l.b16 %v7445
        %v7767 = vunpack.c.h.b16 %v7445
        %v7768 = vunpack.c.l.b16 %v7446
        %v7769 = vunpack.c.h.b16 %v7446
        %v7770 = vunpack.c.l.b16 %v7447
        %v7771 = vunpack.c.h.b16 %v7447
        %v7772 = vunpack.c.l.b16 %v7448
        %v7773 = vunpack.c.h.b16 %v7448
        %v7774 = vunpack.c.l.b16 %v7449
        %v7775 = vunpack.c.h.b16 %v7449
        %v7776 = vunpack.c.l.b16 %v7450
        %v7777 = vunpack.c.h.b16 %v7450
        %v7778 = vunpack.c.l.b16 %v7451
        %v7779 = vunpack.c.h.b16 %v7451
        %v7780 = vunpack.c.l.b16 %v7452
        %v7781 = vunpack.c.h.b16 %v7452
        %v7782 = vunpack.c.l.b16 %v7453
        %v7783 = vunpack.c.h.b16 %v7453
        %v7784 = vunpack.c.l.b16 %v7454
        %v7785 = vunpack.c.h.b16 %v7454
        %v7786 = vunpack.c.l.b16 %v7455
        %v7787 = vunpack.c.h.b16 %v7455
        %v7788 = vunpack.c.l.b16 %v7456
        %v7789 = vunpack.c.h.b16 %v7456
        %v7790 = vunpack.c.l.b16 %v7457
        %v7791 = vunpack.c.h.b16 %v7457
        %v7792 = vunpack.c.l.b16 %v7458
        %v7793 = vunpack.c.h.b16 %v7458
        %v7794 = vunpack.c.l.b16 %v7459
        %v7795 = vunpack.c.h.b16 %v7459
        %v7796 = vunpack.c.l.b16 %v7460
        %v7797 = vunpack.c.h.b16 %v7460
        %v7798 = vunpack.c.l.b16 %v7461
        %v7799 = vunpack.c.h.b16 %v7461
        %v7800 = vunpack.c.l.b16 %v7462
        %v7801 = vunpack.c.h.b16 %v7462
        %v7802 = vunpack.c.l.b16 %v7463
        %v7803 = vunpack.c.h.b16 %v7463
        %v7804 = vunpack.c.l.b16 %v7464
        %v7805 = vunpack.c.h.b16 %v7464
        %v7806 = vunpack.c.l.b16 %v7465
        %v7807 = vunpack.c.h.b16 %v7465
        %v7808 = vunpack.c.l.b16 %v7466
        %v7809 = vunpack.c.h.b16 %v7466
        %v7810 = vunpack.c.l.b16 %v7467
        %v7811 = vunpack.c.h.b16 %v7467
        %v7812 = vunpack.c.l.b16 %v7468
        %v7813 = vunpack.c.h.b16 %v7468
        %v7814 = vunpack.c.l.b16 %v7469
        %v7815 = vunpack.c.h.b16 %v7469
        %v7816 = vunpack.c.l.b16 %v7470
        %v7817 = vunpack.c.h.b16 %v7470
        %v7818 = vunpack.c.l.b16 %v7471
        %v7819 = vunpack.c.h.b16 %v7471
        %v7820 = vunpack.c.l.b16 %v7472
        %v7821 = vunpack.c.h.b16 %v7472
        %v7822 = vunpack.c.l.b16 %v7473
        %v7823 = vunpack.c.h.b16 %v7473
        %v7824 = vunpack.c.l.b16 %v7474
        %v7825 = vunpack.c.h.b16 %v7474
        %v7826 = vunpack.c.l.b16 %v7475
        %v7827 = vunpack.c.h.b16 %v7475
        %v7828 = vpack.c.b16 %v7704, %v7700
        %v7829 = vpack.c.b16 %v7705, %v7701
        %v7830 = vpack.c.b16 %v7706, %v7702
        %v7831 = vpack.c.b16 %v7707, %v7703
        %v7832 = vpack.c.b16 %v7712, %v7708
        %v7833 = vpack.c.b16 %v7713, %v7709
        %v7834 = vpack.c.b16 %v7714, %v7710
        %v7835 = vpack.c.b16 %v7715, %v7711
        %v7836 = vpack.c.b16 %v7720, %v7716
        %v7837 = vpack.c.b16 %v7721, %v7717
        %v7838 = vpack.c.b16 %v7722, %v7718
        %v7839 = vpack.c.b16 %v7723, %v7719
        %v7840 = vpack.c.b16 %v7728, %v7724
        %v7841 = vpack.c.b16 %v7729, %v7725
        %v7842 = vpack.c.b16 %v7730, %v7726
        %v7843 = vpack.c.b16 %v7731, %v7727
        %v7844 = vpack.c.b16 %v7736, %v7732
        %v7845 = vpack.c.b16 %v7737, %v7733
        %v7846 = vpack.c.b16 %v7738, %v7734
        %v7847 = vpack.c.b16 %v7739, %v7735
        %v7848 = vpack.c.b16 %v7744, %v7740
        %v7849 = vpack.c.b16 %v7745, %v7741
        %v7850 = vpack.c.b16 %v7746, %v7742
        %v7851 = vpack.c.b16 %v7747, %v7743
        %v7852 = vpack.c.b16 %v7752, %v7748
        %v7853 = vpack.c.b16 %v7753, %v7749
        %v7854 = vpack.c.b16 %v7754, %v7750
        %v7855 = vpack.c.b16 %v7755, %v7751
        %v7856 = vpack.c.b16 %v7760, %v7756
        %v7857 = vpack.c.b16 %v7761, %v7757
        %v7858 = vpack.c.b16 %v7762, %v7758
        %v7859 = vpack.c.b16 %v7763, %v7759
        %v7860 = vpack.c.b16 %v7768, %v7764
        %v7861 = vpack.c.b16 %v7769, %v7765
        %v7862 = vpack.c.b16 %v7770, %v7766
        %v7863 = vpack.c.b16 %v7771, %v7767
        %v7864 = vpack.c.b16 %v7776, %v7772
        %v7865 = vpack.c.b16 %v7777, %v7773
        %v7866 = vpack.c.b16 %v7778, %v7774
        %v7867 = vpack.c.b16 %v7779, %v7775
        %v7868 = vpack.c.b16 %v7784, %v7780
        %v7869 = vpack.c.b16 %v7785, %v7781
        %v7870 = vpack.c.b16 %v7786, %v7782
        %v7871 = vpack.c.b16 %v7787, %v7783
        %v7872 = vpack.c.b16 %v7792, %v7788
        %v7873 = vpack.c.b16 %v7793, %v7789
        %v7874 = vpack.c.b16 %v7794, %v7790
        %v7875 = vpack.c.b16 %v7795, %v7791
        %v7876 = vpack.c.b16 %v7800, %v7796
        %v7877 = vpack.c.b16 %v7801, %v7797
        %v7878 = vpack.c.b16 %v7802, %v7798
        %v7879 = vpack.c.b16 %v7803, %v7799
        %v7880 = vpack.c.b16 %v7808, %v7804
        %v7881 = vpack.c.b16 %v7809, %v7805
        %v7882 = vpack.c.b16 %v7810, %v7806
        %v7883 = vpack.c.b16 %v7811, %v7807
        %v7884 = vpack.c.b16 %v7816, %v7812
        %v7885 = vpack.c.b16 %v7817, %v7813
        %v7886 = vpack.c.b16 %v7818, %v7814
        %v7887 = vpack.c.b16 %v7819, %v7815
        %v7888 = vpack.c.b16 %v7824, %v7820
        %v7889 = vpack.c.b16 %v7825, %v7821
        %v7890 = vpack.c.b16 %v7826, %v7822
        %v7891 = vpack.c.b16 %v7827, %v7823
        %7956 = vmatprep.subr.bf16.mxu0 %v7857
        %7957 = vmatpush1.bf16.msra.mxu0 %v7856
        %7958 = vmatprep.subr.bf16.mxu0 %v7853
        %7959 = vmatpush1.bf16.msra.mxu0 %v7852
        %7960 = vmatprep.subr.bf16.mxu0 %v7849
        %7961 = vmatpush1.bf16.msra.mxu0 %v7848
        %7962 = vmatprep.subr.bf16.mxu0 %v7845
        %7963 = vmatpush1.bf16.msra.mxu0 %v7844
        %7964 = vmatprep.subr.bf16.mxu0 %v7841
        %7965 = vmatpush1.bf16.msra.mxu0 %v7840
        %7966 = vmatprep.subr.bf16.mxu0 %v7837
        %7967 = vmatpush1.bf16.msra.mxu0 %v7836
        %7968 = vmatprep.subr.bf16.mxu0 %v7833
        %7969 = vmatpush1.bf16.msra.mxu0 %v7832
        %7970 = vmatprep.subr.bf16.mxu0 %v7829
        %7971 = vmatpush1.bf16.msra.mxu0 %v7828
        %7972 = vmatprep.subr.bf16.mxu0 %v7889
        %7973 = vmatpush2.bf16.msra.mxu0 %v7888
        %7974 = vmatprep.subr.bf16.mxu0 %v7885
        %7975 = vmatpush2.bf16.msra.mxu0 %v7884
        %7976 = vmatprep.subr.bf16.mxu0 %v7881
        %7977 = vmatpush2.bf16.msra.mxu0 %v7880
        %7978 = vmatprep.subr.bf16.mxu0 %v7877
        %7979 = vmatpush2.bf16.msra.mxu0 %v7876
        %7980 = vmatprep.subr.bf16.mxu0 %v7873
        %7981 = vmatpush2.bf16.msra.mxu0 %v7872
        %7982 = vmatprep.subr.bf16.mxu0 %v7869
        %7983 = vmatpush2.bf16.msra.mxu0 %v7868
        %7984 = vmatprep.subr.bf16.mxu0 %v7865
        %7985 = vmatpush2.bf16.msra.mxu0 %v7864
        %7986 = vmatprep.subr.bf16.mxu0 %v7861
        %7987 = vmatpush2.bf16.msra.mxu0 %v7860
        %7988 = vmatprep.mubr.bf16.mxu0 %v7573
        %7989 = vmatmul.mubr.bf16.gmra.mxu0 %v7572
        %v7990 = vpop.f32.mrf.mxu0
        %v7991 = vadd.f32 0.0, %v7990
        %v7992 = vpop.f32.mrf.mxu0
        %v7993 = vadd.f32 0.0, %v7992
        %v7994 = vpop.f32.mrf.mxu0
        %v7995 = vadd.f32 0.0, %v7994
        %v7996 = vpop.f32.mrf.mxu0
        %v7997 = vadd.f32 0.0, %v7996
        %7998 = vmatprep.mubr.bf16.mxu0 %v7575
        %7999 = vmatmul.mubr.bf16.gmra.mxu0 %v7574
        %v8000 = vpop.f32.mrf.mxu0
        %v8001 = vadd.f32 0.0, %v8000
        %v8002 = vpop.f32.mrf.mxu0
        %v8003 = vadd.f32 0.0, %v8002
        %v8004 = vpop.f32.mrf.mxu0
        %v8005 = vadd.f32 0.0, %v8004
        %v8006 = vpop.f32.mrf.mxu0
        %v8007 = vadd.f32 0.0, %v8006
        %8008 = vmatprep.mubr.bf16.mxu0 %v7577
        %8009 = vmatmul.mubr.bf16.gmra.mxu0 %v7576
        %v8010 = vpop.f32.mrf.mxu0
        %v8011 = vadd.f32 0.0, %v8010
        %v8012 = vpop.f32.mrf.mxu0
        %v8013 = vadd.f32 0.0, %v8012
        %v8014 = vpop.f32.mrf.mxu0
        %v8015 = vadd.f32 0.0, %v8014
        %v8016 = vpop.f32.mrf.mxu0
        %v8017 = vadd.f32 0.0, %v8016
        %8018 = vmatprep.mubr.bf16.mxu0 %v7579
        %8019 = vmatmul.mubr.bf16.gmra.mxu0 %v7578
        %v8020 = vpop.f32.mrf.mxu0
        %v8021 = vadd.f32 0.0, %v8020
        %v8022 = vpop.f32.mrf.mxu0
        %v8023 = vadd.f32 0.0, %v8022
        %v8024 = vpop.f32.mrf.mxu0
        %v8025 = vadd.f32 0.0, %v8024
        %v8026 = vpop.f32.mrf.mxu0
        %v8027 = vadd.f32 0.0, %v8026
        %8028 = vmatprep.mubr.bf16.mxu0 %v7581
        %8029 = vmatmul.mubr.bf16.gmra.mxu0 %v7580
        %v8030 = vpop.f32.mrf.mxu0
        %v8031 = vadd.f32 0.0, %v8030
        %v8032 = vpop.f32.mrf.mxu0
        %v8033 = vadd.f32 0.0, %v8032
        %v8034 = vpop.f32.mrf.mxu0
        %v8035 = vadd.f32 0.0, %v8034
        %v8036 = vpop.f32.mrf.mxu0
        %v8037 = vadd.f32 0.0, %v8036
        %8038 = vmatprep.mubr.bf16.mxu0 %v7583
        %8039 = vmatmul.mubr.bf16.gmra.mxu0 %v7582
        %v8040 = vpop.f32.mrf.mxu0
        %v8041 = vadd.f32 0.0, %v8040
        %v8042 = vpop.f32.mrf.mxu0
        %v8043 = vadd.f32 0.0, %v8042
        %v8044 = vpop.f32.mrf.mxu0
        %v8045 = vadd.f32 0.0, %v8044
        %v8046 = vpop.f32.mrf.mxu0
        %v8047 = vadd.f32 0.0, %v8046
        %8048 = vmatprep.mubr.bf16.mxu0 %v7585
        %8049 = vmatmul.mubr.bf16.gmra.mxu0 %v7584
        %v8050 = vpop.f32.mrf.mxu0
        %v8051 = vadd.f32 0.0, %v8050
        %v8052 = vpop.f32.mrf.mxu0
        %v8053 = vadd.f32 0.0, %v8052
        %v8054 = vpop.f32.mrf.mxu0
        %v8055 = vadd.f32 0.0, %v8054
        %v8056 = vpop.f32.mrf.mxu0
        %v8057 = vadd.f32 0.0, %v8056
        %8058 = vmatprep.mubr.bf16.mxu0 %v7587
        %8059 = vmatmul.mubr.bf16.gmra.mxu0 %v7586
        %v8060 = vpop.f32.mrf.mxu0
        %v8061 = vadd.f32 0.0, %v8060
        %v8062 = vpop.f32.mrf.mxu0
        %v8063 = vadd.f32 0.0, %v8062
        %v8064 = vpop.f32.mrf.mxu0
        %v8065 = vadd.f32 0.0, %v8064
        %v8066 = vpop.f32.mrf.mxu0
        %v8067 = vadd.f32 0.0, %v8066
        %8068 = vmatprep.mubr.bf16.mxu0 %v7589
        %8069 = vmatmul.mubr.bf16.gmra.mxu0 %v7588
        %v8070 = vpop.f32.mrf.mxu0
        %v8071 = vadd.f32 0.0, %v8070
        %v8072 = vpop.f32.mrf.mxu0
        %v8073 = vadd.f32 0.0, %v8072
        %v8074 = vpop.f32.mrf.mxu0
        %v8075 = vadd.f32 0.0, %v8074
        %v8076 = vpop.f32.mrf.mxu0
        %v8077 = vadd.f32 0.0, %v8076
        %8078 = vmatprep.mubr.bf16.mxu0 %v7591
        %8079 = vmatmul.mubr.bf16.gmra.mxu0 %v7590
        %v8080 = vpop.f32.mrf.mxu0
        %v8081 = vadd.f32 0.0, %v8080
        %v8082 = vpop.f32.mrf.mxu0
        %v8083 = vadd.f32 0.0, %v8082
        %v8084 = vpop.f32.mrf.mxu0
        %v8085 = vadd.f32 0.0, %v8084
        %v8086 = vpop.f32.mrf.mxu0
        %v8087 = vadd.f32 0.0, %v8086
        %8088 = vmatprep.mubr.bf16.mxu0 %v7593
        %8089 = vmatmul.mubr.bf16.gmra.mxu0 %v7592
        %v8090 = vpop.f32.mrf.mxu0
        %v8091 = vadd.f32 0.0, %v8090
        %v8092 = vpop.f32.mrf.mxu0
        %v8093 = vadd.f32 0.0, %v8092
        %v8094 = vpop.f32.mrf.mxu0
        %v8095 = vadd.f32 0.0, %v8094
        %v8096 = vpop.f32.mrf.mxu0
        %v8097 = vadd.f32 0.0, %v8096
        %8098 = vmatprep.mubr.bf16.mxu0 %v7595
        %8099 = vmatmul.mubr.bf16.gmra.mxu0 %v7594
        %v8100 = vpop.f32.mrf.mxu0
        %v8101 = vadd.f32 0.0, %v8100
        %v8102 = vpop.f32.mrf.mxu0
        %v8103 = vadd.f32 0.0, %v8102
        %v8104 = vpop.f32.mrf.mxu0
        %v8105 = vadd.f32 0.0, %v8104
        %v8106 = vpop.f32.mrf.mxu0
        %v8107 = vadd.f32 0.0, %v8106
        %8108 = vmatprep.mubr.bf16.mxu0 %v7597
        %8109 = vmatmul.mubr.bf16.gmra.mxu0 %v7596
        %v8110 = vpop.f32.mrf.mxu0
        %v8111 = vadd.f32 0.0, %v8110
        %v8112 = vpop.f32.mrf.mxu0
        %v8113 = vadd.f32 0.0, %v8112
        %v8114 = vpop.f32.mrf.mxu0
        %v8115 = vadd.f32 0.0, %v8114
        %v8116 = vpop.f32.mrf.mxu0
        %v8117 = vadd.f32 0.0, %v8116
        %8118 = vmatprep.mubr.bf16.mxu0 %v7599
        %8119 = vmatmul.mubr.bf16.gmra.mxu0 %v7598
        %v8120 = vpop.f32.mrf.mxu0
        %v8121 = vadd.f32 0.0, %v8120
        %v8122 = vpop.f32.mrf.mxu0
        %v8123 = vadd.f32 0.0, %v8122
        %v8124 = vpop.f32.mrf.mxu0
        %v8125 = vadd.f32 0.0, %v8124
        %v8126 = vpop.f32.mrf.mxu0
        %v8127 = vadd.f32 0.0, %v8126
        %8128 = vmatprep.mubr.bf16.mxu0 %v7601
        %8129 = vmatmul.mubr.bf16.gmra.mxu0 %v7600
        %v8130 = vpop.f32.mrf.mxu0
        %v8131 = vadd.f32 0.0, %v8130
        %v8132 = vpop.f32.mrf.mxu0
        %v8133 = vadd.f32 0.0, %v8132
        %v8134 = vpop.f32.mrf.mxu0
        %v8135 = vadd.f32 0.0, %v8134
        %v8136 = vpop.f32.mrf.mxu0
        %v8137 = vadd.f32 0.0, %v8136
        %8138 = vmatprep.mubr.bf16.mxu0 %v7603
        %8139 = vmatmul.mubr.bf16.gmra.mxu0 %v7602
        %v8140 = vpop.f32.mrf.mxu0
        %v8141 = vadd.f32 0.0, %v8140
        %v8142 = vpop.f32.mrf.mxu0
        %v8143 = vadd.f32 0.0, %v8142
        %v8144 = vpop.f32.mrf.mxu0
        %v8145 = vadd.f32 0.0, %v8144
        %v8146 = vpop.f32.mrf.mxu0
        %v8147 = vadd.f32 0.0, %v8146
        %8148 = vdwg.mxu0
        %8149 = vmatprep.subr.bf16.mxu0 %v7859
        %8150 = vmatpush1.bf16.msra.mxu0 %v7858
        %8151 = vmatprep.subr.bf16.mxu0 %v7855
        %8152 = vmatpush1.bf16.msra.mxu0 %v7854
        %8153 = vmatprep.subr.bf16.mxu0 %v7851
        %8154 = vmatpush1.bf16.msra.mxu0 %v7850
        %8155 = vmatprep.subr.bf16.mxu0 %v7847
        %8156 = vmatpush1.bf16.msra.mxu0 %v7846
        %8157 = vmatprep.subr.bf16.mxu0 %v7843
        %8158 = vmatpush1.bf16.msra.mxu0 %v7842
        %8159 = vmatprep.subr.bf16.mxu0 %v7839
        %8160 = vmatpush1.bf16.msra.mxu0 %v7838
        %8161 = vmatprep.subr.bf16.mxu0 %v7835
        %8162 = vmatpush1.bf16.msra.mxu0 %v7834
        %8163 = vmatprep.subr.bf16.mxu0 %v7831
        %8164 = vmatpush1.bf16.msra.mxu0 %v7830
        %8165 = vmatprep.subr.bf16.mxu0 %v7891
        %8166 = vmatpush2.bf16.msra.mxu0 %v7890
        %8167 = vmatprep.subr.bf16.mxu0 %v7887
        %8168 = vmatpush2.bf16.msra.mxu0 %v7886
        %8169 = vmatprep.subr.bf16.mxu0 %v7883
        %8170 = vmatpush2.bf16.msra.mxu0 %v7882
        %8171 = vmatprep.subr.bf16.mxu0 %v7879
        %8172 = vmatpush2.bf16.msra.mxu0 %v7878
        %8173 = vmatprep.subr.bf16.mxu0 %v7875
        %8174 = vmatpush2.bf16.msra.mxu0 %v7874
        %8175 = vmatprep.subr.bf16.mxu0 %v7871
        %8176 = vmatpush2.bf16.msra.mxu0 %v7870
        %8177 = vmatprep.subr.bf16.mxu0 %v7867
        %8178 = vmatpush2.bf16.msra.mxu0 %v7866
        %8179 = vmatprep.subr.bf16.mxu0 %v7863
        %8180 = vmatpush2.bf16.msra.mxu0 %v7862
        %8181 = vmatprep.mubr.bf16.mxu0 %v7573
        %8182 = vmatmul.mubr.bf16.gmra.mxu0 %v7572
        %v8183 = vpop.f32.mrf.mxu0
        %v8184 = vadd.f32 0.0, %v8183
        %v8185 = vpop.f32.mrf.mxu0
        %v8186 = vadd.f32 0.0, %v8185
        %v8187 = vpop.f32.mrf.mxu0
        %v8188 = vadd.f32 0.0, %v8187
        %v8189 = vpop.f32.mrf.mxu0
        %v8190 = vadd.f32 0.0, %v8189
        %8191 = vmatprep.mubr.bf16.mxu0 %v7575
        %8192 = vmatmul.mubr.bf16.gmra.mxu0 %v7574
        %v8193 = vpop.f32.mrf.mxu0
        %v8194 = vadd.f32 0.0, %v8193
        %v8195 = vpop.f32.mrf.mxu0
        %v8196 = vadd.f32 0.0, %v8195
        %v8197 = vpop.f32.mrf.mxu0
        %v8198 = vadd.f32 0.0, %v8197
        %v8199 = vpop.f32.mrf.mxu0
        %v8200 = vadd.f32 0.0, %v8199
        %8201 = vmatprep.mubr.bf16.mxu0 %v7577
        %8202 = vmatmul.mubr.bf16.gmra.mxu0 %v7576
        %v8203 = vpop.f32.mrf.mxu0
        %v8204 = vadd.f32 0.0, %v8203
        %v8205 = vpop.f32.mrf.mxu0
        %v8206 = vadd.f32 0.0, %v8205
        %v8207 = vpop.f32.mrf.mxu0
        %v8208 = vadd.f32 0.0, %v8207
        %v8209 = vpop.f32.mrf.mxu0
        %v8210 = vadd.f32 0.0, %v8209
        %8211 = vmatprep.mubr.bf16.mxu0 %v7579
        %8212 = vmatmul.mubr.bf16.gmra.mxu0 %v7578
        %v8213 = vpop.f32.mrf.mxu0
        %v8214 = vadd.f32 0.0, %v8213
        %v8215 = vpop.f32.mrf.mxu0
        %v8216 = vadd.f32 0.0, %v8215
        %v8217 = vpop.f32.mrf.mxu0
        %v8218 = vadd.f32 0.0, %v8217
        %v8219 = vpop.f32.mrf.mxu0
        %v8220 = vadd.f32 0.0, %v8219
        %8221 = vmatprep.mubr.bf16.mxu0 %v7581
        %8222 = vmatmul.mubr.bf16.gmra.mxu0 %v7580
        %v8223 = vpop.f32.mrf.mxu0
        %v8224 = vadd.f32 0.0, %v8223
        %v8225 = vpop.f32.mrf.mxu0
        %v8226 = vadd.f32 0.0, %v8225
        %v8227 = vpop.f32.mrf.mxu0
        %v8228 = vadd.f32 0.0, %v8227
        %v8229 = vpop.f32.mrf.mxu0
        %v8230 = vadd.f32 0.0, %v8229
        %8231 = vmatprep.mubr.bf16.mxu0 %v7583
        %8232 = vmatmul.mubr.bf16.gmra.mxu0 %v7582
        %v8233 = vpop.f32.mrf.mxu0
        %v8234 = vadd.f32 0.0, %v8233
        %v8235 = vpop.f32.mrf.mxu0
        %v8236 = vadd.f32 0.0, %v8235
        %v8237 = vpop.f32.mrf.mxu0
        %v8238 = vadd.f32 0.0, %v8237
        %v8239 = vpop.f32.mrf.mxu0
        %v8240 = vadd.f32 0.0, %v8239
        %8241 = vmatprep.mubr.bf16.mxu0 %v7585
        %8242 = vmatmul.mubr.bf16.gmra.mxu0 %v7584
        %v8243 = vpop.f32.mrf.mxu0
        %v8244 = vadd.f32 0.0, %v8243
        %v8245 = vpop.f32.mrf.mxu0
        %v8246 = vadd.f32 0.0, %v8245
        %v8247 = vpop.f32.mrf.mxu0
        %v8248 = vadd.f32 0.0, %v8247
        %v8249 = vpop.f32.mrf.mxu0
        %v8250 = vadd.f32 0.0, %v8249
        %8251 = vmatprep.mubr.bf16.mxu0 %v7587
        %8252 = vmatmul.mubr.bf16.gmra.mxu0 %v7586
        %v8253 = vpop.f32.mrf.mxu0
        %v8254 = vadd.f32 0.0, %v8253
        %v8255 = vpop.f32.mrf.mxu0
        %v8256 = vadd.f32 0.0, %v8255
        %v8257 = vpop.f32.mrf.mxu0
        %v8258 = vadd.f32 0.0, %v8257
        %v8259 = vpop.f32.mrf.mxu0
        %v8260 = vadd.f32 0.0, %v8259
        %8261 = vmatprep.mubr.bf16.mxu0 %v7589
        %8262 = vmatmul.mubr.bf16.gmra.mxu0 %v7588
        %v8263 = vpop.f32.mrf.mxu0
        %v8264 = vadd.f32 0.0, %v8263
        %v8265 = vpop.f32.mrf.mxu0
        %v8266 = vadd.f32 0.0, %v8265
        %v8267 = vpop.f32.mrf.mxu0
        %v8268 = vadd.f32 0.0, %v8267
        %v8269 = vpop.f32.mrf.mxu0
        %v8270 = vadd.f32 0.0, %v8269
        %8271 = vmatprep.mubr.bf16.mxu0 %v7591
        %8272 = vmatmul.mubr.bf16.gmra.mxu0 %v7590
        %v8273 = vpop.f32.mrf.mxu0
        %v8274 = vadd.f32 0.0, %v8273
        %v8275 = vpop.f32.mrf.mxu0
        %v8276 = vadd.f32 0.0, %v8275
        %v8277 = vpop.f32.mrf.mxu0
        %v8278 = vadd.f32 0.0, %v8277
        %v8279 = vpop.f32.mrf.mxu0
        %v8280 = vadd.f32 0.0, %v8279
        %8281 = vmatprep.mubr.bf16.mxu0 %v7593
        %8282 = vmatmul.mubr.bf16.gmra.mxu0 %v7592
        %v8283 = vpop.f32.mrf.mxu0
        %v8284 = vadd.f32 0.0, %v8283
        %v8285 = vpop.f32.mrf.mxu0
        %v8286 = vadd.f32 0.0, %v8285
        %v8287 = vpop.f32.mrf.mxu0
        %v8288 = vadd.f32 0.0, %v8287
        %v8289 = vpop.f32.mrf.mxu0
        %v8290 = vadd.f32 0.0, %v8289
        %8291 = vmatprep.mubr.bf16.mxu0 %v7595
        %8292 = vmatmul.mubr.bf16.gmra.mxu0 %v7594
        %v8293 = vpop.f32.mrf.mxu0
        %v8294 = vadd.f32 0.0, %v8293
        %v8295 = vpop.f32.mrf.mxu0
        %v8296 = vadd.f32 0.0, %v8295
        %v8297 = vpop.f32.mrf.mxu0
        %v8298 = vadd.f32 0.0, %v8297
        %v8299 = vpop.f32.mrf.mxu0
        %v8300 = vadd.f32 0.0, %v8299
        %8301 = vmatprep.mubr.bf16.mxu0 %v7597
        %8302 = vmatmul.mubr.bf16.gmra.mxu0 %v7596
        %v8303 = vpop.f32.mrf.mxu0
        %v8304 = vadd.f32 0.0, %v8303
        %v8305 = vpop.f32.mrf.mxu0
        %v8306 = vadd.f32 0.0, %v8305
        %v8307 = vpop.f32.mrf.mxu0
        %v8308 = vadd.f32 0.0, %v8307
        %v8309 = vpop.f32.mrf.mxu0
        %v8310 = vadd.f32 0.0, %v8309
        %8311 = vmatprep.mubr.bf16.mxu0 %v7599
        %8312 = vmatmul.mubr.bf16.gmra.mxu0 %v7598
        %v8313 = vpop.f32.mrf.mxu0
        %v8314 = vadd.f32 0.0, %v8313
        %v8315 = vpop.f32.mrf.mxu0
        %v8316 = vadd.f32 0.0, %v8315
        %v8317 = vpop.f32.mrf.mxu0
        %v8318 = vadd.f32 0.0, %v8317
        %v8319 = vpop.f32.mrf.mxu0
        %v8320 = vadd.f32 0.0, %v8319
        %8321 = vmatprep.mubr.bf16.mxu0 %v7601
        %8322 = vmatmul.mubr.bf16.gmra.mxu0 %v7600
        %v8323 = vpop.f32.mrf.mxu0
        %v8324 = vadd.f32 0.0, %v8323
        %v8325 = vpop.f32.mrf.mxu0
        %v8326 = vadd.f32 0.0, %v8325
        %v8327 = vpop.f32.mrf.mxu0
        %v8328 = vadd.f32 0.0, %v8327
        %v8329 = vpop.f32.mrf.mxu0
        %v8330 = vadd.f32 0.0, %v8329
        %8331 = vmatprep.mubr.bf16.mxu0 %v7603
        %8332 = vmatmul.mubr.bf16.gmra.mxu0 %v7602
        %v8333 = vpop.f32.mrf.mxu0
        %v8334 = vadd.f32 0.0, %v8333
        %v8335 = vpop.f32.mrf.mxu0
        %v8336 = vadd.f32 0.0, %v8335
        %v8337 = vpop.f32.mrf.mxu0
        %v8338 = vadd.f32 0.0, %v8337
        %v8339 = vpop.f32.mrf.mxu0
        %v8340 = vadd.f32 0.0, %v8339
        %8341 = vdwg.mxu0
        %v8342 = vadd.f32 %v7027, %v7991
        %v8343 = vadd.f32 %v7029, %v7993
        %v8344 = vadd.f32 %v7220, %v8184
        %v8345 = vadd.f32 %v7222, %v8186
        %v8346 = vadd.f32 %v7031, %v7995
        %v8347 = vadd.f32 %v7033, %v7997
        %v8348 = vadd.f32 %v7224, %v8188
        %v8349 = vadd.f32 %v7226, %v8190
        %v8350 = vadd.f32 %v7037, %v8001
        %v8351 = vadd.f32 %v7039, %v8003
        %v8352 = vadd.f32 %v7230, %v8194
        %v8353 = vadd.f32 %v7232, %v8196
        %v8354 = vadd.f32 %v7041, %v8005
        %v8355 = vadd.f32 %v7043, %v8007
        %v8356 = vadd.f32 %v7234, %v8198
        %v8357 = vadd.f32 %v7236, %v8200
        %v8358 = vadd.f32 %v7047, %v8011
        %v8359 = vadd.f32 %v7049, %v8013
        %v8360 = vadd.f32 %v7240, %v8204
        %v8361 = vadd.f32 %v7242, %v8206
        %v8362 = vadd.f32 %v7051, %v8015
        %v8363 = vadd.f32 %v7053, %v8017
        %v8364 = vadd.f32 %v7244, %v8208
        %v8365 = vadd.f32 %v7246, %v8210
        %v8366 = vadd.f32 %v7057, %v8021
        %v8367 = vadd.f32 %v7059, %v8023
        %v8368 = vadd.f32 %v7250, %v8214
        %v8369 = vadd.f32 %v7252, %v8216
        %v8370 = vadd.f32 %v7061, %v8025
        %v8371 = vadd.f32 %v7063, %v8027
        %v8372 = vadd.f32 %v7254, %v8218
        %v8373 = vadd.f32 %v7256, %v8220
        %v8374 = vadd.f32 %v7067, %v8031
        %v8375 = vadd.f32 %v7069, %v8033
        %v8376 = vadd.f32 %v7260, %v8224
        %v8377 = vadd.f32 %v7262, %v8226
        %v8378 = vadd.f32 %v7071, %v8035
        %v8379 = vadd.f32 %v7073, %v8037
        %v8380 = vadd.f32 %v7264, %v8228
        %v8381 = vadd.f32 %v7266, %v8230
        %v8382 = vadd.f32 %v7077, %v8041
        %v8383 = vadd.f32 %v7079, %v8043
        %v8384 = vadd.f32 %v7270, %v8234
        %v8385 = vadd.f32 %v7272, %v8236
        %v8386 = vadd.f32 %v7081, %v8045
        %v8387 = vadd.f32 %v7083, %v8047
        %v8388 = vadd.f32 %v7274, %v8238
        %v8389 = vadd.f32 %v7276, %v8240
        %v8390 = vadd.f32 %v7087, %v8051
        %v8391 = vadd.f32 %v7089, %v8053
        %v8392 = vadd.f32 %v7280, %v8244
        %v8393 = vadd.f32 %v7282, %v8246
        %v8394 = vadd.f32 %v7091, %v8055
        %v8395 = vadd.f32 %v7093, %v8057
        %v8396 = vadd.f32 %v7284, %v8248
        %v8397 = vadd.f32 %v7286, %v8250
        %v8398 = vadd.f32 %v7097, %v8061
        %v8399 = vadd.f32 %v7099, %v8063
        %v8400 = vadd.f32 %v7290, %v8254
        %v8401 = vadd.f32 %v7292, %v8256
        %v8402 = vadd.f32 %v7101, %v8065
        %v8403 = vadd.f32 %v7103, %v8067
        %v8404 = vadd.f32 %v7294, %v8258
        %v8405 = vadd.f32 %v7296, %v8260
        %v8406 = vadd.f32 %v7107, %v8071
        %v8407 = vadd.f32 %v7109, %v8073
        %v8408 = vadd.f32 %v7300, %v8264
        %v8409 = vadd.f32 %v7302, %v8266
        %v8410 = vadd.f32 %v7111, %v8075
        %v8411 = vadd.f32 %v7113, %v8077
        %v8412 = vadd.f32 %v7304, %v8268
        %v8413 = vadd.f32 %v7306, %v8270
        %v8414 = vadd.f32 %v7117, %v8081
        %v8415 = vadd.f32 %v7119, %v8083
        %v8416 = vadd.f32 %v7310, %v8274
        %v8417 = vadd.f32 %v7312, %v8276
        %v8418 = vadd.f32 %v7121, %v8085
        %v8419 = vadd.f32 %v7123, %v8087
        %v8420 = vadd.f32 %v7314, %v8278
        %v8421 = vadd.f32 %v7316, %v8280
        %v8422 = vadd.f32 %v7127, %v8091
        %v8423 = vadd.f32 %v7129, %v8093
        %v8424 = vadd.f32 %v7320, %v8284
        %v8425 = vadd.f32 %v7322, %v8286
        %v8426 = vadd.f32 %v7131, %v8095
        %v8427 = vadd.f32 %v7133, %v8097
        %v8428 = vadd.f32 %v7324, %v8288
        %v8429 = vadd.f32 %v7326, %v8290
        %v8430 = vadd.f32 %v7137, %v8101
        %v8431 = vadd.f32 %v7139, %v8103
        %v8432 = vadd.f32 %v7330, %v8294
        %v8433 = vadd.f32 %v7332, %v8296
        %v8434 = vadd.f32 %v7141, %v8105
        %v8435 = vadd.f32 %v7143, %v8107
        %v8436 = vadd.f32 %v7334, %v8298
        %v8437 = vadd.f32 %v7336, %v8300
        %v8438 = vadd.f32 %v7147, %v8111
        %v8439 = vadd.f32 %v7149, %v8113
        %v8440 = vadd.f32 %v7340, %v8304
        %v8441 = vadd.f32 %v7342, %v8306
        %v8442 = vadd.f32 %v7151, %v8115
        %v8443 = vadd.f32 %v7153, %v8117
        %v8444 = vadd.f32 %v7344, %v8308
        %v8445 = vadd.f32 %v7346, %v8310
        %v8446 = vadd.f32 %v7157, %v8121
        %v8447 = vadd.f32 %v7159, %v8123
        %v8448 = vadd.f32 %v7350, %v8314
        %v8449 = vadd.f32 %v7352, %v8316
        %v8450 = vadd.f32 %v7161, %v8125
        %v8451 = vadd.f32 %v7163, %v8127
        %v8452 = vadd.f32 %v7354, %v8318
        %v8453 = vadd.f32 %v7356, %v8320
        %v8454 = vadd.f32 %v7167, %v8131
        %v8455 = vadd.f32 %v7169, %v8133
        %v8456 = vadd.f32 %v7360, %v8324
        %v8457 = vadd.f32 %v7362, %v8326
        %v8458 = vadd.f32 %v7171, %v8135
        %v8459 = vadd.f32 %v7173, %v8137
        %v8460 = vadd.f32 %v7364, %v8328
        %v8461 = vadd.f32 %v7366, %v8330
        %v8462 = vadd.f32 %v7177, %v8141
        %v8463 = vadd.f32 %v7179, %v8143
        %v8464 = vadd.f32 %v7370, %v8334
        %v8465 = vadd.f32 %v7372, %v8336
        %v8466 = vadd.f32 %v7181, %v8145
        %v8467 = vadd.f32 %v7183, %v8147
        %v8468 = vadd.f32 %v7374, %v8338
        %v8469 = vadd.f32 %v7376, %v8340
        %v8470 = vld [vmem:[%s5] sm:$0xf]
        %v8472 = vlaneseq
        %v8473 = vshrl.u32 %v8472, 7
        %v8474 = vsub.s32 0, %v8473
        %v8475 = vrot.slane %v8470, %v8474
        %v8476 = vlaneseq
        %v8477 = vshrl.u32 %v8476, 7
        %v8478 = vsub.s32 1, %v8477
        %v8479 = vrot.slane %v8470, %v8478
        %v8480 = vlaneseq
        %v8481 = vshrl.u32 %v8480, 7
        %v8482 = vsub.s32 2, %v8481
        %v8483 = vrot.slane %v8470, %v8482
        %v8484 = vlaneseq
        %v8485 = vshrl.u32 %v8484, 7
        %v8486 = vsub.s32 3, %v8485
        %v8487 = vrot.slane %v8470, %v8486
        %v8492 = vmul.f32 %v8342, %v8475
        %v8493 = vmul.f32 %v8343, %v8479
        %v8494 = vmul.f32 %v8344, %v8483
        %v8495 = vmul.f32 %v8345, %v8487
        %v8496 = vmul.f32 %v8346, %v8475
        %v8497 = vmul.f32 %v8347, %v8479
        %v8498 = vmul.f32 %v8348, %v8483
        %v8499 = vmul.f32 %v8349, %v8487
        %v8500 = vmul.f32 %v8350, %v8475
        %v8501 = vmul.f32 %v8351, %v8479
        %v8502 = vmul.f32 %v8352, %v8483
        %v8503 = vmul.f32 %v8353, %v8487
        %v8504 = vmul.f32 %v8354, %v8475
        %v8505 = vmul.f32 %v8355, %v8479
        %v8506 = vmul.f32 %v8356, %v8483
        %v8507 = vmul.f32 %v8357, %v8487
        %v8508 = vmul.f32 %v8358, %v8475
        %v8509 = vmul.f32 %v8359, %v8479
        %v8510 = vmul.f32 %v8360, %v8483
        %v8511 = vmul.f32 %v8361, %v8487
        %v8512 = vmul.f32 %v8362, %v8475
        %v8513 = vmul.f32 %v8363, %v8479
        %v8514 = vmul.f32 %v8364, %v8483
        %v8515 = vmul.f32 %v8365, %v8487
        %v8516 = vmul.f32 %v8366, %v8475
        %v8517 = vmul.f32 %v8367, %v8479
        %v8518 = vmul.f32 %v8368, %v8483
        %v8519 = vmul.f32 %v8369, %v8487
        %v8520 = vmul.f32 %v8370, %v8475
        %v8521 = vmul.f32 %v8371, %v8479
        %v8522 = vmul.f32 %v8372, %v8483
        %v8523 = vmul.f32 %v8373, %v8487
        %v8524 = vmul.f32 %v8374, %v8475
        %v8525 = vmul.f32 %v8375, %v8479
        %v8526 = vmul.f32 %v8376, %v8483
        %v8527 = vmul.f32 %v8377, %v8487
        %v8528 = vmul.f32 %v8378, %v8475
        %v8529 = vmul.f32 %v8379, %v8479
        %v8530 = vmul.f32 %v8380, %v8483
        %v8531 = vmul.f32 %v8381, %v8487
        %v8532 = vmul.f32 %v8382, %v8475
        %v8533 = vmul.f32 %v8383, %v8479
        %v8534 = vmul.f32 %v8384, %v8483
        %v8535 = vmul.f32 %v8385, %v8487
        %v8536 = vmul.f32 %v8386, %v8475
        %v8537 = vmul.f32 %v8387, %v8479
        %v8538 = vmul.f32 %v8388, %v8483
        %v8539 = vmul.f32 %v8389, %v8487
        %v8540 = vmul.f32 %v8390, %v8475
        %v8541 = vmul.f32 %v8391, %v8479
        %v8542 = vmul.f32 %v8392, %v8483
        %v8543 = vmul.f32 %v8393, %v8487
        %v8544 = vmul.f32 %v8394, %v8475
        %v8545 = vmul.f32 %v8395, %v8479
        %v8546 = vmul.f32 %v8396, %v8483
        %v8547 = vmul.f32 %v8397, %v8487
        %v8548 = vmul.f32 %v8398, %v8475
        %v8549 = vmul.f32 %v8399, %v8479
        %v8550 = vmul.f32 %v8400, %v8483
        %v8551 = vmul.f32 %v8401, %v8487
        %v8552 = vmul.f32 %v8402, %v8475
        %v8553 = vmul.f32 %v8403, %v8479
        %v8554 = vmul.f32 %v8404, %v8483
        %v8555 = vmul.f32 %v8405, %v8487
        %v8556 = vmul.f32 %v8406, %v8475
        %v8557 = vmul.f32 %v8407, %v8479
        %v8558 = vmul.f32 %v8408, %v8483
        %v8559 = vmul.f32 %v8409, %v8487
        %v8560 = vmul.f32 %v8410, %v8475
        %v8561 = vmul.f32 %v8411, %v8479
        %v8562 = vmul.f32 %v8412, %v8483
        %v8563 = vmul.f32 %v8413, %v8487
        %v8564 = vmul.f32 %v8414, %v8475
        %v8565 = vmul.f32 %v8415, %v8479
        %v8566 = vmul.f32 %v8416, %v8483
        %v8567 = vmul.f32 %v8417, %v8487
        %v8568 = vmul.f32 %v8418, %v8475
        %v8569 = vmul.f32 %v8419, %v8479
        %v8570 = vmul.f32 %v8420, %v8483
        %v8571 = vmul.f32 %v8421, %v8487
        %v8572 = vmul.f32 %v8422, %v8475
        %v8573 = vmul.f32 %v8423, %v8479
        %v8574 = vmul.f32 %v8424, %v8483
        %v8575 = vmul.f32 %v8425, %v8487
        %v8576 = vmul.f32 %v8426, %v8475
        %v8577 = vmul.f32 %v8427, %v8479
        %v8578 = vmul.f32 %v8428, %v8483
        %v8579 = vmul.f32 %v8429, %v8487
        %v8580 = vmul.f32 %v8430, %v8475
        %v8581 = vmul.f32 %v8431, %v8479
        %v8582 = vmul.f32 %v8432, %v8483
        %v8583 = vmul.f32 %v8433, %v8487
        %v8584 = vmul.f32 %v8434, %v8475
        %v8585 = vmul.f32 %v8435, %v8479
        %v8586 = vmul.f32 %v8436, %v8483
        %v8587 = vmul.f32 %v8437, %v8487
        %v8588 = vmul.f32 %v8438, %v8475
        %v8589 = vmul.f32 %v8439, %v8479
        %v8590 = vmul.f32 %v8440, %v8483
        %v8591 = vmul.f32 %v8441, %v8487
        %v8592 = vmul.f32 %v8442, %v8475
        %v8593 = vmul.f32 %v8443, %v8479
        %v8594 = vmul.f32 %v8444, %v8483
        %v8595 = vmul.f32 %v8445, %v8487
        %v8596 = vmul.f32 %v8446, %v8475
        %v8597 = vmul.f32 %v8447, %v8479
        %v8598 = vmul.f32 %v8448, %v8483
        %v8599 = vmul.f32 %v8449, %v8487
        %v8600 = vmul.f32 %v8450, %v8475
        %v8601 = vmul.f32 %v8451, %v8479
        %v8602 = vmul.f32 %v8452, %v8483
        %v8603 = vmul.f32 %v8453, %v8487
        %v8604 = vmul.f32 %v8454, %v8475
        %v8605 = vmul.f32 %v8455, %v8479
        %v8606 = vmul.f32 %v8456, %v8483
        %v8607 = vmul.f32 %v8457, %v8487
        %v8608 = vmul.f32 %v8458, %v8475
        %v8609 = vmul.f32 %v8459, %v8479
        %v8610 = vmul.f32 %v8460, %v8483
        %v8611 = vmul.f32 %v8461, %v8487
        %v8612 = vmul.f32 %v8462, %v8475
        %v8613 = vmul.f32 %v8463, %v8479
        %v8614 = vmul.f32 %v8464, %v8483
        %v8615 = vmul.f32 %v8465, %v8487
        %v8616 = vmul.f32 %v8466, %v8475
        %v8617 = vmul.f32 %v8467, %v8479
        %v8618 = vmul.f32 %v8468, %v8483
        %v8619 = vmul.f32 %v8469, %v8487
        %v8620 = vld [vmem:[#allocation11] sm:$0xf]
        %v8622 = vlaneseq
        %v8623 = vshrl.u32 %v8622, 7
        %v8624 = vsub.s32 0, %v8623
        %v8625 = vrot.slane %v8620, %v8624
        %v8626 = vlaneseq
        %v8627 = vshrl.u32 %v8626, 7
        %v8628 = vsub.s32 1, %v8627
        %v8629 = vrot.slane %v8620, %v8628
        %v8630 = vlaneseq
        %v8631 = vshrl.u32 %v8630, 7
        %v8632 = vsub.s32 2, %v8631
        %v8633 = vrot.slane %v8620, %v8632
        %v8634 = vlaneseq
        %v8635 = vshrl.u32 %v8634, 7
        %v8636 = vsub.s32 3, %v8635
        %v8637 = vrot.slane %v8620, %v8636
        %v8642 = vadd.f32 %v8492, %v8625
        %v8643 = vadd.f32 %v8493, %v8629
        %v8644 = vadd.f32 %v8494, %v8633
        %v8645 = vadd.f32 %v8495, %v8637
        %v8646 = vadd.f32 %v8496, %v8625
        %v8647 = vadd.f32 %v8497, %v8629
        %v8648 = vadd.f32 %v8498, %v8633
        %v8649 = vadd.f32 %v8499, %v8637
        %v8650 = vadd.f32 %v8500, %v8625
        %v8651 = vadd.f32 %v8501, %v8629
        %v8652 = vadd.f32 %v8502, %v8633
        %v8653 = vadd.f32 %v8503, %v8637
        %v8654 = vadd.f32 %v8504, %v8625
        %v8655 = vadd.f32 %v8505, %v8629
        %v8656 = vadd.f32 %v8506, %v8633
        %v8657 = vadd.f32 %v8507, %v8637
        %v8658 = vadd.f32 %v8508, %v8625
        %v8659 = vadd.f32 %v8509, %v8629
        %v8660 = vadd.f32 %v8510, %v8633
        %v8661 = vadd.f32 %v8511, %v8637
        %v8662 = vadd.f32 %v8512, %v8625
        %v8663 = vadd.f32 %v8513, %v8629
        %v8664 = vadd.f32 %v8514, %v8633
        %v8665 = vadd.f32 %v8515, %v8637
        %v8666 = vadd.f32 %v8516, %v8625
        %v8667 = vadd.f32 %v8517, %v8629
        %v8668 = vadd.f32 %v8518, %v8633
        %v8669 = vadd.f32 %v8519, %v8637
        %v8670 = vadd.f32 %v8520, %v8625
        %v8671 = vadd.f32 %v8521, %v8629
        %v8672 = vadd.f32 %v8522, %v8633
        %v8673 = vadd.f32 %v8523, %v8637
        %v8674 = vadd.f32 %v8524, %v8625
        %v8675 = vadd.f32 %v8525, %v8629
        %v8676 = vadd.f32 %v8526, %v8633
        %v8677 = vadd.f32 %v8527, %v8637
        %v8678 = vadd.f32 %v8528, %v8625
        %v8679 = vadd.f32 %v8529, %v8629
        %v8680 = vadd.f32 %v8530, %v8633
        %v8681 = vadd.f32 %v8531, %v8637
        %v8682 = vadd.f32 %v8532, %v8625
        %v8683 = vadd.f32 %v8533, %v8629
        %v8684 = vadd.f32 %v8534, %v8633
        %v8685 = vadd.f32 %v8535, %v8637
        %v8686 = vadd.f32 %v8536, %v8625
        %v8687 = vadd.f32 %v8537, %v8629
        %v8688 = vadd.f32 %v8538, %v8633
        %v8689 = vadd.f32 %v8539, %v8637
        %v8690 = vadd.f32 %v8540, %v8625
        %v8691 = vadd.f32 %v8541, %v8629
        %v8692 = vadd.f32 %v8542, %v8633
        %v8693 = vadd.f32 %v8543, %v8637
        %v8694 = vadd.f32 %v8544, %v8625
        %v8695 = vadd.f32 %v8545, %v8629
        %v8696 = vadd.f32 %v8546, %v8633
        %v8697 = vadd.f32 %v8547, %v8637
        %v8698 = vadd.f32 %v8548, %v8625
        %v8699 = vadd.f32 %v8549, %v8629
        %v8700 = vadd.f32 %v8550, %v8633
        %v8701 = vadd.f32 %v8551, %v8637
        %v8702 = vadd.f32 %v8552, %v8625
        %v8703 = vadd.f32 %v8553, %v8629
        %v8704 = vadd.f32 %v8554, %v8633
        %v8705 = vadd.f32 %v8555, %v8637
        %v8706 = vadd.f32 %v8556, %v8625
        %v8707 = vadd.f32 %v8557, %v8629
        %v8708 = vadd.f32 %v8558, %v8633
        %v8709 = vadd.f32 %v8559, %v8637
        %v8710 = vadd.f32 %v8560, %v8625
        %v8711 = vadd.f32 %v8561, %v8629
        %v8712 = vadd.f32 %v8562, %v8633
        %v8713 = vadd.f32 %v8563, %v8637
        %v8714 = vadd.f32 %v8564, %v8625
        %v8715 = vadd.f32 %v8565, %v8629
        %v8716 = vadd.f32 %v8566, %v8633
        %v8717 = vadd.f32 %v8567, %v8637
        %v8718 = vadd.f32 %v8568, %v8625
        %v8719 = vadd.f32 %v8569, %v8629
        %v8720 = vadd.f32 %v8570, %v8633
        %v8721 = vadd.f32 %v8571, %v8637
        %v8722 = vadd.f32 %v8572, %v8625
        %v8723 = vadd.f32 %v8573, %v8629
        %v8724 = vadd.f32 %v8574, %v8633
        %v8725 = vadd.f32 %v8575, %v8637
        %v8726 = vadd.f32 %v8576, %v8625
        %v8727 = vadd.f32 %v8577, %v8629
        %v8728 = vadd.f32 %v8578, %v8633
        %v8729 = vadd.f32 %v8579, %v8637
        %v8730 = vadd.f32 %v8580, %v8625
        %v8731 = vadd.f32 %v8581, %v8629
        %v8732 = vadd.f32 %v8582, %v8633
        %v8733 = vadd.f32 %v8583, %v8637
        %v8734 = vadd.f32 %v8584, %v8625
        %v8735 = vadd.f32 %v8585, %v8629
        %v8736 = vadd.f32 %v8586, %v8633
        %v8737 = vadd.f32 %v8587, %v8637
        %v8738 = vadd.f32 %v8588, %v8625
        %v8739 = vadd.f32 %v8589, %v8629
        %v8740 = vadd.f32 %v8590, %v8633
        %v8741 = vadd.f32 %v8591, %v8637
        %v8742 = vadd.f32 %v8592, %v8625
        %v8743 = vadd.f32 %v8593, %v8629
        %v8744 = vadd.f32 %v8594, %v8633
        %v8745 = vadd.f32 %v8595, %v8637
        %v8746 = vadd.f32 %v8596, %v8625
        %v8747 = vadd.f32 %v8597, %v8629
        %v8748 = vadd.f32 %v8598, %v8633
        %v8749 = vadd.f32 %v8599, %v8637
        %v8750 = vadd.f32 %v8600, %v8625
        %v8751 = vadd.f32 %v8601, %v8629
        %v8752 = vadd.f32 %v8602, %v8633
        %v8753 = vadd.f32 %v8603, %v8637
        %v8754 = vadd.f32 %v8604, %v8625
        %v8755 = vadd.f32 %v8605, %v8629
        %v8756 = vadd.f32 %v8606, %v8633
        %v8757 = vadd.f32 %v8607, %v8637
        %v8758 = vadd.f32 %v8608, %v8625
        %v8759 = vadd.f32 %v8609, %v8629
        %v8760 = vadd.f32 %v8610, %v8633
        %v8761 = vadd.f32 %v8611, %v8637
        %v8762 = vadd.f32 %v8612, %v8625
        %v8763 = vadd.f32 %v8613, %v8629
        %v8764 = vadd.f32 %v8614, %v8633
        %v8765 = vadd.f32 %v8615, %v8637
        %v8766 = vadd.f32 %v8616, %v8625
        %v8767 = vadd.f32 %v8617, %v8629
        %v8768 = vadd.f32 %v8618, %v8633
        %v8769 = vadd.f32 %v8619, %v8637
        %v8770 = vmax.f32 %v8642, 0.0
        %v8771 = vmax.f32 %v8643, 0.0
        %v8772 = vmax.f32 %v8644, 0.0
        %v8773 = vmax.f32 %v8645, 0.0
        %v8774 = vmax.f32 %v8646, 0.0
        %v8775 = vmax.f32 %v8647, 0.0
        %v8776 = vmax.f32 %v8648, 0.0
        %v8777 = vmax.f32 %v8649, 0.0
        %v8778 = vmax.f32 %v8650, 0.0
        %v8779 = vmax.f32 %v8651, 0.0
        %v8780 = vmax.f32 %v8652, 0.0
        %v8781 = vmax.f32 %v8653, 0.0
        %v8782 = vmax.f32 %v8654, 0.0
        %v8783 = vmax.f32 %v8655, 0.0
        %v8784 = vmax.f32 %v8656, 0.0
        %v8785 = vmax.f32 %v8657, 0.0
        %v8786 = vmax.f32 %v8658, 0.0
        %v8787 = vmax.f32 %v8659, 0.0
        %v8788 = vmax.f32 %v8660, 0.0
        %v8789 = vmax.f32 %v8661, 0.0
        %v8790 = vmax.f32 %v8662, 0.0
        %v8791 = vmax.f32 %v8663, 0.0
        %v8792 = vmax.f32 %v8664, 0.0
        %v8793 = vmax.f32 %v8665, 0.0
        %v8794 = vmax.f32 %v8666, 0.0
        %v8795 = vmax.f32 %v8667, 0.0
        %v8796 = vmax.f32 %v8668, 0.0
        %v8797 = vmax.f32 %v8669, 0.0
        %v8798 = vmax.f32 %v8670, 0.0
        %v8799 = vmax.f32 %v8671, 0.0
        %v8800 = vmax.f32 %v8672, 0.0
        %v8801 = vmax.f32 %v8673, 0.0
        %v8802 = vmax.f32 %v8674, 0.0
        %v8803 = vmax.f32 %v8675, 0.0
        %v8804 = vmax.f32 %v8676, 0.0
        %v8805 = vmax.f32 %v8677, 0.0
        %v8806 = vmax.f32 %v8678, 0.0
        %v8807 = vmax.f32 %v8679, 0.0
        %v8808 = vmax.f32 %v8680, 0.0
        %v8809 = vmax.f32 %v8681, 0.0
        %v8810 = vmax.f32 %v8682, 0.0
        %v8811 = vmax.f32 %v8683, 0.0
        %v8812 = vmax.f32 %v8684, 0.0
        %v8813 = vmax.f32 %v8685, 0.0
        %v8814 = vmax.f32 %v8686, 0.0
        %v8815 = vmax.f32 %v8687, 0.0
        %v8816 = vmax.f32 %v8688, 0.0
        %v8817 = vmax.f32 %v8689, 0.0
        %v8818 = vmax.f32 %v8690, 0.0
        %v8819 = vmax.f32 %v8691, 0.0
        %v8820 = vmax.f32 %v8692, 0.0
        %v8821 = vmax.f32 %v8693, 0.0
        %v8822 = vmax.f32 %v8694, 0.0
        %v8823 = vmax.f32 %v8695, 0.0
        %v8824 = vmax.f32 %v8696, 0.0
        %v8825 = vmax.f32 %v8697, 0.0
        %v8826 = vmax.f32 %v8698, 0.0
        %v8827 = vmax.f32 %v8699, 0.0
        %v8828 = vmax.f32 %v8700, 0.0
        %v8829 = vmax.f32 %v8701, 0.0
        %v8830 = vmax.f32 %v8702, 0.0
        %v8831 = vmax.f32 %v8703, 0.0
        %v8832 = vmax.f32 %v8704, 0.0
        %v8833 = vmax.f32 %v8705, 0.0
        %v8834 = vmax.f32 %v8706, 0.0
        %v8835 = vmax.f32 %v8707, 0.0
        %v8836 = vmax.f32 %v8708, 0.0
        %v8837 = vmax.f32 %v8709, 0.0
        %v8838 = vmax.f32 %v8710, 0.0
        %v8839 = vmax.f32 %v8711, 0.0
        %v8840 = vmax.f32 %v8712, 0.0
        %v8841 = vmax.f32 %v8713, 0.0
        %v8842 = vmax.f32 %v8714, 0.0
        %v8843 = vmax.f32 %v8715, 0.0
        %v8844 = vmax.f32 %v8716, 0.0
        %v8845 = vmax.f32 %v8717, 0.0
        %v8846 = vmax.f32 %v8718, 0.0
        %v8847 = vmax.f32 %v8719, 0.0
        %v8848 = vmax.f32 %v8720, 0.0
        %v8849 = vmax.f32 %v8721, 0.0
        %v8850 = vmax.f32 %v8722, 0.0
        %v8851 = vmax.f32 %v8723, 0.0
        %v8852 = vmax.f32 %v8724, 0.0
        %v8853 = vmax.f32 %v8725, 0.0
        %v8854 = vmax.f32 %v8726, 0.0
        %v8855 = vmax.f32 %v8727, 0.0
        %v8856 = vmax.f32 %v8728, 0.0
        %v8857 = vmax.f32 %v8729, 0.0
        %v8858 = vmax.f32 %v8730, 0.0
        %v8859 = vmax.f32 %v8731, 0.0
        %v8860 = vmax.f32 %v8732, 0.0
        %v8861 = vmax.f32 %v8733, 0.0
        %v8862 = vmax.f32 %v8734, 0.0
        %v8863 = vmax.f32 %v8735, 0.0
        %v8864 = vmax.f32 %v8736, 0.0
        %v8865 = vmax.f32 %v8737, 0.0
        %v8866 = vmax.f32 %v8738, 0.0
        %v8867 = vmax.f32 %v8739, 0.0
        %v8868 = vmax.f32 %v8740, 0.0
        %v8869 = vmax.f32 %v8741, 0.0
        %v8870 = vmax.f32 %v8742, 0.0
        %v8871 = vmax.f32 %v8743, 0.0
        %v8872 = vmax.f32 %v8744, 0.0
        %v8873 = vmax.f32 %v8745, 0.0
        %v8874 = vmax.f32 %v8746, 0.0
        %v8875 = vmax.f32 %v8747, 0.0
        %v8876 = vmax.f32 %v8748, 0.0
        %v8877 = vmax.f32 %v8749, 0.0
        %v8878 = vmax.f32 %v8750, 0.0
        %v8879 = vmax.f32 %v8751, 0.0
        %v8880 = vmax.f32 %v8752, 0.0
        %v8881 = vmax.f32 %v8753, 0.0
        %v8882 = vmax.f32 %v8754, 0.0
        %v8883 = vmax.f32 %v8755, 0.0
        %v8884 = vmax.f32 %v8756, 0.0
        %v8885 = vmax.f32 %v8757, 0.0
        %v8886 = vmax.f32 %v8758, 0.0
        %v8887 = vmax.f32 %v8759, 0.0
        %v8888 = vmax.f32 %v8760, 0.0
        %v8889 = vmax.f32 %v8761, 0.0
        %v8890 = vmax.f32 %v8762, 0.0
        %v8891 = vmax.f32 %v8763, 0.0
        %v8892 = vmax.f32 %v8764, 0.0
        %v8893 = vmax.f32 %v8765, 0.0
        %v8894 = vmax.f32 %v8766, 0.0
        %v8895 = vmax.f32 %v8767, 0.0
        %v8896 = vmax.f32 %v8768, 0.0
        %v8897 = vmax.f32 %v8769, 0.0
        %v8898 = vmax.f32 %v8770, %v8772
        %v8899 = vmax.f32 %v8771, %v8773
        %v8900 = vmax.f32 %v8774, %v8776
        %v8901 = vmax.f32 %v8775, %v8777
        %v8902 = vmax.f32 %v8778, %v8780
        %v8903 = vmax.f32 %v8779, %v8781
        %v8904 = vmax.f32 %v8782, %v8784
        %v8905 = vmax.f32 %v8783, %v8785
        %v8906 = vmax.f32 %v8786, %v8788
        %v8907 = vmax.f32 %v8787, %v8789
        %v8908 = vmax.f32 %v8790, %v8792
        %v8909 = vmax.f32 %v8791, %v8793
        %v8910 = vmax.f32 %v8794, %v8796
        %v8911 = vmax.f32 %v8795, %v8797
        %v8912 = vmax.f32 %v8798, %v8800
        %v8913 = vmax.f32 %v8799, %v8801
        %v8914 = vmax.f32 %v8802, %v8804
        %v8915 = vmax.f32 %v8803, %v8805
        %v8916 = vmax.f32 %v8806, %v8808
        %v8917 = vmax.f32 %v8807, %v8809
        %v8918 = vmax.f32 %v8810, %v8812
        %v8919 = vmax.f32 %v8811, %v8813
        %v8920 = vmax.f32 %v8814, %v8816
        %v8921 = vmax.f32 %v8815, %v8817
        %v8922 = vmax.f32 %v8818, %v8820
        %v8923 = vmax.f32 %v8819, %v8821
        %v8924 = vmax.f32 %v8822, %v8824
        %v8925 = vmax.f32 %v8823, %v8825
        %v8926 = vmax.f32 %v8826, %v8828
        %v8927 = vmax.f32 %v8827, %v8829
        %v8928 = vmax.f32 %v8830, %v8832
        %v8929 = vmax.f32 %v8831, %v8833
        %v8930 = vmax.f32 %v8834, %v8836
        %v8931 = vmax.f32 %v8835, %v8837
        %v8932 = vmax.f32 %v8838, %v8840
        %v8933 = vmax.f32 %v8839, %v8841
        %v8934 = vmax.f32 %v8842, %v8844
        %v8935 = vmax.f32 %v8843, %v8845
        %v8936 = vmax.f32 %v8846, %v8848
        %v8937 = vmax.f32 %v8847, %v8849
        %v8938 = vmax.f32 %v8850, %v8852
        %v8939 = vmax.f32 %v8851, %v8853
        %v8940 = vmax.f32 %v8854, %v8856
        %v8941 = vmax.f32 %v8855, %v8857
        %v8942 = vmax.f32 %v8858, %v8860
        %v8943 = vmax.f32 %v8859, %v8861
        %v8944 = vmax.f32 %v8862, %v8864
        %v8945 = vmax.f32 %v8863, %v8865
        %v8946 = vmax.f32 %v8866, %v8868
        %v8947 = vmax.f32 %v8867, %v8869
        %v8948 = vmax.f32 %v8870, %v8872
        %v8949 = vmax.f32 %v8871, %v8873
        %v8950 = vmax.f32 %v8874, %v8876
        %v8951 = vmax.f32 %v8875, %v8877
        %v8952 = vmax.f32 %v8878, %v8880
        %v8953 = vmax.f32 %v8879, %v8881
        %v8954 = vmax.f32 %v8882, %v8884
        %v8955 = vmax.f32 %v8883, %v8885
        %v8956 = vmax.f32 %v8886, %v8888
        %v8957 = vmax.f32 %v8887, %v8889
        %v8958 = vmax.f32 %v8890, %v8892
        %v8959 = vmax.f32 %v8891, %v8893
        %v8960 = vmax.f32 %v8894, %v8896
        %v8961 = vmax.f32 %v8895, %v8897
        %v8962 = vmax.f32 %v8898, %v8902
        %v8963 = vmax.f32 %v8899, %v8903
        %v8964 = vmax.f32 %v8900, %v8904
        %v8965 = vmax.f32 %v8901, %v8905
        %v8966 = vmax.f32 %v8906, %v8910
        %v8967 = vmax.f32 %v8907, %v8911
        %v8968 = vmax.f32 %v8908, %v8912
        %v8969 = vmax.f32 %v8909, %v8913
        %v8970 = vmax.f32 %v8914, %v8918
        %v8971 = vmax.f32 %v8915, %v8919
        %v8972 = vmax.f32 %v8916, %v8920
        %v8973 = vmax.f32 %v8917, %v8921
        %v8974 = vmax.f32 %v8922, %v8926
        %v8975 = vmax.f32 %v8923, %v8927
        %v8976 = vmax.f32 %v8924, %v8928
        %v8977 = vmax.f32 %v8925, %v8929
        %v8978 = vmax.f32 %v8930, %v8934
        %v8979 = vmax.f32 %v8931, %v8935
        %v8980 = vmax.f32 %v8932, %v8936
        %v8981 = vmax.f32 %v8933, %v8937
        %v8982 = vmax.f32 %v8938, %v8942
        %v8983 = vmax.f32 %v8939, %v8943
        %v8984 = vmax.f32 %v8940, %v8944
        %v8985 = vmax.f32 %v8941, %v8945
        %v8986 = vmax.f32 %v8946, %v8950
        %v8987 = vmax.f32 %v8947, %v8951
        %v8988 = vmax.f32 %v8948, %v8952
        %v8989 = vmax.f32 %v8949, %v8953
        %v8990 = vmax.f32 %v8954, %v8958
        %v8991 = vmax.f32 %v8955, %v8959
        %v8992 = vmax.f32 %v8956, %v8960
        %v8993 = vmax.f32 %v8957, %v8961
        %v8994 = vpack.c.bf16 %v8964, %v8962
        %v8995 = vpack.c.bf16 %v8965, %v8963
        %v8996 = vpack.c.bf16 %v8968, %v8966
        %v8997 = vpack.c.bf16 %v8969, %v8967
        %v8998 = vpack.c.bf16 %v8972, %v8970
        %v8999 = vpack.c.bf16 %v8973, %v8971
        %v9000 = vpack.c.bf16 %v8976, %v8974
        %v9001 = vpack.c.bf16 %v8977, %v8975
        %v9002 = vpack.c.bf16 %v8980, %v8978
        %v9003 = vpack.c.bf16 %v8981, %v8979
        %v9004 = vpack.c.bf16 %v8984, %v8982
        %v9005 = vpack.c.bf16 %v8985, %v8983
        %v9006 = vpack.c.bf16 %v8988, %v8986
        %v9007 = vpack.c.bf16 %v8989, %v8987
        %v9008 = vpack.c.bf16 %v8992, %v8990
        %v9009 = vpack.c.bf16 %v8993, %v8991
        %v9010 = vld [vmem:[#allocation12] sm:$0xf]
        %v9011 = vld [vmem:[#allocation12 + $0x4] sm:$0xf]
        %v9012 = vld [vmem:[#allocation12 + $0x8] sm:$0xf]
        %v9013 = vld [vmem:[#allocation12 + $0xc] sm:$0xf]
        %v9014 = vld [vmem:[#allocation12 + $0x10] sm:$0xf]
        %v9015 = vld [vmem:[#allocation12 + $0x14] sm:$0xf]
        %v9016 = vld [vmem:[#allocation12 + $0x18] sm:$0xf]
        %v9017 = vld [vmem:[#allocation12 + $0x1c] sm:$0xf]
        %v9018 = vld [vmem:[#allocation12 + $0x20] sm:$0xf]
        %v9019 = vld [vmem:[#allocation12 + $0x24] sm:$0xf]
        %v9020 = vld [vmem:[#allocation12 + $0x28] sm:$0xf]
        %v9021 = vld [vmem:[#allocation12 + $0x2c] sm:$0xf]
        %v9022 = vld [vmem:[#allocation12 + $0x30] sm:$0xf]
        %v9023 = vld [vmem:[#allocation12 + $0x34] sm:$0xf]
        %v9024 = vld [vmem:[#allocation12 + $0x38] sm:$0xf]
        %v9025 = vld [vmem:[#allocation12 + $0x3c] sm:$0xf]
        %v9026 = vld [vmem:[#allocation12 + $0x40] sm:$0xf]
        %v9027 = vld [vmem:[#allocation12 + $0x44] sm:$0xf]
        %v9028 = vld [vmem:[#allocation12 + $0x48] sm:$0xf]
        %v9029 = vld [vmem:[#allocation12 + $0x4c] sm:$0xf]
        %v9030 = vld [vmem:[#allocation12 + $0x50] sm:$0xf]
        %v9031 = vld [vmem:[#allocation12 + $0x54] sm:$0xf]
        %v9032 = vld [vmem:[#allocation12 + $0x58] sm:$0xf]
        %v9033 = vld [vmem:[#allocation12 + $0x5c] sm:$0xf]
        %v9034 = vld [vmem:[#allocation12 + $0x60] sm:$0xf]
        %v9035 = vld [vmem:[#allocation12 + $0x64] sm:$0xf]
        %v9036 = vld [vmem:[#allocation12 + $0x68] sm:$0xf]
        %v9037 = vld [vmem:[#allocation12 + $0x6c] sm:$0xf]
        %v9038 = vld [vmem:[#allocation12 + $0x70] sm:$0xf]
        %v9039 = vld [vmem:[#allocation12 + $0x74] sm:$0xf]
        %v9040 = vld [vmem:[#allocation12 + $0x78] sm:$0xf]
        %v9041 = vld [vmem:[#allocation12 + $0x7c] sm:$0xf]
        %s9042 = scalar_lea.vmem [#allocation12], 128
        %v9043 = vld [vmem:[%s9042] sm:$0xf]
        %v9044 = vld [vmem:[%s9042 + $0x4] sm:$0xf]
        %v9045 = vld [vmem:[%s9042 + $0x8] sm:$0xf]
        %v9046 = vld [vmem:[%s9042 + $0xc] sm:$0xf]
        %v9047 = vld [vmem:[%s9042 + $0x10] sm:$0xf]
        %v9048 = vld [vmem:[%s9042 + $0x14] sm:$0xf]
        %v9049 = vld [vmem:[%s9042 + $0x18] sm:$0xf]
        %v9050 = vld [vmem:[%s9042 + $0x1c] sm:$0xf]
        %v9051 = vld [vmem:[%s9042 + $0x20] sm:$0xf]
        %v9052 = vld [vmem:[%s9042 + $0x24] sm:$0xf]
        %v9053 = vld [vmem:[%s9042 + $0x28] sm:$0xf]
        %v9054 = vld [vmem:[%s9042 + $0x2c] sm:$0xf]
        %v9055 = vld [vmem:[%s9042 + $0x30] sm:$0xf]
        %v9056 = vld [vmem:[%s9042 + $0x34] sm:$0xf]
        %v9057 = vld [vmem:[%s9042 + $0x38] sm:$0xf]
        %v9058 = vld [vmem:[%s9042 + $0x3c] sm:$0xf]
        %v9059 = vld [vmem:[%s9042 + $0x40] sm:$0xf]
        %v9060 = vld [vmem:[%s9042 + $0x44] sm:$0xf]
        %v9061 = vld [vmem:[%s9042 + $0x48] sm:$0xf]
        %v9062 = vld [vmem:[%s9042 + $0x4c] sm:$0xf]
        %v9063 = vld [vmem:[%s9042 + $0x50] sm:$0xf]
        %v9064 = vld [vmem:[%s9042 + $0x54] sm:$0xf]
        %v9065 = vld [vmem:[%s9042 + $0x58] sm:$0xf]
        %v9066 = vld [vmem:[%s9042 + $0x5c] sm:$0xf]
        %v9067 = vld [vmem:[%s9042 + $0x60] sm:$0xf]
        %v9068 = vld [vmem:[%s9042 + $0x64] sm:$0xf]
        %v9069 = vld [vmem:[%s9042 + $0x68] sm:$0xf]
        %v9070 = vld [vmem:[%s9042 + $0x6c] sm:$0xf]
        %v9071 = vld [vmem:[%s9042 + $0x70] sm:$0xf]
        %v9072 = vld [vmem:[%s9042 + $0x74] sm:$0xf]
        %v9073 = vld [vmem:[%s9042 + $0x78] sm:$0xf]
        %v9074 = vld [vmem:[%s9042 + $0x7c] sm:$0xf]
        %v9107 = vunpack.c.l.b16 %v9043
        %v9108 = vunpack.c.l.b16 %v9044
        %v9109 = vunpack.c.l.b16 %v9045
        %v9110 = vunpack.c.l.b16 %v9046
        %v9111 = vunpack.c.l.b16 %v9047
        %v9112 = vunpack.c.l.b16 %v9048
        %v9113 = vunpack.c.l.b16 %v9049
        %v9114 = vunpack.c.l.b16 %v9050
        %v9115 = vunpack.c.l.b16 %v9051
        %v9116 = vunpack.c.l.b16 %v9052
        %v9117 = vunpack.c.l.b16 %v9053
        %v9118 = vunpack.c.l.b16 %v9054
        %v9119 = vunpack.c.l.b16 %v9055
        %v9120 = vunpack.c.l.b16 %v9056
        %v9121 = vunpack.c.l.b16 %v9057
        %v9122 = vunpack.c.l.b16 %v9058
        %v9123 = vunpack.c.l.b16 %v9059
        %v9124 = vunpack.c.l.b16 %v9060
        %v9125 = vunpack.c.l.b16 %v9061
        %v9126 = vunpack.c.l.b16 %v9062
        %v9127 = vunpack.c.l.b16 %v9063
        %v9128 = vunpack.c.l.b16 %v9064
        %v9129 = vunpack.c.l.b16 %v9065
        %v9130 = vunpack.c.l.b16 %v9066
        %v9131 = vunpack.c.l.b16 %v9067
        %v9132 = vunpack.c.l.b16 %v9068
        %v9133 = vunpack.c.l.b16 %v9069
        %v9134 = vunpack.c.l.b16 %v9070
        %v9135 = vunpack.c.l.b16 %v9071
        %v9136 = vunpack.c.l.b16 %v9072
        %v9137 = vunpack.c.l.b16 %v9073
        %v9138 = vunpack.c.l.b16 %v9074
        %v9139 = vpack.c.b16 %v9108, %v9107
        %v9140 = vpack.c.b16 %v9110, %v9109
        %v9141 = vpack.c.b16 %v9112, %v9111
        %v9142 = vpack.c.b16 %v9114, %v9113
        %v9143 = vpack.c.b16 %v9116, %v9115
        %v9144 = vpack.c.b16 %v9118, %v9117
        %v9145 = vpack.c.b16 %v9120, %v9119
        %v9146 = vpack.c.b16 %v9122, %v9121
        %v9147 = vpack.c.b16 %v9124, %v9123
        %v9148 = vpack.c.b16 %v9126, %v9125
        %v9149 = vpack.c.b16 %v9128, %v9127
        %v9150 = vpack.c.b16 %v9130, %v9129
        %v9151 = vpack.c.b16 %v9132, %v9131
        %v9152 = vpack.c.b16 %v9134, %v9133
        %v9153 = vpack.c.b16 %v9136, %v9135
        %v9154 = vpack.c.b16 %v9138, %v9137
        %9171 = vmatprep.subr.bf16.mxu0 0
        %9172 = vmatpush1.bf16.msra.mxu0 %v9146
        %9173 = vmatprep.subr.bf16.mxu0 0
        %9174 = vmatpush1.bf16.msra.mxu0 %v9145
        %9175 = vmatprep.subr.bf16.mxu0 0
        %9176 = vmatpush1.bf16.msra.mxu0 %v9144
        %9177 = vmatprep.subr.bf16.mxu0 0
        %9178 = vmatpush1.bf16.msra.mxu0 %v9143
        %9179 = vmatprep.subr.bf16.mxu0 0
        %9180 = vmatpush1.bf16.msra.mxu0 %v9142
        %9181 = vmatprep.subr.bf16.mxu0 0
        %9182 = vmatpush1.bf16.msra.mxu0 %v9141
        %9183 = vmatprep.subr.bf16.mxu0 0
        %9184 = vmatpush1.bf16.msra.mxu0 %v9140
        %9185 = vmatprep.subr.bf16.mxu0 0
        %9186 = vmatpush1.bf16.msra.mxu0 %v9139
        %9187 = vmatprep.subr.bf16.mxu0 0
        %9188 = vmatpush2.bf16.msra.mxu0 %v9154
        %9189 = vmatprep.subr.bf16.mxu0 0
        %9190 = vmatpush2.bf16.msra.mxu0 %v9153
        %9191 = vmatprep.subr.bf16.mxu0 0
        %9192 = vmatpush2.bf16.msra.mxu0 %v9152
        %9193 = vmatprep.subr.bf16.mxu0 0
        %9194 = vmatpush2.bf16.msra.mxu0 %v9151
        %9195 = vmatprep.subr.bf16.mxu0 0
        %9196 = vmatpush2.bf16.msra.mxu0 %v9150
        %9197 = vmatprep.subr.bf16.mxu0 0
        %9198 = vmatpush2.bf16.msra.mxu0 %v9149
        %9199 = vmatprep.subr.bf16.mxu0 0
        %9200 = vmatpush2.bf16.msra.mxu0 %v9148
        %9201 = vmatprep.subr.bf16.mxu0 0
        %9202 = vmatpush2.bf16.msra.mxu0 %v9147
        %9203 = vmatprep.mubr.bf16.mxu0 %v8997
        %9204 = vmatmul.mubr.bf16.gmra.mxu0 %v8996
        %v9205 = vpop.f32.mrf.mxu0
        %v9206 = vadd.f32 0.0, %v9205
        %v9207 = vpop.f32.mrf.mxu0
        %v9208 = vpop.f32.mrf.mxu0
        %v9209 = vadd.f32 0.0, %v9208
        %v9210 = vpop.f32.mrf.mxu0
        %9211 = vdwg.mxu0
        %v9244 = vunpack.c.l.b16 %v9010
        %v9245 = vunpack.c.l.b16 %v9011
        %v9246 = vunpack.c.l.b16 %v9012
        %v9247 = vunpack.c.l.b16 %v9013
        %v9248 = vunpack.c.l.b16 %v9014
        %v9249 = vunpack.c.l.b16 %v9015
        %v9250 = vunpack.c.l.b16 %v9016
        %v9251 = vunpack.c.l.b16 %v9017
        %v9252 = vunpack.c.l.b16 %v9018
        %v9253 = vunpack.c.l.b16 %v9019
        %v9254 = vunpack.c.l.b16 %v9020
        %v9255 = vunpack.c.l.b16 %v9021
        %v9256 = vunpack.c.l.b16 %v9022
        %v9257 = vunpack.c.l.b16 %v9023
        %v9258 = vunpack.c.l.b16 %v9024
        %v9259 = vunpack.c.l.b16 %v9025
        %v9260 = vunpack.c.l.b16 %v9026
        %v9261 = vunpack.c.l.b16 %v9027
        %v9262 = vunpack.c.l.b16 %v9028
        %v9263 = vunpack.c.l.b16 %v9029
        %v9264 = vunpack.c.l.b16 %v9030
        %v9265 = vunpack.c.l.b16 %v9031
        %v9266 = vunpack.c.l.b16 %v9032
        %v9267 = vunpack.c.l.b16 %v9033
        %v9268 = vunpack.c.l.b16 %v9034
        %v9269 = vunpack.c.l.b16 %v9035
        %v9270 = vunpack.c.l.b16 %v9036
        %v9271 = vunpack.c.l.b16 %v9037
        %v9272 = vunpack.c.l.b16 %v9038
        %v9273 = vunpack.c.l.b16 %v9039
        %v9274 = vunpack.c.l.b16 %v9040
        %v9275 = vunpack.c.l.b16 %v9041
        %v9276 = vpack.c.b16 %v9245, %v9244
        %v9277 = vpack.c.b16 %v9247, %v9246
        %v9278 = vpack.c.b16 %v9249, %v9248
        %v9279 = vpack.c.b16 %v9251, %v9250
        %v9280 = vpack.c.b16 %v9253, %v9252
        %v9281 = vpack.c.b16 %v9255, %v9254
        %v9282 = vpack.c.b16 %v9257, %v9256
        %v9283 = vpack.c.b16 %v9259, %v9258
        %v9284 = vpack.c.b16 %v9261, %v9260
        %v9285 = vpack.c.b16 %v9263, %v9262
        %v9286 = vpack.c.b16 %v9265, %v9264
        %v9287 = vpack.c.b16 %v9267, %v9266
        %v9288 = vpack.c.b16 %v9269, %v9268
        %v9289 = vpack.c.b16 %v9271, %v9270
        %v9290 = vpack.c.b16 %v9273, %v9272
        %v9291 = vpack.c.b16 %v9275, %v9274
        %9308 = vmatprep.subr.bf16.mxu0 0
        %9309 = vmatpush1.bf16.msra.mxu0 %v9283
        %9310 = vmatprep.subr.bf16.mxu0 0
        %9311 = vmatpush1.bf16.msra.mxu0 %v9282
        %9312 = vmatprep.subr.bf16.mxu0 0
        %9313 = vmatpush1.bf16.msra.mxu0 %v9281
        %9314 = vmatprep.subr.bf16.mxu0 0
        %9315 = vmatpush1.bf16.msra.mxu0 %v9280
        %9316 = vmatprep.subr.bf16.mxu0 0
        %9317 = vmatpush1.bf16.msra.mxu0 %v9279
        %9318 = vmatprep.subr.bf16.mxu0 0
        %9319 = vmatpush1.bf16.msra.mxu0 %v9278
        %9320 = vmatprep.subr.bf16.mxu0 0
        %9321 = vmatpush1.bf16.msra.mxu0 %v9277
        %9322 = vmatprep.subr.bf16.mxu0 0
        %9323 = vmatpush1.bf16.msra.mxu0 %v9276
        %9324 = vmatprep.subr.bf16.mxu0 0
        %9325 = vmatpush2.bf16.msra.mxu0 %v9291
        %9326 = vmatprep.subr.bf16.mxu0 0
        %9327 = vmatpush2.bf16.msra.mxu0 %v9290
        %9328 = vmatprep.subr.bf16.mxu0 0
        %9329 = vmatpush2.bf16.msra.mxu0 %v9289
        %9330 = vmatprep.subr.bf16.mxu0 0
        %9331 = vmatpush2.bf16.msra.mxu0 %v9288
        %9332 = vmatprep.subr.bf16.mxu0 0
        %9333 = vmatpush2.bf16.msra.mxu0 %v9287
        %9334 = vmatprep.subr.bf16.mxu0 0
        %9335 = vmatpush2.bf16.msra.mxu0 %v9286
        %9336 = vmatprep.subr.bf16.mxu0 0
        %9337 = vmatpush2.bf16.msra.mxu0 %v9285
        %9338 = vmatprep.subr.bf16.mxu0 0
        %9339 = vmatpush2.bf16.msra.mxu0 %v9284
        %9340 = vmatprep.mubr.bf16.mxu0 %v8995
        %9341 = vmatmul.mubr.bf16.gmra.mxu0 %v8994
        %v9342 = vpop.f32.mrf.mxu0
        %v9343 = vadd.f32 %v9206, %v9342
        %v9344 = vpop.f32.mrf.mxu0
        %v9345 = vpop.f32.mrf.mxu0
        %v9346 = vadd.f32 %v9209, %v9345
        %v9347 = vpop.f32.mrf.mxu0
        %9348 = vdwg.mxu0
        %s9349 = scalar_lea.vmem [#allocation12], 256
        %v9350 = vld [vmem:[%s9349] sm:$0xf]
        %v9351 = vld [vmem:[%s9349 + $0x4] sm:$0xf]
        %v9352 = vld [vmem:[%s9349 + $0x8] sm:$0xf]
        %v9353 = vld [vmem:[%s9349 + $0xc] sm:$0xf]
        %v9354 = vld [vmem:[%s9349 + $0x10] sm:$0xf]
        %v9355 = vld [vmem:[%s9349 + $0x14] sm:$0xf]
        %v9356 = vld [vmem:[%s9349 + $0x18] sm:$0xf]
        %v9357 = vld [vmem:[%s9349 + $0x1c] sm:$0xf]
        %v9358 = vld [vmem:[%s9349 + $0x20] sm:$0xf]
        %v9359 = vld [vmem:[%s9349 + $0x24] sm:$0xf]
        %v9360 = vld [vmem:[%s9349 + $0x28] sm:$0xf]
        %v9361 = vld [vmem:[%s9349 + $0x2c] sm:$0xf]
        %v9362 = vld [vmem:[%s9349 + $0x30] sm:$0xf]
        %v9363 = vld [vmem:[%s9349 + $0x34] sm:$0xf]
        %v9364 = vld [vmem:[%s9349 + $0x38] sm:$0xf]
        %v9365 = vld [vmem:[%s9349 + $0x3c] sm:$0xf]
        %v9366 = vld [vmem:[%s9349 + $0x40] sm:$0xf]
        %v9367 = vld [vmem:[%s9349 + $0x44] sm:$0xf]
        %v9368 = vld [vmem:[%s9349 + $0x48] sm:$0xf]
        %v9369 = vld [vmem:[%s9349 + $0x4c] sm:$0xf]
        %v9370 = vld [vmem:[%s9349 + $0x50] sm:$0xf]
        %v9371 = vld [vmem:[%s9349 + $0x54] sm:$0xf]
        %v9372 = vld [vmem:[%s9349 + $0x58] sm:$0xf]
        %v9373 = vld [vmem:[%s9349 + $0x5c] sm:$0xf]
        %v9374 = vld [vmem:[%s9349 + $0x60] sm:$0xf]
        %v9375 = vld [vmem:[%s9349 + $0x64] sm:$0xf]
        %v9376 = vld [vmem:[%s9349 + $0x68] sm:$0xf]
        %v9377 = vld [vmem:[%s9349 + $0x6c] sm:$0xf]
        %v9378 = vld [vmem:[%s9349 + $0x70] sm:$0xf]
        %v9379 = vld [vmem:[%s9349 + $0x74] sm:$0xf]
        %v9380 = vld [vmem:[%s9349 + $0x78] sm:$0xf]
        %v9381 = vld [vmem:[%s9349 + $0x7c] sm:$0xf]
        %v9414 = vunpack.c.l.b16 %v9350
        %v9415 = vunpack.c.l.b16 %v9351
        %v9416 = vunpack.c.l.b16 %v9352
        %v9417 = vunpack.c.l.b16 %v9353
        %v9418 = vunpack.c.l.b16 %v9354
        %v9419 = vunpack.c.l.b16 %v9355
        %v9420 = vunpack.c.l.b16 %v9356
        %v9421 = vunpack.c.l.b16 %v9357
        %v9422 = vunpack.c.l.b16 %v9358
        %v9423 = vunpack.c.l.b16 %v9359
        %v9424 = vunpack.c.l.b16 %v9360
        %v9425 = vunpack.c.l.b16 %v9361
        %v9426 = vunpack.c.l.b16 %v9362
        %v9427 = vunpack.c.l.b16 %v9363
        %v9428 = vunpack.c.l.b16 %v9364
        %v9429 = vunpack.c.l.b16 %v9365
        %v9430 = vunpack.c.l.b16 %v9366
        %v9431 = vunpack.c.l.b16 %v9367
        %v9432 = vunpack.c.l.b16 %v9368
        %v9433 = vunpack.c.l.b16 %v9369
        %v9434 = vunpack.c.l.b16 %v9370
        %v9435 = vunpack.c.l.b16 %v9371
        %v9436 = vunpack.c.l.b16 %v9372
        %v9437 = vunpack.c.l.b16 %v9373
        %v9438 = vunpack.c.l.b16 %v9374
        %v9439 = vunpack.c.l.b16 %v9375
        %v9440 = vunpack.c.l.b16 %v9376
        %v9441 = vunpack.c.l.b16 %v9377
        %v9442 = vunpack.c.l.b16 %v9378
        %v9443 = vunpack.c.l.b16 %v9379
        %v9444 = vunpack.c.l.b16 %v9380
        %v9445 = vunpack.c.l.b16 %v9381
        %v9446 = vpack.c.b16 %v9415, %v9414
        %v9447 = vpack.c.b16 %v9417, %v9416
        %v9448 = vpack.c.b16 %v9419, %v9418
        %v9449 = vpack.c.b16 %v9421, %v9420
        %v9450 = vpack.c.b16 %v9423, %v9422
        %v9451 = vpack.c.b16 %v9425, %v9424
        %v9452 = vpack.c.b16 %v9427, %v9426
        %v9453 = vpack.c.b16 %v9429, %v9428
        %v9454 = vpack.c.b16 %v9431, %v9430
        %v9455 = vpack.c.b16 %v9433, %v9432
        %v9456 = vpack.c.b16 %v9435, %v9434
        %v9457 = vpack.c.b16 %v9437, %v9436
        %v9458 = vpack.c.b16 %v9439, %v9438
        %v9459 = vpack.c.b16 %v9441, %v9440
        %v9460 = vpack.c.b16 %v9443, %v9442
        %v9461 = vpack.c.b16 %v9445, %v9444
        %9478 = vmatprep.subr.bf16.mxu0 0
        %9479 = vmatpush1.bf16.msra.mxu0 %v9453
        %9480 = vmatprep.subr.bf16.mxu0 0
        %9481 = vmatpush1.bf16.msra.mxu0 %v9452
        %9482 = vmatprep.subr.bf16.mxu0 0
        %9483 = vmatpush1.bf16.msra.mxu0 %v9451
        %9484 = vmatprep.subr.bf16.mxu0 0
        %9485 = vmatpush1.bf16.msra.mxu0 %v9450
        %9486 = vmatprep.subr.bf16.mxu0 0
        %9487 = vmatpush1.bf16.msra.mxu0 %v9449
        %9488 = vmatprep.subr.bf16.mxu0 0
        %9489 = vmatpush1.bf16.msra.mxu0 %v9448
        %9490 = vmatprep.subr.bf16.mxu0 0
        %9491 = vmatpush1.bf16.msra.mxu0 %v9447
        %9492 = vmatprep.subr.bf16.mxu0 0
        %9493 = vmatpush1.bf16.msra.mxu0 %v9446
        %9494 = vmatprep.subr.bf16.mxu0 0
        %9495 = vmatpush2.bf16.msra.mxu0 %v9461
        %9496 = vmatprep.subr.bf16.mxu0 0
        %9497 = vmatpush2.bf16.msra.mxu0 %v9460
        %9498 = vmatprep.subr.bf16.mxu0 0
        %9499 = vmatpush2.bf16.msra.mxu0 %v9459
        %9500 = vmatprep.subr.bf16.mxu0 0
        %9501 = vmatpush2.bf16.msra.mxu0 %v9458
        %9502 = vmatprep.subr.bf16.mxu0 0
        %9503 = vmatpush2.bf16.msra.mxu0 %v9457
        %9504 = vmatprep.subr.bf16.mxu0 0
        %9505 = vmatpush2.bf16.msra.mxu0 %v9456
        %9506 = vmatprep.subr.bf16.mxu0 0
        %9507 = vmatpush2.bf16.msra.mxu0 %v9455
        %9508 = vmatprep.subr.bf16.mxu0 0
        %9509 = vmatpush2.bf16.msra.mxu0 %v9454
        %9510 = vmatprep.mubr.bf16.mxu0 %v8999
        %9511 = vmatmul.mubr.bf16.gmra.mxu0 %v8998
        %v9512 = vpop.f32.mrf.mxu0
        %v9513 = vadd.f32 0.0, %v9512
        %v9514 = vpop.f32.mrf.mxu0
        %v9515 = vpop.f32.mrf.mxu0
        %v9516 = vadd.f32 0.0, %v9515
        %v9517 = vpop.f32.mrf.mxu0
        %9518 = vdwg.mxu0
        %v9519 = vadd.f32 %v9343, %v9513
        %v9520 = vadd.f32 %v9346, %v9516
        %s9521 = scalar_lea.vmem [#allocation12], 384
        %v9522 = vld [vmem:[%s9521] sm:$0xf]
        %v9523 = vld [vmem:[%s9521 + $0x4] sm:$0xf]
        %v9524 = vld [vmem:[%s9521 + $0x8] sm:$0xf]
        %v9525 = vld [vmem:[%s9521 + $0xc] sm:$0xf]
        %v9526 = vld [vmem:[%s9521 + $0x10] sm:$0xf]
        %v9527 = vld [vmem:[%s9521 + $0x14] sm:$0xf]
        %v9528 = vld [vmem:[%s9521 + $0x18] sm:$0xf]
        %v9529 = vld [vmem:[%s9521 + $0x1c] sm:$0xf]
        %v9530 = vld [vmem:[%s9521 + $0x20] sm:$0xf]
        %v9531 = vld [vmem:[%s9521 + $0x24] sm:$0xf]
        %v9532 = vld [vmem:[%s9521 + $0x28] sm:$0xf]
        %v9533 = vld [vmem:[%s9521 + $0x2c] sm:$0xf]
        %v9534 = vld [vmem:[%s9521 + $0x30] sm:$0xf]
        %v9535 = vld [vmem:[%s9521 + $0x34] sm:$0xf]
        %v9536 = vld [vmem:[%s9521 + $0x38] sm:$0xf]
        %v9537 = vld [vmem:[%s9521 + $0x3c] sm:$0xf]
        %v9538 = vld [vmem:[%s9521 + $0x40] sm:$0xf]
        %v9539 = vld [vmem:[%s9521 + $0x44] sm:$0xf]
        %v9540 = vld [vmem:[%s9521 + $0x48] sm:$0xf]
        %v9541 = vld [vmem:[%s9521 + $0x4c] sm:$0xf]
        %v9542 = vld [vmem:[%s9521 + $0x50] sm:$0xf]
        %v9543 = vld [vmem:[%s9521 + $0x54] sm:$0xf]
        %v9544 = vld [vmem:[%s9521 + $0x58] sm:$0xf]
        %v9545 = vld [vmem:[%s9521 + $0x5c] sm:$0xf]
        %v9546 = vld [vmem:[%s9521 + $0x60] sm:$0xf]
        %v9547 = vld [vmem:[%s9521 + $0x64] sm:$0xf]
        %v9548 = vld [vmem:[%s9521 + $0x68] sm:$0xf]
        %v9549 = vld [vmem:[%s9521 + $0x6c] sm:$0xf]
        %v9550 = vld [vmem:[%s9521 + $0x70] sm:$0xf]
        %v9551 = vld [vmem:[%s9521 + $0x74] sm:$0xf]
        %v9552 = vld [vmem:[%s9521 + $0x78] sm:$0xf]
        %v9553 = vld [vmem:[%s9521 + $0x7c] sm:$0xf]
        %v9586 = vunpack.c.l.b16 %v9522
        %v9587 = vunpack.c.l.b16 %v9523
        %v9588 = vunpack.c.l.b16 %v9524
        %v9589 = vunpack.c.l.b16 %v9525
        %v9590 = vunpack.c.l.b16 %v9526
        %v9591 = vunpack.c.l.b16 %v9527
        %v9592 = vunpack.c.l.b16 %v9528
        %v9593 = vunpack.c.l.b16 %v9529
        %v9594 = vunpack.c.l.b16 %v9530
        %v9595 = vunpack.c.l.b16 %v9531
        %v9596 = vunpack.c.l.b16 %v9532
        %v9597 = vunpack.c.l.b16 %v9533
        %v9598 = vunpack.c.l.b16 %v9534
        %v9599 = vunpack.c.l.b16 %v9535
        %v9600 = vunpack.c.l.b16 %v9536
        %v9601 = vunpack.c.l.b16 %v9537
        %v9602 = vunpack.c.l.b16 %v9538
        %v9603 = vunpack.c.l.b16 %v9539
        %v9604 = vunpack.c.l.b16 %v9540
        %v9605 = vunpack.c.l.b16 %v9541
        %v9606 = vunpack.c.l.b16 %v9542
        %v9607 = vunpack.c.l.b16 %v9543
        %v9608 = vunpack.c.l.b16 %v9544
        %v9609 = vunpack.c.l.b16 %v9545
        %v9610 = vunpack.c.l.b16 %v9546
        %v9611 = vunpack.c.l.b16 %v9547
        %v9612 = vunpack.c.l.b16 %v9548
        %v9613 = vunpack.c.l.b16 %v9549
        %v9614 = vunpack.c.l.b16 %v9550
        %v9615 = vunpack.c.l.b16 %v9551
        %v9616 = vunpack.c.l.b16 %v9552
        %v9617 = vunpack.c.l.b16 %v9553
        %v9618 = vpack.c.b16 %v9587, %v9586
        %v9619 = vpack.c.b16 %v9589, %v9588
        %v9620 = vpack.c.b16 %v9591, %v9590
        %v9621 = vpack.c.b16 %v9593, %v9592
        %v9622 = vpack.c.b16 %v9595, %v9594
        %v9623 = vpack.c.b16 %v9597, %v9596
        %v9624 = vpack.c.b16 %v9599, %v9598
        %v9625 = vpack.c.b16 %v9601, %v9600
        %v9626 = vpack.c.b16 %v9603, %v9602
        %v9627 = vpack.c.b16 %v9605, %v9604
        %v9628 = vpack.c.b16 %v9607, %v9606
        %v9629 = vpack.c.b16 %v9609, %v9608
        %v9630 = vpack.c.b16 %v9611, %v9610
        %v9631 = vpack.c.b16 %v9613, %v9612
        %v9632 = vpack.c.b16 %v9615, %v9614
        %v9633 = vpack.c.b16 %v9617, %v9616
        %9650 = vmatprep.subr.bf16.mxu0 0
        %9651 = vmatpush1.bf16.msra.mxu0 %v9625
        %9652 = vmatprep.subr.bf16.mxu0 0
        %9653 = vmatpush1.bf16.msra.mxu0 %v9624
        %9654 = vmatprep.subr.bf16.mxu0 0
        %9655 = vmatpush1.bf16.msra.mxu0 %v9623
        %9656 = vmatprep.subr.bf16.mxu0 0
        %9657 = vmatpush1.bf16.msra.mxu0 %v9622
        %9658 = vmatprep.subr.bf16.mxu0 0
        %9659 = vmatpush1.bf16.msra.mxu0 %v9621
        %9660 = vmatprep.subr.bf16.mxu0 0
        %9661 = vmatpush1.bf16.msra.mxu0 %v9620
        %9662 = vmatprep.subr.bf16.mxu0 0
        %9663 = vmatpush1.bf16.msra.mxu0 %v9619
        %9664 = vmatprep.subr.bf16.mxu0 0
        %9665 = vmatpush1.bf16.msra.mxu0 %v9618
        %9666 = vmatprep.subr.bf16.mxu0 0
        %9667 = vmatpush2.bf16.msra.mxu0 %v9633
        %9668 = vmatprep.subr.bf16.mxu0 0
        %9669 = vmatpush2.bf16.msra.mxu0 %v9632
        %9670 = vmatprep.subr.bf16.mxu0 0
        %9671 = vmatpush2.bf16.msra.mxu0 %v9631
        %9672 = vmatprep.subr.bf16.mxu0 0
        %9673 = vmatpush2.bf16.msra.mxu0 %v9630
        %9674 = vmatprep.subr.bf16.mxu0 0
        %9675 = vmatpush2.bf16.msra.mxu0 %v9629
        %9676 = vmatprep.subr.bf16.mxu0 0
        %9677 = vmatpush2.bf16.msra.mxu0 %v9628
        %9678 = vmatprep.subr.bf16.mxu0 0
        %9679 = vmatpush2.bf16.msra.mxu0 %v9627
        %9680 = vmatprep.subr.bf16.mxu0 0
        %9681 = vmatpush2.bf16.msra.mxu0 %v9626
        %9682 = vmatprep.mubr.bf16.mxu0 %v9001
        %9683 = vmatmul.mubr.bf16.gmra.mxu0 %v9000
        %v9684 = vpop.f32.mrf.mxu0
        %v9685 = vadd.f32 0.0, %v9684
        %v9686 = vpop.f32.mrf.mxu0
        %v9687 = vpop.f32.mrf.mxu0
        %v9688 = vadd.f32 0.0, %v9687
        %v9689 = vpop.f32.mrf.mxu0
        %9690 = vdwg.mxu0
        %v9691 = vadd.f32 %v9519, %v9685
        %v9692 = vadd.f32 %v9520, %v9688
        %s9693 = scalar_lea.vmem [#allocation12], 512
        %v9694 = vld [vmem:[%s9693] sm:$0xf]
        %v9695 = vld [vmem:[%s9693 + $0x4] sm:$0xf]
        %v9696 = vld [vmem:[%s9693 + $0x8] sm:$0xf]
        %v9697 = vld [vmem:[%s9693 + $0xc] sm:$0xf]
        %v9698 = vld [vmem:[%s9693 + $0x10] sm:$0xf]
        %v9699 = vld [vmem:[%s9693 + $0x14] sm:$0xf]
        %v9700 = vld [vmem:[%s9693 + $0x18] sm:$0xf]
        %v9701 = vld [vmem:[%s9693 + $0x1c] sm:$0xf]
        %v9702 = vld [vmem:[%s9693 + $0x20] sm:$0xf]
        %v9703 = vld [vmem:[%s9693 + $0x24] sm:$0xf]
        %v9704 = vld [vmem:[%s9693 + $0x28] sm:$0xf]
        %v9705 = vld [vmem:[%s9693 + $0x2c] sm:$0xf]
        %v9706 = vld [vmem:[%s9693 + $0x30] sm:$0xf]
        %v9707 = vld [vmem:[%s9693 + $0x34] sm:$0xf]
        %v9708 = vld [vmem:[%s9693 + $0x38] sm:$0xf]
        %v9709 = vld [vmem:[%s9693 + $0x3c] sm:$0xf]
        %v9710 = vld [vmem:[%s9693 + $0x40] sm:$0xf]
        %v9711 = vld [vmem:[%s9693 + $0x44] sm:$0xf]
        %v9712 = vld [vmem:[%s9693 + $0x48] sm:$0xf]
        %v9713 = vld [vmem:[%s9693 + $0x4c] sm:$0xf]
        %v9714 = vld [vmem:[%s9693 + $0x50] sm:$0xf]
        %v9715 = vld [vmem:[%s9693 + $0x54] sm:$0xf]
        %v9716 = vld [vmem:[%s9693 + $0x58] sm:$0xf]
        %v9717 = vld [vmem:[%s9693 + $0x5c] sm:$0xf]
        %v9718 = vld [vmem:[%s9693 + $0x60] sm:$0xf]
        %v9719 = vld [vmem:[%s9693 + $0x64] sm:$0xf]
        %v9720 = vld [vmem:[%s9693 + $0x68] sm:$0xf]
        %v9721 = vld [vmem:[%s9693 + $0x6c] sm:$0xf]
        %v9722 = vld [vmem:[%s9693 + $0x70] sm:$0xf]
        %v9723 = vld [vmem:[%s9693 + $0x74] sm:$0xf]
        %v9724 = vld [vmem:[%s9693 + $0x78] sm:$0xf]
        %v9725 = vld [vmem:[%s9693 + $0x7c] sm:$0xf]
        %v9758 = vunpack.c.l.b16 %v9694
        %v9759 = vunpack.c.l.b16 %v9695
        %v9760 = vunpack.c.l.b16 %v9696
        %v9761 = vunpack.c.l.b16 %v9697
        %v9762 = vunpack.c.l.b16 %v9698
        %v9763 = vunpack.c.l.b16 %v9699
        %v9764 = vunpack.c.l.b16 %v9700
        %v9765 = vunpack.c.l.b16 %v9701
        %v9766 = vunpack.c.l.b16 %v9702
        %v9767 = vunpack.c.l.b16 %v9703
        %v9768 = vunpack.c.l.b16 %v9704
        %v9769 = vunpack.c.l.b16 %v9705
        %v9770 = vunpack.c.l.b16 %v9706
        %v9771 = vunpack.c.l.b16 %v9707
        %v9772 = vunpack.c.l.b16 %v9708
        %v9773 = vunpack.c.l.b16 %v9709
        %v9774 = vunpack.c.l.b16 %v9710
        %v9775 = vunpack.c.l.b16 %v9711
        %v9776 = vunpack.c.l.b16 %v9712
        %v9777 = vunpack.c.l.b16 %v9713
        %v9778 = vunpack.c.l.b16 %v9714
        %v9779 = vunpack.c.l.b16 %v9715
        %v9780 = vunpack.c.l.b16 %v9716
        %v9781 = vunpack.c.l.b16 %v9717
        %v9782 = vunpack.c.l.b16 %v9718
        %v9783 = vunpack.c.l.b16 %v9719
        %v9784 = vunpack.c.l.b16 %v9720
        %v9785 = vunpack.c.l.b16 %v9721
        %v9786 = vunpack.c.l.b16 %v9722
        %v9787 = vunpack.c.l.b16 %v9723
        %v9788 = vunpack.c.l.b16 %v9724
        %v9789 = vunpack.c.l.b16 %v9725
        %v9790 = vpack.c.b16 %v9759, %v9758
        %v9791 = vpack.c.b16 %v9761, %v9760
        %v9792 = vpack.c.b16 %v9763, %v9762
        %v9793 = vpack.c.b16 %v9765, %v9764
        %v9794 = vpack.c.b16 %v9767, %v9766
        %v9795 = vpack.c.b16 %v9769, %v9768
        %v9796 = vpack.c.b16 %v9771, %v9770
        %v9797 = vpack.c.b16 %v9773, %v9772
        %v9798 = vpack.c.b16 %v9775, %v9774
        %v9799 = vpack.c.b16 %v9777, %v9776
        %v9800 = vpack.c.b16 %v9779, %v9778
        %v9801 = vpack.c.b16 %v9781, %v9780
        %v9802 = vpack.c.b16 %v9783, %v9782
        %v9803 = vpack.c.b16 %v9785, %v9784
        %v9804 = vpack.c.b16 %v9787, %v9786
        %v9805 = vpack.c.b16 %v9789, %v9788
        %9822 = vmatprep.subr.bf16.mxu0 0
        %9823 = vmatpush1.bf16.msra.mxu0 %v9797
        %9824 = vmatprep.subr.bf16.mxu0 0
        %9825 = vmatpush1.bf16.msra.mxu0 %v9796
        %9826 = vmatprep.subr.bf16.mxu0 0
        %9827 = vmatpush1.bf16.msra.mxu0 %v9795
        %9828 = vmatprep.subr.bf16.mxu0 0
        %9829 = vmatpush1.bf16.msra.mxu0 %v9794
        %9830 = vmatprep.subr.bf16.mxu0 0
        %9831 = vmatpush1.bf16.msra.mxu0 %v9793
        %9832 = vmatprep.subr.bf16.mxu0 0
        %9833 = vmatpush1.bf16.msra.mxu0 %v9792
        %9834 = vmatprep.subr.bf16.mxu0 0
        %9835 = vmatpush1.bf16.msra.mxu0 %v9791
        %9836 = vmatprep.subr.bf16.mxu0 0
        %9837 = vmatpush1.bf16.msra.mxu0 %v9790
        %9838 = vmatprep.subr.bf16.mxu0 0
        %9839 = vmatpush2.bf16.msra.mxu0 %v9805
        %9840 = vmatprep.subr.bf16.mxu0 0
        %9841 = vmatpush2.bf16.msra.mxu0 %v9804
        %9842 = vmatprep.subr.bf16.mxu0 0
        %9843 = vmatpush2.bf16.msra.mxu0 %v9803
        %9844 = vmatprep.subr.bf16.mxu0 0
        %9845 = vmatpush2.bf16.msra.mxu0 %v9802
        %9846 = vmatprep.subr.bf16.mxu0 0
        %9847 = vmatpush2.bf16.msra.mxu0 %v9801
        %9848 = vmatprep.subr.bf16.mxu0 0
        %9849 = vmatpush2.bf16.msra.mxu0 %v9800
        %9850 = vmatprep.subr.bf16.mxu0 0
        %9851 = vmatpush2.bf16.msra.mxu0 %v9799
        %9852 = vmatprep.subr.bf16.mxu0 0
        %9853 = vmatpush2.bf16.msra.mxu0 %v9798
        %9854 = vmatprep.mubr.bf16.mxu0 %v9003
        %9855 = vmatmul.mubr.bf16.gmra.mxu0 %v9002
        %v9856 = vpop.f32.mrf.mxu0
        %v9857 = vadd.f32 0.0, %v9856
        %v9858 = vpop.f32.mrf.mxu0
        %v9859 = vpop.f32.mrf.mxu0
        %v9860 = vadd.f32 0.0, %v9859
        %v9861 = vpop.f32.mrf.mxu0
        %9862 = vdwg.mxu0
        %v9863 = vadd.f32 %v9691, %v9857
        %v9864 = vadd.f32 %v9692, %v9860
        %s9865 = scalar_lea.vmem [#allocation12], 640
        %v9866 = vld [vmem:[%s9865] sm:$0xf]
        %v9867 = vld [vmem:[%s9865 + $0x4] sm:$0xf]
        %v9868 = vld [vmem:[%s9865 + $0x8] sm:$0xf]
        %v9869 = vld [vmem:[%s9865 + $0xc] sm:$0xf]
        %v9870 = vld [vmem:[%s9865 + $0x10] sm:$0xf]
        %v9871 = vld [vmem:[%s9865 + $0x14] sm:$0xf]
        %v9872 = vld [vmem:[%s9865 + $0x18] sm:$0xf]
        %v9873 = vld [vmem:[%s9865 + $0x1c] sm:$0xf]
        %v9874 = vld [vmem:[%s9865 + $0x20] sm:$0xf]
        %v9875 = vld [vmem:[%s9865 + $0x24] sm:$0xf]
        %v9876 = vld [vmem:[%s9865 + $0x28] sm:$0xf]
        %v9877 = vld [vmem:[%s9865 + $0x2c] sm:$0xf]
        %v9878 = vld [vmem:[%s9865 + $0x30] sm:$0xf]
        %v9879 = vld [vmem:[%s9865 + $0x34] sm:$0xf]
        %v9880 = vld [vmem:[%s9865 + $0x38] sm:$0xf]
        %v9881 = vld [vmem:[%s9865 + $0x3c] sm:$0xf]
        %v9882 = vld [vmem:[%s9865 + $0x40] sm:$0xf]
        %v9883 = vld [vmem:[%s9865 + $0x44] sm:$0xf]
        %v9884 = vld [vmem:[%s9865 + $0x48] sm:$0xf]
        %v9885 = vld [vmem:[%s9865 + $0x4c] sm:$0xf]
        %v9886 = vld [vmem:[%s9865 + $0x50] sm:$0xf]
        %v9887 = vld [vmem:[%s9865 + $0x54] sm:$0xf]
        %v9888 = vld [vmem:[%s9865 + $0x58] sm:$0xf]
        %v9889 = vld [vmem:[%s9865 + $0x5c] sm:$0xf]
        %v9890 = vld [vmem:[%s9865 + $0x60] sm:$0xf]
        %v9891 = vld [vmem:[%s9865 + $0x64] sm:$0xf]
        %v9892 = vld [vmem:[%s9865 + $0x68] sm:$0xf]
        %v9893 = vld [vmem:[%s9865 + $0x6c] sm:$0xf]
        %v9894 = vld [vmem:[%s9865 + $0x70] sm:$0xf]
        %v9895 = vld [vmem:[%s9865 + $0x74] sm:$0xf]
        %v9896 = vld [vmem:[%s9865 + $0x78] sm:$0xf]
        %v9897 = vld [vmem:[%s9865 + $0x7c] sm:$0xf]
        %v9930 = vunpack.c.l.b16 %v9866
        %v9931 = vunpack.c.l.b16 %v9867
        %v9932 = vunpack.c.l.b16 %v9868
        %v9933 = vunpack.c.l.b16 %v9869
        %v9934 = vunpack.c.l.b16 %v9870
        %v9935 = vunpack.c.l.b16 %v9871
        %v9936 = vunpack.c.l.b16 %v9872
        %v9937 = vunpack.c.l.b16 %v9873
        %v9938 = vunpack.c.l.b16 %v9874
        %v9939 = vunpack.c.l.b16 %v9875
        %v9940 = vunpack.c.l.b16 %v9876
        %v9941 = vunpack.c.l.b16 %v9877
        %v9942 = vunpack.c.l.b16 %v9878
        %v9943 = vunpack.c.l.b16 %v9879
        %v9944 = vunpack.c.l.b16 %v9880
        %v9945 = vunpack.c.l.b16 %v9881
        %v9946 = vunpack.c.l.b16 %v9882
        %v9947 = vunpack.c.l.b16 %v9883
        %v9948 = vunpack.c.l.b16 %v9884
        %v9949 = vunpack.c.l.b16 %v9885
        %v9950 = vunpack.c.l.b16 %v9886
        %v9951 = vunpack.c.l.b16 %v9887
        %v9952 = vunpack.c.l.b16 %v9888
        %v9953 = vunpack.c.l.b16 %v9889
        %v9954 = vunpack.c.l.b16 %v9890
        %v9955 = vunpack.c.l.b16 %v9891
        %v9956 = vunpack.c.l.b16 %v9892
        %v9957 = vunpack.c.l.b16 %v9893
        %v9958 = vunpack.c.l.b16 %v9894
        %v9959 = vunpack.c.l.b16 %v9895
        %v9960 = vunpack.c.l.b16 %v9896
        %v9961 = vunpack.c.l.b16 %v9897
        %v9962 = vpack.c.b16 %v9931, %v9930
        %v9963 = vpack.c.b16 %v9933, %v9932
        %v9964 = vpack.c.b16 %v9935, %v9934
        %v9965 = vpack.c.b16 %v9937, %v9936
        %v9966 = vpack.c.b16 %v9939, %v9938
        %v9967 = vpack.c.b16 %v9941, %v9940
        %v9968 = vpack.c.b16 %v9943, %v9942
        %v9969 = vpack.c.b16 %v9945, %v9944
        %v9970 = vpack.c.b16 %v9947, %v9946
        %v9971 = vpack.c.b16 %v9949, %v9948
        %v9972 = vpack.c.b16 %v9951, %v9950
        %v9973 = vpack.c.b16 %v9953, %v9952
        %v9974 = vpack.c.b16 %v9955, %v9954
        %v9975 = vpack.c.b16 %v9957, %v9956
        %v9976 = vpack.c.b16 %v9959, %v9958
        %v9977 = vpack.c.b16 %v9961, %v9960
        %9994 = vmatprep.subr.bf16.mxu0 0
        %9995 = vmatpush1.bf16.msra.mxu0 %v9969
        %9996 = vmatprep.subr.bf16.mxu0 0
        %9997 = vmatpush1.bf16.msra.mxu0 %v9968
        %9998 = vmatprep.subr.bf16.mxu0 0
        %9999 = vmatpush1.bf16.msra.mxu0 %v9967
        %10000 = vmatprep.subr.bf16.mxu0 0
        %10001 = vmatpush1.bf16.msra.mxu0 %v9966
        %10002 = vmatprep.subr.bf16.mxu0 0
        %10003 = vmatpush1.bf16.msra.mxu0 %v9965
        %10004 = vmatprep.subr.bf16.mxu0 0
        %10005 = vmatpush1.bf16.msra.mxu0 %v9964
        %10006 = vmatprep.subr.bf16.mxu0 0
        %10007 = vmatpush1.bf16.msra.mxu0 %v9963
        %10008 = vmatprep.subr.bf16.mxu0 0
        %10009 = vmatpush1.bf16.msra.mxu0 %v9962
        %10010 = vmatprep.subr.bf16.mxu0 0
        %10011 = vmatpush2.bf16.msra.mxu0 %v9977
        %10012 = vmatprep.subr.bf16.mxu0 0
        %10013 = vmatpush2.bf16.msra.mxu0 %v9976
        %10014 = vmatprep.subr.bf16.mxu0 0
        %10015 = vmatpush2.bf16.msra.mxu0 %v9975
        %10016 = vmatprep.subr.bf16.mxu0 0
        %10017 = vmatpush2.bf16.msra.mxu0 %v9974
        %10018 = vmatprep.subr.bf16.mxu0 0
        %10019 = vmatpush2.bf16.msra.mxu0 %v9973
        %10020 = vmatprep.subr.bf16.mxu0 0
        %10021 = vmatpush2.bf16.msra.mxu0 %v9972
        %10022 = vmatprep.subr.bf16.mxu0 0
        %10023 = vmatpush2.bf16.msra.mxu0 %v9971
        %10024 = vmatprep.subr.bf16.mxu0 0
        %10025 = vmatpush2.bf16.msra.mxu0 %v9970
        %10026 = vmatprep.mubr.bf16.mxu0 %v9005
        %10027 = vmatmul.mubr.bf16.gmra.mxu0 %v9004
        %v10028 = vpop.f32.mrf.mxu0
        %v10029 = vadd.f32 0.0, %v10028
        %v10030 = vpop.f32.mrf.mxu0
        %v10031 = vpop.f32.mrf.mxu0
        %v10032 = vadd.f32 0.0, %v10031
        %v10033 = vpop.f32.mrf.mxu0
        %10034 = vdwg.mxu0
        %v10035 = vadd.f32 %v9863, %v10029
        %v10036 = vadd.f32 %v9864, %v10032
        %s10037 = scalar_lea.vmem [#allocation12], 768
        %v10038 = vld [vmem:[%s10037] sm:$0xf]
        %v10039 = vld [vmem:[%s10037 + $0x4] sm:$0xf]
        %v10040 = vld [vmem:[%s10037 + $0x8] sm:$0xf]
        %v10041 = vld [vmem:[%s10037 + $0xc] sm:$0xf]
        %v10042 = vld [vmem:[%s10037 + $0x10] sm:$0xf]
        %v10043 = vld [vmem:[%s10037 + $0x14] sm:$0xf]
        %v10044 = vld [vmem:[%s10037 + $0x18] sm:$0xf]
        %v10045 = vld [vmem:[%s10037 + $0x1c] sm:$0xf]
        %v10046 = vld [vmem:[%s10037 + $0x20] sm:$0xf]
        %v10047 = vld [vmem:[%s10037 + $0x24] sm:$0xf]
        %v10048 = vld [vmem:[%s10037 + $0x28] sm:$0xf]
        %v10049 = vld [vmem:[%s10037 + $0x2c] sm:$0xf]
        %v10050 = vld [vmem:[%s10037 + $0x30] sm:$0xf]
        %v10051 = vld [vmem:[%s10037 + $0x34] sm:$0xf]
        %v10052 = vld [vmem:[%s10037 + $0x38] sm:$0xf]
        %v10053 = vld [vmem:[%s10037 + $0x3c] sm:$0xf]
        %v10054 = vld [vmem:[%s10037 + $0x40] sm:$0xf]
        %v10055 = vld [vmem:[%s10037 + $0x44] sm:$0xf]
        %v10056 = vld [vmem:[%s10037 + $0x48] sm:$0xf]
        %v10057 = vld [vmem:[%s10037 + $0x4c] sm:$0xf]
        %v10058 = vld [vmem:[%s10037 + $0x50] sm:$0xf]
        %v10059 = vld [vmem:[%s10037 + $0x54] sm:$0xf]
        %v10060 = vld [vmem:[%s10037 + $0x58] sm:$0xf]
        %v10061 = vld [vmem:[%s10037 + $0x5c] sm:$0xf]
        %v10062 = vld [vmem:[%s10037 + $0x60] sm:$0xf]
        %v10063 = vld [vmem:[%s10037 + $0x64] sm:$0xf]
        %v10064 = vld [vmem:[%s10037 + $0x68] sm:$0xf]
        %v10065 = vld [vmem:[%s10037 + $0x6c] sm:$0xf]
        %v10066 = vld [vmem:[%s10037 + $0x70] sm:$0xf]
        %v10067 = vld [vmem:[%s10037 + $0x74] sm:$0xf]
        %v10068 = vld [vmem:[%s10037 + $0x78] sm:$0xf]
        %v10069 = vld [vmem:[%s10037 + $0x7c] sm:$0xf]
        %v10102 = vunpack.c.l.b16 %v10038
        %v10103 = vunpack.c.l.b16 %v10039
        %v10104 = vunpack.c.l.b16 %v10040
        %v10105 = vunpack.c.l.b16 %v10041
        %v10106 = vunpack.c.l.b16 %v10042
        %v10107 = vunpack.c.l.b16 %v10043
        %v10108 = vunpack.c.l.b16 %v10044
        %v10109 = vunpack.c.l.b16 %v10045
        %v10110 = vunpack.c.l.b16 %v10046
        %v10111 = vunpack.c.l.b16 %v10047
        %v10112 = vunpack.c.l.b16 %v10048
        %v10113 = vunpack.c.l.b16 %v10049
        %v10114 = vunpack.c.l.b16 %v10050
        %v10115 = vunpack.c.l.b16 %v10051
        %v10116 = vunpack.c.l.b16 %v10052
        %v10117 = vunpack.c.l.b16 %v10053
        %v10118 = vunpack.c.l.b16 %v10054
        %v10119 = vunpack.c.l.b16 %v10055
        %v10120 = vunpack.c.l.b16 %v10056
        %v10121 = vunpack.c.l.b16 %v10057
        %v10122 = vunpack.c.l.b16 %v10058
        %v10123 = vunpack.c.l.b16 %v10059
        %v10124 = vunpack.c.l.b16 %v10060
        %v10125 = vunpack.c.l.b16 %v10061
        %v10126 = vunpack.c.l.b16 %v10062
        %v10127 = vunpack.c.l.b16 %v10063
        %v10128 = vunpack.c.l.b16 %v10064
        %v10129 = vunpack.c.l.b16 %v10065
        %v10130 = vunpack.c.l.b16 %v10066
        %v10131 = vunpack.c.l.b16 %v10067
        %v10132 = vunpack.c.l.b16 %v10068
        %v10133 = vunpack.c.l.b16 %v10069
        %v10134 = vpack.c.b16 %v10103, %v10102
        %v10135 = vpack.c.b16 %v10105, %v10104
        %v10136 = vpack.c.b16 %v10107, %v10106
        %v10137 = vpack.c.b16 %v10109, %v10108
        %v10138 = vpack.c.b16 %v10111, %v10110
        %v10139 = vpack.c.b16 %v10113, %v10112
        %v10140 = vpack.c.b16 %v10115, %v10114
        %v10141 = vpack.c.b16 %v10117, %v10116
        %v10142 = vpack.c.b16 %v10119, %v10118
        %v10143 = vpack.c.b16 %v10121, %v10120
        %v10144 = vpack.c.b16 %v10123, %v10122
        %v10145 = vpack.c.b16 %v10125, %v10124
        %v10146 = vpack.c.b16 %v10127, %v10126
        %v10147 = vpack.c.b16 %v10129, %v10128
        %v10148 = vpack.c.b16 %v10131, %v10130
        %v10149 = vpack.c.b16 %v10133, %v10132
        %10166 = vmatprep.subr.bf16.mxu0 0
        %10167 = vmatpush1.bf16.msra.mxu0 %v10141
        %10168 = vmatprep.subr.bf16.mxu0 0
        %10169 = vmatpush1.bf16.msra.mxu0 %v10140
        %10170 = vmatprep.subr.bf16.mxu0 0
        %10171 = vmatpush1.bf16.msra.mxu0 %v10139
        %10172 = vmatprep.subr.bf16.mxu0 0
        %10173 = vmatpush1.bf16.msra.mxu0 %v10138
        %10174 = vmatprep.subr.bf16.mxu0 0
        %10175 = vmatpush1.bf16.msra.mxu0 %v10137
        %10176 = vmatprep.subr.bf16.mxu0 0
        %10177 = vmatpush1.bf16.msra.mxu0 %v10136
        %10178 = vmatprep.subr.bf16.mxu0 0
        %10179 = vmatpush1.bf16.msra.mxu0 %v10135
        %10180 = vmatprep.subr.bf16.mxu0 0
        %10181 = vmatpush1.bf16.msra.mxu0 %v10134
        %10182 = vmatprep.subr.bf16.mxu0 0
        %10183 = vmatpush2.bf16.msra.mxu0 %v10149
        %10184 = vmatprep.subr.bf16.mxu0 0
        %10185 = vmatpush2.bf16.msra.mxu0 %v10148
        %10186 = vmatprep.subr.bf16.mxu0 0
        %10187 = vmatpush2.bf16.msra.mxu0 %v10147
        %10188 = vmatprep.subr.bf16.mxu0 0
        %10189 = vmatpush2.bf16.msra.mxu0 %v10146
        %10190 = vmatprep.subr.bf16.mxu0 0
        %10191 = vmatpush2.bf16.msra.mxu0 %v10145
        %10192 = vmatprep.subr.bf16.mxu0 0
        %10193 = vmatpush2.bf16.msra.mxu0 %v10144
        %10194 = vmatprep.subr.bf16.mxu0 0
        %10195 = vmatpush2.bf16.msra.mxu0 %v10143
        %10196 = vmatprep.subr.bf16.mxu0 0
        %10197 = vmatpush2.bf16.msra.mxu0 %v10142
        %10198 = vmatprep.mubr.bf16.mxu0 %v9007
        %10199 = vmatmul.mubr.bf16.gmra.mxu0 %v9006
        %v10200 = vpop.f32.mrf.mxu0
        %v10201 = vadd.f32 0.0, %v10200
        %v10202 = vpop.f32.mrf.mxu0
        %v10203 = vpop.f32.mrf.mxu0
        %v10204 = vadd.f32 0.0, %v10203
        %v10205 = vpop.f32.mrf.mxu0
        %10206 = vdwg.mxu0
        %v10207 = vadd.f32 %v10035, %v10201
        %v10208 = vadd.f32 %v10036, %v10204
        %s10209 = scalar_lea.vmem [#allocation12], 896
        %v10210 = vld [vmem:[%s10209] sm:$0xf]
        %v10211 = vld [vmem:[%s10209 + $0x4] sm:$0xf]
        %v10212 = vld [vmem:[%s10209 + $0x8] sm:$0xf]
        %v10213 = vld [vmem:[%s10209 + $0xc] sm:$0xf]
        %v10214 = vld [vmem:[%s10209 + $0x10] sm:$0xf]
        %v10215 = vld [vmem:[%s10209 + $0x14] sm:$0xf]
        %v10216 = vld [vmem:[%s10209 + $0x18] sm:$0xf]
        %v10217 = vld [vmem:[%s10209 + $0x1c] sm:$0xf]
        %v10218 = vld [vmem:[%s10209 + $0x20] sm:$0xf]
        %v10219 = vld [vmem:[%s10209 + $0x24] sm:$0xf]
        %v10220 = vld [vmem:[%s10209 + $0x28] sm:$0xf]
        %v10221 = vld [vmem:[%s10209 + $0x2c] sm:$0xf]
        %v10222 = vld [vmem:[%s10209 + $0x30] sm:$0xf]
        %v10223 = vld [vmem:[%s10209 + $0x34] sm:$0xf]
        %v10224 = vld [vmem:[%s10209 + $0x38] sm:$0xf]
        %v10225 = vld [vmem:[%s10209 + $0x3c] sm:$0xf]
        %v10226 = vld [vmem:[%s10209 + $0x40] sm:$0xf]
        %v10227 = vld [vmem:[%s10209 + $0x44] sm:$0xf]
        %v10228 = vld [vmem:[%s10209 + $0x48] sm:$0xf]
        %v10229 = vld [vmem:[%s10209 + $0x4c] sm:$0xf]
        %v10230 = vld [vmem:[%s10209 + $0x50] sm:$0xf]
        %v10231 = vld [vmem:[%s10209 + $0x54] sm:$0xf]
        %v10232 = vld [vmem:[%s10209 + $0x58] sm:$0xf]
        %v10233 = vld [vmem:[%s10209 + $0x5c] sm:$0xf]
        %v10234 = vld [vmem:[%s10209 + $0x60] sm:$0xf]
        %v10235 = vld [vmem:[%s10209 + $0x64] sm:$0xf]
        %v10236 = vld [vmem:[%s10209 + $0x68] sm:$0xf]
        %v10237 = vld [vmem:[%s10209 + $0x6c] sm:$0xf]
        %v10238 = vld [vmem:[%s10209 + $0x70] sm:$0xf]
        %v10239 = vld [vmem:[%s10209 + $0x74] sm:$0xf]
        %v10240 = vld [vmem:[%s10209 + $0x78] sm:$0xf]
        %v10241 = vld [vmem:[%s10209 + $0x7c] sm:$0xf]
        %v10274 = vunpack.c.l.b16 %v10210
        %v10275 = vunpack.c.l.b16 %v10211
        %v10276 = vunpack.c.l.b16 %v10212
        %v10277 = vunpack.c.l.b16 %v10213
        %v10278 = vunpack.c.l.b16 %v10214
        %v10279 = vunpack.c.l.b16 %v10215
        %v10280 = vunpack.c.l.b16 %v10216
        %v10281 = vunpack.c.l.b16 %v10217
        %v10282 = vunpack.c.l.b16 %v10218
        %v10283 = vunpack.c.l.b16 %v10219
        %v10284 = vunpack.c.l.b16 %v10220
        %v10285 = vunpack.c.l.b16 %v10221
        %v10286 = vunpack.c.l.b16 %v10222
        %v10287 = vunpack.c.l.b16 %v10223
        %v10288 = vunpack.c.l.b16 %v10224
        %v10289 = vunpack.c.l.b16 %v10225
        %v10290 = vunpack.c.l.b16 %v10226
        %v10291 = vunpack.c.l.b16 %v10227
        %v10292 = vunpack.c.l.b16 %v10228
        %v10293 = vunpack.c.l.b16 %v10229
        %v10294 = vunpack.c.l.b16 %v10230
        %v10295 = vunpack.c.l.b16 %v10231
        %v10296 = vunpack.c.l.b16 %v10232
        %v10297 = vunpack.c.l.b16 %v10233
        %v10298 = vunpack.c.l.b16 %v10234
        %v10299 = vunpack.c.l.b16 %v10235
        %v10300 = vunpack.c.l.b16 %v10236
        %v10301 = vunpack.c.l.b16 %v10237
        %v10302 = vunpack.c.l.b16 %v10238
        %v10303 = vunpack.c.l.b16 %v10239
        %v10304 = vunpack.c.l.b16 %v10240
        %v10305 = vunpack.c.l.b16 %v10241
        %v10306 = vpack.c.b16 %v10275, %v10274
        %v10307 = vpack.c.b16 %v10277, %v10276
        %v10308 = vpack.c.b16 %v10279, %v10278
        %v10309 = vpack.c.b16 %v10281, %v10280
        %v10310 = vpack.c.b16 %v10283, %v10282
        %v10311 = vpack.c.b16 %v10285, %v10284
        %v10312 = vpack.c.b16 %v10287, %v10286
        %v10313 = vpack.c.b16 %v10289, %v10288
        %v10314 = vpack.c.b16 %v10291, %v10290
        %v10315 = vpack.c.b16 %v10293, %v10292
        %v10316 = vpack.c.b16 %v10295, %v10294
        %v10317 = vpack.c.b16 %v10297, %v10296
        %v10318 = vpack.c.b16 %v10299, %v10298
        %v10319 = vpack.c.b16 %v10301, %v10300
        %v10320 = vpack.c.b16 %v10303, %v10302
        %v10321 = vpack.c.b16 %v10305, %v10304
        %10338 = vmatprep.subr.bf16.mxu0 0
        %10339 = vmatpush1.bf16.msra.mxu0 %v10313
        %10340 = vmatprep.subr.bf16.mxu0 0
        %10341 = vmatpush1.bf16.msra.mxu0 %v10312
        %10342 = vmatprep.subr.bf16.mxu0 0
        %10343 = vmatpush1.bf16.msra.mxu0 %v10311
        %10344 = vmatprep.subr.bf16.mxu0 0
        %10345 = vmatpush1.bf16.msra.mxu0 %v10310
        %10346 = vmatprep.subr.bf16.mxu0 0
        %10347 = vmatpush1.bf16.msra.mxu0 %v10309
        %10348 = vmatprep.subr.bf16.mxu0 0
        %10349 = vmatpush1.bf16.msra.mxu0 %v10308
        %10350 = vmatprep.subr.bf16.mxu0 0
        %10351 = vmatpush1.bf16.msra.mxu0 %v10307
        %10352 = vmatprep.subr.bf16.mxu0 0
        %10353 = vmatpush1.bf16.msra.mxu0 %v10306
        %10354 = vmatprep.subr.bf16.mxu0 0
        %10355 = vmatpush2.bf16.msra.mxu0 %v10321
        %10356 = vmatprep.subr.bf16.mxu0 0
        %10357 = vmatpush2.bf16.msra.mxu0 %v10320
        %10358 = vmatprep.subr.bf16.mxu0 0
        %10359 = vmatpush2.bf16.msra.mxu0 %v10319
        %10360 = vmatprep.subr.bf16.mxu0 0
        %10361 = vmatpush2.bf16.msra.mxu0 %v10318
        %10362 = vmatprep.subr.bf16.mxu0 0
        %10363 = vmatpush2.bf16.msra.mxu0 %v10317
        %10364 = vmatprep.subr.bf16.mxu0 0
        %10365 = vmatpush2.bf16.msra.mxu0 %v10316
        %10366 = vmatprep.subr.bf16.mxu0 0
        %10367 = vmatpush2.bf16.msra.mxu0 %v10315
        %10368 = vmatprep.subr.bf16.mxu0 0
        %10369 = vmatpush2.bf16.msra.mxu0 %v10314
        %10370 = vmatprep.mubr.bf16.mxu0 %v9009
        %10371 = vmatmul.mubr.bf16.gmra.mxu0 %v9008
        %v10372 = vpop.f32.mrf.mxu0
        %v10373 = vadd.f32 0.0, %v10372
        %v10374 = vpop.f32.mrf.mxu0
        %v10375 = vpop.f32.mrf.mxu0
        %v10376 = vadd.f32 0.0, %v10375
        %v10377 = vpop.f32.mrf.mxu0
        %10378 = vdwg.mxu0
        %v10379 = vadd.f32 %v10207, %v10373
        %v10380 = vadd.f32 %v10208, %v10376
        %v10381 = vld [vmem:[%s8] sm:$0x1]
        %v10383 = vlaneseq
        %v10384 = vshrl.u32 %v10383, 7
        %v10385 = vsub.s32 0, %v10384
        %v10386 = vrot.slane %v10381, %v10385
        %v10388 = vadd.f32 %v10379, %v10386
        %v10389 = vadd.f32 %v10380, %v10386
        %10390 = vst [vmem:[%s444] sm:$0xff] %v10388
        %10391 = vst [vmem:[%s444 + $0x8] sm:$0xff] %v10389
        %s10392 = sand.u32 %s231, 1
        %s10393 = scalar_lea.sflag [#allocation5], %s10392
        %s10394 = sand.u32 %s231, 1
        %s10395 = smul.addr %s10394, 16
        %s10396 = scalar_lea.vmem [#allocation14], %s10395
        // Predicated region
        $region81: #{tpu_custom_call.1} parent=55 // pred_check
          %p10397 = pneg %p241
        $region82: #{tpu_custom_call.1} parent=55 // pred_check_branch
          %10399 = sbr.rel (%p10397) target = $region84
        $region83: #{tpu_custom_call.1} parent=55 // pred_region
          %s10400 = smul.u32 2, %s29
          %s10402 = ssub.s32 256, 256
          %10403 = vsyncadd %s10393, %s10402
          %s10404 = smul.addr %s10400, 128
          %s10405 = scalar_lea.hbm %s9, %s10404
          %s10406 = sshll.u32 %s10396, 4
          %s10407 = int_to_ptr.vmem [resolvable:$true] %s10406
          %10412 = dma.vmem_to_hbm [thread:$0]  %s10407, 256, %s10405, %s10393, 128, 128, 8
        $region84: #{tpu_custom_call.1} parent=55 // pred_fallthru
          _
      $region56: #{tpu_custom_call.1} parent=5 // pred_fallthru
        _
      %p10413 = scmp.le.s32.totalorder 2, %s24
      // Predicated region
      $region85: #{tpu_custom_call.1} parent=5 // pred_check
        %p10414 = pneg %p10413
      $region86: #{tpu_custom_call.1} parent=5 // pred_check_branch
        %10416 = sbr.rel (%p10414) target = $region88
      $region87: #{tpu_custom_call.1} parent=5 // pred_region
        %s10417 = ssub.s32 %s24, 2
        // Predicated region
        $region89: #{tpu_custom_call.1} parent=87 // pred_check
          %p10418 = pneg %p247
        $region90: #{tpu_custom_call.1} parent=87 // pred_check_branch
          %10420 = sbr.rel (%p10418) target = $region92
        $region91: #{tpu_custom_call.1} parent=87 // pred_region
          %s10421 = sand.u32 %s232, 1
          %s10422 = scalar_lea.sflag [#allocation5], %s10421
          %s10423 = sand.u32 %s232, 1
          %s10424 = smul.addr %s10423, 16
          %s10425 = scalar_lea.vmem [#allocation14], %s10424
          %10426 = dma.done %s10422, 256
        $region92: #{tpu_custom_call.1} parent=87 // pred_fallthru
          _
      $region88: #{tpu_custom_call.1} parent=5 // pred_fallthru
        _
    $region6: #{tpu_custom_call.1} parent=1 // loop_footer
      %s28 = sadd.s32 1, %s24
    $region7: #{tpu_custom_call.1} parent=1 // loop_footer_branch
      %23 = sbr.rel target = $region3
    $region8: #{tpu_custom_call.1} parent=1 // loop_exit
      _
    %10427 = vsyncpa [#allocation4], 1
    %s10428 = scalar_lea.sflag [#allocation4], 1
    %10429 = vsyncpa %s10428, 1
    %10430 = vsyncpa [#allocation7], 1
    %10431 = vsyncpa [#allocation10], 1
    %10432 = vsyncpa [#allocation13], 1
    %10433 = vsyncpa [#allocation5], 1
    %s10434 = scalar_lea.sflag [#allocation5], 1
    %10435 = vsyncpa %s10434, 1

</llo_original>
